<compile_context>
chip_gen: v5e
topology: v5e:2x2
jax: 0.10.0
libtpu: 0.0.40
codegen_flags: <defaults>
</compile_context>

<pallas_src>
import functools
import math

import jax
import jax.numpy as jnp
import numpy as np
from jax.experimental import pallas as pl
from jax.experimental.pallas import tpu as pltpu

LANE = 128
_VMEM_SPEC = pl.BlockSpec(memory_space=pltpu.MemorySpace.VMEM)


def _round_up(x, m):
    return -(-x // m) * m


# ----------------------------------------------------------------------------
# Geometry helpers (all static Python ints)
# ----------------------------------------------------------------------------
def _conv_geometry(N, H, W, KH, KW, stride, pad):
    s = stride
    Hp, Wp = H + 2 * pad, W + 2 * pad
    Hq, Wq = -(-Hp // s), -(-Wp // s)          # per-phase image size
    OH = (Hp - KH) // s + 1
    OW = (Wp - KW) // s + 1
    qH, qW = (KH - 1) // s, (KW - 1) // s      # max intra-phase tap offsets
    assert Hq >= OH + qH and Wq >= OW + qW
    SEG = Hq * Wq                              # rows per (phase, image) segment
    M = N * SEG                                # fused (batch, pixel) rows
    M_pad = _round_up(M, 8)
    TRAIL = (qH + 1) * Wq + qW + (M_pad - M) + 8   # slack so tap spans stay in-bounds
    taps = tuple(
        ((ki % s) * s + (kj % s)) * M + (ki // s) * Wq + (kj // s)
        for ki in range(KH) for kj in range(KW))
    return dict(N=N, s=s, pad=pad, KH=KH, KW=KW, Hq=Hq, Wq=Wq, OH=OH, OW=OW,
                SEG=SEG, M=M, M_pad=M_pad, TRAIL=TRAIL, taps=taps)


def _flatten_input(x_nhwc, g):
    """Pad + (space-to-depth for stride>1) + flatten to (rows, Cin)."""
    N, H, W, C = x_nhwc.shape
    s, pad = g["s"], g["pad"]
    xp = jnp.pad(x_nhwc, ((0, 0), (pad, pad), (pad, pad), (0, 0)))
    xp = jnp.pad(xp, ((0, 0), (0, s * g["Hq"] - xp.shape[1]),
                      (0, s * g["Wq"] - xp.shape[2]), (0, 0)))
    xr = xp.reshape(N, g["Hq"], s, g["Wq"], s, C)
    xr = jnp.transpose(xr, (2, 4, 0, 1, 3, 5))           # (pi, pj, N, Hq, Wq, C)
    flat = xr.reshape(s * s * g["M"], C)
    return jnp.pad(flat, ((0, g["TRAIL"]), (0, 0)))


def _valid_mask(g):
    """(M_pad, 1) f32 mask of fused accumulator rows holding real output pixels."""
    per = np.zeros((g["SEG"],), np.float32)
    for oh in range(g["OH"]):
        per[oh * g["Wq"]: oh * g["Wq"] + g["OW"]] = 1.0
    m = np.zeros((g["M_pad"], 1), np.float32)
    for n in range(g["N"]):
        m[n * g["SEG"]:(n + 1) * g["SEG"], 0] = per
    return jnp.asarray(m)


def _unflatten_output(out2d, g):
    C = out2d.shape[-1]
    x = out2d[:g["M"]].reshape(g["N"], g["Hq"], g["Wq"], C)
    return x[:, :g["OH"], :g["OW"], :]


def _im2col(x_nhwc, KH, KW, stride, pad):
    """Thin im2col (only used for small-K / 1x1-output convs)."""
    N, H, W, C = x_nhwc.shape
    s = stride
    OH = (H + 2 * pad - KH) // s + 1
    OW = (W + 2 * pad - KW) // s + 1
    xp = jnp.pad(x_nhwc, ((0, 0), (pad, pad), (pad, pad), (0, 0)))
    cols = [xp[:, ki:ki + (OH - 1) * s + 1:s, kj:kj + (OW - 1) * s + 1:s, :]
            for ki in range(KH) for kj in range(KW)]
    cols = jnp.concatenate(cols, axis=-1).reshape(N * OH * OW, KH * KW * C)
    return cols, OH, OW


# ----------------------------------------------------------------------------
# In-kernel helpers
# ----------------------------------------------------------------------------
def _bn_apply(acc, mask, count, eps, gamma, beta):
    """Batch-stat BN with two-pass (shifted) variance, masked to valid rows."""
    mean = jnp.sum(acc * mask, axis=0, keepdims=True) / count
    cen = (acc - mean) * mask
    var = jnp.sum(cen * cen, axis=0, keepdims=True) / count
    return (acc - mean) * jax.lax.rsqrt(var + eps) * gamma + beta


def _tap_accumulate(src_ref, w_ref, taps, m_rows):
    cout = w_ref.shape[-1]
    acc = jnp.zeros((m_rows, cout), jnp.float32)
    for t, off in enumerate(taps):
        acc = acc + jnp.dot(src_ref[pl.ds(off, m_rows), :], w_ref[t],
                            preferred_element_type=jnp.float32)
    return acc


# ----------------------------------------------------------------------------
# Kernels
# ----------------------------------------------------------------------------
def _matmul_bn_act_kernel(slope, eps, apply_bn, count,
                          x_ref, w_ref, gamma_ref, beta_ref, mask_ref, o_ref):
    """conv-as-single-matmul (+ optional BN(batch stats) + LeakyReLU)."""
    acc = jnp.dot(x_ref[...], w_ref[...], preferred_element_type=jnp.float32)
    if apply_bn:
        y = _bn_apply(acc, mask_ref[...], count, eps, gamma_ref[...], beta_ref[...])
        acc = jnp.where(y >= 0.0, y, slope * y)
    o_ref[...] = acc


def _conv_bn_act_tap_kernel(g, slope, eps, count,
                            x_ref, w_ref, gamma_ref, beta_ref, mask_ref, o_ref):
    """4x4 stride-2 conv as KH*KW tap matmuls (batch fused into M) + BN + LReLU."""
    acc = _tap_accumulate(x_ref, w_ref, g["taps"], g["M_pad"])
    y = _bn_apply(acc, mask_ref[...], count, eps, gamma_ref[...], beta_ref[...])
    o_ref[...] = jnp.where(y >= 0.0, y, slope * y)


def _res_se_block_kernel(g, eps, count, inv_hw,
                         x_ref, se_w1_ref, se_b1_ref, se_w2_ref, se_b2_ref,
                         w1_ref, g1_ref, b1_ref, w2_ref, g2_ref, b2_ref,
                         mask_ref, o_ref, stage_ref, pack_ref):
    N, SEG, Wq = g["N"], g["SEG"], g["Wq"]
    M, Mp, TRAIL = g["M"], g["M_pad"], g["TRAIL"]
    C = x_ref.shape[-1]
    mask = mask_ref[...]
    halo = Wq + 1

    # --- SE: per-image global average pool + batched 2-layer MLP + sigmoid ---
    pooled = jnp.concatenate(
        [jnp.sum(x_ref[pl.ds(n * SEG, SEG), :], axis=0, keepdims=True) * inv_hw
         for n in range(N)], axis=0)                               # (N, C)
    h = jnp.maximum(
        jnp.dot(pooled, se_w1_ref[...], preferred_element_type=jnp.float32)
        + se_b1_ref[...], 0.0)
    z = jnp.dot(h, se_w2_ref[...], preferred_element_type=jnp.float32) + se_b2_ref[...]
    scales = 1.0 / (1.0 + jnp.exp(-z))                              # (N, C)

    # --- stage SE-scaled input ONCE in bf16 (conv1's MXU operand) ------------
    # TODO(synk): per-image offsets n*SEG are not sublane-aligned; a padded
    # per-image SEG would make these stores unmasked.
    for n in range(N):
        stage_ref[pl.ds(n * SEG, SEG), :] = (
            x_ref[pl.ds(n * SEG, SEG), :] * scales[n:n + 1, :]
        ).astype(stage_ref.dtype)
    stage_ref[pl.ds(M, TRAIL), :] = jnp.zeros((TRAIL, C), stage_ref.dtype)

    # --- conv1 + BN1 + ReLU ---------------------------------------------------
    acc1 = _tap_accumulate(stage_ref, w1_ref, g["taps"], Mp)
    y1 = _bn_apply(acc1, mask, count, eps, g1_ref[...], b1_ref[...])
    y1 = jnp.maximum(y1, 0.0) * mask           # zero padding / slack rows

    # --- re-pack BN1/ReLU output into conv2's zero-padded layout (VMEM only) --
    # Only the halo border needs explicit zeros; the interior is fully
    # overwritten by the shifted (masked) store below.
    pack_ref[pl.ds(0, halo), :] = jnp.zeros((halo, C), pack_ref.dtype)
    pack_ref[pl.ds(M + halo, TRAIL - halo), :] = jnp.zeros(
        (TRAIL - halo, C), pack_ref.dtype)
    pack_ref[pl.ds(halo, Mp), :] = y1.astype(pack_ref.dtype)

    # --- conv2 + BN2 + residual add -------------------------------------------
    acc2 = _tap_accumulate(pack_ref, w2_ref, g["taps"], Mp)
    y2 = _bn_apply(acc2, mask, count, eps, g2_ref[...], b2_ref[...])
    o_ref[...] = y2 + x_ref[pl.ds(halo, Mp), :]   # identity = original x rows


# ----------------------------------------------------------------------------
# Stage wrappers (JAX glue: one layout change + one grid-less pallas_call)
# ----------------------------------------------------------------------------
def matmul_conv_stage(x_nhwc, w_mat, gamma, beta, *, KH, KW, stride, pad,
                      slope=0.2, apply_bn=True, eps=1e-5):
    N, H, W, C = x_nhwc.shape
    Kp, Cout_p = w_mat.shape
    cols, OH, OW = _im2col(x_nhwc, KH, KW, stride, pad)
    M = N * OH * OW
    Mp = _round_up(M, 8)
    K = KH * KW * C
    assert Kp >= K, (Kp, K)
    cols = jnp.pad(cols.astype(jnp.bfloat16), ((0, Mp - M), (0, Kp - K)))
    mask = jnp.asarray(np.concatenate(
        [np.ones((M, 1), np.float32), np.zeros((Mp - M, 1), np.float32)], axis=0))

    out2d = pl.pallas_call(
        functools.partial(_matmul_bn_act_kernel, float(slope), float(eps),
                          bool(apply_bn), float(M)),
        out_shape=jax.ShapeDtypeStruct((Mp, Cout_p), jnp.float32),
        in_specs=[_VMEM_SPEC] * 5,
        out_specs=_VMEM_SPEC,
        cost_estimate=pl.CostEstimate(
            flops=int(2 * Mp * Kp * Cout_p), transcendentals=0,
            bytes_accessed=int(cols.size * 2 + w_mat.size * 2 + Mp * Cout_p * 4)),
    )(cols, w_mat, gamma, beta, mask)
    return out2d[:M].reshape(N, OH, OW, Cout_p)


def conv_bn_act_tap_stage(x_nhwc, w_taps, gamma, beta, *, stride=2, pad=1,
                          slope=0.2, eps=1e-5):
    N, H, W, C = x_nhwc.shape
    T, Cin_p, Cout_p = w_taps.shape
    assert Cin_p == C, f"activation channels {C} != weight Cin {Cin_p}"
    KH = KW = int(round(math.sqrt(T)))
    g = _conv_geometry(N, H, W, KH, KW, stride, pad)
    x_flat = _flatten_input(x_nhwc.astype(jnp.bfloat16), g)   # bf16 once
    mask = _valid_mask(g)
    count = float(N * g["OH"] * g["OW"])

    out2d = pl.pallas_call(
        functools.partial(_conv_bn_act_tap_kernel, g, float(slope), float(eps),
                          count),
        out_shape=jax.ShapeDtypeStruct((g["M_pad"], Cout_p), jnp.float32),
        in_specs=[_VMEM_SPEC] * 5,
        out_specs=_VMEM_SPEC,
        cost_estimate=pl.CostEstimate(
            flops=int(2 * T * g["M_pad"] * Cin_p * Cout_p), transcendentals=0,
            bytes_accessed=int(x_flat.size * 2 + w_taps.size * 2
                               + g["M_pad"] * Cout_p * 4)),
    )(x_flat, w_taps, gamma, beta, mask)
    return _unflatten_output(out2d, g)


def res_se_block_stage(x_nhwc, p, eps=1e-5):
    N, H, W, C = x_nhwc.shape
    assert p["conv1_w"].shape[1] == C, (p["conv1_w"].shape, C)
    g = _conv_geometry(N, H, W, 3, 3, 1, 1)
    x_flat = _flatten_input(x_nhwc, g)             # f32 (identity / SE pool)
    mask = _valid_mask(g)
    count = float(N * g["OH"] * g["OW"])
    inv_hw = 1.0 / float(g["OH"] * g["OW"])
    args = (x_flat, p["se_w1"], p["se_b1"], p["se_w2"], p["se_b2"],
            p["conv1_w"], p["bn1_g"], p["bn1_b"],
            p["conv2_w"], p["bn2_g"], p["bn2_b"], mask)

    out2d = pl.pallas_call(
        functools.partial(_res_se_block_kernel, g, float(eps), count, inv_hw),
        out_shape=jax.ShapeDtypeStruct((g["M_pad"], C), jnp.float32),
        in_specs=[_VMEM_SPEC] * len(args),
        out_specs=_VMEM_SPEC,
        scratch_shapes=[pltpu.VMEM(x_flat.shape, jnp.bfloat16),   # SE-scaled x
                        pltpu.VMEM(x_flat.shape, jnp.bfloat16)],  # packed BN1 out
        cost_estimate=pl.CostEstimate(
            flops=int(2 * 2 * 9 * g["M_pad"] * C * C),
            transcendentals=int(N * C),
            bytes_accessed=int(x_flat.size * 4
                               + (p["conv1_w"].size + p["conv2_w"].size) * 2
                               + g["M_pad"] * C * 4)),
    )(*args)
    return _unflatten_output(out2d, g)


# ----------------------------------------------------------------------------
# Parameters: init (PyTorch-like shapes) + one-time prepare for the kernels
# ----------------------------------------------------------------------------
def init_params(key, isize, nz, nc, ngf, reduction=16):
    keys = iter(jax.random.split(key, 128))

    def nrm(shape, scale=0.02):
        return scale * jax.random.normal(next(keys), shape, dtype=jnp.float32)

    def res_params(c):
        cr = max(c // reduction, 1)
        return dict(
            se_w1=nrm((c, cr)), se_b1=nrm((cr,)),
            se_w2=nrm((cr, c)), se_b2=nrm((c,)),
            conv1_w=nrm((c, c, 3, 3)),
            bn1_g=1.0 + nrm((c,)), bn1_b=nrm((c,)),
            conv2_w=nrm((c, c, 3, 3)),
            bn2_g=1.0 + nrm((c,)), bn2_b=nrm((c,)),
        )

    params = dict(
        initial_conv_w=nrm((ngf, nc, 4, 4)),
        initial_bn_g=1.0 + nrm((ngf,)), initial_bn_b=nrm((ngf,)),
        initial_res=res_params(ngf),
        pyramid=[],
    )
    cur_c, cur_s = ngf, isize // 2
    for _ in range(int(math.log2(cur_s / 4))):
        out_c = min(cur_c * 2, 1024)
        params["pyramid"].append(dict(
            conv_w=nrm((out_c, cur_c, 4, 4)),
            bn_g=1.0 + nrm((out_c,)), bn_b=nrm((out_c,)),
            res=res_params(out_c),
        ))
        cur_c, cur_s = out_c, cur_s // 2
    params["final_conv_w"] = nrm((nz, cur_c, 4, 4))
    return params


def _pad_row(v, cp):
    v = jnp.asarray(v).reshape(1, -1).astype(jnp.float32)
    return jnp.pad(v, ((0, 0), (0, cp - v.shape[1])))


def _conv_w_to_taps(w_oihw, cin_pad, cout_pad):
    """OIHW -> (KH*KW, cin_pad, cout_pad) bf16 tap tensor (done once)."""
    Cout, Cin, KH, KW = w_oihw.shape
    taps = jnp.transpose(w_oihw, (2, 3, 1, 0)).reshape(KH * KW, Cin, Cout)
    taps = jnp.pad(taps, ((0, 0), (0, cin_pad - Cin), (0, cout_pad - Cout)))
    return taps.astype(jnp.bfloat16)


def _conv_w_to_matmul(w_oihw, cin_total, cout_pad):
    """OIHW -> (round128(KH*KW*cin_total), cout_pad) bf16 im2col weight."""
    Cout, Cin, KH, KW = w_oihw.shape
    w = jnp.transpose(w_oihw, (2, 3, 1, 0))            # (KH, KW, Cin, Cout)
    w = jnp.pad(w, ((0, 0), (0, 0), (0, cin_total - Cin), (0, cout_pad - Cout)))
    w = w.reshape(KH * KW * cin_total, cout_pad)
    K = KH * KW * cin_total
    Kp = _round_up(K, LANE)
    return jnp.pad(w, ((0, Kp - K), (0, 0))).astype(jnp.bfloat16)


def _prep_res(p, c):
    cp = _round_up(c, LANE)
    cr = p["se_w1"].shape[1]
    crp = max(8, _round_up(cr, 8))
    return dict(
        se_w1=jnp.pad(p["se_w1"].astype(jnp.float32), ((0, cp - c), (0, crp - cr))),
        se_b1=_pad_row(p["se_b1"], crp),
        se_w2=jnp.pad(p["se_w2"].astype(jnp.float32), ((0, crp - cr), (0, cp - c))),
        se_b2=_pad_row(p["se_b2"], cp),
        conv1_w=_conv_w_to_taps(p["conv1_w"], cp, cp),
        bn1_g=_pad_row(p["bn1_g"], cp), bn1_b=_pad_row(p["bn1_b"], cp),
        conv2_w=_conv_w_to_taps(p["conv2_w"], cp, cp),
        bn2_g=_pad_row(p["bn2_g"], cp), bn2_b=_pad_row(p["bn2_b"], cp),
    )


def prepare_params(params):
    ngf, nc = params["initial_conv_w"].shape[0], params["initial_conv_w"].shape[1]
    ngf_p = _round_up(ngf, LANE)
    prep = dict(
        initial_conv_w=_conv_w_to_matmul(params["initial_conv_w"], nc, ngf_p),
        initial_bn_g=_pad_row(params["initial_bn_g"], ngf_p),
        initial_bn_b=_pad_row(params["initial_bn_b"], ngf_p),
        initial_res=_prep_res(params["initial_res"], ngf),
        pyramid=[],
    )
    cur_c = ngf
    for sp in params["pyramid"]:
        out_c = sp["conv_w"].shape[0]
        out_p = _round_up(out_c, LANE)
        prep["pyramid"].append(dict(
            conv_w=_conv_w_to_taps(sp["conv_w"], _round_up(cur_c, LANE), out_p),
            bn_g=_pad_row(sp["bn_g"], out_p), bn_b=_pad_row(sp["bn_b"], out_p),
            res=_prep_res(sp["res"], out_c),
        ))
        cur_c = out_c
    nz = params["final_conv_w"].shape[0]
    prep["final_conv_w"] = _conv_w_to_matmul(
        params["final_conv_w"], _round_up(cur_c, LANE), _round_up(nz, LANE))
    return prep


# ----------------------------------------------------------------------------
# Encoder forward (mirrors Encoder_RES_GANomaly.forward / self.main)
# ----------------------------------------------------------------------------
def encoder_forward(x_nchw, prep, *, nz, add_final_conv=True):
    # TODO(synk): nn.parallel.data_parallel (ngpu>1 CUDA branch) has no Pallas
    # equivalent; the single-device path is implemented.
    x = jnp.transpose(x_nchw, (0, 2, 3, 1)).astype(jnp.float32)   # NCHW -> NHWC

    # initial conv(4x4,s2,p1) + BN + LeakyReLU as one thin-im2col matmul kernel
    x = matmul_conv_stage(x, prep["initial_conv_w"], prep["initial_bn_g"],
                          prep["initial_bn_b"], KH=4, KW=4, stride=2, pad=1,
                          slope=0.2, apply_bn=True)
    x = res_se_block_stage(x, prep["initial_res"])

    for sp in prep["pyramid"]:
        x = conv_bn_act_tap_stage(x, sp["conv_w"], sp["bn_g"], sp["bn_b"],
                                  stride=2, pad=1, slope=0.2)
        x = res_se_block_stage(x, sp["res"])

    if add_final_conv:
        cp = prep["final_conv_w"].shape[-1]
        dummy = jnp.zeros((1, cp), jnp.float32)
        x = matmul_conv_stage(x, prep["final_conv_w"], dummy, dummy,
                              KH=4, KW=4, stride=1, pad=0, slope=1.0,
                              apply_bn=False)
        x = x[..., :nz]                         # strip lane padding
    return jnp.transpose(x, (0, 3, 1, 2))       # NHWC -> NCHW


# ----------------------------------------------------------------------------
# Pure-JAX reference with matching numerics (bf16 conv operands, f32 acc,
# batch-stat BN with two-pass variance)
# ----------------------------------------------------------------------------
def ref_forward(x_nchw, params, add_final_conv=True, eps=1e-5):
    def conv(h, w_oihw, stride, pad):
        w = jnp.transpose(w_oihw, (2, 3, 1, 0)).astype(jnp.bfloat16)
        return jax.lax.conv_general_dilated(
            h.astype(jnp.bfloat16), w, (stride, stride),
            [(pad, pad), (pad, pad)],
            dimension_numbers=("NHWC", "HWIO", "NHWC"),
            preferred_element_type=jnp.float32)

    def bn(h, gamma, beta):
        mean = jnp.mean(h, axis=(0, 1, 2), keepdims=True)
        var = jnp.mean((h - mean) ** 2, axis=(0, 1, 2), keepdims=True)
        return (h - mean) * jax.lax.rsqrt(var + eps) * gamma + beta

    def lrelu(h, s):
        return jnp.where(h >= 0.0, h, s * h)

    def se(h, p):
        pooled = jnp.mean(h, axis=(1, 2))
        z = jnp.maximum(pooled @ p["se_w1"] + p["se_b1"], 0.0)
        z = 1.0 / (1.0 + jnp.exp(-(z @ p["se_w2"] + p["se_b2"])))
        return h * z[:, None, None, :]

    def resblock(h, p):
        idn = h
        o = se(h, p)
        o = jnp.maximum(bn(conv(o, p["conv1_w"], 1, 1), p["bn1_g"], p["bn1_b"]), 0.0)
        o = bn(conv(o, p["conv2_w"], 1, 1), p["bn2_g"], p["bn2_b"])
        return o + idn

    x = jnp.transpose(x_nchw, (0, 2, 3, 1)).astype(jnp.float32)
    x = lrelu(bn(conv(x, params["initial_conv_w"], 2, 1),
                 params["initial_bn_g"], params["initial_bn_b"]), 0.2)
    x = resblock(x, params["initial_res"])
    for sp in params["pyramid"]:
        x = lrelu(bn(conv(x, sp["conv_w"], 2, 1), sp["bn_g"], sp["bn_b"]), 0.2)
        x = resblock(x, sp["res"])
    if add_final_conv:
        x = conv(x, params["final_conv_w"], 1, 0)
    return jnp.transpose(x, (0, 3, 1, 2))


# ----------------------------------------------------------------------------
if __name__ == "__main__":
    isize, nz, nc, ngf, batch = 16, 32, 4, 32, 2

    key = jax.random.PRNGKey(0)
    pkey, xkey = jax.random.split(key)
    params = init_params(pkey, isize, nz, nc, ngf)
    prep = prepare_params(params)
    x = jax.random.normal(xkey, (batch, nc, isize, isize), dtype=jnp.float32)

    fwd = jax.jit(functools.partial(encoder_forward, nz=nz))
    out = jax.block_until_ready(fwd(x, prep))

    assert out.shape == (batch, nz, 1, 1), out.shape
    assert bool(jnp.all(jnp.isfinite(out)))

    ref = jax.block_until_ready(jax.jit(ref_forward)(x, params))
    max_err = float(jnp.max(jnp.abs(out - ref)))
    assert max_err < 5e-2, f"mismatch vs JAX reference: {max_err}"

    print("KERNEL_OK")
</pallas_src>

<mosaic_0001>
module attributes {stable_mosaic.version = 11 : i64} {
  func.func @_matmul_bn_act_kernel(%arg0: memref<128x128xbf16, #tpu.memory_space<vmem>>, %arg1: memref<128x128xbf16, #tpu.memory_space<vmem>>, %arg2: memref<1x128xf32, #tpu.memory_space<vmem>>, %arg3: memref<1x128xf32, #tpu.memory_space<vmem>>, %arg4: memref<128x1xf32, #tpu.memory_space<vmem>>, %arg5: memref<128x128xf32, #tpu.memory_space<vmem>>) attributes {dimension_semantics = [], scalar_prefetch = 0 : i64, scratch_operands = 0 : i64, tpu.core_type = #tpu.core_type<tc>} {
    %c0 = arith.constant 0 : index
    %c0_0 = arith.constant 0 : index
    %0 = vector.load %arg0[%c0, %c0_0] : memref<128x128xbf16, #tpu.memory_space<vmem>>, vector<128x128xbf16>
    %c0_1 = arith.constant 0 : index
    %c0_2 = arith.constant 0 : index
    %1 = vector.load %arg1[%c0_1, %c0_2] : memref<128x128xbf16, #tpu.memory_space<vmem>>, vector<128x128xbf16>
    %cst = arith.constant dense<0.000000e+00> : vector<128x128xf32>
    %2 = tpu.matmul %0, %1, %cst {dimension_numbers = #tpu.dot_dimension_numbers<[1], [0], [0], [1], [0, 0, 1, 1], [], []>} : vector<128x128xbf16>, vector<128x128xbf16>, vector<128x128xf32> -> vector<128x128xf32>
    %c0_3 = arith.constant 0 : index
    %c0_4 = arith.constant 0 : index
    %3 = vector.load %arg4[%c0_3, %c0_4] : memref<128x1xf32, #tpu.memory_space<vmem>>, vector<128x1xf32>
    %c0_5 = arith.constant 0 : index
    %c0_6 = arith.constant 0 : index
    %4 = vector.load %arg2[%c0_5, %c0_6] : memref<1x128xf32, #tpu.memory_space<vmem>>, vector<1x128xf32>
    %c0_7 = arith.constant 0 : index
    %c0_8 = arith.constant 0 : index
    %5 = vector.load %arg3[%c0_7, %c0_8] : memref<1x128xf32, #tpu.memory_space<vmem>>, vector<1x128xf32>
    %6 = vector.broadcast %3 : vector<128x1xf32> to vector<128x128xf32>
    %7 = arith.mulf %2, %6 : vector<128x128xf32>
    %cst_9 = arith.constant dense<0.000000e+00> : vector<128xf32>
    %8 = vector.multi_reduction <add>, %7, %cst_9 [0] : vector<128x128xf32> to vector<128xf32>
    %9 = vector.shape_cast %8 : vector<128xf32> to vector<1x128xf32>
    %cst_10 = arith.constant 1.280000e+02 : f32
    %10 = vector.broadcast %cst_10 : f32 to vector<1x128xf32>
    %11 = arith.divf %9, %10 : vector<1x128xf32>
    %12 = vector.broadcast %11 : vector<1x128xf32> to vector<128x128xf32>
    %13 = arith.subf %2, %12 : vector<128x128xf32>
    %14 = vector.broadcast %3 : vector<128x1xf32> to vector<128x128xf32>
    %15 = arith.mulf %13, %14 : vector<128x128xf32>
    %16 = arith.mulf %15, %15 : vector<128x128xf32>
    %cst_11 = arith.constant dense<0.000000e+00> : vector<128xf32>
    %17 = vector.multi_reduction <add>, %16, %cst_11 [0] : vector<128x128xf32> to vector<128xf32>
    %18 = vector.shape_cast %17 : vector<128xf32> to vector<1x128xf32>
    %cst_12 = arith.constant 1.280000e+02 : f32
    %19 = vector.broadcast %cst_12 : f32 to vector<1x128xf32>
    %20 = arith.divf %18, %19 : vector<1x128xf32>
    %21 = vector.broadcast %11 : vector<1x128xf32> to vector<128x128xf32>
    %22 = arith.subf %2, %21 : vector<128x128xf32>
    %cst_13 = arith.constant 9.99999974E-6 : f32
    %23 = vector.broadcast %cst_13 : f32 to vector<1x128xf32>
    %24 = arith.addf %20, %23 : vector<1x128xf32>
    %25 = math.rsqrt %24 : vector<1x128xf32>
    %26 = vector.broadcast %25 : vector<1x128xf32> to vector<128x128xf32>
    %27 = arith.mulf %22, %26 : vector<128x128xf32>
    %28 = vector.broadcast %4 : vector<1x128xf32> to vector<128x128xf32>
    %29 = arith.mulf %27, %28 : vector<128x128xf32>
    %30 = vector.broadcast %5 : vector<1x128xf32> to vector<128x128xf32>
    %31 = arith.addf %29, %30 : vector<128x128xf32>
    %cst_14 = arith.constant 0.000000e+00 : f32
    %32 = vector.broadcast %cst_14 : f32 to vector<128x128xf32>
    %33 = arith.cmpf oge, %31, %32 : vector<128x128xf32>
    %cst_15 = arith.constant 2.000000e-01 : f32
    %34 = vector.broadcast %cst_15 : f32 to vector<128x128xf32>
    %35 = arith.mulf %34, %31 : vector<128x128xf32>
    %36 = arith.select %33, %31, %35 : vector<128x128xi1>, vector<128x128xf32>
    %c0_16 = arith.constant 0 : index
    %c0_17 = arith.constant 0 : index
    %37 = vector.load %arg5[%c0_16, %c0_17] : memref<128x128xf32, #tpu.memory_space<vmem>>, vector<128x128xf32>
    tpu.vector_store %arg5[%c0_16, %c0_17], %36 {strides = array<i32>} : memref<128x128xf32, #tpu.memory_space<vmem>>, vector<128x128xf32>,
    return
  }
}

module attributes {stable_mosaic.version = 11 : i64} {
  func.func @_res_se_block_kernel(%arg0: memref<240x128xf32, #tpu.memory_space<vmem>>, %arg1: memref<128x8xf32, #tpu.memory_space<vmem>>, %arg2: memref<1x8xf32, #tpu.memory_space<vmem>>, %arg3: memref<8x128xf32, #tpu.memory_space<vmem>>, %arg4: memref<1x128xf32, #tpu.memory_space<vmem>>, %arg5: memref<9x128x128xbf16, #tpu.memory_space<vmem>>, %arg6: memref<1x128xf32, #tpu.memory_space<vmem>>, %arg7: memref<1x128xf32, #tpu.memory_space<vmem>>, %arg8: memref<9x128x128xbf16, #tpu.memory_space<vmem>>, %arg9: memref<1x128xf32, #tpu.memory_space<vmem>>, %arg10: memref<1x128xf32, #tpu.memory_space<vmem>>, %arg11: memref<200x1xf32, #tpu.memory_space<vmem>>, %arg12: memref<200x128xf32, #tpu.memory_space<vmem>>, %arg13: memref<240x128xbf16, #tpu.memory_space<vmem>>, %arg14: memref<240x128xbf16, #tpu.memory_space<vmem>>) attributes {dimension_semantics = [], scalar_prefetch = 0 : i64, scratch_operands = 2 : i64, tpu.core_type = #tpu.core_type<tc>} {
    %c0 = arith.constant 0 : index
    %c0_0 = arith.constant 0 : index
    %0 = vector.load %arg11[%c0, %c0_0] : memref<200x1xf32, #tpu.memory_space<vmem>>, vector<200x1xf32>
    %c0_1 = arith.constant 0 : index
    %c0_2 = arith.constant 0 : index
    %1 = vector.load %arg0[%c0_1, %c0_2] : memref<240x128xf32, #tpu.memory_space<vmem>>, vector<100x128xf32>
    %cst = arith.constant dense<0.000000e+00> : vector<128xf32>
    %2 = vector.multi_reduction <add>, %1, %cst [0] : vector<100x128xf32> to vector<128xf32>
    %3 = vector.shape_cast %2 : vector<128xf32> to vector<1x128xf32>
    %cst_3 = arith.constant 1.562500e-02 : f32
    %4 = vector.broadcast %cst_3 : f32 to vector<1x128xf32>
    %5 = arith.mulf %3, %4 : vector<1x128xf32>
    %c100 = arith.constant 100 : index
    %c0_4 = arith.constant 0 : index
    %6 = vector.load %arg0[%c100, %c0_4] : memref<240x128xf32, #tpu.memory_space<vmem>>, vector<100x128xf32>
    %cst_5 = arith.constant dense<0.000000e+00> : vector<128xf32>
    %7 = vector.multi_reduction <add>, %6, %cst_5 [0] : vector<100x128xf32> to vector<128xf32>
    %8 = vector.shape_cast %7 : vector<128xf32> to vector<1x128xf32>
    %cst_6 = arith.constant 1.562500e-02 : f32
    %9 = vector.broadcast %cst_6 : f32 to vector<1x128xf32>
    %10 = arith.mulf %8, %9 : vector<1x128xf32>
    %11 = tpu.concatenate %5, %10 in 0 : vector<1x128xf32>, vector<1x128xf32> -> vector<2x128xf32>
    %c0_7 = arith.constant 0 : index
    %c0_8 = arith.constant 0 : index
    %12 = vector.load %arg1[%c0_7, %c0_8] : memref<128x8xf32, #tpu.memory_space<vmem>>, vector<128x8xf32>
    %cst_9 = arith.constant dense<0.000000e+00> : vector<2x8xf32>
    %13 = tpu.matmul %11, %12, %cst_9 {dimension_numbers = #tpu.dot_dimension_numbers<[1], [0], [0], [1], [0, 0, 1, 1], [], []>} : vector<2x128xf32>, vector<128x8xf32>, vector<2x8xf32> -> vector<2x8xf32>
    %c0_10 = arith.constant 0 : index
    %c0_11 = arith.constant 0 : index
    %14 = vector.load %arg2[%c0_10, %c0_11] : memref<1x8xf32, #tpu.memory_space<vmem>>, vector<1x8xf32>
    %15 = vector.broadcast %14 : vector<1x8xf32> to vector<2x8xf32>
    %16 = arith.addf %13, %15 : vector<2x8xf32>
    %cst_12 = arith.constant 0.000000e+00 : f32
    %17 = vector.broadcast %cst_12 : f32 to vector<2x8xf32>
    %18 = arith.maximumf %16, %17 : vector<2x8xf32>
    %c0_13 = arith.constant 0 : index
    %c0_14 = arith.constant 0 : index
    %19 = vector.load %arg3[%c0_13, %c0_14] : memref<8x128xf32, #tpu.memory_space<vmem>>, vector<8x128xf32>
    %cst_15 = arith.constant dense<0.000000e+00> : vector<2x128xf32>
    %20 = tpu.matmul %18, %19, %cst_15 {dimension_numbers = #tpu.dot_dimension_numbers<[1], [0], [0], [1], [0, 0, 1, 1], [], []>} : vector<2x8xf32>, vector<8x128xf32>, vector<2x128xf32> -> vector<2x128xf32>
    %c0_16 = arith.constant 0 : index
    %c0_17 = arith.constant 0 : index
    %21 = vector.load %arg4[%c0_16, %c0_17] : memref<1x128xf32, #tpu.memory_space<vmem>>, vector<1x128xf32>
    %22 = vector.broadcast %21 : vector<1x128xf32> to vector<2x128xf32>
    %23 = arith.addf %20, %22 : vector<2x128xf32>
    %cst_18 = arith.constant 0.000000e+00 : f32
    %24 = vector.broadcast %cst_18 : f32 to vector<2x128xf32>
    %25 = arith.subf %24, %23 : vector<2x128xf32>
    %26 = math.exp %25 : vector<2x128xf32>
    %cst_19 = arith.constant 1.000000e+00 : f32
    %27 = vector.broadcast %cst_19 : f32 to vector<2x128xf32>
    %28 = arith.addf %27, %26 : vector<2x128xf32>
    %cst_20 = arith.constant 1.000000e+00 : f32
    %29 = vector.broadcast %cst_20 : f32 to vector<2x128xf32>
    %30 = arith.divf %29, %28 : vector<2x128xf32>
    %c0_21 = arith.constant 0 : index
    %c0_22 = arith.constant 0 : index
    %31 = vector.load %arg0[%c0_21, %c0_22] : memref<240x128xf32, #tpu.memory_space<vmem>>, vector<100x128xf32>
    %32 = vector.extract_strided_slice %30 {offsets = [0, 0], sizes = [1, 128], strides = [1, 1]} : vector<2x128xf32> to vector<1x128xf32>
    %33 = vector.broadcast %32 : vector<1x128xf32> to vector<100x128xf32>
    %34 = arith.mulf %31, %33 : vector<100x128xf32>
    %35 = arith.truncf %34 : vector<100x128xf32> to vector<100x128xbf16>
    %c0_23 = arith.constant 0 : index
    %c0_24 = arith.constant 0 : index
    %36 = vector.load %arg13[%c0_23, %c0_24] : memref<240x128xbf16, #tpu.memory_space<vmem>>, vector<100x128xbf16>
    tpu.vector_store %arg13[%c0_23, %c0_24], %35 {strides = array<i32>} : memref<240x128xbf16, #tpu.memory_space<vmem>>, vector<100x128xbf16>,
    %c100_25 = arith.constant 100 : index
    %c0_26 = arith.constant 0 : index
    %37 = vector.load %arg0[%c100_25, %c0_26] : memref<240x128xf32, #tpu.memory_space<vmem>>, vector<100x128xf32>
    %38 = vector.extract_strided_slice %30 {offsets = [1, 0], sizes = [1, 128], strides = [1, 1]} : vector<2x128xf32> to vector<1x128xf32>
    %39 = vector.broadcast %38 : vector<1x128xf32> to vector<100x128xf32>
    %40 = arith.mulf %37, %39 : vector<100x128xf32>
    %41 = arith.truncf %40 : vector<100x128xf32> to vector<100x128xbf16>
    %c100_27 = arith.constant 100 : index
    %c0_28 = arith.constant 0 : index
    %42 = vector.load %arg13[%c100_27, %c0_28] : memref<240x128xbf16, #tpu.memory_space<vmem>>, vector<100x128xbf16>
    tpu.vector_store %arg13[%c100_27, %c0_28], %41 {strides = array<i32>} : memref<240x128xbf16, #tpu.memory_space<vmem>>, vector<100x128xbf16>,
    %cst_29 = arith.constant 0.000000e+00 : bf16
    %43 = vector.broadcast %cst_29 : bf16 to vector<40x128xbf16>
    %c200 = arith.constant 200 : index
    %c0_30 = arith.constant 0 : index
    %44 = vector.load %arg13[%c200, %c0_30] : memref<240x128xbf16, #tpu.memory_space<vmem>>, vector<40x128xbf16>
    tpu.vector_store %arg13[%c200, %c0_30], %43 {strides = array<i32>} : memref<240x128xbf16, #tpu.memory_space<vmem>>, vector<40x128xbf16>,
    %cst_31 = arith.constant 0.000000e+00 : f32
    %45 = vector.broadcast %cst_31 : f32 to vector<200x128xf32>
    %c0_32 = arith.constant 0 : index
    %c0_33 = arith.constant 0 : index
    %46 = vector.load %arg13[%c0_32, %c0_33] : memref<240x128xbf16, #tpu.memory_space<vmem>>, vector<200x128xbf16>
    %c0_34 = arith.constant 0 : index
    %c0_35 = arith.constant 0 : index
    %c0_36 = arith.constant 0 : index
    %47 = vector.load %arg5[%c0_34, %c0_35, %c0_36] : memref<9x128x128xbf16, #tpu.memory_space<vmem>>, vector<1x128x128xbf16>
    %48 = vector.shape_cast %47 : vector<1x128x128xbf16> to vector<128x128xbf16>
    %cst_37 = arith.constant dense<0.000000e+00> : vector<200x128xf32>
    %49 = tpu.matmul %46, %48, %cst_37 {dimension_numbers = #tpu.dot_dimension_numbers<[1], [0], [0], [1], [0, 0, 1, 1], [], []>} : vector<200x128xbf16>, vector<128x128xbf16>, vector<200x128xf32> -> vector<200x128xf32>
    %50 = arith.addf %45, %49 : vector<200x128xf32>
    %c1 = arith.constant 1 : index
    %c0_38 = arith.constant 0 : index
    %51 = vector.load %arg13[%c1, %c0_38] : memref<240x128xbf16, #tpu.memory_space<vmem>>, vector<200x128xbf16>
    %c1_39 = arith.constant 1 : index
    %c0_40 = arith.constant 0 : index
    %c0_41 = arith.constant 0 : index
    %52 = vector.load %arg5[%c1_39, %c0_40, %c0_41] : memref<9x128x128xbf16, #tpu.memory_space<vmem>>, vector<1x128x128xbf16>
    %53 = vector.shape_cast %52 : vector<1x128x128xbf16> to vector<128x128xbf16>
    %cst_42 = arith.constant dense<0.000000e+00> : vector<200x128xf32>
    %54 = tpu.matmul %51, %53, %cst_42 {dimension_numbers = #tpu.dot_dimension_numbers<[1], [0], [0], [1], [0, 0, 1, 1], [], []>} : vector<200x128xbf16>, vector<128x128xbf16>, vector<200x128xf32> -> vector<200x128xf32>
    %55 = arith.addf %50, %54 : vector<200x128xf32>
    %c2 = arith.constant 2 : index
    %c0_43 = arith.constant 0 : index
    %56 = vector.load %arg13[%c2, %c0_43] : memref<240x128xbf16, #tpu.memory_space<vmem>>, vector<200x128xbf16>
    %c2_44 = arith.constant 2 : index
    %c0_45 = arith.constant 0 : index
    %c0_46 = arith.constant 0 : index
    %57 = vector.load %arg5[%c2_44, %c0_45, %c0_46] : memref<9x128x128xbf16, #tpu.memory_space<vmem>>, vector<1x128x128xbf16>
    %58 = vector.shape_cast %57 : vector<1x128x128xbf16> to vector<128x128xbf16>
    %cst_47 = arith.constant dense<0.000000e+00> : vector<200x128xf32>
    %59 = tpu.matmul %56, %58, %cst_47 {dimension_numbers = #tpu.dot_dimension_numbers<[1], [0], [0], [1], [0, 0, 1, 1], [], []>} : vector<200x128xbf16>, vector<128x128xbf16>, vector<200x128xf32> -> vector<200x128xf32>
    %60 = arith.addf %55, %59 : vector<200x128xf32>
    %c10 = arith.constant 10 : index
    %c0_48 = arith.constant 0 : index
    %61 = vector.load %arg13[%c10, %c0_48] : memref<240x128xbf16, #tpu.memory_space<vmem>>, vector<200x128xbf16>
    %c3 = arith.constant 3 : index
    %c0_49 = arith.constant 0 : index
    %c0_50 = arith.constant 0 : index
    %62 = vector.load %arg5[%c3, %c0_49, %c0_50] : memref<9x128x128xbf16, #tpu.memory_space<vmem>>, vector<1x128x128xbf16>
    %63 = vector.shape_cast %62 : vector<1x128x128xbf16> to vector<128x128xbf16>
    %cst_51 = arith.constant dense<0.000000e+00> : vector<200x128xf32>
    %64 = tpu.matmul %61, %63, %cst_51 {dimension_numbers = #tpu.dot_dimension_numbers<[1], [0], [0], [1], [0, 0, 1, 1], [], []>} : vector<200x128xbf16>, vector<128x128xbf16>, vector<200x128xf32> -> vector<200x128xf32>
    %65 = arith.addf %60, %64 : vector<200x128xf32>
    %c11 = arith.constant 11 : index
    %c0_52 = arith.constant 0 : index
    %66 = vector.load %arg13[%c11, %c0_52] : memref<240x128xbf16, #tpu.memory_space<vmem>>, vector<200x128xbf16>
    %c4 = arith.constant 4 : index
    %c0_53 = arith.constant 0 : index
    %c0_54 = arith.constant 0 : index
    %67 = vector.load %arg5[%c4, %c0_53, %c0_54] : memref<9x128x128xbf16, #tpu.memory_space<vmem>>, vector<1x128x128xbf16>
    %68 = vector.shape_cast %67 : vector<1x128x128xbf16> to vector<128x128xbf16>
    %cst_55 = arith.constant dense<0.000000e+00> : vector<200x128xf32>
    %69 = tpu.matmul %66, %68, %cst_55 {dimension_numbers = #tpu.dot_dimension_numbers<[1], [0], [0], [1], [0, 0, 1, 1], [], []>} : vector<200x128xbf16>, vector<128x128xbf16>, vector<200x128xf32> -> vector<200x128xf32>
    %70 = arith.addf %65, %69 : vector<200x128xf32>
    %c12 = arith.constant 12 : index
    %c0_56 = arith.constant 0 : index
    %71 = vector.load %arg13[%c12, %c0_56] : memref<240x128xbf16, #tpu.memory_space<vmem>>, vector<200x128xbf16>
    %c5 = arith.constant 5 : index
    %c0_57 = arith.constant 0 : index
    %c0_58 = arith.constant 0 : index
    %72 = vector.load %arg5[%c5, %c0_57, %c0_58] : memref<9x128x128xbf16, #tpu.memory_space<vmem>>, vector<1x128x128xbf16>
    %73 = vector.shape_cast %72 : vector<1x128x128xbf16> to vector<128x128xbf16>
    %cst_59 = arith.constant dense<0.000000e+00> : vector<200x128xf32>
    %74 = tpu.matmul %71, %73, %cst_59 {dimension_numbers = #tpu.dot_dimension_numbers<[1], [0], [0], [1], [0, 0, 1, 1], [], []>} : vector<200x128xbf16>, vector<128x128xbf16>, vector<200x128xf32> -> vector<200x128xf32>
    %75 = arith.addf %70, %74 : vector<200x128xf32>
    %c20 = arith.constant 20 : index
    %c0_60 = arith.constant 0 : index
    %76 = vector.load %arg13[%c20, %c0_60] : memref<240x128xbf16, #tpu.memory_space<vmem>>, vector<200x128xbf16>
    %c6 = arith.constant 6 : index
    %c0_61 = arith.constant 0 : index
    %c0_62 = arith.constant 0 : index
    %77 = vector.load %arg5[%c6, %c0_61, %c0_62] : memref<9x128x128xbf16, #tpu.memory_space<vmem>>, vector<1x128x128xbf16>
    %78 = vector.shape_cast %77 : vector<1x128x128xbf16> to vector<128x128xbf16>
    %cst_63 = arith.constant dense<0.000000e+00> : vector<200x128xf32>
    %79 = tpu.matmul %76, %78, %cst_63 {dimension_numbers = #tpu.dot_dimension_numbers<[1], [0], [0], [1], [0, 0, 1, 1], [], []>} : vector<200x128xbf16>, vector<128x128xbf16>, vector<200x128xf32> -> vector<200x128xf32>
    %80 = arith.addf %75, %79 : vector<200x128xf32>
    %c21 = arith.constant 21 : index
    %c0_64 = arith.constant 0 : index
    %81 = vector.load %arg13[%c21, %c0_64] : memref<240x128xbf16, #tpu.memory_space<vmem>>, vector<200x128xbf16>
    %c7 = arith.constant 7 : index
    %c0_65 = arith.constant 0 : index
    %c0_66 = arith.constant 0 : index
    %82 = vector.load %arg5[%c7, %c0_65, %c0_66] : memref<9x128x128xbf16, #tpu.memory_space<vmem>>, vector<1x128x128xbf16>
    %83 = vector.shape_cast %82 : vector<1x128x128xbf16> to vector<128x128xbf16>
    %cst_67 = arith.constant dense<0.000000e+00> : vector<200x128xf32>
    %84 = tpu.matmul %81, %83, %cst_67 {dimension_numbers = #tpu.dot_dimension_numbers<[1], [0], [0], [1], [0, 0, 1, 1], [], []>} : vector<200x128xbf16>, vector<128x128xbf16>, vector<200x128xf32> -> vector<200x128xf32>
    %85 = arith.addf %80, %84 : vector<200x128xf32>
    %c22 = arith.constant 22 : index
    %c0_68 = arith.constant 0 : index
    %86 = vector.load %arg13[%c22, %c0_68] : memref<240x128xbf16, #tpu.memory_space<vmem>>, vector<200x128xbf16>
    %c8 = arith.constant 8 : index
    %c0_69 = arith.constant 0 : index
    %c0_70 = arith.constant 0 : index
    %87 = vector.load %arg5[%c8, %c0_69, %c0_70] : memref<9x128x128xbf16, #tpu.memory_space<vmem>>, vector<1x128x128xbf16>
    %88 = vector.shape_cast %87 : vector<1x128x128xbf16> to vector<128x128xbf16>
    %cst_71 = arith.constant dense<0.000000e+00> : vector<200x128xf32>
    %89 = tpu.matmul %86, %88, %cst_71 {dimension_numbers = #tpu.dot_dimension_numbers<[1], [0], [0], [1], [0, 0, 1, 1], [], []>} : vector<200x128xbf16>, vector<128x128xbf16>, vector<200x128xf32> -> vector<200x128xf32>
    %90 = arith.addf %85, %89 : vector<200x128xf32>
    %c0_72 = arith.constant 0 : index
    %c0_73 = arith.constant 0 : index
    %91 = vector.load %arg6[%c0_72, %c0_73] : memref<1x128xf32, #tpu.memory_space<vmem>>, vector<1x128xf32>
    %c0_74 = arith.constant 0 : index
    %c0_75 = arith.constant 0 : index
    %92 = vector.load %arg7[%c0_74, %c0_75] : memref<1x128xf32, #tpu.memory_space<vmem>>, vector<1x128xf32>
    %93 = vector.broadcast %0 : vector<200x1xf32> to vector<200x128xf32>
    %94 = arith.mulf %90, %93 : vector<200x128xf32>
    %cst_76 = arith.constant dense<0.000000e+00> : vector<128xf32>
    %95 = vector.multi_reduction <add>, %94, %cst_76 [0] : vector<200x128xf32> to vector<128xf32>
    %96 = vector.shape_cast %95 : vector<128xf32> to vector<1x128xf32>
    %cst_77 = arith.constant 1.280000e+02 : f32
    %97 = vector.broadcast %cst_77 : f32 to vector<1x128xf32>
    %98 = arith.divf %96, %97 : vector<1x128xf32>
    %99 = vector.broadcast %98 : vector<1x128xf32> to vector<200x128xf32>
    %100 = arith.subf %90, %99 : vector<200x128xf32>
    %101 = vector.broadcast %0 : vector<200x1xf32> to vector<200x128xf32>
    %102 = arith.mulf %100, %101 : vector<200x128xf32>
    %103 = arith.mulf %102, %102 : vector<200x128xf32>
    %cst_78 = arith.constant dense<0.000000e+00> : vector<128xf32>
    %104 = vector.multi_reduction <add>, %103, %cst_78 [0] : vector<200x128xf32> to vector<128xf32>
    %105 = vector.shape_cast %104 : vector<128xf32> to vector<1x128xf32>
    %cst_79 = arith.constant 1.280000e+02 : f32
    %106 = vector.broadcast %cst_79 : f32 to vector<1x128xf32>
    %107 = arith.divf %105, %106 : vector<1x128xf32>
    %108 = vector.broadcast %98 : vector<1x128xf32> to vector<200x128xf32>
    %109 = arith.subf %90, %108 : vector<200x128xf32>
    %cst_80 = arith.constant 9.99999974E-6 : f32
    %110 = vector.broadcast %cst_80 : f32 to vector<1x128xf32>
    %111 = arith.addf %107, %110 : vector<1x128xf32>
    %112 = math.rsqrt %111 : vector<1x128xf32>
    %113 = vector.broadcast %112 : vector<1x128xf32> to vector<200x128xf32>
    %114 = arith.mulf %109, %113 : vector<200x128xf32>
    %115 = vector.broadcast %91 : vector<1x128xf32> to vector<200x128xf32>
    %116 = arith.mulf %114, %115 : vector<200x128xf32>
    %117 = vector.broadcast %92 : vector<1x128xf32> to vector<200x128xf32>
    %118 = arith.addf %116, %117 : vector<200x128xf32>
    %cst_81 = arith.constant 0.000000e+00 : f32
    %119 = vector.broadcast %cst_81 : f32 to vector<200x128xf32>
    %120 = arith.maximumf %118, %119 : vector<200x128xf32>
    %121 = vector.broadcast %0 : vector<200x1xf32> to vector<200x128xf32>
    %122 = arith.mulf %120, %121 : vector<200x128xf32>
    %cst_82 = arith.constant 0.000000e+00 : bf16
    %123 = vector.broadcast %cst_82 : bf16 to vector<11x128xbf16>
    %c0_83 = arith.constant 0 : index
    %c0_84 = arith.constant 0 : index
    %124 = vector.load %arg14[%c0_83, %c0_84] : memref<240x128xbf16, #tpu.memory_space<vmem>>, vector<11x128xbf16>
    tpu.vector_store %arg14[%c0_83, %c0_84], %123 {strides = array<i32>} : memref<240x128xbf16, #tpu.memory_space<vmem>>, vector<11x128xbf16>,
    %cst_85 = arith.constant 0.000000e+00 : bf16
    %125 = vector.broadcast %cst_85 : bf16 to vector<29x128xbf16>
    %c211 = arith.constant 211 : index
    %c0_86 = arith.constant 0 : index
    %126 = vector.load %arg14[%c211, %c0_86] : memref<240x128xbf16, #tpu.memory_space<vmem>>, vector<29x128xbf16>
    tpu.vector_store %arg14[%c211, %c0_86], %125 {strides = array<i32>} : memref<240x128xbf16, #tpu.memory_space<vmem>>, vector<29x128xbf16>,
    %127 = arith.truncf %122 : vector<200x128xf32> to vector<200x128xbf16>
    %c11_87 = arith.constant 11 : index
    %c0_88 = arith.constant 0 : index
    %128 = vector.load %arg14[%c11_87, %c0_88] : memref<240x128xbf16, #tpu.memory_space<vmem>>, vector<200x128xbf16>
    tpu.vector_store %arg14[%c11_87, %c0_88], %127 {strides = array<i32>} : memref<240x128xbf16, #tpu.memory_space<vmem>>, vector<200x128xbf16>,
    %cst_89 = arith.constant 0.000000e+00 : f32
    %129 = vector.broadcast %cst_89 : f32 to vector<200x128xf32>
    %c0_90 = arith.constant 0 : index
    %c0_91 = arith.constant 0 : index
    %130 = vector.load %arg14[%c0_90, %c0_91] : memref<240x128xbf16, #tpu.memory_space<vmem>>, vector<200x128xbf16>
    %c0_92 = arith.constant 0 : index
    %c0_93 = arith.constant 0 : index
    %c0_94 = arith.constant 0 : index
    %131 = vector.load %arg8[%c0_92, %c0_93, %c0_94] : memref<9x128x128xbf16, #tpu.memory_space<vmem>>, vector<1x128x128xbf16>
    %132 = vector.shape_cast %131 : vector<1x128x128xbf16> to vector<128x128xbf16>
    %cst_95 = arith.constant dense<0.000000e+00> : vector<200x128xf32>
    %133 = tpu.matmul %130, %132, %cst_95 {dimension_numbers = #tpu.dot_dimension_numbers<[1], [0], [0], [1], [0, 0, 1, 1], [], []>} : vector<200x128xbf16>, vector<128x128xbf16>, vector<200x128xf32> -> vector<200x128xf32>
    %134 = arith.addf %129, %133 : vector<200x128xf32>
    %c1_96 = arith.constant 1 : index
    %c0_97 = arith.constant 0 : index
    %135 = vector.load %arg14[%c1_96, %c0_97] : memref<240x128xbf16, #tpu.memory_space<vmem>>, vector<200x128xbf16>
    %c1_98 = arith.constant 1 : index
    %c0_99 = arith.constant 0 : index
    %c0_100 = arith.constant 0 : index
    %136 = vector.load %arg8[%c1_98, %c0_99, %c0_100] : memref<9x128x128xbf16, #tpu.memory_space<vmem>>, vector<1x128x128xbf16>
    %137 = vector.shape_cast %136 : vector<1x128x128xbf16> to vector<128x128xbf16>
    %cst_101 = arith.constant dense<0.000000e+00> : vector<200x128xf32>
    %138 = tpu.matmul %135, %137, %cst_101 {dimension_numbers = #tpu.dot_dimension_numbers<[1], [0], [0], [1], [0, 0, 1, 1], [], []>} : vector<200x128xbf16>, vector<128x128xbf16>, vector<200x128xf32> -> vector<200x128xf32>
    %139 = arith.addf %134, %138 : vector<200x128xf32>
    %c2_102 = arith.constant 2 : index
    %c0_103 = arith.constant 0 : index
    %140 = vector.load %arg14[%c2_102, %c0_103] : memref<240x128xbf16, #tpu.memory_space<vmem>>, vector<200x128xbf16>
    %c2_104 = arith.constant 2 : index
    %c0_105 = arith.constant 0 : index
    %c0_106 = arith.constant 0 : index
    %141 = vector.load %arg8[%c2_104, %c0_105, %c0_106] : memref<9x128x128xbf16, #tpu.memory_space<vmem>>, vector<1x128x128xbf16>
    %142 = vector.shape_cast %141 : vector<1x128x128xbf16> to vector<128x128xbf16>
    %cst_107 = arith.constant dense<0.000000e+00> : vector<200x128xf32>
    %143 = tpu.matmul %140, %142, %cst_107 {dimension_numbers = #tpu.dot_dimension_numbers<[1], [0], [0], [1], [0, 0, 1, 1], [], []>} : vector<200x128xbf16>, vector<128x128xbf16>, vector<200x128xf32> -> vector<200x128xf32>
    %144 = arith.addf %139, %143 : vector<200x128xf32>
    %c10_108 = arith.constant 10 : index
    %c0_109 = arith.constant 0 : index
    %145 = vector.load %arg14[%c10_108, %c0_109] : memref<240x128xbf16, #tpu.memory_space<vmem>>, vector<200x128xbf16>
    %c3_110 = arith.constant 3 : index
    %c0_111 = arith.constant 0 : index
    %c0_112 = arith.constant 0 : index
    %146 = vector.load %arg8[%c3_110, %c0_111, %c0_112] : memref<9x128x128xbf16, #tpu.memory_space<vmem>>, vector<1x128x128xbf16>
    %147 = vector.shape_cast %146 : vector<1x128x128xbf16> to vector<128x128xbf16>
    %cst_113 = arith.constant dense<0.000000e+00> : vector<200x128xf32>
    %148 = tpu.matmul %145, %147, %cst_113 {dimension_numbers = #tpu.dot_dimension_numbers<[1], [0], [0], [1], [0, 0, 1, 1], [], []>} : vector<200x128xbf16>, vector<128x128xbf16>, vector<200x128xf32> -> vector<200x128xf32>
    %149 = arith.addf %144, %148 : vector<200x128xf32>
    %c11_114 = arith.constant 11 : index
    %c0_115 = arith.constant 0 : index
    %150 = vector.load %arg14[%c11_114, %c0_115] : memref<240x128xbf16, #tpu.memory_space<vmem>>, vector<200x128xbf16>
    %c4_116 = arith.constant 4 : index
    %c0_117 = arith.constant 0 : index
    %c0_118 = arith.constant 0 : index
    %151 = vector.load %arg8[%c4_116, %c0_117, %c0_118] : memref<9x128x128xbf16, #tpu.memory_space<vmem>>, vector<1x128x128xbf16>
    %152 = vector.shape_cast %151 : vector<1x128x128xbf16> to vector<128x128xbf16>
    %cst_119 = arith.constant dense<0.000000e+00> : vector<200x128xf32>
    %153 = tpu.matmul %150, %152, %cst_119 {dimension_numbers = #tpu.dot_dimension_numbers<[1], [0], [0], [1], [0, 0, 1, 1], [], []>} : vector<200x128xbf16>, vector<128x128xbf16>, vector<200x128xf32> -> vector<200x128xf32>
    %154 = arith.addf %149, %153 : vector<200x128xf32>
    %c12_120 = arith.constant 12 : index
    %c0_121 = arith.constant 0 : index
    %155 = vector.load %arg14[%c12_120, %c0_121] : memref<240x128xbf16, #tpu.memory_space<vmem>>, vector<200x128xbf16>
    %c5_122 = arith.constant 5 : index
    %c0_123 = arith.constant 0 : index
    %c0_124 = arith.constant 0 : index
    %156 = vector.load %arg8[%c5_122, %c0_123, %c0_124] : memref<9x128x128xbf16, #tpu.memory_space<vmem>>, vector<1x128x128xbf16>
    %157 = vector.shape_cast %156 : vector<1x128x128xbf16> to vector<128x128xbf16>
    %cst_125 = arith.constant dense<0.000000e+00> : vector<200x128xf32>
    %158 = tpu.matmul %155, %157, %cst_125 {dimension_numbers = #tpu.dot_dimension_numbers<[1], [0], [0], [1], [0, 0, 1, 1], [], []>} : vector<200x128xbf16>, vector<128x128xbf16>, vector<200x128xf32> -> vector<200x128xf32>
    %159 = arith.addf %154, %158 : vector<200x128xf32>
    %c20_126 = arith.constant 20 : index
    %c0_127 = arith.constant 0 : index
    %160 = vector.load %arg14[%c20_126, %c0_127] : memref<240x128xbf16, #tpu.memory_space<vmem>>, vector<200x128xbf16>
    %c6_128 = arith.constant 6 : index
    %c0_129 = arith.constant 0 : index
    %c0_130 = arith.constant 0 : index
    %161 = vector.load %arg8[%c6_128, %c0_129, %c0_130] : memref<9x128x128xbf16, #tpu.memory_space<vmem>>, vector<1x128x128xbf16>
    %162 = vector.shape_cast %161 : vector<1x128x128xbf16> to vector<128x128xbf16>
    %cst_131 = arith.constant dense<0.000000e+00> : vector<200x128xf32>
    %163 = tpu.matmul %160, %162, %cst_131 {dimension_numbers = #tpu.dot_dimension_numbers<[1], [0], [0], [1], [0, 0, 1, 1], [], []>} : vector<200x128xbf16>, vector<128x128xbf16>, vector<200x128xf32> -> vector<200x128xf32>
    %164 = arith.addf %159, %163 : vector<200x128xf32>
    %c21_132 = arith.constant 21 : index
    %c0_133 = arith.constant 0 : index
    %165 = vector.load %arg14[%c21_132, %c0_133] : memref<240x128xbf16, #tpu.memory_space<vmem>>, vector<200x128xbf16>
    %c7_134 = arith.constant 7 : index
    %c0_135 = arith.constant 0 : index
    %c0_136 = arith.constant 0 : index
    %166 = vector.load %arg8[%c7_134, %c0_135, %c0_136] : memref<9x128x128xbf16, #tpu.memory_space<vmem>>, vector<1x128x128xbf16>
    %167 = vector.shape_cast %166 : vector<1x128x128xbf16> to vector<128x128xbf16>
    %cst_137 = arith.constant dense<0.000000e+00> : vector<200x128xf32>
    %168 = tpu.matmul %165, %167, %cst_137 {dimension_numbers = #tpu.dot_dimension_numbers<[1], [0], [0], [1], [0, 0, 1, 1], [], []>} : vector<200x128xbf16>, vector<128x128xbf16>, vector<200x128xf32> -> vector<200x128xf32>
    %169 = arith.addf %164, %168 : vector<200x128xf32>
    %c22_138 = arith.constant 22 : index
    %c0_139 = arith.constant 0 : index
    %170 = vector.load %arg14[%c22_138, %c0_139] : memref<240x128xbf16, #tpu.memory_space<vmem>>, vector<200x128xbf16>
    %c8_140 = arith.constant 8 : index
    %c0_141 = arith.constant 0 : index
    %c0_142 = arith.constant 0 : index
    %171 = vector.load %arg8[%c8_140, %c0_141, %c0_142] : memref<9x128x128xbf16, #tpu.memory_space<vmem>>, vector<1x128x128xbf16>
    %172 = vector.shape_cast %171 : vector<1x128x128xbf16> to vector<128x128xbf16>
    %cst_143 = arith.constant dense<0.000000e+00> : vector<200x128xf32>
    %173 = tpu.matmul %170, %172, %cst_143 {dimension_numbers = #tpu.dot_dimension_numbers<[1], [0], [0], [1], [0, 0, 1, 1], [], []>} : vector<200x128xbf16>, vector<128x128xbf16>, vector<200x128xf32> -> vector<200x128xf32>
    %174 = arith.addf %169, %173 : vector<200x128xf32>
    %c0_144 = arith.constant 0 : index
    %c0_145 = arith.constant 0 : index
    %175 = vector.load %arg9[%c0_144, %c0_145] : memref<1x128xf32, #tpu.memory_space<vmem>>, vector<1x128xf32>
    %c0_146 = arith.constant 0 : index
    %c0_147 = arith.constant 0 : index
    %176 = vector.load %arg10[%c0_146, %c0_147] : memref<1x128xf32, #tpu.memory_space<vmem>>, vector<1x128xf32>
    %177 = vector.broadcast %0 : vector<200x1xf32> to vector<200x128xf32>
    %178 = arith.mulf %174, %177 : vector<200x128xf32>
    %cst_148 = arith.constant dense<0.000000e+00> : vector<128xf32>
    %179 = vector.multi_reduction <add>, %178, %cst_148 [0] : vector<200x128xf32> to vector<128xf32>
    %180 = vector.shape_cast %179 : vector<128xf32> to vector<1x128xf32>
    %cst_149 = arith.constant 1.280000e+02 : f32
    %181 = vector.broadcast %cst_149 : f32 to vector<1x128xf32>
    %182 = arith.divf %180, %181 : vector<1x128xf32>
    %183 = vector.broadcast %182 : vector<1x128xf32> to vector<200x128xf32>
    %184 = arith.subf %174, %183 : vector<200x128xf32>
    %185 = vector.broadcast %0 : vector<200x1xf32> to vector<200x128xf32>
    %186 = arith.mulf %184, %185 : vector<200x128xf32>
    %187 = arith.mulf %186, %186 : vector<200x128xf32>
    %cst_150 = arith.constant dense<0.000000e+00> : vector<128xf32>
    %188 = vector.multi_reduction <add>, %187, %cst_150 [0] : vector<200x128xf32> to vector<128xf32>
    %189 = vector.shape_cast %188 : vector<128xf32> to vector<1x128xf32>
    %cst_151 = arith.constant 1.280000e+02 : f32
    %190 = vector.broadcast %cst_151 : f32 to vector<1x128xf32>
    %191 = arith.divf %189, %190 : vector<1x128xf32>
    %192 = vector.broadcast %182 : vector<1x128xf32> to vector<200x128xf32>
    %193 = arith.subf %174, %192 : vector<200x128xf32>
    %cst_152 = arith.constant 9.99999974E-6 : f32
    %194 = vector.broadcast %cst_152 : f32 to vector<1x128xf32>
    %195 = arith.addf %191, %194 : vector<1x128xf32>
    %196 = math.rsqrt %195 : vector<1x128xf32>
    %197 = vector.broadcast %196 : vector<1x128xf32> to vector<200x128xf32>
    %198 = arith.mulf %193, %197 : vector<200x128xf32>
    %199 = vector.broadcast %175 : vector<1x128xf32> to vector<200x128xf32>
    %200 = arith.mulf %198, %199 : vector<200x128xf32>
    %201 = vector.broadcast %176 : vector<1x128xf32> to vector<200x128xf32>
    %202 = arith.addf %200, %201 : vector<200x128xf32>
    %c11_153 = arith.constant 11 : index
    %c0_154 = arith.constant 0 : index
    %203 = vector.load %arg0[%c11_153, %c0_154] : memref<240x128xf32, #tpu.memory_space<vmem>>, vector<200x128xf32>
    %204 = arith.addf %202, %203 : vector<200x128xf32>
    %c0_155 = arith.constant 0 : index
    %c0_156 = arith.constant 0 : index
    %205 = vector.load %arg12[%c0_155, %c0_156] : memref<200x128xf32, #tpu.memory_space<vmem>>, vector<200x128xf32>
    tpu.vector_store %arg12[%c0_155, %c0_156], %204 {strides = array<i32>} : memref<200x128xf32, #tpu.memory_space<vmem>>, vector<200x128xf32>,
    return
  }
}

module attributes {stable_mosaic.version = 11 : i64} {
  func.func @_conv_bn_act_tap_kernel(%arg0: memref<225x128xbf16, #tpu.memory_space<vmem>>, %arg1: memref<16x128x128xbf16, #tpu.memory_space<vmem>>, %arg2: memref<1x128xf32, #tpu.memory_space<vmem>>, %arg3: memref<1x128xf32, #tpu.memory_space<vmem>>, %arg4: memref<56x1xf32, #tpu.memory_space<vmem>>, %arg5: memref<56x128xf32, #tpu.memory_space<vmem>>) attributes {dimension_semantics = [], scalar_prefetch = 0 : i64, scratch_operands = 0 : i64, tpu.core_type = #tpu.core_type<tc>} {
    %cst = arith.constant 0.000000e+00 : f32
    %0 = vector.broadcast %cst : f32 to vector<56x128xf32>
    %c0 = arith.constant 0 : index
    %c0_0 = arith.constant 0 : index
    %1 = vector.load %arg0[%c0, %c0_0] : memref<225x128xbf16, #tpu.memory_space<vmem>>, vector<56x128xbf16>
    %c0_1 = arith.constant 0 : index
    %c0_2 = arith.constant 0 : index
    %c0_3 = arith.constant 0 : index
    %2 = vector.load %arg1[%c0_1, %c0_2, %c0_3] : memref<16x128x128xbf16, #tpu.memory_space<vmem>>, vector<1x128x128xbf16>
    %3 = vector.shape_cast %2 : vector<1x128x128xbf16> to vector<128x128xbf16>
    %cst_4 = arith.constant dense<0.000000e+00> : vector<56x128xf32>
    %4 = tpu.matmul %1, %3, %cst_4 {dimension_numbers = #tpu.dot_dimension_numbers<[1], [0], [0], [1], [0, 0, 1, 1], [], []>} : vector<56x128xbf16>, vector<128x128xbf16>, vector<56x128xf32> -> vector<56x128xf32>
    %5 = arith.addf %0, %4 : vector<56x128xf32>
    %c50 = arith.constant 50 : index
    %c0_5 = arith.constant 0 : index
    %6 = vector.load %arg0[%c50, %c0_5] : memref<225x128xbf16, #tpu.memory_space<vmem>>, vector<56x128xbf16>
    %c1 = arith.constant 1 : index
    %c0_6 = arith.constant 0 : index
    %c0_7 = arith.constant 0 : index
    %7 = vector.load %arg1[%c1, %c0_6, %c0_7] : memref<16x128x128xbf16, #tpu.memory_space<vmem>>, vector<1x128x128xbf16>
    %8 = vector.shape_cast %7 : vector<1x128x128xbf16> to vector<128x128xbf16>
    %cst_8 = arith.constant dense<0.000000e+00> : vector<56x128xf32>
    %9 = tpu.matmul %6, %8, %cst_8 {dimension_numbers = #tpu.dot_dimension_numbers<[1], [0], [0], [1], [0, 0, 1, 1], [], []>} : vector<56x128xbf16>, vector<128x128xbf16>, vector<56x128xf32> -> vector<56x128xf32>
    %10 = arith.addf %5, %9 : vector<56x128xf32>
    %c1_9 = arith.constant 1 : index
    %c0_10 = arith.constant 0 : index
    %11 = vector.load %arg0[%c1_9, %c0_10] : memref<225x128xbf16, #tpu.memory_space<vmem>>, vector<56x128xbf16>
    %c2 = arith.constant 2 : index
    %c0_11 = arith.constant 0 : index
    %c0_12 = arith.constant 0 : index
    %12 = vector.load %arg1[%c2, %c0_11, %c0_12] : memref<16x128x128xbf16, #tpu.memory_space<vmem>>, vector<1x128x128xbf16>
    %13 = vector.shape_cast %12 : vector<1x128x128xbf16> to vector<128x128xbf16>
    %cst_13 = arith.constant dense<0.000000e+00> : vector<56x128xf32>
    %14 = tpu.matmul %11, %13, %cst_13 {dimension_numbers = #tpu.dot_dimension_numbers<[1], [0], [0], [1], [0, 0, 1, 1], [], []>} : vector<56x128xbf16>, vector<128x128xbf16>, vector<56x128xf32> -> vector<56x128xf32>
    %15 = arith.addf %10, %14 : vector<56x128xf32>
    %c51 = arith.constant 51 : index
    %c0_14 = arith.constant 0 : index
    %16 = vector.load %arg0[%c51, %c0_14] : memref<225x128xbf16, #tpu.memory_space<vmem>>, vector<56x128xbf16>
    %c3 = arith.constant 3 : index
    %c0_15 = arith.constant 0 : index
    %c0_16 = arith.constant 0 : index
    %17 = vector.load %arg1[%c3, %c0_15, %c0_16] : memref<16x128x128xbf16, #tpu.memory_space<vmem>>, vector<1x128x128xbf16>
    %18 = vector.shape_cast %17 : vector<1x128x128xbf16> to vector<128x128xbf16>
    %cst_17 = arith.constant dense<0.000000e+00> : vector<56x128xf32>
    %19 = tpu.matmul %16, %18, %cst_17 {dimension_numbers = #tpu.dot_dimension_numbers<[1], [0], [0], [1], [0, 0, 1, 1], [], []>} : vector<56x128xbf16>, vector<128x128xbf16>, vector<56x128xf32> -> vector<56x128xf32>
    %20 = arith.addf %15, %19 : vector<56x128xf32>
    %c100 = arith.constant 100 : index
    %c0_18 = arith.constant 0 : index
    %21 = vector.load %arg0[%c100, %c0_18] : memref<225x128xbf16, #tpu.memory_space<vmem>>, vector<56x128xbf16>
    %c4 = arith.constant 4 : index
    %c0_19 = arith.constant 0 : index
    %c0_20 = arith.constant 0 : index
    %22 = vector.load %arg1[%c4, %c0_19, %c0_20] : memref<16x128x128xbf16, #tpu.memory_space<vmem>>, vector<1x128x128xbf16>
    %23 = vector.shape_cast %22 : vector<1x128x128xbf16> to vector<128x128xbf16>
    %cst_21 = arith.constant dense<0.000000e+00> : vector<56x128xf32>
    %24 = tpu.matmul %21, %23, %cst_21 {dimension_numbers = #tpu.dot_dimension_numbers<[1], [0], [0], [1], [0, 0, 1, 1], [], []>} : vector<56x128xbf16>, vector<128x128xbf16>, vector<56x128xf32> -> vector<56x128xf32>
    %25 = arith.addf %20, %24 : vector<56x128xf32>
    %c150 = arith.constant 150 : index
    %c0_22 = arith.constant 0 : index
    %26 = vector.load %arg0[%c150, %c0_22] : memref<225x128xbf16, #tpu.memory_space<vmem>>, vector<56x128xbf16>
    %c5 = arith.constant 5 : index
    %c0_23 = arith.constant 0 : index
    %c0_24 = arith.constant 0 : index
    %27 = vector.load %arg1[%c5, %c0_23, %c0_24] : memref<16x128x128xbf16, #tpu.memory_space<vmem>>, vector<1x128x128xbf16>
    %28 = vector.shape_cast %27 : vector<1x128x128xbf16> to vector<128x128xbf16>
    %cst_25 = arith.constant dense<0.000000e+00> : vector<56x128xf32>
    %29 = tpu.matmul %26, %28, %cst_25 {dimension_numbers = #tpu.dot_dimension_numbers<[1], [0], [0], [1], [0, 0, 1, 1], [], []>} : vector<56x128xbf16>, vector<128x128xbf16>, vector<56x128xf32> -> vector<56x128xf32>
    %30 = arith.addf %25, %29 : vector<56x128xf32>
    %c101 = arith.constant 101 : index
    %c0_26 = arith.constant 0 : index
    %31 = vector.load %arg0[%c101, %c0_26] : memref<225x128xbf16, #tpu.memory_space<vmem>>, vector<56x128xbf16>
    %c6 = arith.constant 6 : index
    %c0_27 = arith.constant 0 : index
    %c0_28 = arith.constant 0 : index
    %32 = vector.load %arg1[%c6, %c0_27, %c0_28] : memref<16x128x128xbf16, #tpu.memory_space<vmem>>, vector<1x128x128xbf16>
    %33 = vector.shape_cast %32 : vector<1x128x128xbf16> to vector<128x128xbf16>
    %cst_29 = arith.constant dense<0.000000e+00> : vector<56x128xf32>
    %34 = tpu.matmul %31, %33, %cst_29 {dimension_numbers = #tpu.dot_dimension_numbers<[1], [0], [0], [1], [0, 0, 1, 1], [], []>} : vector<56x128xbf16>, vector<128x128xbf16>, vector<56x128xf32> -> vector<56x128xf32>
    %35 = arith.addf %30, %34 : vector<56x128xf32>
    %c151 = arith.constant 151 : index
    %c0_30 = arith.constant 0 : index
    %36 = vector.load %arg0[%c151, %c0_30] : memref<225x128xbf16, #tpu.memory_space<vmem>>, vector<56x128xbf16>
    %c7 = arith.constant 7 : index
    %c0_31 = arith.constant 0 : index
    %c0_32 = arith.constant 0 : index
    %37 = vector.load %arg1[%c7, %c0_31, %c0_32] : memref<16x128x128xbf16, #tpu.memory_space<vmem>>, vector<1x128x128xbf16>
    %38 = vector.shape_cast %37 : vector<1x128x128xbf16> to vector<128x128xbf16>
    %cst_33 = arith.constant dense<0.000000e+00> : vector<56x128xf32>
    %39 = tpu.matmul %36, %38, %cst_33 {dimension_numbers = #tpu.dot_dimension_numbers<[1], [0], [0], [1], [0, 0, 1, 1], [], []>} : vector<56x128xbf16>, vector<128x128xbf16>, vector<56x128xf32> -> vector<56x128xf32>
    %40 = arith.addf %35, %39 : vector<56x128xf32>
    %c5_34 = arith.constant 5 : index
    %c0_35 = arith.constant 0 : index
    %41 = vector.load %arg0[%c5_34, %c0_35] : memref<225x128xbf16, #tpu.memory_space<vmem>>, vector<56x128xbf16>
    %c8 = arith.constant 8 : index
    %c0_36 = arith.constant 0 : index
    %c0_37 = arith.constant 0 : index
    %42 = vector.load %arg1[%c8, %c0_36, %c0_37] : memref<16x128x128xbf16, #tpu.memory_space<vmem>>, vector<1x128x128xbf16>
    %43 = vector.shape_cast %42 : vector<1x128x128xbf16> to vector<128x128xbf16>
    %cst_38 = arith.constant dense<0.000000e+00> : vector<56x128xf32>
    %44 = tpu.matmul %41, %43, %cst_38 {dimension_numbers = #tpu.dot_dimension_numbers<[1], [0], [0], [1], [0, 0, 1, 1], [], []>} : vector<56x128xbf16>, vector<128x128xbf16>, vector<56x128xf32> -> vector<56x128xf32>
    %45 = arith.addf %40, %44 : vector<56x128xf32>
    %c55 = arith.constant 55 : index
    %c0_39 = arith.constant 0 : index
    %46 = vector.load %arg0[%c55, %c0_39] : memref<225x128xbf16, #tpu.memory_space<vmem>>, vector<56x128xbf16>
    %c9 = arith.constant 9 : index
    %c0_40 = arith.constant 0 : index
    %c0_41 = arith.constant 0 : index
    %47 = vector.load %arg1[%c9, %c0_40, %c0_41] : memref<16x128x128xbf16, #tpu.memory_space<vmem>>, vector<1x128x128xbf16>
    %48 = vector.shape_cast %47 : vector<1x128x128xbf16> to vector<128x128xbf16>
    %cst_42 = arith.constant dense<0.000000e+00> : vector<56x128xf32>
    %49 = tpu.matmul %46, %48, %cst_42 {dimension_numbers = #tpu.dot_dimension_numbers<[1], [0], [0], [1], [0, 0, 1, 1], [], []>} : vector<56x128xbf16>, vector<128x128xbf16>, vector<56x128xf32> -> vector<56x128xf32>
    %50 = arith.addf %45, %49 : vector<56x128xf32>
    %c6_43 = arith.constant 6 : index
    %c0_44 = arith.constant 0 : index
    %51 = vector.load %arg0[%c6_43, %c0_44] : memref<225x128xbf16, #tpu.memory_space<vmem>>, vector<56x128xbf16>
    %c10 = arith.constant 10 : index
    %c0_45 = arith.constant 0 : index
    %c0_46 = arith.constant 0 : index
    %52 = vector.load %arg1[%c10, %c0_45, %c0_46] : memref<16x128x128xbf16, #tpu.memory_space<vmem>>, vector<1x128x128xbf16>
    %53 = vector.shape_cast %52 : vector<1x128x128xbf16> to vector<128x128xbf16>
    %cst_47 = arith.constant dense<0.000000e+00> : vector<56x128xf32>
    %54 = tpu.matmul %51, %53, %cst_47 {dimension_numbers = #tpu.dot_dimension_numbers<[1], [0], [0], [1], [0, 0, 1, 1], [], []>} : vector<56x128xbf16>, vector<128x128xbf16>, vector<56x128xf32> -> vector<56x128xf32>
    %55 = arith.addf %50, %54 : vector<56x128xf32>
    %c56 = arith.constant 56 : index
    %c0_48 = arith.constant 0 : index
    %56 = vector.load %arg0[%c56, %c0_48] : memref<225x128xbf16, #tpu.memory_space<vmem>>, vector<56x128xbf16>
    %c11 = arith.constant 11 : index
    %c0_49 = arith.constant 0 : index
    %c0_50 = arith.constant 0 : index
    %57 = vector.load %arg1[%c11, %c0_49, %c0_50] : memref<16x128x128xbf16, #tpu.memory_space<vmem>>, vector<1x128x128xbf16>
    %58 = vector.shape_cast %57 : vector<1x128x128xbf16> to vector<128x128xbf16>
    %cst_51 = arith.constant dense<0.000000e+00> : vector<56x128xf32>
    %59 = tpu.matmul %56, %58, %cst_51 {dimension_numbers = #tpu.dot_dimension_numbers<[1], [0], [0], [1], [0, 0, 1, 1], [], []>} : vector<56x128xbf16>, vector<128x128xbf16>, vector<56x128xf32> -> vector<56x128xf32>
    %60 = arith.addf %55, %59 : vector<56x128xf32>
    %c105 = arith.constant 105 : index
    %c0_52 = arith.constant 0 : index
    %61 = vector.load %arg0[%c105, %c0_52] : memref<225x128xbf16, #tpu.memory_space<vmem>>, vector<56x128xbf16>
    %c12 = arith.constant 12 : index
    %c0_53 = arith.constant 0 : index
    %c0_54 = arith.constant 0 : index
    %62 = vector.load %arg1[%c12, %c0_53, %c0_54] : memref<16x128x128xbf16, #tpu.memory_space<vmem>>, vector<1x128x128xbf16>
    %63 = vector.shape_cast %62 : vector<1x128x128xbf16> to vector<128x128xbf16>
    %cst_55 = arith.constant dense<0.000000e+00> : vector<56x128xf32>
    %64 = tpu.matmul %61, %63, %cst_55 {dimension_numbers = #tpu.dot_dimension_numbers<[1], [0], [0], [1], [0, 0, 1, 1], [], []>} : vector<56x128xbf16>, vector<128x128xbf16>, vector<56x128xf32> -> vector<56x128xf32>
    %65 = arith.addf %60, %64 : vector<56x128xf32>
    %c155 = arith.constant 155 : index
    %c0_56 = arith.constant 0 : index
    %66 = vector.load %arg0[%c155, %c0_56] : memref<225x128xbf16, #tpu.memory_space<vmem>>, vector<56x128xbf16>
    %c13 = arith.constant 13 : index
    %c0_57 = arith.constant 0 : index
    %c0_58 = arith.constant 0 : index
    %67 = vector.load %arg1[%c13, %c0_57, %c0_58] : memref<16x128x128xbf16, #tpu.memory_space<vmem>>, vector<1x128x128xbf16>
    %68 = vector.shape_cast %67 : vector<1x128x128xbf16> to vector<128x128xbf16>
    %cst_59 = arith.constant dense<0.000000e+00> : vector<56x128xf32>
    %69 = tpu.matmul %66, %68, %cst_59 {dimension_numbers = #tpu.dot_dimension_numbers<[1], [0], [0], [1], [0, 0, 1, 1], [], []>} : vector<56x128xbf16>, vector<128x128xbf16>, vector<56x128xf32> -> vector<56x128xf32>
    %70 = arith.addf %65, %69 : vector<56x128xf32>
    %c106 = arith.constant 106 : index
    %c0_60 = arith.constant 0 : index
    %71 = vector.load %arg0[%c106, %c0_60] : memref<225x128xbf16, #tpu.memory_space<vmem>>, vector<56x128xbf16>
    %c14 = arith.constant 14 : index
    %c0_61 = arith.constant 0 : index
    %c0_62 = arith.constant 0 : index
    %72 = vector.load %arg1[%c14, %c0_61, %c0_62] : memref<16x128x128xbf16, #tpu.memory_space<vmem>>, vector<1x128x128xbf16>
    %73 = vector.shape_cast %72 : vector<1x128x128xbf16> to vector<128x128xbf16>
    %cst_63 = arith.constant dense<0.000000e+00> : vector<56x128xf32>
    %74 = tpu.matmul %71, %73, %cst_63 {dimension_numbers = #tpu.dot_dimension_numbers<[1], [0], [0], [1], [0, 0, 1, 1], [], []>} : vector<56x128xbf16>, vector<128x128xbf16>, vector<56x128xf32> -> vector<56x128xf32>
    %75 = arith.addf %70, %74 : vector<56x128xf32>
    %c156 = arith.constant 156 : index
    %c0_64 = arith.constant 0 : index
    %76 = vector.load %arg0[%c156, %c0_64] : memref<225x128xbf16, #tpu.memory_space<vmem>>, vector<56x128xbf16>
    %c15 = arith.constant 15 : index
    %c0_65 = arith.constant 0 : index
    %c0_66 = arith.constant 0 : index
    %77 = vector.load %arg1[%c15, %c0_65, %c0_66] : memref<16x128x128xbf16, #tpu.memory_space<vmem>>, vector<1x128x128xbf16>
    %78 = vector.shape_cast %77 : vector<1x128x128xbf16> to vector<128x128xbf16>
    %cst_67 = arith.constant dense<0.000000e+00> : vector<56x128xf32>
    %79 = tpu.matmul %76, %78, %cst_67 {dimension_numbers = #tpu.dot_dimension_numbers<[1], [0], [0], [1], [0, 0, 1, 1], [], []>} : vector<56x128xbf16>, vector<128x128xbf16>, vector<56x128xf32> -> vector<56x128xf32>
    %80 = arith.addf %75, %79 : vector<56x128xf32>
    %c0_68 = arith.constant 0 : index
    %c0_69 = arith.constant 0 : index
    %81 = vector.load %arg4[%c0_68, %c0_69] : memref<56x1xf32, #tpu.memory_space<vmem>>, vector<56x1xf32>
    %c0_70 = arith.constant 0 : index
    %c0_71 = arith.constant 0 : index
    %82 = vector.load %arg2[%c0_70, %c0_71] : memref<1x128xf32, #tpu.memory_space<vmem>>, vector<1x128xf32>
    %c0_72 = arith.constant 0 : index
    %c0_73 = arith.constant 0 : index
    %83 = vector.load %arg3[%c0_72, %c0_73] : memref<1x128xf32, #tpu.memory_space<vmem>>, vector<1x128xf32>
    %84 = vector.broadcast %81 : vector<56x1xf32> to vector<56x128xf32>
    %85 = arith.mulf %80, %84 : vector<56x128xf32>
    %cst_74 = arith.constant dense<0.000000e+00> : vector<128xf32>
    %86 = vector.multi_reduction <add>, %85, %cst_74 [0] : vector<56x128xf32> to vector<128xf32>
    %87 = vector.shape_cast %86 : vector<128xf32> to vector<1x128xf32>
    %cst_75 = arith.constant 3.200000e+01 : f32
    %88 = vector.broadcast %cst_75 : f32 to vector<1x128xf32>
    %89 = arith.divf %87, %88 : vector<1x128xf32>
    %90 = vector.broadcast %89 : vector<1x128xf32> to vector<56x128xf32>
    %91 = arith.subf %80, %90 : vector<56x128xf32>
    %92 = vector.broadcast %81 : vector<56x1xf32> to vector<56x128xf32>
    %93 = arith.mulf %91, %92 : vector<56x128xf32>
    %94 = arith.mulf %93, %93 : vector<56x128xf32>
    %cst_76 = arith.constant dense<0.000000e+00> : vector<128xf32>
    %95 = vector.multi_reduction <add>, %94, %cst_76 [0] : vector<56x128xf32> to vector<128xf32>
    %96 = vector.shape_cast %95 : vector<128xf32> to vector<1x128xf32>
    %cst_77 = arith.constant 3.200000e+01 : f32
    %97 = vector.broadcast %cst_77 : f32 to vector<1x128xf32>
    %98 = arith.divf %96, %97 : vector<1x128xf32>
    %99 = vector.broadcast %89 : vector<1x128xf32> to vector<56x128xf32>
    %100 = arith.subf %80, %99 : vector<56x128xf32>
    %cst_78 = arith.constant 9.99999974E-6 : f32
    %101 = vector.broadcast %cst_78 : f32 to vector<1x128xf32>
    %102 = arith.addf %98, %101 : vector<1x128xf32>
    %103 = math.rsqrt %102 : vector<1x128xf32>
    %104 = vector.broadcast %103 : vector<1x128xf32> to vector<56x128xf32>
    %105 = arith.mulf %100, %104 : vector<56x128xf32>
    %106 = vector.broadcast %82 : vector<1x128xf32> to vector<56x128xf32>
    %107 = arith.mulf %105, %106 : vector<56x128xf32>
    %108 = vector.broadcast %83 : vector<1x128xf32> to vector<56x128xf32>
    %109 = arith.addf %107, %108 : vector<56x128xf32>
    %cst_79 = arith.constant 0.000000e+00 : f32
    %110 = vector.broadcast %cst_79 : f32 to vector<56x128xf32>
    %111 = arith.cmpf oge, %109, %110 : vector<56x128xf32>
    %cst_80 = arith.constant 2.000000e-01 : f32
    %112 = vector.broadcast %cst_80 : f32 to vector<56x128xf32>
    %113 = arith.mulf %112, %109 : vector<56x128xf32>
    %114 = arith.select %111, %109, %113 : vector<56x128xi1>, vector<56x128xf32>
    %c0_81 = arith.constant 0 : index
    %c0_82 = arith.constant 0 : index
    %115 = vector.load %arg5[%c0_81, %c0_82] : memref<56x128xf32, #tpu.memory_space<vmem>>, vector<56x128xf32>
    tpu.vector_store %arg5[%c0_81, %c0_82], %114 {strides = array<i32>} : memref<56x128xf32, #tpu.memory_space<vmem>>, vector<56x128xf32>,
    return
  }
}

module attributes {stable_mosaic.version = 11 : i64} {
  func.func @_res_se_block_kernel(%arg0: memref<100x128xf32, #tpu.memory_space<vmem>>, %arg1: memref<128x8xf32, #tpu.memory_space<vmem>>, %arg2: memref<1x8xf32, #tpu.memory_space<vmem>>, %arg3: memref<8x128xf32, #tpu.memory_space<vmem>>, %arg4: memref<1x128xf32, #tpu.memory_space<vmem>>, %arg5: memref<9x128x128xbf16, #tpu.memory_space<vmem>>, %arg6: memref<1x128xf32, #tpu.memory_space<vmem>>, %arg7: memref<1x128xf32, #tpu.memory_space<vmem>>, %arg8: memref<9x128x128xbf16, #tpu.memory_space<vmem>>, %arg9: memref<1x128xf32, #tpu.memory_space<vmem>>, %arg10: memref<1x128xf32, #tpu.memory_space<vmem>>, %arg11: memref<72x1xf32, #tpu.memory_space<vmem>>, %arg12: memref<72x128xf32, #tpu.memory_space<vmem>>, %arg13: memref<100x128xbf16, #tpu.memory_space<vmem>>, %arg14: memref<100x128xbf16, #tpu.memory_space<vmem>>) attributes {dimension_semantics = [], scalar_prefetch = 0 : i64, scratch_operands = 2 : i64, tpu.core_type = #tpu.core_type<tc>} {
    %c0 = arith.constant 0 : index
    %c0_0 = arith.constant 0 : index
    %0 = vector.load %arg11[%c0, %c0_0] : memref<72x1xf32, #tpu.memory_space<vmem>>, vector<72x1xf32>
    %c0_1 = arith.constant 0 : index
    %c0_2 = arith.constant 0 : index
    %1 = vector.load %arg0[%c0_1, %c0_2] : memref<100x128xf32, #tpu.memory_space<vmem>>, vector<36x128xf32>
    %cst = arith.constant dense<0.000000e+00> : vector<128xf32>
    %2 = vector.multi_reduction <add>, %1, %cst [0] : vector<36x128xf32> to vector<128xf32>
    %3 = vector.shape_cast %2 : vector<128xf32> to vector<1x128xf32>
    %cst_3 = arith.constant 6.250000e-02 : f32
    %4 = vector.broadcast %cst_3 : f32 to vector<1x128xf32>
    %5 = arith.mulf %3, %4 : vector<1x128xf32>
    %c36 = arith.constant 36 : index
    %c0_4 = arith.constant 0 : index
    %6 = vector.load %arg0[%c36, %c0_4] : memref<100x128xf32, #tpu.memory_space<vmem>>, vector<36x128xf32>
    %cst_5 = arith.constant dense<0.000000e+00> : vector<128xf32>
    %7 = vector.multi_reduction <add>, %6, %cst_5 [0] : vector<36x128xf32> to vector<128xf32>
    %8 = vector.shape_cast %7 : vector<128xf32> to vector<1x128xf32>
    %cst_6 = arith.constant 6.250000e-02 : f32
    %9 = vector.broadcast %cst_6 : f32 to vector<1x128xf32>
    %10 = arith.mulf %8, %9 : vector<1x128xf32>
    %11 = tpu.concatenate %5, %10 in 0 : vector<1x128xf32>, vector<1x128xf32> -> vector<2x128xf32>
    %c0_7 = arith.constant 0 : index
    %c0_8 = arith.constant 0 : index
    %12 = vector.load %arg1[%c0_7, %c0_8] : memref<128x8xf32, #tpu.memory_space<vmem>>, vector<128x8xf32>
    %cst_9 = arith.constant dense<0.000000e+00> : vector<2x8xf32>
    %13 = tpu.matmul %11, %12, %cst_9 {dimension_numbers = #tpu.dot_dimension_numbers<[1], [0], [0], [1], [0, 0, 1, 1], [], []>} : vector<2x128xf32>, vector<128x8xf32>, vector<2x8xf32> -> vector<2x8xf32>
    %c0_10 = arith.constant 0 : index
    %c0_11 = arith.constant 0 : index
    %14 = vector.load %arg2[%c0_10, %c0_11] : memref<1x8xf32, #tpu.memory_space<vmem>>, vector<1x8xf32>
    %15 = vector.broadcast %14 : vector<1x8xf32> to vector<2x8xf32>
    %16 = arith.addf %13, %15 : vector<2x8xf32>
    %cst_12 = arith.constant 0.000000e+00 : f32
    %17 = vector.broadcast %cst_12 : f32 to vector<2x8xf32>
    %18 = arith.maximumf %16, %17 : vector<2x8xf32>
    %c0_13 = arith.constant 0 : index
    %c0_14 = arith.constant 0 : index
    %19 = vector.load %arg3[%c0_13, %c0_14] : memref<8x128xf32, #tpu.memory_space<vmem>>, vector<8x128xf32>
    %cst_15 = arith.constant dense<0.000000e+00> : vector<2x128xf32>
    %20 = tpu.matmul %18, %19, %cst_15 {dimension_numbers = #tpu.dot_dimension_numbers<[1], [0], [0], [1], [0, 0, 1, 1], [], []>} : vector<2x8xf32>, vector<8x128xf32>, vector<2x128xf32> -> vector<2x128xf32>
    %c0_16 = arith.constant 0 : index
    %c0_17 = arith.constant 0 : index
    %21 = vector.load %arg4[%c0_16, %c0_17] : memref<1x128xf32, #tpu.memory_space<vmem>>, vector<1x128xf32>
    %22 = vector.broadcast %21 : vector<1x128xf32> to vector<2x128xf32>
    %23 = arith.addf %20, %22 : vector<2x128xf32>
    %cst_18 = arith.constant 0.000000e+00 : f32
    %24 = vector.broadcast %cst_18 : f32 to vector<2x128xf32>
    %25 = arith.subf %24, %23 : vector<2x128xf32>
    %26 = math.exp %25 : vector<2x128xf32>
    %cst_19 = arith.constant 1.000000e+00 : f32
    %27 = vector.broadcast %cst_19 : f32 to vector<2x128xf32>
    %28 = arith.addf %27, %26 : vector<2x128xf32>
    %cst_20 = arith.constant 1.000000e+00 : f32
    %29 = vector.broadcast %cst_20 : f32 to vector<2x128xf32>
    %30 = arith.divf %29, %28 : vector<2x128xf32>
    %c0_21 = arith.constant 0 : index
    %c0_22 = arith.constant 0 : index
    %31 = vector.load %arg0[%c0_21, %c0_22] : memref<100x128xf32, #tpu.memory_space<vmem>>, vector<36x128xf32>
    %32 = vector.extract_strided_slice %30 {offsets = [0, 0], sizes = [1, 128], strides = [1, 1]} : vector<2x128xf32> to vector<1x128xf32>
    %33 = vector.broadcast %32 : vector<1x128xf32> to vector<36x128xf32>
    %34 = arith.mulf %31, %33 : vector<36x128xf32>
    %35 = arith.truncf %34 : vector<36x128xf32> to vector<36x128xbf16>
    %c0_23 = arith.constant 0 : index
    %c0_24 = arith.constant 0 : index
    %36 = vector.load %arg13[%c0_23, %c0_24] : memref<100x128xbf16, #tpu.memory_space<vmem>>, vector<36x128xbf16>
    tpu.vector_store %arg13[%c0_23, %c0_24], %35 {strides = array<i32>} : memref<100x128xbf16, #tpu.memory_space<vmem>>, vector<36x128xbf16>,
    %c36_25 = arith.constant 36 : index
    %c0_26 = arith.constant 0 : index
    %37 = vector.load %arg0[%c36_25, %c0_26] : memref<100x128xf32, #tpu.memory_space<vmem>>, vector<36x128xf32>
    %38 = vector.extract_strided_slice %30 {offsets = [1, 0], sizes = [1, 128], strides = [1, 1]} : vector<2x128xf32> to vector<1x128xf32>
    %39 = vector.broadcast %38 : vector<1x128xf32> to vector<36x128xf32>
    %40 = arith.mulf %37, %39 : vector<36x128xf32>
    %41 = arith.truncf %40 : vector<36x128xf32> to vector<36x128xbf16>
    %c36_27 = arith.constant 36 : index
    %c0_28 = arith.constant 0 : index
    %42 = vector.load %arg13[%c36_27, %c0_28] : memref<100x128xbf16, #tpu.memory_space<vmem>>, vector<36x128xbf16>
    tpu.vector_store %arg13[%c36_27, %c0_28], %41 {strides = array<i32>} : memref<100x128xbf16, #tpu.memory_space<vmem>>, vector<36x128xbf16>,
    %cst_29 = arith.constant 0.000000e+00 : bf16
    %43 = vector.broadcast %cst_29 : bf16 to vector<28x128xbf16>
    %c72 = arith.constant 72 : index
    %c0_30 = arith.constant 0 : index
    %44 = vector.load %arg13[%c72, %c0_30] : memref<100x128xbf16, #tpu.memory_space<vmem>>, vector<28x128xbf16>
    tpu.vector_store %arg13[%c72, %c0_30], %43 {strides = array<i32>} : memref<100x128xbf16, #tpu.memory_space<vmem>>, vector<28x128xbf16>,
    %cst_31 = arith.constant 0.000000e+00 : f32
    %45 = vector.broadcast %cst_31 : f32 to vector<72x128xf32>
    %c0_32 = arith.constant 0 : index
    %c0_33 = arith.constant 0 : index
    %46 = vector.load %arg13[%c0_32, %c0_33] : memref<100x128xbf16, #tpu.memory_space<vmem>>, vector<72x128xbf16>
    %c0_34 = arith.constant 0 : index
    %c0_35 = arith.constant 0 : index
    %c0_36 = arith.constant 0 : index
    %47 = vector.load %arg5[%c0_34, %c0_35, %c0_36] : memref<9x128x128xbf16, #tpu.memory_space<vmem>>, vector<1x128x128xbf16>
    %48 = vector.shape_cast %47 : vector<1x128x128xbf16> to vector<128x128xbf16>
    %cst_37 = arith.constant dense<0.000000e+00> : vector<72x128xf32>
    %49 = tpu.matmul %46, %48, %cst_37 {dimension_numbers = #tpu.dot_dimension_numbers<[1], [0], [0], [1], [0, 0, 1, 1], [], []>} : vector<72x128xbf16>, vector<128x128xbf16>, vector<72x128xf32> -> vector<72x128xf32>
    %50 = arith.addf %45, %49 : vector<72x128xf32>
    %c1 = arith.constant 1 : index
    %c0_38 = arith.constant 0 : index
    %51 = vector.load %arg13[%c1, %c0_38] : memref<100x128xbf16, #tpu.memory_space<vmem>>, vector<72x128xbf16>
    %c1_39 = arith.constant 1 : index
    %c0_40 = arith.constant 0 : index
    %c0_41 = arith.constant 0 : index
    %52 = vector.load %arg5[%c1_39, %c0_40, %c0_41] : memref<9x128x128xbf16, #tpu.memory_space<vmem>>, vector<1x128x128xbf16>
    %53 = vector.shape_cast %52 : vector<1x128x128xbf16> to vector<128x128xbf16>
    %cst_42 = arith.constant dense<0.000000e+00> : vector<72x128xf32>
    %54 = tpu.matmul %51, %53, %cst_42 {dimension_numbers = #tpu.dot_dimension_numbers<[1], [0], [0], [1], [0, 0, 1, 1], [], []>} : vector<72x128xbf16>, vector<128x128xbf16>, vector<72x128xf32> -> vector<72x128xf32>
    %55 = arith.addf %50, %54 : vector<72x128xf32>
    %c2 = arith.constant 2 : index
    %c0_43 = arith.constant 0 : index
    %56 = vector.load %arg13[%c2, %c0_43] : memref<100x128xbf16, #tpu.memory_space<vmem>>, vector<72x128xbf16>
    %c2_44 = arith.constant 2 : index
    %c0_45 = arith.constant 0 : index
    %c0_46 = arith.constant 0 : index
    %57 = vector.load %arg5[%c2_44, %c0_45, %c0_46] : memref<9x128x128xbf16, #tpu.memory_space<vmem>>, vector<1x128x128xbf16>
    %58 = vector.shape_cast %57 : vector<1x128x128xbf16> to vector<128x128xbf16>
    %cst_47 = arith.constant dense<0.000000e+00> : vector<72x128xf32>
    %59 = tpu.matmul %56, %58, %cst_47 {dimension_numbers = #tpu.dot_dimension_numbers<[1], [0], [0], [1], [0, 0, 1, 1], [], []>} : vector<72x128xbf16>, vector<128x128xbf16>, vector<72x128xf32> -> vector<72x128xf32>
    %60 = arith.addf %55, %59 : vector<72x128xf32>
    %c6 = arith.constant 6 : index
    %c0_48 = arith.constant 0 : index
    %61 = vector.load %arg13[%c6, %c0_48] : memref<100x128xbf16, #tpu.memory_space<vmem>>, vector<72x128xbf16>
    %c3 = arith.constant 3 : index
    %c0_49 = arith.constant 0 : index
    %c0_50 = arith.constant 0 : index
    %62 = vector.load %arg5[%c3, %c0_49, %c0_50] : memref<9x128x128xbf16, #tpu.memory_space<vmem>>, vector<1x128x128xbf16>
    %63 = vector.shape_cast %62 : vector<1x128x128xbf16> to vector<128x128xbf16>
    %cst_51 = arith.constant dense<0.000000e+00> : vector<72x128xf32>
    %64 = tpu.matmul %61, %63, %cst_51 {dimension_numbers = #tpu.dot_dimension_numbers<[1], [0], [0], [1], [0, 0, 1, 1], [], []>} : vector<72x128xbf16>, vector<128x128xbf16>, vector<72x128xf32> -> vector<72x128xf32>
    %65 = arith.addf %60, %64 : vector<72x128xf32>
    %c7 = arith.constant 7 : index
    %c0_52 = arith.constant 0 : index
    %66 = vector.load %arg13[%c7, %c0_52] : memref<100x128xbf16, #tpu.memory_space<vmem>>, vector<72x128xbf16>
    %c4 = arith.constant 4 : index
    %c0_53 = arith.constant 0 : index
    %c0_54 = arith.constant 0 : index
    %67 = vector.load %arg5[%c4, %c0_53, %c0_54] : memref<9x128x128xbf16, #tpu.memory_space<vmem>>, vector<1x128x128xbf16>
    %68 = vector.shape_cast %67 : vector<1x128x128xbf16> to vector<128x128xbf16>
    %cst_55 = arith.constant dense<0.000000e+00> : vector<72x128xf32>
    %69 = tpu.matmul %66, %68, %cst_55 {dimension_numbers = #tpu.dot_dimension_numbers<[1], [0], [0], [1], [0, 0, 1, 1], [], []>} : vector<72x128xbf16>, vector<128x128xbf16>, vector<72x128xf32> -> vector<72x128xf32>
    %70 = arith.addf %65, %69 : vector<72x128xf32>
    %c8 = arith.constant 8 : index
    %c0_56 = arith.constant 0 : index
    %71 = vector.load %arg13[%c8, %c0_56] : memref<100x128xbf16, #tpu.memory_space<vmem>>, vector<72x128xbf16>
    %c5 = arith.constant 5 : index
    %c0_57 = arith.constant 0 : index
    %c0_58 = arith.constant 0 : index
    %72 = vector.load %arg5[%c5, %c0_57, %c0_58] : memref<9x128x128xbf16, #tpu.memory_space<vmem>>, vector<1x128x128xbf16>
    %73 = vector.shape_cast %72 : vector<1x128x128xbf16> to vector<128x128xbf16>
    %cst_59 = arith.constant dense<0.000000e+00> : vector<72x128xf32>
    %74 = tpu.matmul %71, %73, %cst_59 {dimension_numbers = #tpu.dot_dimension_numbers<[1], [0], [0], [1], [0, 0, 1, 1], [], []>} : vector<72x128xbf16>, vector<128x128xbf16>, vector<72x128xf32> -> vector<72x128xf32>
    %75 = arith.addf %70, %74 : vector<72x128xf32>
    %c12 = arith.constant 12 : index
    %c0_60 = arith.constant 0 : index
    %76 = vector.load %arg13[%c12, %c0_60] : memref<100x128xbf16, #tpu.memory_space<vmem>>, vector<72x128xbf16>
    %c6_61 = arith.constant 6 : index
    %c0_62 = arith.constant 0 : index
    %c0_63 = arith.constant 0 : index
    %77 = vector.load %arg5[%c6_61, %c0_62, %c0_63] : memref<9x128x128xbf16, #tpu.memory_space<vmem>>, vector<1x128x128xbf16>
    %78 = vector.shape_cast %77 : vector<1x128x128xbf16> to vector<128x128xbf16>
    %cst_64 = arith.constant dense<0.000000e+00> : vector<72x128xf32>
    %79 = tpu.matmul %76, %78, %cst_64 {dimension_numbers = #tpu.dot_dimension_numbers<[1], [0], [0], [1], [0, 0, 1, 1], [], []>} : vector<72x128xbf16>, vector<128x128xbf16>, vector<72x128xf32> -> vector<72x128xf32>
    %80 = arith.addf %75, %79 : vector<72x128xf32>
    %c13 = arith.constant 13 : index
    %c0_65 = arith.constant 0 : index
    %81 = vector.load %arg13[%c13, %c0_65] : memref<100x128xbf16, #tpu.memory_space<vmem>>, vector<72x128xbf16>
    %c7_66 = arith.constant 7 : index
    %c0_67 = arith.constant 0 : index
    %c0_68 = arith.constant 0 : index
    %82 = vector.load %arg5[%c7_66, %c0_67, %c0_68] : memref<9x128x128xbf16, #tpu.memory_space<vmem>>, vector<1x128x128xbf16>
    %83 = vector.shape_cast %82 : vector<1x128x128xbf16> to vector<128x128xbf16>
    %cst_69 = arith.constant dense<0.000000e+00> : vector<72x128xf32>
    %84 = tpu.matmul %81, %83, %cst_69 {dimension_numbers = #tpu.dot_dimension_numbers<[1], [0], [0], [1], [0, 0, 1, 1], [], []>} : vector<72x128xbf16>, vector<128x128xbf16>, vector<72x128xf32> -> vector<72x128xf32>
    %85 = arith.addf %80, %84 : vector<72x128xf32>
    %c14 = arith.constant 14 : index
    %c0_70 = arith.constant 0 : index
    %86 = vector.load %arg13[%c14, %c0_70] : memref<100x128xbf16, #tpu.memory_space<vmem>>, vector<72x128xbf16>
    %c8_71 = arith.constant 8 : index
    %c0_72 = arith.constant 0 : index
    %c0_73 = arith.constant 0 : index
    %87 = vector.load %arg5[%c8_71, %c0_72, %c0_73] : memref<9x128x128xbf16, #tpu.memory_space<vmem>>, vector<1x128x128xbf16>
    %88 = vector.shape_cast %87 : vector<1x128x128xbf16> to vector<128x128xbf16>
    %cst_74 = arith.constant dense<0.000000e+00> : vector<72x128xf32>
    %89 = tpu.matmul %86, %88, %cst_74 {dimension_numbers = #tpu.dot_dimension_numbers<[1], [0], [0], [1], [0, 0, 1, 1], [], []>} : vector<72x128xbf16>, vector<128x128xbf16>, vector<72x128xf32> -> vector<72x128xf32>
    %90 = arith.addf %85, %89 : vector<72x128xf32>
    %c0_75 = arith.constant 0 : index
    %c0_76 = arith.constant 0 : index
    %91 = vector.load %arg6[%c0_75, %c0_76] : memref<1x128xf32, #tpu.memory_space<vmem>>, vector<1x128xf32>
    %c0_77 = arith.constant 0 : index
    %c0_78 = arith.constant 0 : index
    %92 = vector.load %arg7[%c0_77, %c0_78] : memref<1x128xf32, #tpu.memory_space<vmem>>, vector<1x128xf32>
    %93 = vector.broadcast %0 : vector<72x1xf32> to vector<72x128xf32>
    %94 = arith.mulf %90, %93 : vector<72x128xf32>
    %cst_79 = arith.constant dense<0.000000e+00> : vector<128xf32>
    %95 = vector.multi_reduction <add>, %94, %cst_79 [0] : vector<72x128xf32> to vector<128xf32>
    %96 = vector.shape_cast %95 : vector<128xf32> to vector<1x128xf32>
    %cst_80 = arith.constant 3.200000e+01 : f32
    %97 = vector.broadcast %cst_80 : f32 to vector<1x128xf32>
    %98 = arith.divf %96, %97 : vector<1x128xf32>
    %99 = vector.broadcast %98 : vector<1x128xf32> to vector<72x128xf32>
    %100 = arith.subf %90, %99 : vector<72x128xf32>
    %101 = vector.broadcast %0 : vector<72x1xf32> to vector<72x128xf32>
    %102 = arith.mulf %100, %101 : vector<72x128xf32>
    %103 = arith.mulf %102, %102 : vector<72x128xf32>
    %cst_81 = arith.constant dense<0.000000e+00> : vector<128xf32>
    %104 = vector.multi_reduction <add>, %103, %cst_81 [0] : vector<72x128xf32> to vector<128xf32>
    %105 = vector.shape_cast %104 : vector<128xf32> to vector<1x128xf32>
    %cst_82 = arith.constant 3.200000e+01 : f32
    %106 = vector.broadcast %cst_82 : f32 to vector<1x128xf32>
    %107 = arith.divf %105, %106 : vector<1x128xf32>
    %108 = vector.broadcast %98 : vector<1x128xf32> to vector<72x128xf32>
    %109 = arith.subf %90, %108 : vector<72x128xf32>
    %cst_83 = arith.constant 9.99999974E-6 : f32
    %110 = vector.broadcast %cst_83 : f32 to vector<1x128xf32>
    %111 = arith.addf %107, %110 : vector<1x128xf32>
    %112 = math.rsqrt %111 : vector<1x128xf32>
    %113 = vector.broadcast %112 : vector<1x128xf32> to vector<72x128xf32>
    %114 = arith.mulf %109, %113 : vector<72x128xf32>
    %115 = vector.broadcast %91 : vector<1x128xf32> to vector<72x128xf32>
    %116 = arith.mulf %114, %115 : vector<72x128xf32>
    %117 = vector.broadcast %92 : vector<1x128xf32> to vector<72x128xf32>
    %118 = arith.addf %116, %117 : vector<72x128xf32>
    %cst_84 = arith.constant 0.000000e+00 : f32
    %119 = vector.broadcast %cst_84 : f32 to vector<72x128xf32>
    %120 = arith.maximumf %118, %119 : vector<72x128xf32>
    %121 = vector.broadcast %0 : vector<72x1xf32> to vector<72x128xf32>
    %122 = arith.mulf %120, %121 : vector<72x128xf32>
    %cst_85 = arith.constant 0.000000e+00 : bf16
    %123 = vector.broadcast %cst_85 : bf16 to vector<7x128xbf16>
    %c0_86 = arith.constant 0 : index
    %c0_87 = arith.constant 0 : index
    %124 = vector.load %arg14[%c0_86, %c0_87] : memref<100x128xbf16, #tpu.memory_space<vmem>>, vector<7x128xbf16>
    tpu.vector_store %arg14[%c0_86, %c0_87], %123 {strides = array<i32>} : memref<100x128xbf16, #tpu.memory_space<vmem>>, vector<7x128xbf16>,
    %cst_88 = arith.constant 0.000000e+00 : bf16
    %125 = vector.broadcast %cst_88 : bf16 to vector<21x128xbf16>
    %c79 = arith.constant 79 : index
    %c0_89 = arith.constant 0 : index
    %126 = vector.load %arg14[%c79, %c0_89] : memref<100x128xbf16, #tpu.memory_space<vmem>>, vector<21x128xbf16>
    tpu.vector_store %arg14[%c79, %c0_89], %125 {strides = array<i32>} : memref<100x128xbf16, #tpu.memory_space<vmem>>, vector<21x128xbf16>,
    %127 = arith.truncf %122 : vector<72x128xf32> to vector<72x128xbf16>
    %c7_90 = arith.constant 7 : index
    %c0_91 = arith.constant 0 : index
    %128 = vector.load %arg14[%c7_90, %c0_91] : memref<100x128xbf16, #tpu.memory_space<vmem>>, vector<72x128xbf16>
    tpu.vector_store %arg14[%c7_90, %c0_91], %127 {strides = array<i32>} : memref<100x128xbf16, #tpu.memory_space<vmem>>, vector<72x128xbf16>,
    %cst_92 = arith.constant 0.000000e+00 : f32
    %129 = vector.broadcast %cst_92 : f32 to vector<72x128xf32>
    %c0_93 = arith.constant 0 : index
    %c0_94 = arith.constant 0 : index
    %130 = vector.load %arg14[%c0_93, %c0_94] : memref<100x128xbf16, #tpu.memory_space<vmem>>, vector<72x128xbf16>
    %c0_95 = arith.constant 0 : index
    %c0_96 = arith.constant 0 : index
    %c0_97 = arith.constant 0 : index
    %131 = vector.load %arg8[%c0_95, %c0_96, %c0_97] : memref<9x128x128xbf16, #tpu.memory_space<vmem>>, vector<1x128x128xbf16>
    %132 = vector.shape_cast %131 : vector<1x128x128xbf16> to vector<128x128xbf16>
    %cst_98 = arith.constant dense<0.000000e+00> : vector<72x128xf32>
    %133 = tpu.matmul %130, %132, %cst_98 {dimension_numbers = #tpu.dot_dimension_numbers<[1], [0], [0], [1], [0, 0, 1, 1], [], []>} : vector<72x128xbf16>, vector<128x128xbf16>, vector<72x128xf32> -> vector<72x128xf32>
    %134 = arith.addf %129, %133 : vector<72x128xf32>
    %c1_99 = arith.constant 1 : index
    %c0_100 = arith.constant 0 : index
    %135 = vector.load %arg14[%c1_99, %c0_100] : memref<100x128xbf16, #tpu.memory_space<vmem>>, vector<72x128xbf16>
    %c1_101 = arith.constant 1 : index
    %c0_102 = arith.constant 0 : index
    %c0_103 = arith.constant 0 : index
    %136 = vector.load %arg8[%c1_101, %c0_102, %c0_103] : memref<9x128x128xbf16, #tpu.memory_space<vmem>>, vector<1x128x128xbf16>
    %137 = vector.shape_cast %136 : vector<1x128x128xbf16> to vector<128x128xbf16>
    %cst_104 = arith.constant dense<0.000000e+00> : vector<72x128xf32>
    %138 = tpu.matmul %135, %137, %cst_104 {dimension_numbers = #tpu.dot_dimension_numbers<[1], [0], [0], [1], [0, 0, 1, 1], [], []>} : vector<72x128xbf16>, vector<128x128xbf16>, vector<72x128xf32> -> vector<72x128xf32>
    %139 = arith.addf %134, %138 : vector<72x128xf32>
    %c2_105 = arith.constant 2 : index
    %c0_106 = arith.constant 0 : index
    %140 = vector.load %arg14[%c2_105, %c0_106] : memref<100x128xbf16, #tpu.memory_space<vmem>>, vector<72x128xbf16>
    %c2_107 = arith.constant 2 : index
    %c0_108 = arith.constant 0 : index
    %c0_109 = arith.constant 0 : index
    %141 = vector.load %arg8[%c2_107, %c0_108, %c0_109] : memref<9x128x128xbf16, #tpu.memory_space<vmem>>, vector<1x128x128xbf16>
    %142 = vector.shape_cast %141 : vector<1x128x128xbf16> to vector<128x128xbf16>
    %cst_110 = arith.constant dense<0.000000e+00> : vector<72x128xf32>
    %143 = tpu.matmul %140, %142, %cst_110 {dimension_numbers = #tpu.dot_dimension_numbers<[1], [0], [0], [1], [0, 0, 1, 1], [], []>} : vector<72x128xbf16>, vector<128x128xbf16>, vector<72x128xf32> -> vector<72x128xf32>
    %144 = arith.addf %139, %143 : vector<72x128xf32>
    %c6_111 = arith.constant 6 : index
    %c0_112 = arith.constant 0 : index
    %145 = vector.load %arg14[%c6_111, %c0_112] : memref<100x128xbf16, #tpu.memory_space<vmem>>, vector<72x128xbf16>
    %c3_113 = arith.constant 3 : index
    %c0_114 = arith.constant 0 : index
    %c0_115 = arith.constant 0 : index
    %146 = vector.load %arg8[%c3_113, %c0_114, %c0_115] : memref<9x128x128xbf16, #tpu.memory_space<vmem>>, vector<1x128x128xbf16>
    %147 = vector.shape_cast %146 : vector<1x128x128xbf16> to vector<128x128xbf16>
    %cst_116 = arith.constant dense<0.000000e+00> : vector<72x128xf32>
    %148 = tpu.matmul %145, %147, %cst_116 {dimension_numbers = #tpu.dot_dimension_numbers<[1], [0], [0], [1], [0, 0, 1, 1], [], []>} : vector<72x128xbf16>, vector<128x128xbf16>, vector<72x128xf32> -> vector<72x128xf32>
    %149 = arith.addf %144, %148 : vector<72x128xf32>
    %c7_117 = arith.constant 7 : index
    %c0_118 = arith.constant 0 : index
    %150 = vector.load %arg14[%c7_117, %c0_118] : memref<100x128xbf16, #tpu.memory_space<vmem>>, vector<72x128xbf16>
    %c4_119 = arith.constant 4 : index
    %c0_120 = arith.constant 0 : index
    %c0_121 = arith.constant 0 : index
    %151 = vector.load %arg8[%c4_119, %c0_120, %c0_121] : memref<9x128x128xbf16, #tpu.memory_space<vmem>>, vector<1x128x128xbf16>
    %152 = vector.shape_cast %151 : vector<1x128x128xbf16> to vector<128x128xbf16>
    %cst_122 = arith.constant dense<0.000000e+00> : vector<72x128xf32>
    %153 = tpu.matmul %150, %152, %cst_122 {dimension_numbers = #tpu.dot_dimension_numbers<[1], [0], [0], [1], [0, 0, 1, 1], [], []>} : vector<72x128xbf16>, vector<128x128xbf16>, vector<72x128xf32> -> vector<72x128xf32>
    %154 = arith.addf %149, %153 : vector<72x128xf32>
    %c8_123 = arith.constant 8 : index
    %c0_124 = arith.constant 0 : index
    %155 = vector.load %arg14[%c8_123, %c0_124] : memref<100x128xbf16, #tpu.memory_space<vmem>>, vector<72x128xbf16>
    %c5_125 = arith.constant 5 : index
    %c0_126 = arith.constant 0 : index
    %c0_127 = arith.constant 0 : index
    %156 = vector.load %arg8[%c5_125, %c0_126, %c0_127] : memref<9x128x128xbf16, #tpu.memory_space<vmem>>, vector<1x128x128xbf16>
    %157 = vector.shape_cast %156 : vector<1x128x128xbf16> to vector<128x128xbf16>
    %cst_128 = arith.constant dense<0.000000e+00> : vector<72x128xf32>
    %158 = tpu.matmul %155, %157, %cst_128 {dimension_numbers = #tpu.dot_dimension_numbers<[1], [0], [0], [1], [0, 0, 1, 1], [], []>} : vector<72x128xbf16>, vector<128x128xbf16>, vector<72x128xf32> -> vector<72x128xf32>
    %159 = arith.addf %154, %158 : vector<72x128xf32>
    %c12_129 = arith.constant 12 : index
    %c0_130 = arith.constant 0 : index
    %160 = vector.load %arg14[%c12_129, %c0_130] : memref<100x128xbf16, #tpu.memory_space<vmem>>, vector<72x128xbf16>
    %c6_131 = arith.constant 6 : index
    %c0_132 = arith.constant 0 : index
    %c0_133 = arith.constant 0 : index
    %161 = vector.load %arg8[%c6_131, %c0_132, %c0_133] : memref<9x128x128xbf16, #tpu.memory_space<vmem>>, vector<1x128x128xbf16>
    %162 = vector.shape_cast %161 : vector<1x128x128xbf16> to vector<128x128xbf16>
    %cst_134 = arith.constant dense<0.000000e+00> : vector<72x128xf32>
    %163 = tpu.matmul %160, %162, %cst_134 {dimension_numbers = #tpu.dot_dimension_numbers<[1], [0], [0], [1], [0, 0, 1, 1], [], []>} : vector<72x128xbf16>, vector<128x128xbf16>, vector<72x128xf32> -> vector<72x128xf32>
    %164 = arith.addf %159, %163 : vector<72x128xf32>
    %c13_135 = arith.constant 13 : index
    %c0_136 = arith.constant 0 : index
    %165 = vector.load %arg14[%c13_135, %c0_136] : memref<100x128xbf16, #tpu.memory_space<vmem>>, vector<72x128xbf16>
    %c7_137 = arith.constant 7 : index
    %c0_138 = arith.constant 0 : index
    %c0_139 = arith.constant 0 : index
    %166 = vector.load %arg8[%c7_137, %c0_138, %c0_139] : memref<9x128x128xbf16, #tpu.memory_space<vmem>>, vector<1x128x128xbf16>
    %167 = vector.shape_cast %166 : vector<1x128x128xbf16> to vector<128x128xbf16>
    %cst_140 = arith.constant dense<0.000000e+00> : vector<72x128xf32>
    %168 = tpu.matmul %165, %167, %cst_140 {dimension_numbers = #tpu.dot_dimension_numbers<[1], [0], [0], [1], [0, 0, 1, 1], [], []>} : vector<72x128xbf16>, vector<128x128xbf16>, vector<72x128xf32> -> vector<72x128xf32>
    %169 = arith.addf %164, %168 : vector<72x128xf32>
    %c14_141 = arith.constant 14 : index
    %c0_142 = arith.constant 0 : index
    %170 = vector.load %arg14[%c14_141, %c0_142] : memref<100x128xbf16, #tpu.memory_space<vmem>>, vector<72x128xbf16>
    %c8_143 = arith.constant 8 : index
    %c0_144 = arith.constant 0 : index
    %c0_145 = arith.constant 0 : index
    %171 = vector.load %arg8[%c8_143, %c0_144, %c0_145] : memref<9x128x128xbf16, #tpu.memory_space<vmem>>, vector<1x128x128xbf16>
    %172 = vector.shape_cast %171 : vector<1x128x128xbf16> to vector<128x128xbf16>
    %cst_146 = arith.constant dense<0.000000e+00> : vector<72x128xf32>
    %173 = tpu.matmul %170, %172, %cst_146 {dimension_numbers = #tpu.dot_dimension_numbers<[1], [0], [0], [1], [0, 0, 1, 1], [], []>} : vector<72x128xbf16>, vector<128x128xbf16>, vector<72x128xf32> -> vector<72x128xf32>
    %174 = arith.addf %169, %173 : vector<72x128xf32>
    %c0_147 = arith.constant 0 : index
    %c0_148 = arith.constant 0 : index
    %175 = vector.load %arg9[%c0_147, %c0_148] : memref<1x128xf32, #tpu.memory_space<vmem>>, vector<1x128xf32>
    %c0_149 = arith.constant 0 : index
    %c0_150 = arith.constant 0 : index
    %176 = vector.load %arg10[%c0_149, %c0_150] : memref<1x128xf32, #tpu.memory_space<vmem>>, vector<1x128xf32>
    %177 = vector.broadcast %0 : vector<72x1xf32> to vector<72x128xf32>
    %178 = arith.mulf %174, %177 : vector<72x128xf32>
    %cst_151 = arith.constant dense<0.000000e+00> : vector<128xf32>
    %179 = vector.multi_reduction <add>, %178, %cst_151 [0] : vector<72x128xf32> to vector<128xf32>
    %180 = vector.shape_cast %179 : vector<128xf32> to vector<1x128xf32>
    %cst_152 = arith.constant 3.200000e+01 : f32
    %181 = vector.broadcast %cst_152 : f32 to vector<1x128xf32>
    %182 = arith.divf %180, %181 : vector<1x128xf32>
    %183 = vector.broadcast %182 : vector<1x128xf32> to vector<72x128xf32>
    %184 = arith.subf %174, %183 : vector<72x128xf32>
    %185 = vector.broadcast %0 : vector<72x1xf32> to vector<72x128xf32>
    %186 = arith.mulf %184, %185 : vector<72x128xf32>
    %187 = arith.mulf %186, %186 : vector<72x128xf32>
    %cst_153 = arith.constant dense<0.000000e+00> : vector<128xf32>
    %188 = vector.multi_reduction <add>, %187, %cst_153 [0] : vector<72x128xf32> to vector<128xf32>
    %189 = vector.shape_cast %188 : vector<128xf32> to vector<1x128xf32>
    %cst_154 = arith.constant 3.200000e+01 : f32
    %190 = vector.broadcast %cst_154 : f32 to vector<1x128xf32>
    %191 = arith.divf %189, %190 : vector<1x128xf32>
    %192 = vector.broadcast %182 : vector<1x128xf32> to vector<72x128xf32>
    %193 = arith.subf %174, %192 : vector<72x128xf32>
    %cst_155 = arith.constant 9.99999974E-6 : f32
    %194 = vector.broadcast %cst_155 : f32 to vector<1x128xf32>
    %195 = arith.addf %191, %194 : vector<1x128xf32>
    %196 = math.rsqrt %195 : vector<1x128xf32>
    %197 = vector.broadcast %196 : vector<1x128xf32> to vector<72x128xf32>
    %198 = arith.mulf %193, %197 : vector<72x128xf32>
    %199 = vector.broadcast %175 : vector<1x128xf32> to vector<72x128xf32>
    %200 = arith.mulf %198, %199 : vector<72x128xf32>
    %201 = vector.broadcast %176 : vector<1x128xf32> to vector<72x128xf32>
    %202 = arith.addf %200, %201 : vector<72x128xf32>
    %c7_156 = arith.constant 7 : index
    %c0_157 = arith.constant 0 : index
    %203 = vector.load %arg0[%c7_156, %c0_157] : memref<100x128xf32, #tpu.memory_space<vmem>>, vector<72x128xf32>
    %204 = arith.addf %202, %203 : vector<72x128xf32>
    %c0_158 = arith.constant 0 : index
    %c0_159 = arith.constant 0 : index
    %205 = vector.load %arg12[%c0_158, %c0_159] : memref<72x128xf32, #tpu.memory_space<vmem>>, vector<72x128xf32>
    tpu.vector_store %arg12[%c0_158, %c0_159], %204 {strides = array<i32>} : memref<72x128xf32, #tpu.memory_space<vmem>>, vector<72x128xf32>,
    return
  }
}

module attributes {stable_mosaic.version = 11 : i64} {
  func.func @_matmul_bn_act_kernel(%arg0: memref<8x2048xbf16, #tpu.memory_space<vmem>>, %arg1: memref<2048x128xbf16, #tpu.memory_space<vmem>>, %arg2: memref<1x128xf32, #tpu.memory_space<vmem>>, %arg3: memref<1x128xf32, #tpu.memory_space<vmem>>, %arg4: memref<8x1xf32, #tpu.memory_space<vmem>>, %arg5: memref<8x128xf32, #tpu.memory_space<vmem>>) attributes {dimension_semantics = [], scalar_prefetch = 0 : i64, scratch_operands = 0 : i64, tpu.core_type = #tpu.core_type<tc>} {
    %c0 = arith.constant 0 : index
    %c0_0 = arith.constant 0 : index
    %0 = vector.load %arg0[%c0, %c0_0] : memref<8x2048xbf16, #tpu.memory_space<vmem>>, vector<8x2048xbf16>
    %c0_1 = arith.constant 0 : index
    %c0_2 = arith.constant 0 : index
    %1 = vector.load %arg1[%c0_1, %c0_2] : memref<2048x128xbf16, #tpu.memory_space<vmem>>, vector<2048x128xbf16>
    %cst = arith.constant dense<0.000000e+00> : vector<8x128xf32>
    %2 = tpu.matmul %0, %1, %cst {dimension_numbers = #tpu.dot_dimension_numbers<[1], [0], [0], [1], [0, 0, 1, 1], [], []>} : vector<8x2048xbf16>, vector<2048x128xbf16>, vector<8x128xf32> -> vector<8x128xf32>
    %c0_3 = arith.constant 0 : index
    %c0_4 = arith.constant 0 : index
    %3 = vector.load %arg5[%c0_3, %c0_4] : memref<8x128xf32, #tpu.memory_space<vmem>>, vector<8x128xf32>
    tpu.vector_store %arg5[%c0_3, %c0_4], %2 {strides = array<i32>} : memref<8x128xf32, #tpu.memory_space<vmem>>, vector<8x128xf32>,
    return
  }
}

</mosaic_0001>

<llo_original>
// kernel: encoder_forward.5
$region0: #{encoder_forward.5}
  #allocation0 [shape = 'u32[]', space=smem, size = 0x4, offset = 0x4, fixed_abs, tag = 'smem constant byte address 0x4 - core index']
  #allocation1 [shape = 'u32[72,128]{1,0:T(1,128)}', space=vmem, size = 0x9000, scoped, tag = 'internal scratch']
  %s0 = inlined_call_operand.vmem [shape: bf16[128,128], index: 0, kind: input, shape index: {}]
  %s1 = inlined_call_operand.vmem [shape: bf16[128,128], index: 1, kind: input, shape index: {}]
  %s2 = inlined_call_operand.vmem [shape: f32[1,128], index: 2, kind: input, shape index: {}]
  %s3 = inlined_call_operand.vmem [shape: f32[1,128], index: 3, kind: input, shape index: {}]
  %s4 = inlined_call_operand.vmem [shape: f32[128,1], index: 4, kind: input, shape index: {}]
  %s5 = inlined_call_operand.vmem [shape: f32[128,128], index: 5, kind: output, shape index: {}]
  %s6 = sld [smem:[#allocation0]]
  $region30: #{encoder_forward.5} parent=0
    _
  %s8 = ssub.s32 1, %s6
  %s9 = scalar_select 0, %s8, %s6
  // Predicated region
  $region2: #{encoder_forward.5} parent=0 // pred_check
    _
  $region3: #{encoder_forward.5} parent=0 // pred_check_branch
    %11 = sbr.rel (0) target = $region5
  $region4: #{encoder_forward.5} parent=0 // pred_region
    _
  $region5: #{encoder_forward.5} parent=0 // pred_fallthru
    _
  // Predicated region
  $region6: #{encoder_forward.5} parent=0 // pred_check
    _
  $region7: #{encoder_forward.5} parent=0 // pred_check_branch
    %13 = sbr.rel (0) target = $region9
  $region8: #{encoder_forward.5} parent=0 // pred_region
    _
  $region9: #{encoder_forward.5} parent=0 // pred_fallthru
    _
  // Predicated region
  $region10: #{encoder_forward.5} parent=0 // pred_check
    _
  $region11: #{encoder_forward.5} parent=0 // pred_check_branch
    %15 = sbr.rel (0) target = $region13
  $region12: #{encoder_forward.5} parent=0 // pred_region
    _
  $region13: #{encoder_forward.5} parent=0 // pred_fallthru
    _
  // Predicated region
  $region14: #{encoder_forward.5} parent=0 // pred_check
    _
  $region15: #{encoder_forward.5} parent=0 // pred_check_branch
    %17 = sbr.rel (0) target = $region17
  $region16: #{encoder_forward.5} parent=0 // pred_region
    _
  $region17: #{encoder_forward.5} parent=0 // pred_fallthru
    _
  // Predicated region
  $region18: #{encoder_forward.5} parent=0 // pred_check
    _
  $region19: #{encoder_forward.5} parent=0 // pred_check_branch
    %19 = sbr.rel (0) target = $region21
  $region20: #{encoder_forward.5} parent=0 // pred_region
    _
  $region21: #{encoder_forward.5} parent=0 // pred_fallthru
    _
  %v20 = vld [vmem:[%s0] sm:$0xf]
  %v21 = vld [vmem:[%s0 + $0x4] sm:$0xf]
  %v22 = vld [vmem:[%s0 + $0x8] sm:$0xf]
  %v23 = vld [vmem:[%s0 + $0xc] sm:$0xf]
  %v24 = vld [vmem:[%s0 + $0x10] sm:$0xf]
  %v25 = vld [vmem:[%s0 + $0x14] sm:$0xf]
  %v26 = vld [vmem:[%s0 + $0x18] sm:$0xf]
  %v27 = vld [vmem:[%s0 + $0x1c] sm:$0xf]
  %v28 = vld [vmem:[%s0 + $0x20] sm:$0xf]
  %v29 = vld [vmem:[%s0 + $0x24] sm:$0xf]
  %v30 = vld [vmem:[%s0 + $0x28] sm:$0xf]
  %v31 = vld [vmem:[%s0 + $0x2c] sm:$0xf]
  %v32 = vld [vmem:[%s0 + $0x30] sm:$0xf]
  %v33 = vld [vmem:[%s0 + $0x34] sm:$0xf]
  %v34 = vld [vmem:[%s0 + $0x38] sm:$0xf]
  %v35 = vld [vmem:[%s0 + $0x3c] sm:$0xf]
  %v36 = vld [vmem:[%s1] sm:$0xf]
  %v37 = vld [vmem:[%s1 + $0x4] sm:$0xf]
  %v38 = vld [vmem:[%s1 + $0x8] sm:$0xf]
  %v39 = vld [vmem:[%s1 + $0xc] sm:$0xf]
  %v40 = vld [vmem:[%s1 + $0x10] sm:$0xf]
  %v41 = vld [vmem:[%s1 + $0x14] sm:$0xf]
  %v42 = vld [vmem:[%s1 + $0x18] sm:$0xf]
  %v43 = vld [vmem:[%s1 + $0x1c] sm:$0xf]
  %v44 = vld [vmem:[%s1 + $0x20] sm:$0xf]
  %v45 = vld [vmem:[%s1 + $0x24] sm:$0xf]
  %v46 = vld [vmem:[%s1 + $0x28] sm:$0xf]
  %v47 = vld [vmem:[%s1 + $0x2c] sm:$0xf]
  %v48 = vld [vmem:[%s1 + $0x30] sm:$0xf]
  %v49 = vld [vmem:[%s1 + $0x34] sm:$0xf]
  %v50 = vld [vmem:[%s1 + $0x38] sm:$0xf]
  %v51 = vld [vmem:[%s1 + $0x3c] sm:$0xf]
  %v68 = vunpack.c.l.b16 %v20
  %v69 = vunpack.c.l.b16 %v21
  %v70 = vunpack.c.l.b16 %v22
  %v71 = vunpack.c.l.b16 %v23
  %v72 = vunpack.c.l.b16 %v24
  %v73 = vunpack.c.l.b16 %v25
  %v74 = vunpack.c.l.b16 %v26
  %v75 = vunpack.c.l.b16 %v27
  %v76 = vunpack.c.l.b16 %v28
  %v77 = vunpack.c.l.b16 %v29
  %v78 = vunpack.c.l.b16 %v30
  %v79 = vunpack.c.l.b16 %v31
  %v80 = vunpack.c.l.b16 %v32
  %v81 = vunpack.c.l.b16 %v33
  %v82 = vunpack.c.l.b16 %v34
  %v83 = vunpack.c.l.b16 %v35
  %v84 = vpack.c.b16 %v69, %v68
  %v85 = vpack.c.b16 %v71, %v70
  %v86 = vpack.c.b16 %v73, %v72
  %v87 = vpack.c.b16 %v75, %v74
  %v88 = vpack.c.b16 %v77, %v76
  %v89 = vpack.c.b16 %v79, %v78
  %v90 = vpack.c.b16 %v81, %v80
  %v91 = vpack.c.b16 %v83, %v82
  %v116 = vunpack.c.l.b16 %v36
  %v117 = vunpack.c.l.b16 %v37
  %v118 = vunpack.c.l.b16 %v38
  %v119 = vunpack.c.l.b16 %v39
  %v120 = vunpack.c.l.b16 %v40
  %v121 = vunpack.c.l.b16 %v41
  %v122 = vunpack.c.l.b16 %v42
  %v123 = vunpack.c.l.b16 %v43
  %v124 = vunpack.c.l.b16 %v44
  %v125 = vunpack.c.l.b16 %v45
  %v126 = vunpack.c.l.b16 %v46
  %v127 = vunpack.c.l.b16 %v47
  %v128 = vunpack.c.l.b16 %v48
  %v129 = vunpack.c.l.b16 %v49
  %v130 = vunpack.c.l.b16 %v50
  %v131 = vunpack.c.l.b16 %v51
  %v132 = vpack.c.b16 %v117, %v116
  %v133 = vpack.c.b16 %v119, %v118
  %v134 = vpack.c.b16 %v121, %v120
  %v135 = vpack.c.b16 %v123, %v122
  %v136 = vpack.c.b16 %v125, %v124
  %v137 = vpack.c.b16 %v127, %v126
  %v138 = vpack.c.b16 %v129, %v128
  %v139 = vpack.c.b16 %v131, %v130
  %148 = vmatpush.bf16.msra.mxu0 %v139
  %149 = vmatpush.bf16.msra.mxu0 %v138
  %150 = vmatpush.bf16.msra.mxu0 %v137
  %151 = vmatpush.bf16.msra.mxu0 %v136
  %152 = vmatpush.bf16.msra.mxu0 %v135
  %153 = vmatpush.bf16.msra.mxu0 %v134
  %154 = vmatpush.bf16.msra.mxu0 %v133
  %155 = vmatpush.bf16.msra.mxu0 %v132
  %156 = vmatmul.bf16.gmra.mxu0 %v84
  %v157 = vpop.f32.mrf.mxu0
  %v158 = vadd.f32 0.0, %v157
  %v159 = vpop.f32.mrf.mxu0
  %v160 = vadd.f32 0.0, %v159
  %161 = vmatmul.bf16.gmra.mxu0 %v85
  %v162 = vpop.f32.mrf.mxu0
  %v163 = vadd.f32 0.0, %v162
  %v164 = vpop.f32.mrf.mxu0
  %v165 = vadd.f32 0.0, %v164
  %166 = vmatmul.bf16.gmra.mxu0 %v86
  %v167 = vpop.f32.mrf.mxu0
  %v168 = vadd.f32 0.0, %v167
  %v169 = vpop.f32.mrf.mxu0
  %v170 = vadd.f32 0.0, %v169
  %171 = vmatmul.bf16.gmra.mxu0 %v87
  %v172 = vpop.f32.mrf.mxu0
  %v173 = vadd.f32 0.0, %v172
  %v174 = vpop.f32.mrf.mxu0
  %v175 = vadd.f32 0.0, %v174
  %176 = vmatmul.bf16.gmra.mxu0 %v88
  %v177 = vpop.f32.mrf.mxu0
  %v178 = vadd.f32 0.0, %v177
  %v179 = vpop.f32.mrf.mxu0
  %v180 = vadd.f32 0.0, %v179
  %181 = vmatmul.bf16.gmra.mxu0 %v89
  %v182 = vpop.f32.mrf.mxu0
  %v183 = vadd.f32 0.0, %v182
  %v184 = vpop.f32.mrf.mxu0
  %v185 = vadd.f32 0.0, %v184
  %186 = vmatmul.bf16.gmra.mxu0 %v90
  %v187 = vpop.f32.mrf.mxu0
  %v188 = vadd.f32 0.0, %v187
  %v189 = vpop.f32.mrf.mxu0
  %v190 = vadd.f32 0.0, %v189
  %191 = vmatmul.bf16.gmra.mxu0 %v91
  %v192 = vpop.f32.mrf.mxu0
  %v193 = vadd.f32 0.0, %v192
  %v194 = vpop.f32.mrf.mxu0
  %v195 = vadd.f32 0.0, %v194
  %196 = vdwg.mxu0
  %v197 = vld [vmem:[%s4] sm:$0xff]
  %v198 = vld [vmem:[%s4 + $0x8] sm:$0xff]
  %v199 = vld [vmem:[%s4 + $0x10] sm:$0xff]
  %v200 = vld [vmem:[%s4 + $0x18] sm:$0xff]
  %v201 = vld [vmem:[%s4 + $0x20] sm:$0xff]
  %v202 = vld [vmem:[%s4 + $0x28] sm:$0xff]
  %v203 = vld [vmem:[%s4 + $0x30] sm:$0xff]
  %v204 = vld [vmem:[%s4 + $0x38] sm:$0xff]
  %v205 = vld [vmem:[%s4 + $0x40] sm:$0xff]
  %v206 = vld [vmem:[%s4 + $0x48] sm:$0xff]
  %v207 = vld [vmem:[%s4 + $0x50] sm:$0xff]
  %v208 = vld [vmem:[%s4 + $0x58] sm:$0xff]
  %v209 = vld [vmem:[%s4 + $0x60] sm:$0xff]
  %v210 = vld [vmem:[%s4 + $0x68] sm:$0xff]
  %v211 = vld [vmem:[%s4 + $0x70] sm:$0xff]
  %v212 = vld [vmem:[%s4 + $0x78] sm:$0xff]
  %v213 = vld [vmem:[%s2] sm:$0x1]
  %v214 = vld [vmem:[%s3] sm:$0x1]
  %216 = vset.pattern.permute.xlu0 0
  %217 = vperm.xlu0 %216, %v197
  %v218 = vpop.permute.xlu0 %217
  %221 = vset.pattern.permute.xlu0 0
  %222 = vperm.xlu0 %221, %v198
  %v223 = vpop.permute.xlu0 %222
  %226 = vset.pattern.permute.xlu0 0
  %227 = vperm.xlu0 %226, %v199
  %v228 = vpop.permute.xlu0 %227
  %231 = vset.pattern.permute.xlu0 0
  %232 = vperm.xlu0 %231, %v200
  %v233 = vpop.permute.xlu0 %232
  %236 = vset.pattern.permute.xlu0 0
  %237 = vperm.xlu0 %236, %v201
  %v238 = vpop.permute.xlu0 %237
  %241 = vset.pattern.permute.xlu0 0
  %242 = vperm.xlu0 %241, %v202
  %v243 = vpop.permute.xlu0 %242
  %246 = vset.pattern.permute.xlu0 0
  %247 = vperm.xlu0 %246, %v203
  %v248 = vpop.permute.xlu0 %247
  %251 = vset.pattern.permute.xlu0 0
  %252 = vperm.xlu0 %251, %v204
  %v253 = vpop.permute.xlu0 %252
  %256 = vset.pattern.permute.xlu0 0
  %257 = vperm.xlu0 %256, %v205
  %v258 = vpop.permute.xlu0 %257
  %261 = vset.pattern.permute.xlu0 0
  %262 = vperm.xlu0 %261, %v206
  %v263 = vpop.permute.xlu0 %262
  %266 = vset.pattern.permute.xlu0 0
  %267 = vperm.xlu0 %266, %v207
  %v268 = vpop.permute.xlu0 %267
  %271 = vset.pattern.permute.xlu0 0
  %272 = vperm.xlu0 %271, %v208
  %v273 = vpop.permute.xlu0 %272
  %276 = vset.pattern.permute.xlu0 0
  %277 = vperm.xlu0 %276, %v209
  %v278 = vpop.permute.xlu0 %277
  %281 = vset.pattern.permute.xlu0 0
  %282 = vperm.xlu0 %281, %v210
  %v283 = vpop.permute.xlu0 %282
  %286 = vset.pattern.permute.xlu0 0
  %287 = vperm.xlu0 %286, %v211
  %v288 = vpop.permute.xlu0 %287
  %291 = vset.pattern.permute.xlu0 0
  %292 = vperm.xlu0 %291, %v212
  %v293 = vpop.permute.xlu0 %292
  %v295 = vmul.f32 %v158, %v218
  %v296 = vmul.f32 %v160, %v223
  %v297 = vmul.f32 %v163, %v228
  %v298 = vmul.f32 %v165, %v233
  %v299 = vmul.f32 %v168, %v238
  %v300 = vmul.f32 %v170, %v243
  %v301 = vmul.f32 %v173, %v248
  %v302 = vmul.f32 %v175, %v253
  %v303 = vmul.f32 %v178, %v258
  %v304 = vmul.f32 %v180, %v263
  %v305 = vmul.f32 %v183, %v268
  %v306 = vmul.f32 %v185, %v273
  %v307 = vmul.f32 %v188, %v278
  %v308 = vmul.f32 %v190, %v283
  %v309 = vmul.f32 %v193, %v288
  %v310 = vmul.f32 %v195, %v293
  %v311 = vadd.f32 %v295, %v296
  %v312 = vadd.f32 %v311, %v297
  %v313 = vadd.f32 %v312, %v298
  %v314 = vadd.f32 %v313, %v299
  %v315 = vadd.f32 %v314, %v300
  %v316 = vadd.f32 %v315, %v301
  %v317 = vadd.f32 %v316, %v302
  %v318 = vadd.f32 %v317, %v303
  %v319 = vadd.f32 %v318, %v304
  %v320 = vadd.f32 %v319, %v305
  %v321 = vadd.f32 %v320, %v306
  %v322 = vadd.f32 %v321, %v307
  %v323 = vadd.f32 %v322, %v308
  %v324 = vadd.f32 %v323, %v309
  %v325 = vadd.f32 %v324, %v310
  %v326 = vrot.slane %v325, 4
  %v327 = vadd.f32 %v325, %v326
  %v328 = vrot.slane %v327, 2
  %v329 = vadd.f32 %v327, %v328
  %v330 = vrot.slane %v329, 1
  %v331 = vadd.f32 %v329, %v330
  %v332 = vrcp.pop 128.0
  %v333 = vmul.f32 128.0, %v332
  %v334 = vsub.f32 1.0, %v333
  %v335 = vmul.f32 %v332, %v334
  %v336 = vadd.f32 %v332, %v335
  %vm337 = vweird.f32 %v332
  %v338 = vsel %vm337, %v332, %v336
  %v339 = vmul.f32 %v331, %v338
  %v340 = vsub.f32 %v158, %v339
  %v341 = vsub.f32 %v160, %v339
  %v342 = vsub.f32 %v163, %v339
  %v343 = vsub.f32 %v165, %v339
  %v344 = vsub.f32 %v168, %v339
  %v345 = vsub.f32 %v170, %v339
  %v346 = vsub.f32 %v173, %v339
  %v347 = vsub.f32 %v175, %v339
  %v348 = vsub.f32 %v178, %v339
  %v349 = vsub.f32 %v180, %v339
  %v350 = vsub.f32 %v183, %v339
  %v351 = vsub.f32 %v185, %v339
  %v352 = vsub.f32 %v188, %v339
  %v353 = vsub.f32 %v190, %v339
  %v354 = vsub.f32 %v193, %v339
  %v355 = vsub.f32 %v195, %v339
  %v356 = vmul.f32 %v340, %v218
  %v357 = vmul.f32 %v341, %v223
  %v358 = vmul.f32 %v342, %v228
  %v359 = vmul.f32 %v343, %v233
  %v360 = vmul.f32 %v344, %v238
  %v361 = vmul.f32 %v345, %v243
  %v362 = vmul.f32 %v346, %v248
  %v363 = vmul.f32 %v347, %v253
  %v364 = vmul.f32 %v348, %v258
  %v365 = vmul.f32 %v349, %v263
  %v366 = vmul.f32 %v350, %v268
  %v367 = vmul.f32 %v351, %v273
  %v368 = vmul.f32 %v352, %v278
  %v369 = vmul.f32 %v353, %v283
  %v370 = vmul.f32 %v354, %v288
  %v371 = vmul.f32 %v355, %v293
  %v372 = vmul.f32 %v356, %v356
  %v373 = vmul.f32 %v357, %v357
  %v374 = vmul.f32 %v358, %v358
  %v375 = vmul.f32 %v359, %v359
  %v376 = vmul.f32 %v360, %v360
  %v377 = vmul.f32 %v361, %v361
  %v378 = vmul.f32 %v362, %v362
  %v379 = vmul.f32 %v363, %v363
  %v380 = vmul.f32 %v364, %v364
  %v381 = vmul.f32 %v365, %v365
  %v382 = vmul.f32 %v366, %v366
  %v383 = vmul.f32 %v367, %v367
  %v384 = vmul.f32 %v368, %v368
  %v385 = vmul.f32 %v369, %v369
  %v386 = vmul.f32 %v370, %v370
  %v387 = vmul.f32 %v371, %v371
  %v388 = vadd.f32 %v372, %v373
  %v389 = vadd.f32 %v388, %v374
  %v390 = vadd.f32 %v389, %v375
  %v391 = vadd.f32 %v390, %v376
  %v392 = vadd.f32 %v391, %v377
  %v393 = vadd.f32 %v392, %v378
  %v394 = vadd.f32 %v393, %v379
  %v395 = vadd.f32 %v394, %v380
  %v396 = vadd.f32 %v395, %v381
  %v397 = vadd.f32 %v396, %v382
  %v398 = vadd.f32 %v397, %v383
  %v399 = vadd.f32 %v398, %v384
  %v400 = vadd.f32 %v399, %v385
  %v401 = vadd.f32 %v400, %v386
  %v402 = vadd.f32 %v401, %v387
  %v403 = vrot.slane %v402, 4
  %v404 = vadd.f32 %v402, %v403
  %v405 = vrot.slane %v404, 2
  %v406 = vadd.f32 %v404, %v405
  %v407 = vrot.slane %v406, 1
  %v408 = vadd.f32 %v406, %v407
  %v409 = vmul.f32 %v408, %v338
  %v410 = vadd.f32 %v409, 1e-05
  %v411 = vrsqrt.pop %v410
  %v412 = vmul.f32 %v411, %v410
  %v413 = vmul.f32 %v412, %v411
  %v414 = vmul.f32 0.5, %v413
  %v415 = vsub.f32 1.5, %v414
  %v416 = vmul.f32 %v411, %v415
  %vm417 = vweird.f32 %v410
  %vm418 = vweird.f32 %v411
  %vm419 = vmor %vm417, %vm418
  %v420 = vsel %vm419, %v411, %v416
  %v421 = vmul.f32 %v340, %v420
  %v422 = vmul.f32 %v341, %v420
  %v423 = vmul.f32 %v342, %v420
  %v424 = vmul.f32 %v343, %v420
  %v425 = vmul.f32 %v344, %v420
  %v426 = vmul.f32 %v345, %v420
  %v427 = vmul.f32 %v346, %v420
  %v428 = vmul.f32 %v347, %v420
  %v429 = vmul.f32 %v348, %v420
  %v430 = vmul.f32 %v349, %v420
  %v431 = vmul.f32 %v350, %v420
  %v432 = vmul.f32 %v351, %v420
  %v433 = vmul.f32 %v352, %v420
  %v434 = vmul.f32 %v353, %v420
  %v435 = vmul.f32 %v354, %v420
  %v436 = vmul.f32 %v355, %v420
  %v438 = vperm.slane %v213, 0
  %v440 = vmul.f32 %v421, %v438
  %v441 = vmul.f32 %v422, %v438
  %v442 = vmul.f32 %v423, %v438
  %v443 = vmul.f32 %v424, %v438
  %v444 = vmul.f32 %v425, %v438
  %v445 = vmul.f32 %v426, %v438
  %v446 = vmul.f32 %v427, %v438
  %v447 = vmul.f32 %v428, %v438
  %v448 = vmul.f32 %v429, %v438
  %v449 = vmul.f32 %v430, %v438
  %v450 = vmul.f32 %v431, %v438
  %v451 = vmul.f32 %v432, %v438
  %v452 = vmul.f32 %v433, %v438
  %v453 = vmul.f32 %v434, %v438
  %v454 = vmul.f32 %v435, %v438
  %v455 = vmul.f32 %v436, %v438
  %v457 = vperm.slane %v214, 0
  %v459 = vadd.f32 %v440, %v457
  %v460 = vadd.f32 %v441, %v457
  %v461 = vadd.f32 %v442, %v457
  %v462 = vadd.f32 %v443, %v457
  %v463 = vadd.f32 %v444, %v457
  %v464 = vadd.f32 %v445, %v457
  %v465 = vadd.f32 %v446, %v457
  %v466 = vadd.f32 %v447, %v457
  %v467 = vadd.f32 %v448, %v457
  %v468 = vadd.f32 %v449, %v457
  %v469 = vadd.f32 %v450, %v457
  %v470 = vadd.f32 %v451, %v457
  %v471 = vadd.f32 %v452, %v457
  %v472 = vadd.f32 %v453, %v457
  %v473 = vadd.f32 %v454, %v457
  %v474 = vadd.f32 %v455, %v457
  %vm475 = vcmp.ge.f32.partialorder %v459, 0.0
  %vm476 = vcmp.ge.f32.partialorder %v460, 0.0
  %vm477 = vcmp.ge.f32.partialorder %v461, 0.0
  %vm478 = vcmp.ge.f32.partialorder %v462, 0.0
  %vm479 = vcmp.ge.f32.partialorder %v463, 0.0
  %vm480 = vcmp.ge.f32.partialorder %v464, 0.0
  %vm481 = vcmp.ge.f32.partialorder %v465, 0.0
  %vm482 = vcmp.ge.f32.partialorder %v466, 0.0
  %vm483 = vcmp.ge.f32.partialorder %v467, 0.0
  %vm484 = vcmp.ge.f32.partialorder %v468, 0.0
  %vm485 = vcmp.ge.f32.partialorder %v469, 0.0
  %vm486 = vcmp.ge.f32.partialorder %v470, 0.0
  %vm487 = vcmp.ge.f32.partialorder %v471, 0.0
  %vm488 = vcmp.ge.f32.partialorder %v472, 0.0
  %vm489 = vcmp.ge.f32.partialorder %v473, 0.0
  %vm490 = vcmp.ge.f32.partialorder %v474, 0.0
  %v491 = vmul.f32 %v459, 0.2
  %v492 = vmul.f32 %v460, 0.2
  %v493 = vmul.f32 %v461, 0.2
  %v494 = vmul.f32 %v462, 0.2
  %v495 = vmul.f32 %v463, 0.2
  %v496 = vmul.f32 %v464, 0.2
  %v497 = vmul.f32 %v465, 0.2
  %v498 = vmul.f32 %v466, 0.2
  %v499 = vmul.f32 %v467, 0.2
  %v500 = vmul.f32 %v468, 0.2
  %v501 = vmul.f32 %v469, 0.2
  %v502 = vmul.f32 %v470, 0.2
  %v503 = vmul.f32 %v471, 0.2
  %v504 = vmul.f32 %v472, 0.2
  %v505 = vmul.f32 %v473, 0.2
  %v506 = vmul.f32 %v474, 0.2
  %v507 = vsel %vm475, %v459, %v491
  %v508 = vsel %vm476, %v460, %v492
  %v509 = vsel %vm477, %v461, %v493
  %v510 = vsel %vm478, %v462, %v494
  %v511 = vsel %vm479, %v463, %v495
  %v512 = vsel %vm480, %v464, %v496
  %v513 = vsel %vm481, %v465, %v497
  %v514 = vsel %vm482, %v466, %v498
  %v515 = vsel %vm483, %v467, %v499
  %v516 = vsel %vm484, %v468, %v500
  %v517 = vsel %vm485, %v469, %v501
  %v518 = vsel %vm486, %v470, %v502
  %v519 = vsel %vm487, %v471, %v503
  %v520 = vsel %vm488, %v472, %v504
  %v521 = vsel %vm489, %v473, %v505
  %v522 = vsel %vm490, %v474, %v506
  %523 = vst [vmem:[%s5] sm:$0xff] %v507
  %524 = vst [vmem:[%s5 + $0x8] sm:$0xff] %v508
  %525 = vst [vmem:[%s5 + $0x10] sm:$0xff] %v509
  %526 = vst [vmem:[%s5 + $0x18] sm:$0xff] %v510
  %527 = vst [vmem:[%s5 + $0x20] sm:$0xff] %v511
  %528 = vst [vmem:[%s5 + $0x28] sm:$0xff] %v512
  %529 = vst [vmem:[%s5 + $0x30] sm:$0xff] %v513
  %530 = vst [vmem:[%s5 + $0x38] sm:$0xff] %v514
  %531 = vst [vmem:[%s5 + $0x40] sm:$0xff] %v515
  %532 = vst [vmem:[%s5 + $0x48] sm:$0xff] %v516
  %533 = vst [vmem:[%s5 + $0x50] sm:$0xff] %v517
  %534 = vst [vmem:[%s5 + $0x58] sm:$0xff] %v518
  %535 = vst [vmem:[%s5 + $0x60] sm:$0xff] %v519
  %536 = vst [vmem:[%s5 + $0x68] sm:$0xff] %v520
  %537 = vst [vmem:[%s5 + $0x70] sm:$0xff] %v521
  %538 = vst [vmem:[%s5 + $0x78] sm:$0xff] %v522
  // Predicated region
  $region22: #{encoder_forward.5} parent=0 // pred_check
    _
  $region23: #{encoder_forward.5} parent=0 // pred_check_branch
    %540 = sbr.rel (0) target = $region25
  $region24: #{encoder_forward.5} parent=0 // pred_region
    _
  $region25: #{encoder_forward.5} parent=0 // pred_fallthru
    _
  // Predicated region
  $region26: #{encoder_forward.5} parent=0 // pred_check
    _
  $region27: #{encoder_forward.5} parent=0 // pred_check_branch
    %542 = sbr.rel (0) target = $region29
  $region28: #{encoder_forward.5} parent=0 // pred_region
    _
  $region29: #{encoder_forward.5} parent=0 // pred_fallthru
    _

// kernel: encoder_forward.7
$region0: #{encoder_forward.7}
  #allocation0 [shape = 'u32[]', space=smem, size = 0x4, offset = 0x4, fixed_abs, tag = 'smem constant byte address 0x4 - core index']
  #allocation1 [shape = 'u32[72,128]{1,0:T(1,128)}', space=vmem, size = 0x9000, scoped, tag = 'internal scratch']
  %s0 = inlined_call_operand.vmem [shape: bf16[225,128], index: 0, kind: input, shape index: {}]
  %s1 = inlined_call_operand.vmem [shape: bf16[16,128,128], index: 1, kind: input, shape index: {}]
  %s2 = inlined_call_operand.vmem [shape: f32[1,128], index: 2, kind: input, shape index: {}]
  %s3 = inlined_call_operand.vmem [shape: f32[1,128], index: 3, kind: input, shape index: {}]
  %s4 = inlined_call_operand.vmem [shape: f32[56,1], index: 4, kind: input, shape index: {}]
  %s5 = inlined_call_operand.vmem [shape: f32[56,128], index: 5, kind: output, shape index: {}]
  %s6 = sld [smem:[#allocation0]]
  $region30: #{encoder_forward.7} parent=0
    _
  %s8 = ssub.s32 1, %s6
  %s9 = scalar_select 0, %s8, %s6
  // Predicated region
  $region2: #{encoder_forward.7} parent=0 // pred_check
    _
  $region3: #{encoder_forward.7} parent=0 // pred_check_branch
    %11 = sbr.rel (0) target = $region5
  $region4: #{encoder_forward.7} parent=0 // pred_region
    _
  $region5: #{encoder_forward.7} parent=0 // pred_fallthru
    _
  // Predicated region
  $region6: #{encoder_forward.7} parent=0 // pred_check
    _
  $region7: #{encoder_forward.7} parent=0 // pred_check_branch
    %13 = sbr.rel (0) target = $region9
  $region8: #{encoder_forward.7} parent=0 // pred_region
    _
  $region9: #{encoder_forward.7} parent=0 // pred_fallthru
    _
  // Predicated region
  $region10: #{encoder_forward.7} parent=0 // pred_check
    _
  $region11: #{encoder_forward.7} parent=0 // pred_check_branch
    %15 = sbr.rel (0) target = $region13
  $region12: #{encoder_forward.7} parent=0 // pred_region
    _
  $region13: #{encoder_forward.7} parent=0 // pred_fallthru
    _
  // Predicated region
  $region14: #{encoder_forward.7} parent=0 // pred_check
    _
  $region15: #{encoder_forward.7} parent=0 // pred_check_branch
    %17 = sbr.rel (0) target = $region17
  $region16: #{encoder_forward.7} parent=0 // pred_region
    _
  $region17: #{encoder_forward.7} parent=0 // pred_fallthru
    _
  // Predicated region
  $region18: #{encoder_forward.7} parent=0 // pred_check
    _
  $region19: #{encoder_forward.7} parent=0 // pred_check_branch
    %19 = sbr.rel (0) target = $region21
  $region20: #{encoder_forward.7} parent=0 // pred_region
    _
  $region21: #{encoder_forward.7} parent=0 // pred_fallthru
    _
  %v20 = vld [vmem:[%s0] sm:$0xf]
  %v21 = vld [vmem:[%s0 + $0x4] sm:$0xf]
  %v22 = vld [vmem:[%s0 + $0x8] sm:$0xf]
  %v23 = vld [vmem:[%s0 + $0xc] sm:$0xf]
  %v24 = vld [vmem:[%s0 + $0x10] sm:$0xf]
  %v25 = vld [vmem:[%s0 + $0x14] sm:$0xf]
  %v26 = vld [vmem:[%s0 + $0x18] sm:$0xf]
  %v27 = vld [vmem:[%s1] sm:$0xf]
  %v28 = vld [vmem:[%s1 + $0x4] sm:$0xf]
  %v29 = vld [vmem:[%s1 + $0x8] sm:$0xf]
  %v30 = vld [vmem:[%s1 + $0xc] sm:$0xf]
  %v31 = vld [vmem:[%s1 + $0x10] sm:$0xf]
  %v32 = vld [vmem:[%s1 + $0x14] sm:$0xf]
  %v33 = vld [vmem:[%s1 + $0x18] sm:$0xf]
  %v34 = vld [vmem:[%s1 + $0x1c] sm:$0xf]
  %v35 = vld [vmem:[%s1 + $0x20] sm:$0xf]
  %v36 = vld [vmem:[%s1 + $0x24] sm:$0xf]
  %v37 = vld [vmem:[%s1 + $0x28] sm:$0xf]
  %v38 = vld [vmem:[%s1 + $0x2c] sm:$0xf]
  %v39 = vld [vmem:[%s1 + $0x30] sm:$0xf]
  %v40 = vld [vmem:[%s1 + $0x34] sm:$0xf]
  %v41 = vld [vmem:[%s1 + $0x38] sm:$0xf]
  %v42 = vld [vmem:[%s1 + $0x3c] sm:$0xf]
  %v43 = vld [vmem:[%s0 + $0x18] sm:$0xe]
  %v44 = vld [vmem:[%s0 + $0x1c] sm:$0xf]
  %v45 = vld [vmem:[%s0 + $0x20] sm:$0xf]
  %v46 = vld [vmem:[%s0 + $0x24] sm:$0xf]
  %v47 = vld [vmem:[%s0 + $0x28] sm:$0xf]
  %v48 = vld [vmem:[%s0 + $0x2c] sm:$0xf]
  %v49 = vld [vmem:[%s0 + $0x30] sm:$0xf]
  %v50 = vld [vmem:[%s0 + $0x34] sm:$0x1]
  %s51 = scalar_lea.vmem %s1, 64
  %v52 = vld [vmem:[%s51] sm:$0xf]
  %v53 = vld [vmem:[%s51 + $0x4] sm:$0xf]
  %v54 = vld [vmem:[%s51 + $0x8] sm:$0xf]
  %v55 = vld [vmem:[%s51 + $0xc] sm:$0xf]
  %v56 = vld [vmem:[%s51 + $0x10] sm:$0xf]
  %v57 = vld [vmem:[%s51 + $0x14] sm:$0xf]
  %v58 = vld [vmem:[%s51 + $0x18] sm:$0xf]
  %v59 = vld [vmem:[%s51 + $0x1c] sm:$0xf]
  %v60 = vld [vmem:[%s51 + $0x20] sm:$0xf]
  %v61 = vld [vmem:[%s51 + $0x24] sm:$0xf]
  %v62 = vld [vmem:[%s51 + $0x28] sm:$0xf]
  %v63 = vld [vmem:[%s51 + $0x2c] sm:$0xf]
  %v64 = vld [vmem:[%s51 + $0x30] sm:$0xf]
  %v65 = vld [vmem:[%s51 + $0x34] sm:$0xf]
  %v66 = vld [vmem:[%s51 + $0x38] sm:$0xf]
  %v67 = vld [vmem:[%s51 + $0x3c] sm:$0xf]
  %v76 = vunpack.c.l.b16 %v43
  %v77 = vunpack.c.l.b16 %v44
  %v78 = vunpack.c.l.b16 %v45
  %v79 = vunpack.c.l.b16 %v46
  %v80 = vunpack.c.l.b16 %v47
  %v81 = vunpack.c.l.b16 %v48
  %v82 = vunpack.c.l.b16 %v49
  %v83 = vunpack.c.l.b16 %v50
  %v84 = vpack.c.b16 %v77, %v76
  %v85 = vpack.c.b16 %v79, %v78
  %v86 = vpack.c.b16 %v81, %v80
  %v87 = vpack.c.b16 %v83, %v82
  %vm88 = vcmask 1046528
  %v89 = vrot.slane %v84, 1
  %v90 = vrot.slane %v85, 1
  %v91 = vsel %vm88, %v89, %v90
  %v92 = vrot.slane %v86, 1
  %v93 = vsel %vm88, %v90, %v92
  %v94 = vrot.slane %v87, 1
  %v95 = vsel %vm88, %v92, %v94
  %v116 = vunpack.c.l.b16 %v52
  %v117 = vunpack.c.l.b16 %v53
  %v118 = vunpack.c.l.b16 %v54
  %v119 = vunpack.c.l.b16 %v55
  %v120 = vunpack.c.l.b16 %v56
  %v121 = vunpack.c.l.b16 %v57
  %v122 = vunpack.c.l.b16 %v58
  %v123 = vunpack.c.l.b16 %v59
  %v124 = vunpack.c.l.b16 %v60
  %v125 = vunpack.c.l.b16 %v61
  %v126 = vunpack.c.l.b16 %v62
  %v127 = vunpack.c.l.b16 %v63
  %v128 = vunpack.c.l.b16 %v64
  %v129 = vunpack.c.l.b16 %v65
  %v130 = vunpack.c.l.b16 %v66
  %v131 = vunpack.c.l.b16 %v67
  %v132 = vpack.c.b16 %v117, %v116
  %v133 = vpack.c.b16 %v119, %v118
  %v134 = vpack.c.b16 %v121, %v120
  %v135 = vpack.c.b16 %v123, %v122
  %v136 = vpack.c.b16 %v125, %v124
  %v137 = vpack.c.b16 %v127, %v126
  %v138 = vpack.c.b16 %v129, %v128
  %v139 = vpack.c.b16 %v131, %v130
  %148 = vmatpush.bf16.msra.mxu0 %v139
  %149 = vmatpush.bf16.msra.mxu0 %v138
  %150 = vmatpush.bf16.msra.mxu0 %v137
  %151 = vmatpush.bf16.msra.mxu0 %v136
  %152 = vmatpush.bf16.msra.mxu0 %v135
  %153 = vmatpush.bf16.msra.mxu0 %v134
  %154 = vmatpush.bf16.msra.mxu0 %v133
  %155 = vmatpush.bf16.msra.mxu0 %v132
  %156 = vmatmul.bf16.gmra.mxu0 %v91
  %v157 = vpop.f32.mrf.mxu0
  %v158 = vadd.f32 0.0, %v157
  %v159 = vpop.f32.mrf.mxu0
  %v160 = vadd.f32 0.0, %v159
  %161 = vmatmul.bf16.gmra.mxu0 %v93
  %v162 = vpop.f32.mrf.mxu0
  %v163 = vadd.f32 0.0, %v162
  %v164 = vpop.f32.mrf.mxu0
  %v165 = vadd.f32 0.0, %v164
  %166 = vmatmul.bf16.gmra.mxu0 %v95
  %v167 = vpop.f32.mrf.mxu0
  %v168 = vadd.f32 0.0, %v167
  %v169 = vpop.f32.mrf.mxu0
  %v170 = vadd.f32 0.0, %v169
  %171 = vmatmul.bf16.gmra.mxu0 %v94
  %v172 = vpop.f32.mrf.mxu0
  %v173 = vadd.f32 0.0, %v172
  %v174 = vpop.f32.mrf.mxu0
  %175 = vdwg.mxu0
  %v183 = vunpack.c.l.b16 %v20
  %v184 = vunpack.c.l.b16 %v21
  %v185 = vunpack.c.l.b16 %v22
  %v186 = vunpack.c.l.b16 %v23
  %v187 = vunpack.c.l.b16 %v24
  %v188 = vunpack.c.l.b16 %v25
  %v189 = vunpack.c.l.b16 %v26
  %v190 = vpack.c.b16 %v184, %v183
  %v191 = vpack.c.b16 %v186, %v185
  %v192 = vpack.c.b16 %v188, %v187
  %v193 = vpack.c.b16 %v189, %v189
  %v214 = vunpack.c.l.b16 %v27
  %v215 = vunpack.c.l.b16 %v28
  %v216 = vunpack.c.l.b16 %v29
  %v217 = vunpack.c.l.b16 %v30
  %v218 = vunpack.c.l.b16 %v31
  %v219 = vunpack.c.l.b16 %v32
  %v220 = vunpack.c.l.b16 %v33
  %v221 = vunpack.c.l.b16 %v34
  %v222 = vunpack.c.l.b16 %v35
  %v223 = vunpack.c.l.b16 %v36
  %v224 = vunpack.c.l.b16 %v37
  %v225 = vunpack.c.l.b16 %v38
  %v226 = vunpack.c.l.b16 %v39
  %v227 = vunpack.c.l.b16 %v40
  %v228 = vunpack.c.l.b16 %v41
  %v229 = vunpack.c.l.b16 %v42
  %v230 = vpack.c.b16 %v215, %v214
  %v231 = vpack.c.b16 %v217, %v216
  %v232 = vpack.c.b16 %v219, %v218
  %v233 = vpack.c.b16 %v221, %v220
  %v234 = vpack.c.b16 %v223, %v222
  %v235 = vpack.c.b16 %v225, %v224
  %v236 = vpack.c.b16 %v227, %v226
  %v237 = vpack.c.b16 %v229, %v228
  %246 = vmatpush.bf16.msra.mxu0 %v237
  %247 = vmatpush.bf16.msra.mxu0 %v236
  %248 = vmatpush.bf16.msra.mxu0 %v235
  %249 = vmatpush.bf16.msra.mxu0 %v234
  %250 = vmatpush.bf16.msra.mxu0 %v233
  %251 = vmatpush.bf16.msra.mxu0 %v232
  %252 = vmatpush.bf16.msra.mxu0 %v231
  %253 = vmatpush.bf16.msra.mxu0 %v230
  %254 = vmatmul.bf16.gmra.mxu0 %v190
  %v255 = vpop.f32.mrf.mxu0
  %v256 = vadd.f32 %v158, %v255
  %v257 = vpop.f32.mrf.mxu0
  %v258 = vadd.f32 %v160, %v257
  %259 = vmatmul.bf16.gmra.mxu0 %v191
  %v260 = vpop.f32.mrf.mxu0
  %v261 = vadd.f32 %v163, %v260
  %v262 = vpop.f32.mrf.mxu0
  %v263 = vadd.f32 %v165, %v262
  %264 = vmatmul.bf16.gmra.mxu0 %v192
  %v265 = vpop.f32.mrf.mxu0
  %v266 = vadd.f32 %v168, %v265
  %v267 = vpop.f32.mrf.mxu0
  %v268 = vadd.f32 %v170, %v267
  %269 = vmatmul.bf16.gmra.mxu0 %v193
  %v270 = vpop.f32.mrf.mxu0
  %v271 = vadd.f32 %v173, %v270
  %v272 = vpop.f32.mrf.mxu0
  %273 = vdwg.mxu0
  %v274 = vld [vmem:[%s0] sm:$0xf]
  %v275 = vld [vmem:[%s0 + $0x4] sm:$0xf]
  %v276 = vld [vmem:[%s0 + $0x8] sm:$0xf]
  %v277 = vld [vmem:[%s0 + $0xc] sm:$0xf]
  %v278 = vld [vmem:[%s0 + $0x10] sm:$0xf]
  %v279 = vld [vmem:[%s0 + $0x14] sm:$0xf]
  %v280 = vld [vmem:[%s0 + $0x18] sm:$0xf]
  %v281 = vld [vmem:[%s0 + $0x1c] sm:$0x1]
  %s282 = scalar_lea.vmem %s1, 128
  %v283 = vld [vmem:[%s282] sm:$0xf]
  %v284 = vld [vmem:[%s282 + $0x4] sm:$0xf]
  %v285 = vld [vmem:[%s282 + $0x8] sm:$0xf]
  %v286 = vld [vmem:[%s282 + $0xc] sm:$0xf]
  %v287 = vld [vmem:[%s282 + $0x10] sm:$0xf]
  %v288 = vld [vmem:[%s282 + $0x14] sm:$0xf]
  %v289 = vld [vmem:[%s282 + $0x18] sm:$0xf]
  %v290 = vld [vmem:[%s282 + $0x1c] sm:$0xf]
  %v291 = vld [vmem:[%s282 + $0x20] sm:$0xf]
  %v292 = vld [vmem:[%s282 + $0x24] sm:$0xf]
  %v293 = vld [vmem:[%s282 + $0x28] sm:$0xf]
  %v294 = vld [vmem:[%s282 + $0x2c] sm:$0xf]
  %v295 = vld [vmem:[%s282 + $0x30] sm:$0xf]
  %v296 = vld [vmem:[%s282 + $0x34] sm:$0xf]
  %v297 = vld [vmem:[%s282 + $0x38] sm:$0xf]
  %v298 = vld [vmem:[%s282 + $0x3c] sm:$0xf]
  %v307 = vunpack.c.l.b16 %v274
  %v308 = vunpack.c.l.b16 %v275
  %v309 = vunpack.c.l.b16 %v276
  %v310 = vunpack.c.l.b16 %v277
  %v311 = vunpack.c.l.b16 %v278
  %v312 = vunpack.c.l.b16 %v279
  %v313 = vunpack.c.l.b16 %v280
  %v314 = vunpack.c.l.b16 %v281
  %v315 = vpack.c.b16 %v308, %v307
  %v316 = vpack.c.b16 %v310, %v309
  %v317 = vpack.c.b16 %v312, %v311
  %v318 = vpack.c.b16 %v314, %v313
  %vm319 = vsmask.f32 7424
  %v321 = vshrl.u32 %v315, 16
  %v323 = vshll.u32 %v315, 16
  %v325 = vrot.slane %v323, 1
  %v326 = vor.u32 %v321, %v325
  %v328 = vshll.u32 %v316, 16
  %v330 = vrot.slane %v328, 1
  %v331 = vsel %vm319, %v326, %v330
  %v332 = vshrl.u32 %v316, 16
  %v334 = vor.u32 %v332, %v330
  %v336 = vshll.u32 %v317, 16
  %v338 = vrot.slane %v336, 1
  %v339 = vsel %vm319, %v334, %v338
  %v340 = vshrl.u32 %v317, 16
  %v342 = vor.u32 %v340, %v338
  %v344 = vshll.u32 %v318, 16
  %v346 = vrot.slane %v344, 1
  %v347 = vsel %vm319, %v342, %v346
  %v348 = vshrl.u32 %v318, 16
  %v350 = vor.u32 %v348, %v346
  %v371 = vunpack.c.l.b16 %v283
  %v372 = vunpack.c.l.b16 %v284
  %v373 = vunpack.c.l.b16 %v285
  %v374 = vunpack.c.l.b16 %v286
  %v375 = vunpack.c.l.b16 %v287
  %v376 = vunpack.c.l.b16 %v288
  %v377 = vunpack.c.l.b16 %v289
  %v378 = vunpack.c.l.b16 %v290
  %v379 = vunpack.c.l.b16 %v291
  %v380 = vunpack.c.l.b16 %v292
  %v381 = vunpack.c.l.b16 %v293
  %v382 = vunpack.c.l.b16 %v294
  %v383 = vunpack.c.l.b16 %v295
  %v384 = vunpack.c.l.b16 %v296
  %v385 = vunpack.c.l.b16 %v297
  %v386 = vunpack.c.l.b16 %v298
  %v387 = vpack.c.b16 %v372, %v371
  %v388 = vpack.c.b16 %v374, %v373
  %v389 = vpack.c.b16 %v376, %v375
  %v390 = vpack.c.b16 %v378, %v377
  %v391 = vpack.c.b16 %v380, %v379
  %v392 = vpack.c.b16 %v382, %v381
  %v393 = vpack.c.b16 %v384, %v383
  %v394 = vpack.c.b16 %v386, %v385
  %403 = vmatpush.bf16.msra.mxu0 %v394
  %404 = vmatpush.bf16.msra.mxu0 %v393
  %405 = vmatpush.bf16.msra.mxu0 %v392
  %406 = vmatpush.bf16.msra.mxu0 %v391
  %407 = vmatpush.bf16.msra.mxu0 %v390
  %408 = vmatpush.bf16.msra.mxu0 %v389
  %409 = vmatpush.bf16.msra.mxu0 %v388
  %410 = vmatpush.bf16.msra.mxu0 %v387
  %411 = vmatmul.bf16.gmra.mxu0 %v331
  %v412 = vpop.f32.mrf.mxu0
  %v413 = vadd.f32 0.0, %v412
  %v414 = vpop.f32.mrf.mxu0
  %v415 = vadd.f32 0.0, %v414
  %416 = vmatmul.bf16.gmra.mxu0 %v339
  %v417 = vpop.f32.mrf.mxu0
  %v418 = vadd.f32 0.0, %v417
  %v419 = vpop.f32.mrf.mxu0
  %v420 = vadd.f32 0.0, %v419
  %421 = vmatmul.bf16.gmra.mxu0 %v347
  %v422 = vpop.f32.mrf.mxu0
  %v423 = vadd.f32 0.0, %v422
  %v424 = vpop.f32.mrf.mxu0
  %v425 = vadd.f32 0.0, %v424
  %426 = vmatmul.bf16.gmra.mxu0 %v350
  %v427 = vpop.f32.mrf.mxu0
  %v428 = vadd.f32 0.0, %v427
  %v429 = vpop.f32.mrf.mxu0
  %430 = vdwg.mxu0
  %v431 = vadd.f32 %v256, %v413
  %v432 = vadd.f32 %v258, %v415
  %v433 = vadd.f32 %v261, %v418
  %v434 = vadd.f32 %v263, %v420
  %v435 = vadd.f32 %v266, %v423
  %v436 = vadd.f32 %v268, %v425
  %v437 = vadd.f32 %v271, %v428
  %v438 = vld [vmem:[%s0 + $0x34] sm:$0x3]
  %s439 = scalar_lea.vmem %s1, 192
  %v440 = vld [vmem:[%s439] sm:$0xf]
  %v441 = vld [vmem:[%s439 + $0x4] sm:$0xf]
  %v442 = vld [vmem:[%s439 + $0x8] sm:$0xf]
  %v443 = vld [vmem:[%s439 + $0xc] sm:$0xf]
  %v444 = vld [vmem:[%s439 + $0x10] sm:$0xf]
  %v445 = vld [vmem:[%s439 + $0x14] sm:$0xf]
  %v446 = vld [vmem:[%s439 + $0x18] sm:$0xf]
  %v447 = vld [vmem:[%s439 + $0x1c] sm:$0xf]
  %v448 = vld [vmem:[%s439 + $0x20] sm:$0xf]
  %v449 = vld [vmem:[%s439 + $0x24] sm:$0xf]
  %v450 = vld [vmem:[%s439 + $0x28] sm:$0xf]
  %v451 = vld [vmem:[%s439 + $0x2c] sm:$0xf]
  %v452 = vld [vmem:[%s439 + $0x30] sm:$0xf]
  %v453 = vld [vmem:[%s439 + $0x34] sm:$0xf]
  %v454 = vld [vmem:[%s439 + $0x38] sm:$0xf]
  %v455 = vld [vmem:[%s439 + $0x3c] sm:$0xf]
  %v457 = vunpack.c.l.b16 %v438
  %v458 = vpack.c.b16 %v457, %v82
  %vm459 = vsmask.f32 6400
  %v461 = vshrl.u32 %v84, 16
  %v463 = vrot.slane %v461, 1
  %v464 = vshll.u32 %v84, 16
  %v466 = vrot.slane %v464, 2
  %v467 = vor.u32 %v463, %v466
  %v469 = vshrl.u32 %v85, 16
  %v471 = vrot.slane %v469, 1
  %v472 = vshll.u32 %v85, 16
  %v474 = vrot.slane %v472, 2
  %v475 = vor.u32 %v471, %v474
  %v476 = vsel %vm459, %v467, %v475
  %v478 = vshrl.u32 %v86, 16
  %v480 = vrot.slane %v478, 1
  %v481 = vshll.u32 %v86, 16
  %v483 = vrot.slane %v481, 2
  %v484 = vor.u32 %v480, %v483
  %v485 = vsel %vm459, %v475, %v484
  %v487 = vshrl.u32 %v458, 16
  %v489 = vrot.slane %v487, 1
  %v490 = vshll.u32 %v458, 16
  %v492 = vrot.slane %v490, 2
  %v493 = vor.u32 %v489, %v492
  %v494 = vsel %vm459, %v484, %v493
  %v515 = vunpack.c.l.b16 %v440
  %v516 = vunpack.c.l.b16 %v441
  %v517 = vunpack.c.l.b16 %v442
  %v518 = vunpack.c.l.b16 %v443
  %v519 = vunpack.c.l.b16 %v444
  %v520 = vunpack.c.l.b16 %v445
  %v521 = vunpack.c.l.b16 %v446
  %v522 = vunpack.c.l.b16 %v447
  %v523 = vunpack.c.l.b16 %v448
  %v524 = vunpack.c.l.b16 %v449
  %v525 = vunpack.c.l.b16 %v450
  %v526 = vunpack.c.l.b16 %v451
  %v527 = vunpack.c.l.b16 %v452
  %v528 = vunpack.c.l.b16 %v453
  %v529 = vunpack.c.l.b16 %v454
  %v530 = vunpack.c.l.b16 %v455
  %v531 = vpack.c.b16 %v516, %v515
  %v532 = vpack.c.b16 %v518, %v517
  %v533 = vpack.c.b16 %v520, %v519
  %v534 = vpack.c.b16 %v522, %v521
  %v535 = vpack.c.b16 %v524, %v523
  %v536 = vpack.c.b16 %v526, %v525
  %v537 = vpack.c.b16 %v528, %v527
  %v538 = vpack.c.b16 %v530, %v529
  %547 = vmatpush.bf16.msra.mxu0 %v538
  %548 = vmatpush.bf16.msra.mxu0 %v537
  %549 = vmatpush.bf16.msra.mxu0 %v536
  %550 = vmatpush.bf16.msra.mxu0 %v535
  %551 = vmatpush.bf16.msra.mxu0 %v534
  %552 = vmatpush.bf16.msra.mxu0 %v533
  %553 = vmatpush.bf16.msra.mxu0 %v532
  %554 = vmatpush.bf16.msra.mxu0 %v531
  %555 = vmatmul.bf16.gmra.mxu0 %v476
  %v556 = vpop.f32.mrf.mxu0
  %v557 = vadd.f32 0.0, %v556
  %v558 = vpop.f32.mrf.mxu0
  %v559 = vadd.f32 0.0, %v558
  %560 = vmatmul.bf16.gmra.mxu0 %v485
  %v561 = vpop.f32.mrf.mxu0
  %v562 = vadd.f32 0.0, %v561
  %v563 = vpop.f32.mrf.mxu0
  %v564 = vadd.f32 0.0, %v563
  %565 = vmatmul.bf16.gmra.mxu0 %v494
  %v566 = vpop.f32.mrf.mxu0
  %v567 = vadd.f32 0.0, %v566
  %v568 = vpop.f32.mrf.mxu0
  %v569 = vadd.f32 0.0, %v568
  %570 = vmatmul.bf16.gmra.mxu0 %v493
  %v571 = vpop.f32.mrf.mxu0
  %v572 = vadd.f32 0.0, %v571
  %v573 = vpop.f32.mrf.mxu0
  %574 = vdwg.mxu0
  %v575 = vadd.f32 %v431, %v557
  %v576 = vadd.f32 %v432, %v559
  %v577 = vadd.f32 %v433, %v562
  %v578 = vadd.f32 %v434, %v564
  %v579 = vadd.f32 %v435, %v567
  %v580 = vadd.f32 %v436, %v569
  %v581 = vadd.f32 %v437, %v572
  %v582 = vld [vmem:[%s0 + $0x30] sm:$0xc]
  %v583 = vld [vmem:[%s0 + $0x34] sm:$0xf]
  %v584 = vld [vmem:[%s0 + $0x38] sm:$0xf]
  %v585 = vld [vmem:[%s0 + $0x3c] sm:$0xf]
  %v586 = vld [vmem:[%s0 + $0x40] sm:$0xf]
  %v587 = vld [vmem:[%s0 + $0x44] sm:$0xf]
  %v588 = vld [vmem:[%s0 + $0x48] sm:$0xf]
  %v589 = vld [vmem:[%s0 + $0x4c] sm:$0x3]
  %s590 = scalar_lea.vmem %s1, 256
  %v591 = vld [vmem:[%s590] sm:$0xf]
  %v592 = vld [vmem:[%s590 + $0x4] sm:$0xf]
  %v593 = vld [vmem:[%s590 + $0x8] sm:$0xf]
  %v594 = vld [vmem:[%s590 + $0xc] sm:$0xf]
  %v595 = vld [vmem:[%s590 + $0x10] sm:$0xf]
  %v596 = vld [vmem:[%s590 + $0x14] sm:$0xf]
  %v597 = vld [vmem:[%s590 + $0x18] sm:$0xf]
  %v598 = vld [vmem:[%s590 + $0x1c] sm:$0xf]
  %v599 = vld [vmem:[%s590 + $0x20] sm:$0xf]
  %v600 = vld [vmem:[%s590 + $0x24] sm:$0xf]
  %v601 = vld [vmem:[%s590 + $0x28] sm:$0xf]
  %v602 = vld [vmem:[%s590 + $0x2c] sm:$0xf]
  %v603 = vld [vmem:[%s590 + $0x30] sm:$0xf]
  %v604 = vld [vmem:[%s590 + $0x34] sm:$0xf]
  %v605 = vld [vmem:[%s590 + $0x38] sm:$0xf]
  %v606 = vld [vmem:[%s590 + $0x3c] sm:$0xf]
  %v615 = vunpack.c.l.b16 %v582
  %v616 = vunpack.c.l.b16 %v583
  %v617 = vunpack.c.l.b16 %v584
  %v618 = vunpack.c.l.b16 %v585
  %v619 = vunpack.c.l.b16 %v586
  %v620 = vunpack.c.l.b16 %v587
  %v621 = vunpack.c.l.b16 %v588
  %v622 = vunpack.c.l.b16 %v589
  %v623 = vpack.c.b16 %v616, %v615
  %v624 = vpack.c.b16 %v618, %v617
  %v625 = vpack.c.b16 %v620, %v619
  %v626 = vpack.c.b16 %v622, %v621
  %vm627 = vcmask 1045504
  %v628 = vrot.slane %v623, 2
  %v629 = vrot.slane %v624, 2
  %v630 = vsel %vm627, %v628, %v629
  %v631 = vrot.slane %v625, 2
  %v632 = vsel %vm627, %v629, %v631
  %v633 = vrot.slane %v626, 2
  %v634 = vsel %vm627, %v631, %v633
  %v655 = vunpack.c.l.b16 %v591
  %v656 = vunpack.c.l.b16 %v592
  %v657 = vunpack.c.l.b16 %v593
  %v658 = vunpack.c.l.b16 %v594
  %v659 = vunpack.c.l.b16 %v595
  %v660 = vunpack.c.l.b16 %v596
  %v661 = vunpack.c.l.b16 %v597
  %v662 = vunpack.c.l.b16 %v598
  %v663 = vunpack.c.l.b16 %v599
  %v664 = vunpack.c.l.b16 %v600
  %v665 = vunpack.c.l.b16 %v601
  %v666 = vunpack.c.l.b16 %v602
  %v667 = vunpack.c.l.b16 %v603
  %v668 = vunpack.c.l.b16 %v604
  %v669 = vunpack.c.l.b16 %v605
  %v670 = vunpack.c.l.b16 %v606
  %v671 = vpack.c.b16 %v656, %v655
  %v672 = vpack.c.b16 %v658, %v657
  %v673 = vpack.c.b16 %v660, %v659
  %v674 = vpack.c.b16 %v662, %v661
  %v675 = vpack.c.b16 %v664, %v663
  %v676 = vpack.c.b16 %v666, %v665
  %v677 = vpack.c.b16 %v668, %v667
  %v678 = vpack.c.b16 %v670, %v669
  %687 = vmatpush.bf16.msra.mxu0 %v678
  %688 = vmatpush.bf16.msra.mxu0 %v677
  %689 = vmatpush.bf16.msra.mxu0 %v676
  %690 = vmatpush.bf16.msra.mxu0 %v675
  %691 = vmatpush.bf16.msra.mxu0 %v674
  %692 = vmatpush.bf16.msra.mxu0 %v673
  %693 = vmatpush.bf16.msra.mxu0 %v672
  %694 = vmatpush.bf16.msra.mxu0 %v671
  %695 = vmatmul.bf16.gmra.mxu0 %v630
  %v696 = vpop.f32.mrf.mxu0
  %v697 = vadd.f32 0.0, %v696
  %v698 = vpop.f32.mrf.mxu0
  %v699 = vadd.f32 0.0, %v698
  %700 = vmatmul.bf16.gmra.mxu0 %v632
  %v701 = vpop.f32.mrf.mxu0
  %v702 = vadd.f32 0.0, %v701
  %v703 = vpop.f32.mrf.mxu0
  %v704 = vadd.f32 0.0, %v703
  %705 = vmatmul.bf16.gmra.mxu0 %v634
  %v706 = vpop.f32.mrf.mxu0
  %v707 = vadd.f32 0.0, %v706
  %v708 = vpop.f32.mrf.mxu0
  %v709 = vadd.f32 0.0, %v708
  %710 = vmatmul.bf16.gmra.mxu0 %v633
  %v711 = vpop.f32.mrf.mxu0
  %v712 = vadd.f32 0.0, %v711
  %v713 = vpop.f32.mrf.mxu0
  %714 = vdwg.mxu0
  %v715 = vadd.f32 %v575, %v697
  %v716 = vadd.f32 %v576, %v699
  %v717 = vadd.f32 %v577, %v702
  %v718 = vadd.f32 %v578, %v704
  %v719 = vadd.f32 %v579, %v707
  %v720 = vadd.f32 %v580, %v709
  %v721 = vadd.f32 %v581, %v712
  %v722 = vld [vmem:[%s0 + $0x48] sm:$0x8]
  %v723 = vld [vmem:[%s0 + $0x4c] sm:$0xf]
  %v724 = vld [vmem:[%s0 + $0x50] sm:$0xf]
  %v725 = vld [vmem:[%s0 + $0x54] sm:$0xf]
  %v726 = vld [vmem:[%s0 + $0x58] sm:$0xf]
  %v727 = vld [vmem:[%s0 + $0x5c] sm:$0xf]
  %v728 = vld [vmem:[%s0 + $0x60] sm:$0xf]
  %v729 = vld [vmem:[%s0 + $0x64] sm:$0x7]
  %s730 = scalar_lea.vmem %s1, 320
  %v731 = vld [vmem:[%s730] sm:$0xf]
  %v732 = vld [vmem:[%s730 + $0x4] sm:$0xf]
  %v733 = vld [vmem:[%s730 + $0x8] sm:$0xf]
  %v734 = vld [vmem:[%s730 + $0xc] sm:$0xf]
  %v735 = vld [vmem:[%s730 + $0x10] sm:$0xf]
  %v736 = vld [vmem:[%s730 + $0x14] sm:$0xf]
  %v737 = vld [vmem:[%s730 + $0x18] sm:$0xf]
  %v738 = vld [vmem:[%s730 + $0x1c] sm:$0xf]
  %v739 = vld [vmem:[%s730 + $0x20] sm:$0xf]
  %v740 = vld [vmem:[%s730 + $0x24] sm:$0xf]
  %v741 = vld [vmem:[%s730 + $0x28] sm:$0xf]
  %v742 = vld [vmem:[%s730 + $0x2c] sm:$0xf]
  %v743 = vld [vmem:[%s730 + $0x30] sm:$0xf]
  %v744 = vld [vmem:[%s730 + $0x34] sm:$0xf]
  %v745 = vld [vmem:[%s730 + $0x38] sm:$0xf]
  %v746 = vld [vmem:[%s730 + $0x3c] sm:$0xf]
  %v755 = vunpack.c.l.b16 %v722
  %v756 = vunpack.c.l.b16 %v723
  %v757 = vunpack.c.l.b16 %v724
  %v758 = vunpack.c.l.b16 %v725
  %v759 = vunpack.c.l.b16 %v726
  %v760 = vunpack.c.l.b16 %v727
  %v761 = vunpack.c.l.b16 %v728
  %v762 = vunpack.c.l.b16 %v729
  %v763 = vpack.c.b16 %v756, %v755
  %v764 = vpack.c.b16 %v758, %v757
  %v765 = vpack.c.b16 %v760, %v759
  %v766 = vpack.c.b16 %v762, %v761
  %vm767 = vcmask 1044480
  %v768 = vrot.slane %v763, 3
  %v769 = vrot.slane %v764, 3
  %v770 = vsel %vm767, %v768, %v769
  %v771 = vrot.slane %v765, 3
  %v772 = vsel %vm767, %v769, %v771
  %v773 = vrot.slane %v766, 3
  %v774 = vsel %vm767, %v771, %v773
  %v795 = vunpack.c.l.b16 %v731
  %v796 = vunpack.c.l.b16 %v732
  %v797 = vunpack.c.l.b16 %v733
  %v798 = vunpack.c.l.b16 %v734
  %v799 = vunpack.c.l.b16 %v735
  %v800 = vunpack.c.l.b16 %v736
  %v801 = vunpack.c.l.b16 %v737
  %v802 = vunpack.c.l.b16 %v738
  %v803 = vunpack.c.l.b16 %v739
  %v804 = vunpack.c.l.b16 %v740
  %v805 = vunpack.c.l.b16 %v741
  %v806 = vunpack.c.l.b16 %v742
  %v807 = vunpack.c.l.b16 %v743
  %v808 = vunpack.c.l.b16 %v744
  %v809 = vunpack.c.l.b16 %v745
  %v810 = vunpack.c.l.b16 %v746
  %v811 = vpack.c.b16 %v796, %v795
  %v812 = vpack.c.b16 %v798, %v797
  %v813 = vpack.c.b16 %v800, %v799
  %v814 = vpack.c.b16 %v802, %v801
  %v815 = vpack.c.b16 %v804, %v803
  %v816 = vpack.c.b16 %v806, %v805
  %v817 = vpack.c.b16 %v808, %v807
  %v818 = vpack.c.b16 %v810, %v809
  %827 = vmatpush.bf16.msra.mxu0 %v818
  %828 = vmatpush.bf16.msra.mxu0 %v817
  %829 = vmatpush.bf16.msra.mxu0 %v816
  %830 = vmatpush.bf16.msra.mxu0 %v815
  %831 = vmatpush.bf16.msra.mxu0 %v814
  %832 = vmatpush.bf16.msra.mxu0 %v813
  %833 = vmatpush.bf16.msra.mxu0 %v812
  %834 = vmatpush.bf16.msra.mxu0 %v811
  %835 = vmatmul.bf16.gmra.mxu0 %v770
  %v836 = vpop.f32.mrf.mxu0
  %v837 = vadd.f32 0.0, %v836
  %v838 = vpop.f32.mrf.mxu0
  %v839 = vadd.f32 0.0, %v838
  %840 = vmatmul.bf16.gmra.mxu0 %v772
  %v841 = vpop.f32.mrf.mxu0
  %v842 = vadd.f32 0.0, %v841
  %v843 = vpop.f32.mrf.mxu0
  %v844 = vadd.f32 0.0, %v843
  %845 = vmatmul.bf16.gmra.mxu0 %v774
  %v846 = vpop.f32.mrf.mxu0
  %v847 = vadd.f32 0.0, %v846
  %v848 = vpop.f32.mrf.mxu0
  %v849 = vadd.f32 0.0, %v848
  %850 = vmatmul.bf16.gmra.mxu0 %v773
  %v851 = vpop.f32.mrf.mxu0
  %v852 = vadd.f32 0.0, %v851
  %v853 = vpop.f32.mrf.mxu0
  %854 = vdwg.mxu0
  %v855 = vadd.f32 %v715, %v837
  %v856 = vadd.f32 %v716, %v839
  %v857 = vadd.f32 %v717, %v842
  %v858 = vadd.f32 %v718, %v844
  %v859 = vadd.f32 %v719, %v847
  %v860 = vadd.f32 %v720, %v849
  %v861 = vadd.f32 %v721, %v852
  %v862 = vld [vmem:[%s0 + $0x4c] sm:$0x7]
  %s863 = scalar_lea.vmem %s1, 384
  %v864 = vld [vmem:[%s863] sm:$0xf]
  %v865 = vld [vmem:[%s863 + $0x4] sm:$0xf]
  %v866 = vld [vmem:[%s863 + $0x8] sm:$0xf]
  %v867 = vld [vmem:[%s863 + $0xc] sm:$0xf]
  %v868 = vld [vmem:[%s863 + $0x10] sm:$0xf]
  %v869 = vld [vmem:[%s863 + $0x14] sm:$0xf]
  %v870 = vld [vmem:[%s863 + $0x18] sm:$0xf]
  %v871 = vld [vmem:[%s863 + $0x1c] sm:$0xf]
  %v872 = vld [vmem:[%s863 + $0x20] sm:$0xf]
  %v873 = vld [vmem:[%s863 + $0x24] sm:$0xf]
  %v874 = vld [vmem:[%s863 + $0x28] sm:$0xf]
  %v875 = vld [vmem:[%s863 + $0x2c] sm:$0xf]
  %v876 = vld [vmem:[%s863 + $0x30] sm:$0xf]
  %v877 = vld [vmem:[%s863 + $0x34] sm:$0xf]
  %v878 = vld [vmem:[%s863 + $0x38] sm:$0xf]
  %v879 = vld [vmem:[%s863 + $0x3c] sm:$0xf]
  %v881 = vunpack.c.l.b16 %v862
  %v882 = vpack.c.b16 %v881, %v621
  %vm883 = vsmask.f32 5376
  %v885 = vshrl.u32 %v623, 16
  %v887 = vrot.slane %v885, 2
  %v888 = vshll.u32 %v623, 16
  %v890 = vrot.slane %v888, 3
  %v891 = vor.u32 %v887, %v890
  %v893 = vshrl.u32 %v624, 16
  %v895 = vrot.slane %v893, 2
  %v896 = vshll.u32 %v624, 16
  %v898 = vrot.slane %v896, 3
  %v899 = vor.u32 %v895, %v898
  %v900 = vsel %vm883, %v891, %v899
  %v902 = vshrl.u32 %v625, 16
  %v904 = vrot.slane %v902, 2
  %v905 = vshll.u32 %v625, 16
  %v907 = vrot.slane %v905, 3
  %v908 = vor.u32 %v904, %v907
  %v909 = vsel %vm883, %v899, %v908
  %v911 = vshrl.u32 %v882, 16
  %v913 = vrot.slane %v911, 2
  %v914 = vshll.u32 %v882, 16
  %v916 = vrot.slane %v914, 3
  %v917 = vor.u32 %v913, %v916
  %v918 = vsel %vm883, %v908, %v917
  %v939 = vunpack.c.l.b16 %v864
  %v940 = vunpack.c.l.b16 %v865
  %v941 = vunpack.c.l.b16 %v866
  %v942 = vunpack.c.l.b16 %v867
  %v943 = vunpack.c.l.b16 %v868
  %v944 = vunpack.c.l.b16 %v869
  %v945 = vunpack.c.l.b16 %v870
  %v946 = vunpack.c.l.b16 %v871
  %v947 = vunpack.c.l.b16 %v872
  %v948 = vunpack.c.l.b16 %v873
  %v949 = vunpack.c.l.b16 %v874
  %v950 = vunpack.c.l.b16 %v875
  %v951 = vunpack.c.l.b16 %v876
  %v952 = vunpack.c.l.b16 %v877
  %v953 = vunpack.c.l.b16 %v878
  %v954 = vunpack.c.l.b16 %v879
  %v955 = vpack.c.b16 %v940, %v939
  %v956 = vpack.c.b16 %v942, %v941
  %v957 = vpack.c.b16 %v944, %v943
  %v958 = vpack.c.b16 %v946, %v945
  %v959 = vpack.c.b16 %v948, %v947
  %v960 = vpack.c.b16 %v950, %v949
  %v961 = vpack.c.b16 %v952, %v951
  %v962 = vpack.c.b16 %v954, %v953
  %971 = vmatpush.bf16.msra.mxu0 %v962
  %972 = vmatpush.bf16.msra.mxu0 %v961
  %973 = vmatpush.bf16.msra.mxu0 %v960
  %974 = vmatpush.bf16.msra.mxu0 %v959
  %975 = vmatpush.bf16.msra.mxu0 %v958
  %976 = vmatpush.bf16.msra.mxu0 %v957
  %977 = vmatpush.bf16.msra.mxu0 %v956
  %978 = vmatpush.bf16.msra.mxu0 %v955
  %979 = vmatmul.bf16.gmra.mxu0 %v900
  %v980 = vpop.f32.mrf.mxu0
  %v981 = vadd.f32 0.0, %v980
  %v982 = vpop.f32.mrf.mxu0
  %v983 = vadd.f32 0.0, %v982
  %984 = vmatmul.bf16.gmra.mxu0 %v909
  %v985 = vpop.f32.mrf.mxu0
  %v986 = vadd.f32 0.0, %v985
  %v987 = vpop.f32.mrf.mxu0
  %v988 = vadd.f32 0.0, %v987
  %989 = vmatmul.bf16.gmra.mxu0 %v918
  %v990 = vpop.f32.mrf.mxu0
  %v991 = vadd.f32 0.0, %v990
  %v992 = vpop.f32.mrf.mxu0
  %v993 = vadd.f32 0.0, %v992
  %994 = vmatmul.bf16.gmra.mxu0 %v917
  %v995 = vpop.f32.mrf.mxu0
  %v996 = vadd.f32 0.0, %v995
  %v997 = vpop.f32.mrf.mxu0
  %998 = vdwg.mxu0
  %v999 = vadd.f32 %v855, %v981
  %v1000 = vadd.f32 %v856, %v983
  %v1001 = vadd.f32 %v857, %v986
  %v1002 = vadd.f32 %v858, %v988
  %v1003 = vadd.f32 %v859, %v991
  %v1004 = vadd.f32 %v860, %v993
  %v1005 = vadd.f32 %v861, %v996
  %v1006 = vld [vmem:[%s0 + $0x64] sm:$0xf]
  %s1007 = scalar_lea.vmem %s1, 448
  %v1008 = vld [vmem:[%s1007] sm:$0xf]
  %v1009 = vld [vmem:[%s1007 + $0x4] sm:$0xf]
  %v1010 = vld [vmem:[%s1007 + $0x8] sm:$0xf]
  %v1011 = vld [vmem:[%s1007 + $0xc] sm:$0xf]
  %v1012 = vld [vmem:[%s1007 + $0x10] sm:$0xf]
  %v1013 = vld [vmem:[%s1007 + $0x14] sm:$0xf]
  %v1014 = vld [vmem:[%s1007 + $0x18] sm:$0xf]
  %v1015 = vld [vmem:[%s1007 + $0x1c] sm:$0xf]
  %v1016 = vld [vmem:[%s1007 + $0x20] sm:$0xf]
  %v1017 = vld [vmem:[%s1007 + $0x24] sm:$0xf]
  %v1018 = vld [vmem:[%s1007 + $0x28] sm:$0xf]
  %v1019 = vld [vmem:[%s1007 + $0x2c] sm:$0xf]
  %v1020 = vld [vmem:[%s1007 + $0x30] sm:$0xf]
  %v1021 = vld [vmem:[%s1007 + $0x34] sm:$0xf]
  %v1022 = vld [vmem:[%s1007 + $0x38] sm:$0xf]
  %v1023 = vld [vmem:[%s1007 + $0x3c] sm:$0xf]
  %v1025 = vunpack.c.l.b16 %v1006
  %v1026 = vpack.c.b16 %v1025, %v761
  %vm1027 = vsmask.f32 4352
  %v1029 = vshrl.u32 %v763, 16
  %v1031 = vrot.slane %v1029, 3
  %v1032 = vshll.u32 %v763, 16
  %v1034 = vrot.slane %v1032, 4
  %v1035 = vor.u32 %v1031, %v1034
  %v1037 = vshrl.u32 %v764, 16
  %v1039 = vrot.slane %v1037, 3
  %v1040 = vshll.u32 %v764, 16
  %v1042 = vrot.slane %v1040, 4
  %v1043 = vor.u32 %v1039, %v1042
  %v1044 = vsel %vm1027, %v1035, %v1043
  %v1046 = vshrl.u32 %v765, 16
  %v1048 = vrot.slane %v1046, 3
  %v1049 = vshll.u32 %v765, 16
  %v1051 = vrot.slane %v1049, 4
  %v1052 = vor.u32 %v1048, %v1051
  %v1053 = vsel %vm1027, %v1043, %v1052
  %v1055 = vshrl.u32 %v1026, 16
  %v1057 = vrot.slane %v1055, 3
  %v1058 = vshll.u32 %v1026, 16
  %v1060 = vrot.slane %v1058, 4
  %v1061 = vor.u32 %v1057, %v1060
  %v1062 = vsel %vm1027, %v1052, %v1061
  %v1083 = vunpack.c.l.b16 %v1008
  %v1084 = vunpack.c.l.b16 %v1009
  %v1085 = vunpack.c.l.b16 %v1010
  %v1086 = vunpack.c.l.b16 %v1011
  %v1087 = vunpack.c.l.b16 %v1012
  %v1088 = vunpack.c.l.b16 %v1013
  %v1089 = vunpack.c.l.b16 %v1014
  %v1090 = vunpack.c.l.b16 %v1015
  %v1091 = vunpack.c.l.b16 %v1016
  %v1092 = vunpack.c.l.b16 %v1017
  %v1093 = vunpack.c.l.b16 %v1018
  %v1094 = vunpack.c.l.b16 %v1019
  %v1095 = vunpack.c.l.b16 %v1020
  %v1096 = vunpack.c.l.b16 %v1021
  %v1097 = vunpack.c.l.b16 %v1022
  %v1098 = vunpack.c.l.b16 %v1023
  %v1099 = vpack.c.b16 %v1084, %v1083
  %v1100 = vpack.c.b16 %v1086, %v1085
  %v1101 = vpack.c.b16 %v1088, %v1087
  %v1102 = vpack.c.b16 %v1090, %v1089
  %v1103 = vpack.c.b16 %v1092, %v1091
  %v1104 = vpack.c.b16 %v1094, %v1093
  %v1105 = vpack.c.b16 %v1096, %v1095
  %v1106 = vpack.c.b16 %v1098, %v1097
  %1115 = vmatpush.bf16.msra.mxu0 %v1106
  %1116 = vmatpush.bf16.msra.mxu0 %v1105
  %1117 = vmatpush.bf16.msra.mxu0 %v1104
  %1118 = vmatpush.bf16.msra.mxu0 %v1103
  %1119 = vmatpush.bf16.msra.mxu0 %v1102
  %1120 = vmatpush.bf16.msra.mxu0 %v1101
  %1121 = vmatpush.bf16.msra.mxu0 %v1100
  %1122 = vmatpush.bf16.msra.mxu0 %v1099
  %1123 = vmatmul.bf16.gmra.mxu0 %v1044
  %v1124 = vpop.f32.mrf.mxu0
  %v1125 = vadd.f32 0.0, %v1124
  %v1126 = vpop.f32.mrf.mxu0
  %v1127 = vadd.f32 0.0, %v1126
  %1128 = vmatmul.bf16.gmra.mxu0 %v1053
  %v1129 = vpop.f32.mrf.mxu0
  %v1130 = vadd.f32 0.0, %v1129
  %v1131 = vpop.f32.mrf.mxu0
  %v1132 = vadd.f32 0.0, %v1131
  %1133 = vmatmul.bf16.gmra.mxu0 %v1062
  %v1134 = vpop.f32.mrf.mxu0
  %v1135 = vadd.f32 0.0, %v1134
  %v1136 = vpop.f32.mrf.mxu0
  %v1137 = vadd.f32 0.0, %v1136
  %1138 = vmatmul.bf16.gmra.mxu0 %v1061
  %v1139 = vpop.f32.mrf.mxu0
  %v1140 = vadd.f32 0.0, %v1139
  %v1141 = vpop.f32.mrf.mxu0
  %1142 = vdwg.mxu0
  %v1143 = vadd.f32 %v999, %v1125
  %v1144 = vadd.f32 %v1000, %v1127
  %v1145 = vadd.f32 %v1001, %v1130
  %v1146 = vadd.f32 %v1002, %v1132
  %v1147 = vadd.f32 %v1003, %v1135
  %v1148 = vadd.f32 %v1004, %v1137
  %v1149 = vadd.f32 %v1005, %v1140
  %v1150 = vld [vmem:[%s0] sm:$0xc]
  %v1151 = vld [vmem:[%s0 + $0x1c] sm:$0x7]
  %s1152 = scalar_lea.vmem %s1, 512
  %v1153 = vld [vmem:[%s1152] sm:$0xf]
  %v1154 = vld [vmem:[%s1152 + $0x4] sm:$0xf]
  %v1155 = vld [vmem:[%s1152 + $0x8] sm:$0xf]
  %v1156 = vld [vmem:[%s1152 + $0xc] sm:$0xf]
  %v1157 = vld [vmem:[%s1152 + $0x10] sm:$0xf]
  %v1158 = vld [vmem:[%s1152 + $0x14] sm:$0xf]
  %v1159 = vld [vmem:[%s1152 + $0x18] sm:$0xf]
  %v1160 = vld [vmem:[%s1152 + $0x1c] sm:$0xf]
  %v1161 = vld [vmem:[%s1152 + $0x20] sm:$0xf]
  %v1162 = vld [vmem:[%s1152 + $0x24] sm:$0xf]
  %v1163 = vld [vmem:[%s1152 + $0x28] sm:$0xf]
  %v1164 = vld [vmem:[%s1152 + $0x2c] sm:$0xf]
  %v1165 = vld [vmem:[%s1152 + $0x30] sm:$0xf]
  %v1166 = vld [vmem:[%s1152 + $0x34] sm:$0xf]
  %v1167 = vld [vmem:[%s1152 + $0x38] sm:$0xf]
  %v1168 = vld [vmem:[%s1152 + $0x3c] sm:$0xf]
  %v1171 = vunpack.c.l.b16 %v1150
  %v1172 = vunpack.c.l.b16 %v1151
  %v1173 = vpack.c.b16 %v308, %v1171
  %v1174 = vpack.c.b16 %v1172, %v313
  %v1176 = vshrl.u32 %v1173, 16
  %v1178 = vrot.slane %v1176, 2
  %v1179 = vshll.u32 %v1173, 16
  %v1181 = vrot.slane %v1179, 3
  %v1182 = vor.u32 %v1178, %v1181
  %v1183 = vrot.slane %v332, 2
  %v1184 = vrot.slane %v328, 3
  %v1185 = vor.u32 %v1183, %v1184
  %v1186 = vsel %vm883, %v1182, %v1185
  %v1187 = vrot.slane %v340, 2
  %v1188 = vrot.slane %v336, 3
  %v1189 = vor.u32 %v1187, %v1188
  %v1190 = vsel %vm883, %v1185, %v1189
  %v1192 = vshrl.u32 %v1174, 16
  %v1194 = vrot.slane %v1192, 2
  %v1195 = vshll.u32 %v1174, 16
  %v1197 = vrot.slane %v1195, 3
  %v1198 = vor.u32 %v1194, %v1197
  %v1199 = vsel %vm883, %v1189, %v1198
  %v1220 = vunpack.c.l.b16 %v1153
  %v1221 = vunpack.c.l.b16 %v1154
  %v1222 = vunpack.c.l.b16 %v1155
  %v1223 = vunpack.c.l.b16 %v1156
  %v1224 = vunpack.c.l.b16 %v1157
  %v1225 = vunpack.c.l.b16 %v1158
  %v1226 = vunpack.c.l.b16 %v1159
  %v1227 = vunpack.c.l.b16 %v1160
  %v1228 = vunpack.c.l.b16 %v1161
  %v1229 = vunpack.c.l.b16 %v1162
  %v1230 = vunpack.c.l.b16 %v1163
  %v1231 = vunpack.c.l.b16 %v1164
  %v1232 = vunpack.c.l.b16 %v1165
  %v1233 = vunpack.c.l.b16 %v1166
  %v1234 = vunpack.c.l.b16 %v1167
  %v1235 = vunpack.c.l.b16 %v1168
  %v1236 = vpack.c.b16 %v1221, %v1220
  %v1237 = vpack.c.b16 %v1223, %v1222
  %v1238 = vpack.c.b16 %v1225, %v1224
  %v1239 = vpack.c.b16 %v1227, %v1226
  %v1240 = vpack.c.b16 %v1229, %v1228
  %v1241 = vpack.c.b16 %v1231, %v1230
  %v1242 = vpack.c.b16 %v1233, %v1232
  %v1243 = vpack.c.b16 %v1235, %v1234
  %1252 = vmatpush.bf16.msra.mxu0 %v1243
  %1253 = vmatpush.bf16.msra.mxu0 %v1242
  %1254 = vmatpush.bf16.msra.mxu0 %v1241
  %1255 = vmatpush.bf16.msra.mxu0 %v1240
  %1256 = vmatpush.bf16.msra.mxu0 %v1239
  %1257 = vmatpush.bf16.msra.mxu0 %v1238
  %1258 = vmatpush.bf16.msra.mxu0 %v1237
  %1259 = vmatpush.bf16.msra.mxu0 %v1236
  %1260 = vmatmul.bf16.gmra.mxu0 %v1186
  %v1261 = vpop.f32.mrf.mxu0
  %v1262 = vadd.f32 0.0, %v1261
  %v1263 = vpop.f32.mrf.mxu0
  %v1264 = vadd.f32 0.0, %v1263
  %1265 = vmatmul.bf16.gmra.mxu0 %v1190
  %v1266 = vpop.f32.mrf.mxu0
  %v1267 = vadd.f32 0.0, %v1266
  %v1268 = vpop.f32.mrf.mxu0
  %v1269 = vadd.f32 0.0, %v1268
  %1270 = vmatmul.bf16.gmra.mxu0 %v1199
  %v1271 = vpop.f32.mrf.mxu0
  %v1272 = vadd.f32 0.0, %v1271
  %v1273 = vpop.f32.mrf.mxu0
  %v1274 = vadd.f32 0.0, %v1273
  %1275 = vmatmul.bf16.gmra.mxu0 %v1198
  %v1276 = vpop.f32.mrf.mxu0
  %v1277 = vadd.f32 0.0, %v1276
  %v1278 = vpop.f32.mrf.mxu0
  %1279 = vdwg.mxu0
  %v1280 = vadd.f32 %v1143, %v1262
  %v1281 = vadd.f32 %v1144, %v1264
  %v1282 = vadd.f32 %v1145, %v1267
  %v1283 = vadd.f32 %v1146, %v1269
  %v1284 = vadd.f32 %v1147, %v1272
  %v1285 = vadd.f32 %v1148, %v1274
  %v1286 = vadd.f32 %v1149, %v1277
  %v1287 = vld [vmem:[%s0 + $0x18] sm:$0x8]
  %v1288 = vld [vmem:[%s0 + $0x34] sm:$0xf]
  %s1289 = scalar_lea.vmem %s1, 576
  %v1290 = vld [vmem:[%s1289] sm:$0xf]
  %v1291 = vld [vmem:[%s1289 + $0x4] sm:$0xf]
  %v1292 = vld [vmem:[%s1289 + $0x8] sm:$0xf]
  %v1293 = vld [vmem:[%s1289 + $0xc] sm:$0xf]
  %v1294 = vld [vmem:[%s1289 + $0x10] sm:$0xf]
  %v1295 = vld [vmem:[%s1289 + $0x14] sm:$0xf]
  %v1296 = vld [vmem:[%s1289 + $0x18] sm:$0xf]
  %v1297 = vld [vmem:[%s1289 + $0x1c] sm:$0xf]
  %v1298 = vld [vmem:[%s1289 + $0x20] sm:$0xf]
  %v1299 = vld [vmem:[%s1289 + $0x24] sm:$0xf]
  %v1300 = vld [vmem:[%s1289 + $0x28] sm:$0xf]
  %v1301 = vld [vmem:[%s1289 + $0x2c] sm:$0xf]
  %v1302 = vld [vmem:[%s1289 + $0x30] sm:$0xf]
  %v1303 = vld [vmem:[%s1289 + $0x34] sm:$0xf]
  %v1304 = vld [vmem:[%s1289 + $0x38] sm:$0xf]
  %v1305 = vld [vmem:[%s1289 + $0x3c] sm:$0xf]
  %v1308 = vunpack.c.l.b16 %v1287
  %v1309 = vunpack.c.l.b16 %v1288
  %v1310 = vpack.c.b16 %v77, %v1308
  %v1311 = vpack.c.b16 %v1309, %v82
  %v1313 = vshrl.u32 %v1310, 16
  %v1315 = vrot.slane %v1313, 3
  %v1316 = vshll.u32 %v1310, 16
  %v1318 = vrot.slane %v1316, 4
  %v1319 = vor.u32 %v1315, %v1318
  %v1320 = vrot.slane %v469, 3
  %v1321 = vrot.slane %v472, 4
  %v1322 = vor.u32 %v1320, %v1321
  %v1323 = vsel %vm1027, %v1319, %v1322
  %v1324 = vrot.slane %v478, 3
  %v1325 = vrot.slane %v481, 4
  %v1326 = vor.u32 %v1324, %v1325
  %v1327 = vsel %vm1027, %v1322, %v1326
  %v1329 = vshrl.u32 %v1311, 16
  %v1331 = vrot.slane %v1329, 3
  %v1332 = vshll.u32 %v1311, 16
  %v1334 = vrot.slane %v1332, 4
  %v1335 = vor.u32 %v1331, %v1334
  %v1336 = vsel %vm1027, %v1326, %v1335
  %v1357 = vunpack.c.l.b16 %v1290
  %v1358 = vunpack.c.l.b16 %v1291
  %v1359 = vunpack.c.l.b16 %v1292
  %v1360 = vunpack.c.l.b16 %v1293
  %v1361 = vunpack.c.l.b16 %v1294
  %v1362 = vunpack.c.l.b16 %v1295
  %v1363 = vunpack.c.l.b16 %v1296
  %v1364 = vunpack.c.l.b16 %v1297
  %v1365 = vunpack.c.l.b16 %v1298
  %v1366 = vunpack.c.l.b16 %v1299
  %v1367 = vunpack.c.l.b16 %v1300
  %v1368 = vunpack.c.l.b16 %v1301
  %v1369 = vunpack.c.l.b16 %v1302
  %v1370 = vunpack.c.l.b16 %v1303
  %v1371 = vunpack.c.l.b16 %v1304
  %v1372 = vunpack.c.l.b16 %v1305
  %v1373 = vpack.c.b16 %v1358, %v1357
  %v1374 = vpack.c.b16 %v1360, %v1359
  %v1375 = vpack.c.b16 %v1362, %v1361
  %v1376 = vpack.c.b16 %v1364, %v1363
  %v1377 = vpack.c.b16 %v1366, %v1365
  %v1378 = vpack.c.b16 %v1368, %v1367
  %v1379 = vpack.c.b16 %v1370, %v1369
  %v1380 = vpack.c.b16 %v1372, %v1371
  %1389 = vmatpush.bf16.msra.mxu0 %v1380
  %1390 = vmatpush.bf16.msra.mxu0 %v1379
  %1391 = vmatpush.bf16.msra.mxu0 %v1378
  %1392 = vmatpush.bf16.msra.mxu0 %v1377
  %1393 = vmatpush.bf16.msra.mxu0 %v1376
  %1394 = vmatpush.bf16.msra.mxu0 %v1375
  %1395 = vmatpush.bf16.msra.mxu0 %v1374
  %1396 = vmatpush.bf16.msra.mxu0 %v1373
  %1397 = vmatmul.bf16.gmra.mxu0 %v1323
  %v1398 = vpop.f32.mrf.mxu0
  %v1399 = vadd.f32 0.0, %v1398
  %v1400 = vpop.f32.mrf.mxu0
  %v1401 = vadd.f32 0.0, %v1400
  %1402 = vmatmul.bf16.gmra.mxu0 %v1327
  %v1403 = vpop.f32.mrf.mxu0
  %v1404 = vadd.f32 0.0, %v1403
  %v1405 = vpop.f32.mrf.mxu0
  %v1406 = vadd.f32 0.0, %v1405
  %1407 = vmatmul.bf16.gmra.mxu0 %v1336
  %v1408 = vpop.f32.mrf.mxu0
  %v1409 = vadd.f32 0.0, %v1408
  %v1410 = vpop.f32.mrf.mxu0
  %v1411 = vadd.f32 0.0, %v1410
  %1412 = vmatmul.bf16.gmra.mxu0 %v1335
  %v1413 = vpop.f32.mrf.mxu0
  %v1414 = vadd.f32 0.0, %v1413
  %v1415 = vpop.f32.mrf.mxu0
  %1416 = vdwg.mxu0
  %v1417 = vadd.f32 %v1280, %v1399
  %v1418 = vadd.f32 %v1281, %v1401
  %v1419 = vadd.f32 %v1282, %v1404
  %v1420 = vadd.f32 %v1283, %v1406
  %v1421 = vadd.f32 %v1284, %v1409
  %v1422 = vadd.f32 %v1285, %v1411
  %v1423 = vadd.f32 %v1286, %v1414
  %v1424 = vld [vmem:[%s0] sm:$0x8]
  %s1425 = scalar_lea.vmem %s1, 640
  %v1426 = vld [vmem:[%s1425] sm:$0xf]
  %v1427 = vld [vmem:[%s1425 + $0x4] sm:$0xf]
  %v1428 = vld [vmem:[%s1425 + $0x8] sm:$0xf]
  %v1429 = vld [vmem:[%s1425 + $0xc] sm:$0xf]
  %v1430 = vld [vmem:[%s1425 + $0x10] sm:$0xf]
  %v1431 = vld [vmem:[%s1425 + $0x14] sm:$0xf]
  %v1432 = vld [vmem:[%s1425 + $0x18] sm:$0xf]
  %v1433 = vld [vmem:[%s1425 + $0x1c] sm:$0xf]
  %v1434 = vld [vmem:[%s1425 + $0x20] sm:$0xf]
  %v1435 = vld [vmem:[%s1425 + $0x24] sm:$0xf]
  %v1436 = vld [vmem:[%s1425 + $0x28] sm:$0xf]
  %v1437 = vld [vmem:[%s1425 + $0x2c] sm:$0xf]
  %v1438 = vld [vmem:[%s1425 + $0x30] sm:$0xf]
  %v1439 = vld [vmem:[%s1425 + $0x34] sm:$0xf]
  %v1440 = vld [vmem:[%s1425 + $0x38] sm:$0xf]
  %v1441 = vld [vmem:[%s1425 + $0x3c] sm:$0xf]
  %v1443 = vunpack.c.l.b16 %v1424
  %v1444 = vpack.c.b16 %v308, %v1443
  %v1445 = vrot.slane %v1444, 3
  %v1446 = vrot.slane %v316, 3
  %v1447 = vsel %vm767, %v1445, %v1446
  %v1448 = vrot.slane %v317, 3
  %v1449 = vsel %vm767, %v1446, %v1448
  %v1450 = vrot.slane %v1174, 3
  %v1451 = vsel %vm767, %v1448, %v1450
  %v1472 = vunpack.c.l.b16 %v1426
  %v1473 = vunpack.c.l.b16 %v1427
  %v1474 = vunpack.c.l.b16 %v1428
  %v1475 = vunpack.c.l.b16 %v1429
  %v1476 = vunpack.c.l.b16 %v1430
  %v1477 = vunpack.c.l.b16 %v1431
  %v1478 = vunpack.c.l.b16 %v1432
  %v1479 = vunpack.c.l.b16 %v1433
  %v1480 = vunpack.c.l.b16 %v1434
  %v1481 = vunpack.c.l.b16 %v1435
  %v1482 = vunpack.c.l.b16 %v1436
  %v1483 = vunpack.c.l.b16 %v1437
  %v1484 = vunpack.c.l.b16 %v1438
  %v1485 = vunpack.c.l.b16 %v1439
  %v1486 = vunpack.c.l.b16 %v1440
  %v1487 = vunpack.c.l.b16 %v1441
  %v1488 = vpack.c.b16 %v1473, %v1472
  %v1489 = vpack.c.b16 %v1475, %v1474
  %v1490 = vpack.c.b16 %v1477, %v1476
  %v1491 = vpack.c.b16 %v1479, %v1478
  %v1492 = vpack.c.b16 %v1481, %v1480
  %v1493 = vpack.c.b16 %v1483, %v1482
  %v1494 = vpack.c.b16 %v1485, %v1484
  %v1495 = vpack.c.b16 %v1487, %v1486
  %1504 = vmatpush.bf16.msra.mxu0 %v1495
  %1505 = vmatpush.bf16.msra.mxu0 %v1494
  %1506 = vmatpush.bf16.msra.mxu0 %v1493
  %1507 = vmatpush.bf16.msra.mxu0 %v1492
  %1508 = vmatpush.bf16.msra.mxu0 %v1491
  %1509 = vmatpush.bf16.msra.mxu0 %v1490
  %1510 = vmatpush.bf16.msra.mxu0 %v1489
  %1511 = vmatpush.bf16.msra.mxu0 %v1488
  %1512 = vmatmul.bf16.gmra.mxu0 %v1447
  %v1513 = vpop.f32.mrf.mxu0
  %v1514 = vadd.f32 0.0, %v1513
  %v1515 = vpop.f32.mrf.mxu0
  %v1516 = vadd.f32 0.0, %v1515
  %1517 = vmatmul.bf16.gmra.mxu0 %v1449
  %v1518 = vpop.f32.mrf.mxu0
  %v1519 = vadd.f32 0.0, %v1518
  %v1520 = vpop.f32.mrf.mxu0
  %v1521 = vadd.f32 0.0, %v1520
  %1522 = vmatmul.bf16.gmra.mxu0 %v1451
  %v1523 = vpop.f32.mrf.mxu0
  %v1524 = vadd.f32 0.0, %v1523
  %v1525 = vpop.f32.mrf.mxu0
  %v1526 = vadd.f32 0.0, %v1525
  %1527 = vmatmul.bf16.gmra.mxu0 %v1450
  %v1528 = vpop.f32.mrf.mxu0
  %v1529 = vadd.f32 0.0, %v1528
  %v1530 = vpop.f32.mrf.mxu0
  %1531 = vdwg.mxu0
  %v1532 = vadd.f32 %v1417, %v1514
  %v1533 = vadd.f32 %v1418, %v1516
  %v1534 = vadd.f32 %v1419, %v1519
  %v1535 = vadd.f32 %v1420, %v1521
  %v1536 = vadd.f32 %v1421, %v1524
  %v1537 = vadd.f32 %v1422, %v1526
  %v1538 = vadd.f32 %v1423, %v1529
  %s1539 = scalar_lea.vmem %s1, 704
  %v1540 = vld [vmem:[%s1539] sm:$0xf]
  %v1541 = vld [vmem:[%s1539 + $0x4] sm:$0xf]
  %v1542 = vld [vmem:[%s1539 + $0x8] sm:$0xf]
  %v1543 = vld [vmem:[%s1539 + $0xc] sm:$0xf]
  %v1544 = vld [vmem:[%s1539 + $0x10] sm:$0xf]
  %v1545 = vld [vmem:[%s1539 + $0x14] sm:$0xf]
  %v1546 = vld [vmem:[%s1539 + $0x18] sm:$0xf]
  %v1547 = vld [vmem:[%s1539 + $0x1c] sm:$0xf]
  %v1548 = vld [vmem:[%s1539 + $0x20] sm:$0xf]
  %v1549 = vld [vmem:[%s1539 + $0x24] sm:$0xf]
  %v1550 = vld [vmem:[%s1539 + $0x28] sm:$0xf]
  %v1551 = vld [vmem:[%s1539 + $0x2c] sm:$0xf]
  %v1552 = vld [vmem:[%s1539 + $0x30] sm:$0xf]
  %v1553 = vld [vmem:[%s1539 + $0x34] sm:$0xf]
  %v1554 = vld [vmem:[%s1539 + $0x38] sm:$0xf]
  %v1555 = vld [vmem:[%s1539 + $0x3c] sm:$0xf]
  %v1556 = vpack.c.b16 %v78, %v77
  %v1557 = vpack.c.b16 %v80, %v79
  %v1558 = vpack.c.b16 %v82, %v81
  %v1559 = vpack.c.b16 %v1309, %v1309
  %v1580 = vunpack.c.l.b16 %v1540
  %v1581 = vunpack.c.l.b16 %v1541
  %v1582 = vunpack.c.l.b16 %v1542
  %v1583 = vunpack.c.l.b16 %v1543
  %v1584 = vunpack.c.l.b16 %v1544
  %v1585 = vunpack.c.l.b16 %v1545
  %v1586 = vunpack.c.l.b16 %v1546
  %v1587 = vunpack.c.l.b16 %v1547
  %v1588 = vunpack.c.l.b16 %v1548
  %v1589 = vunpack.c.l.b16 %v1549
  %v1590 = vunpack.c.l.b16 %v1550
  %v1591 = vunpack.c.l.b16 %v1551
  %v1592 = vunpack.c.l.b16 %v1552
  %v1593 = vunpack.c.l.b16 %v1553
  %v1594 = vunpack.c.l.b16 %v1554
  %v1595 = vunpack.c.l.b16 %v1555
  %v1596 = vpack.c.b16 %v1581, %v1580
  %v1597 = vpack.c.b16 %v1583, %v1582
  %v1598 = vpack.c.b16 %v1585, %v1584
  %v1599 = vpack.c.b16 %v1587, %v1586
  %v1600 = vpack.c.b16 %v1589, %v1588
  %v1601 = vpack.c.b16 %v1591, %v1590
  %v1602 = vpack.c.b16 %v1593, %v1592
  %v1603 = vpack.c.b16 %v1595, %v1594
  %1612 = vmatpush.bf16.msra.mxu0 %v1603
  %1613 = vmatpush.bf16.msra.mxu0 %v1602
  %1614 = vmatpush.bf16.msra.mxu0 %v1601
  %1615 = vmatpush.bf16.msra.mxu0 %v1600
  %1616 = vmatpush.bf16.msra.mxu0 %v1599
  %1617 = vmatpush.bf16.msra.mxu0 %v1598
  %1618 = vmatpush.bf16.msra.mxu0 %v1597
  %1619 = vmatpush.bf16.msra.mxu0 %v1596
  %1620 = vmatmul.bf16.gmra.mxu0 %v1556
  %v1621 = vpop.f32.mrf.mxu0
  %v1622 = vadd.f32 0.0, %v1621
  %v1623 = vpop.f32.mrf.mxu0
  %v1624 = vadd.f32 0.0, %v1623
  %1625 = vmatmul.bf16.gmra.mxu0 %v1557
  %v1626 = vpop.f32.mrf.mxu0
  %v1627 = vadd.f32 0.0, %v1626
  %v1628 = vpop.f32.mrf.mxu0
  %v1629 = vadd.f32 0.0, %v1628
  %1630 = vmatmul.bf16.gmra.mxu0 %v1558
  %v1631 = vpop.f32.mrf.mxu0
  %v1632 = vadd.f32 0.0, %v1631
  %v1633 = vpop.f32.mrf.mxu0
  %v1634 = vadd.f32 0.0, %v1633
  %1635 = vmatmul.bf16.gmra.mxu0 %v1559
  %v1636 = vpop.f32.mrf.mxu0
  %v1637 = vadd.f32 0.0, %v1636
  %v1638 = vpop.f32.mrf.mxu0
  %1639 = vdwg.mxu0
  %v1640 = vadd.f32 %v1532, %v1622
  %v1641 = vadd.f32 %v1533, %v1624
  %v1642 = vadd.f32 %v1534, %v1627
  %v1643 = vadd.f32 %v1535, %v1629
  %v1644 = vadd.f32 %v1536, %v1632
  %v1645 = vadd.f32 %v1537, %v1634
  %v1646 = vadd.f32 %v1538, %v1637
  %v1647 = vld [vmem:[%s0 + $0x34] sm:$0xf]
  %v1648 = vld [vmem:[%s0 + $0x38] sm:$0xf]
  %v1649 = vld [vmem:[%s0 + $0x3c] sm:$0xf]
  %v1650 = vld [vmem:[%s0 + $0x40] sm:$0xf]
  %v1651 = vld [vmem:[%s0 + $0x44] sm:$0xf]
  %v1652 = vld [vmem:[%s0 + $0x48] sm:$0xf]
  %v1653 = vld [vmem:[%s0 + $0x4c] sm:$0xf]
  %v1654 = vld [vmem:[%s0 + $0x50] sm:$0x1]
  %s1655 = scalar_lea.vmem %s1, 768
  %v1656 = vld [vmem:[%s1655] sm:$0xf]
  %v1657 = vld [vmem:[%s1655 + $0x4] sm:$0xf]
  %v1658 = vld [vmem:[%s1655 + $0x8] sm:$0xf]
  %v1659 = vld [vmem:[%s1655 + $0xc] sm:$0xf]
  %v1660 = vld [vmem:[%s1655 + $0x10] sm:$0xf]
  %v1661 = vld [vmem:[%s1655 + $0x14] sm:$0xf]
  %v1662 = vld [vmem:[%s1655 + $0x18] sm:$0xf]
  %v1663 = vld [vmem:[%s1655 + $0x1c] sm:$0xf]
  %v1664 = vld [vmem:[%s1655 + $0x20] sm:$0xf]
  %v1665 = vld [vmem:[%s1655 + $0x24] sm:$0xf]
  %v1666 = vld [vmem:[%s1655 + $0x28] sm:$0xf]
  %v1667 = vld [vmem:[%s1655 + $0x2c] sm:$0xf]
  %v1668 = vld [vmem:[%s1655 + $0x30] sm:$0xf]
  %v1669 = vld [vmem:[%s1655 + $0x34] sm:$0xf]
  %v1670 = vld [vmem:[%s1655 + $0x38] sm:$0xf]
  %v1671 = vld [vmem:[%s1655 + $0x3c] sm:$0xf]
  %v1680 = vunpack.c.l.b16 %v1647
  %v1681 = vunpack.c.l.b16 %v1648
  %v1682 = vunpack.c.l.b16 %v1649
  %v1683 = vunpack.c.l.b16 %v1650
  %v1684 = vunpack.c.l.b16 %v1651
  %v1685 = vunpack.c.l.b16 %v1652
  %v1686 = vunpack.c.l.b16 %v1653
  %v1687 = vunpack.c.l.b16 %v1654
  %v1688 = vpack.c.b16 %v1681, %v1680
  %v1689 = vpack.c.b16 %v1683, %v1682
  %v1690 = vpack.c.b16 %v1685, %v1684
  %v1691 = vpack.c.b16 %v1687, %v1686
  %v1693 = vshrl.u32 %v1688, 16
  %v1695 = vshll.u32 %v1688, 16
  %v1697 = vrot.slane %v1695, 1
  %v1698 = vor.u32 %v1693, %v1697
  %v1700 = vshll.u32 %v1689, 16
  %v1702 = vrot.slane %v1700, 1
  %v1703 = vsel %vm319, %v1698, %v1702
  %v1704 = vshrl.u32 %v1689, 16
  %v1706 = vor.u32 %v1704, %v1702
  %v1708 = vshll.u32 %v1690, 16
  %v1710 = vrot.slane %v1708, 1
  %v1711 = vsel %vm319, %v1706, %v1710
  %v1712 = vshrl.u32 %v1690, 16
  %v1714 = vor.u32 %v1712, %v1710
  %v1716 = vshll.u32 %v1691, 16
  %v1718 = vrot.slane %v1716, 1
  %v1719 = vsel %vm319, %v1714, %v1718
  %v1720 = vshrl.u32 %v1691, 16
  %v1722 = vor.u32 %v1720, %v1718
  %v1743 = vunpack.c.l.b16 %v1656
  %v1744 = vunpack.c.l.b16 %v1657
  %v1745 = vunpack.c.l.b16 %v1658
  %v1746 = vunpack.c.l.b16 %v1659
  %v1747 = vunpack.c.l.b16 %v1660
  %v1748 = vunpack.c.l.b16 %v1661
  %v1749 = vunpack.c.l.b16 %v1662
  %v1750 = vunpack.c.l.b16 %v1663
  %v1751 = vunpack.c.l.b16 %v1664
  %v1752 = vunpack.c.l.b16 %v1665
  %v1753 = vunpack.c.l.b16 %v1666
  %v1754 = vunpack.c.l.b16 %v1667
  %v1755 = vunpack.c.l.b16 %v1668
  %v1756 = vunpack.c.l.b16 %v1669
  %v1757 = vunpack.c.l.b16 %v1670
  %v1758 = vunpack.c.l.b16 %v1671
  %v1759 = vpack.c.b16 %v1744, %v1743
  %v1760 = vpack.c.b16 %v1746, %v1745
  %v1761 = vpack.c.b16 %v1748, %v1747
  %v1762 = vpack.c.b16 %v1750, %v1749
  %v1763 = vpack.c.b16 %v1752, %v1751
  %v1764 = vpack.c.b16 %v1754, %v1753
  %v1765 = vpack.c.b16 %v1756, %v1755
  %v1766 = vpack.c.b16 %v1758, %v1757
  %1775 = vmatpush.bf16.msra.mxu0 %v1766
  %1776 = vmatpush.bf16.msra.mxu0 %v1765
  %1777 = vmatpush.bf16.msra.mxu0 %v1764
  %1778 = vmatpush.bf16.msra.mxu0 %v1763
  %1779 = vmatpush.bf16.msra.mxu0 %v1762
  %1780 = vmatpush.bf16.msra.mxu0 %v1761
  %1781 = vmatpush.bf16.msra.mxu0 %v1760
  %1782 = vmatpush.bf16.msra.mxu0 %v1759
  %1783 = vmatmul.bf16.gmra.mxu0 %v1703
  %v1784 = vpop.f32.mrf.mxu0
  %v1785 = vadd.f32 0.0, %v1784
  %v1786 = vpop.f32.mrf.mxu0
  %v1787 = vadd.f32 0.0, %v1786
  %1788 = vmatmul.bf16.gmra.mxu0 %v1711
  %v1789 = vpop.f32.mrf.mxu0
  %v1790 = vadd.f32 0.0, %v1789
  %v1791 = vpop.f32.mrf.mxu0
  %v1792 = vadd.f32 0.0, %v1791
  %1793 = vmatmul.bf16.gmra.mxu0 %v1719
  %v1794 = vpop.f32.mrf.mxu0
  %v1795 = vadd.f32 0.0, %v1794
  %v1796 = vpop.f32.mrf.mxu0
  %v1797 = vadd.f32 0.0, %v1796
  %1798 = vmatmul.bf16.gmra.mxu0 %v1722
  %v1799 = vpop.f32.mrf.mxu0
  %v1800 = vadd.f32 0.0, %v1799
  %v1801 = vpop.f32.mrf.mxu0
  %1802 = vdwg.mxu0
  %v1803 = vadd.f32 %v1640, %v1785
  %v1804 = vadd.f32 %v1641, %v1787
  %v1805 = vadd.f32 %v1642, %v1790
  %v1806 = vadd.f32 %v1643, %v1792
  %v1807 = vadd.f32 %v1644, %v1795
  %v1808 = vadd.f32 %v1645, %v1797
  %v1809 = vadd.f32 %v1646, %v1800
  %v1810 = vld [vmem:[%s0 + $0x4c] sm:$0xe]
  %v1811 = vld [vmem:[%s0 + $0x50] sm:$0xf]
  %v1812 = vld [vmem:[%s0 + $0x54] sm:$0xf]
  %v1813 = vld [vmem:[%s0 + $0x58] sm:$0xf]
  %v1814 = vld [vmem:[%s0 + $0x5c] sm:$0xf]
  %v1815 = vld [vmem:[%s0 + $0x60] sm:$0xf]
  %v1816 = vld [vmem:[%s0 + $0x64] sm:$0xf]
  %v1817 = vld [vmem:[%s0 + $0x68] sm:$0x3]
  %s1818 = scalar_lea.vmem %s1, 832
  %v1819 = vld [vmem:[%s1818] sm:$0xf]
  %v1820 = vld [vmem:[%s1818 + $0x4] sm:$0xf]
  %v1821 = vld [vmem:[%s1818 + $0x8] sm:$0xf]
  %v1822 = vld [vmem:[%s1818 + $0xc] sm:$0xf]
  %v1823 = vld [vmem:[%s1818 + $0x10] sm:$0xf]
  %v1824 = vld [vmem:[%s1818 + $0x14] sm:$0xf]
  %v1825 = vld [vmem:[%s1818 + $0x18] sm:$0xf]
  %v1826 = vld [vmem:[%s1818 + $0x1c] sm:$0xf]
  %v1827 = vld [vmem:[%s1818 + $0x20] sm:$0xf]
  %v1828 = vld [vmem:[%s1818 + $0x24] sm:$0xf]
  %v1829 = vld [vmem:[%s1818 + $0x28] sm:$0xf]
  %v1830 = vld [vmem:[%s1818 + $0x2c] sm:$0xf]
  %v1831 = vld [vmem:[%s1818 + $0x30] sm:$0xf]
  %v1832 = vld [vmem:[%s1818 + $0x34] sm:$0xf]
  %v1833 = vld [vmem:[%s1818 + $0x38] sm:$0xf]
  %v1834 = vld [vmem:[%s1818 + $0x3c] sm:$0xf]
  %v1843 = vunpack.c.l.b16 %v1810
  %v1844 = vunpack.c.l.b16 %v1811
  %v1845 = vunpack.c.l.b16 %v1812
  %v1846 = vunpack.c.l.b16 %v1813
  %v1847 = vunpack.c.l.b16 %v1814
  %v1848 = vunpack.c.l.b16 %v1815
  %v1849 = vunpack.c.l.b16 %v1816
  %v1850 = vunpack.c.l.b16 %v1817
  %v1851 = vpack.c.b16 %v1844, %v1843
  %v1852 = vpack.c.b16 %v1846, %v1845
  %v1853 = vpack.c.b16 %v1848, %v1847
  %v1854 = vpack.c.b16 %v1850, %v1849
  %v1856 = vshrl.u32 %v1851, 16
  %v1858 = vrot.slane %v1856, 1
  %v1859 = vshll.u32 %v1851, 16
  %v1861 = vrot.slane %v1859, 2
  %v1862 = vor.u32 %v1858, %v1861
  %v1864 = vshrl.u32 %v1852, 16
  %v1866 = vrot.slane %v1864, 1
  %v1867 = vshll.u32 %v1852, 16
  %v1869 = vrot.slane %v1867, 2
  %v1870 = vor.u32 %v1866, %v1869
  %v1871 = vsel %vm459, %v1862, %v1870
  %v1873 = vshrl.u32 %v1853, 16
  %v1875 = vrot.slane %v1873, 1
  %v1876 = vshll.u32 %v1853, 16
  %v1878 = vrot.slane %v1876, 2
  %v1879 = vor.u32 %v1875, %v1878
  %v1880 = vsel %vm459, %v1870, %v1879
  %v1882 = vshrl.u32 %v1854, 16
  %v1884 = vrot.slane %v1882, 1
  %v1885 = vshll.u32 %v1854, 16
  %v1887 = vrot.slane %v1885, 2
  %v1888 = vor.u32 %v1884, %v1887
  %v1889 = vsel %vm459, %v1879, %v1888
  %v1910 = vunpack.c.l.b16 %v1819
  %v1911 = vunpack.c.l.b16 %v1820
  %v1912 = vunpack.c.l.b16 %v1821
  %v1913 = vunpack.c.l.b16 %v1822
  %v1914 = vunpack.c.l.b16 %v1823
  %v1915 = vunpack.c.l.b16 %v1824
  %v1916 = vunpack.c.l.b16 %v1825
  %v1917 = vunpack.c.l.b16 %v1826
  %v1918 = vunpack.c.l.b16 %v1827
  %v1919 = vunpack.c.l.b16 %v1828
  %v1920 = vunpack.c.l.b16 %v1829
  %v1921 = vunpack.c.l.b16 %v1830
  %v1922 = vunpack.c.l.b16 %v1831
  %v1923 = vunpack.c.l.b16 %v1832
  %v1924 = vunpack.c.l.b16 %v1833
  %v1925 = vunpack.c.l.b16 %v1834
  %v1926 = vpack.c.b16 %v1911, %v1910
  %v1927 = vpack.c.b16 %v1913, %v1912
  %v1928 = vpack.c.b16 %v1915, %v1914
  %v1929 = vpack.c.b16 %v1917, %v1916
  %v1930 = vpack.c.b16 %v1919, %v1918
  %v1931 = vpack.c.b16 %v1921, %v1920
  %v1932 = vpack.c.b16 %v1923, %v1922
  %v1933 = vpack.c.b16 %v1925, %v1924
  %1942 = vmatpush.bf16.msra.mxu0 %v1933
  %1943 = vmatpush.bf16.msra.mxu0 %v1932
  %1944 = vmatpush.bf16.msra.mxu0 %v1931
  %1945 = vmatpush.bf16.msra.mxu0 %v1930
  %1946 = vmatpush.bf16.msra.mxu0 %v1929
  %1947 = vmatpush.bf16.msra.mxu0 %v1928
  %1948 = vmatpush.bf16.msra.mxu0 %v1927
  %1949 = vmatpush.bf16.msra.mxu0 %v1926
  %1950 = vmatmul.bf16.gmra.mxu0 %v1871
  %v1951 = vpop.f32.mrf.mxu0
  %v1952 = vadd.f32 0.0, %v1951
  %v1953 = vpop.f32.mrf.mxu0
  %v1954 = vadd.f32 0.0, %v1953
  %1955 = vmatmul.bf16.gmra.mxu0 %v1880
  %v1956 = vpop.f32.mrf.mxu0
  %v1957 = vadd.f32 0.0, %v1956
  %v1958 = vpop.f32.mrf.mxu0
  %v1959 = vadd.f32 0.0, %v1958
  %1960 = vmatmul.bf16.gmra.mxu0 %v1889
  %v1961 = vpop.f32.mrf.mxu0
  %v1962 = vadd.f32 0.0, %v1961
  %v1963 = vpop.f32.mrf.mxu0
  %v1964 = vadd.f32 0.0, %v1963
  %1965 = vmatmul.bf16.gmra.mxu0 %v1888
  %v1966 = vpop.f32.mrf.mxu0
  %v1967 = vadd.f32 0.0, %v1966
  %v1968 = vpop.f32.mrf.mxu0
  %1969 = vdwg.mxu0
  %v1970 = vadd.f32 %v1803, %v1952
  %v1971 = vadd.f32 %v1804, %v1954
  %v1972 = vadd.f32 %v1805, %v1957
  %v1973 = vadd.f32 %v1806, %v1959
  %v1974 = vadd.f32 %v1807, %v1962
  %v1975 = vadd.f32 %v1808, %v1964
  %v1976 = vadd.f32 %v1809, %v1967
  %v1977 = vld [vmem:[%s0 + $0x34] sm:$0xe]
  %s1978 = scalar_lea.vmem %s1, 896
  %v1979 = vld [vmem:[%s1978] sm:$0xf]
  %v1980 = vld [vmem:[%s1978 + $0x4] sm:$0xf]
  %v1981 = vld [vmem:[%s1978 + $0x8] sm:$0xf]
  %v1982 = vld [vmem:[%s1978 + $0xc] sm:$0xf]
  %v1983 = vld [vmem:[%s1978 + $0x10] sm:$0xf]
  %v1984 = vld [vmem:[%s1978 + $0x14] sm:$0xf]
  %v1985 = vld [vmem:[%s1978 + $0x18] sm:$0xf]
  %v1986 = vld [vmem:[%s1978 + $0x1c] sm:$0xf]
  %v1987 = vld [vmem:[%s1978 + $0x20] sm:$0xf]
  %v1988 = vld [vmem:[%s1978 + $0x24] sm:$0xf]
  %v1989 = vld [vmem:[%s1978 + $0x28] sm:$0xf]
  %v1990 = vld [vmem:[%s1978 + $0x2c] sm:$0xf]
  %v1991 = vld [vmem:[%s1978 + $0x30] sm:$0xf]
  %v1992 = vld [vmem:[%s1978 + $0x34] sm:$0xf]
  %v1993 = vld [vmem:[%s1978 + $0x38] sm:$0xf]
  %v1994 = vld [vmem:[%s1978 + $0x3c] sm:$0xf]
  %v1996 = vunpack.c.l.b16 %v1977
  %v1997 = vpack.c.b16 %v1681, %v1996
  %v1998 = vrot.slane %v1997, 1
  %v1999 = vrot.slane %v1689, 1
  %v2000 = vsel %vm88, %v1998, %v1999
  %v2001 = vrot.slane %v1690, 1
  %v2002 = vsel %vm88, %v1999, %v2001
  %v2003 = vrot.slane %v1691, 1
  %v2004 = vsel %vm88, %v2001, %v2003
  %v2025 = vunpack.c.l.b16 %v1979
  %v2026 = vunpack.c.l.b16 %v1980
  %v2027 = vunpack.c.l.b16 %v1981
  %v2028 = vunpack.c.l.b16 %v1982
  %v2029 = vunpack.c.l.b16 %v1983
  %v2030 = vunpack.c.l.b16 %v1984
  %v2031 = vunpack.c.l.b16 %v1985
  %v2032 = vunpack.c.l.b16 %v1986
  %v2033 = vunpack.c.l.b16 %v1987
  %v2034 = vunpack.c.l.b16 %v1988
  %v2035 = vunpack.c.l.b16 %v1989
  %v2036 = vunpack.c.l.b16 %v1990
  %v2037 = vunpack.c.l.b16 %v1991
  %v2038 = vunpack.c.l.b16 %v1992
  %v2039 = vunpack.c.l.b16 %v1993
  %v2040 = vunpack.c.l.b16 %v1994
  %v2041 = vpack.c.b16 %v2026, %v2025
  %v2042 = vpack.c.b16 %v2028, %v2027
  %v2043 = vpack.c.b16 %v2030, %v2029
  %v2044 = vpack.c.b16 %v2032, %v2031
  %v2045 = vpack.c.b16 %v2034, %v2033
  %v2046 = vpack.c.b16 %v2036, %v2035
  %v2047 = vpack.c.b16 %v2038, %v2037
  %v2048 = vpack.c.b16 %v2040, %v2039
  %2057 = vmatpush.bf16.msra.mxu0 %v2048
  %2058 = vmatpush.bf16.msra.mxu0 %v2047
  %2059 = vmatpush.bf16.msra.mxu0 %v2046
  %2060 = vmatpush.bf16.msra.mxu0 %v2045
  %2061 = vmatpush.bf16.msra.mxu0 %v2044
  %2062 = vmatpush.bf16.msra.mxu0 %v2043
  %2063 = vmatpush.bf16.msra.mxu0 %v2042
  %2064 = vmatpush.bf16.msra.mxu0 %v2041
  %2065 = vmatmul.bf16.gmra.mxu0 %v2000
  %v2066 = vpop.f32.mrf.mxu0
  %v2067 = vadd.f32 0.0, %v2066
  %v2068 = vpop.f32.mrf.mxu0
  %v2069 = vadd.f32 0.0, %v2068
  %2070 = vmatmul.bf16.gmra.mxu0 %v2002
  %v2071 = vpop.f32.mrf.mxu0
  %v2072 = vadd.f32 0.0, %v2071
  %v2073 = vpop.f32.mrf.mxu0
  %v2074 = vadd.f32 0.0, %v2073
  %2075 = vmatmul.bf16.gmra.mxu0 %v2004
  %v2076 = vpop.f32.mrf.mxu0
  %v2077 = vadd.f32 0.0, %v2076
  %v2078 = vpop.f32.mrf.mxu0
  %v2079 = vadd.f32 0.0, %v2078
  %2080 = vmatmul.bf16.gmra.mxu0 %v2003
  %v2081 = vpop.f32.mrf.mxu0
  %v2082 = vadd.f32 0.0, %v2081
  %v2083 = vpop.f32.mrf.mxu0
  %2084 = vdwg.mxu0
  %v2085 = vadd.f32 %v1970, %v2067
  %v2086 = vadd.f32 %v1971, %v2069
  %v2087 = vadd.f32 %v1972, %v2072
  %v2088 = vadd.f32 %v1973, %v2074
  %v2089 = vadd.f32 %v1974, %v2077
  %v2090 = vadd.f32 %v1975, %v2079
  %v2091 = vadd.f32 %v1976, %v2082
  %v2092 = vld [vmem:[%s0 + $0x4c] sm:$0xc]
  %s2093 = scalar_lea.vmem %s1, 960
  %v2094 = vld [vmem:[%s2093] sm:$0xf]
  %v2095 = vld [vmem:[%s2093 + $0x4] sm:$0xf]
  %v2096 = vld [vmem:[%s2093 + $0x8] sm:$0xf]
  %v2097 = vld [vmem:[%s2093 + $0xc] sm:$0xf]
  %v2098 = vld [vmem:[%s2093 + $0x10] sm:$0xf]
  %v2099 = vld [vmem:[%s2093 + $0x14] sm:$0xf]
  %v2100 = vld [vmem:[%s2093 + $0x18] sm:$0xf]
  %v2101 = vld [vmem:[%s2093 + $0x1c] sm:$0xf]
  %v2102 = vld [vmem:[%s2093 + $0x20] sm:$0xf]
  %v2103 = vld [vmem:[%s2093 + $0x24] sm:$0xf]
  %v2104 = vld [vmem:[%s2093 + $0x28] sm:$0xf]
  %v2105 = vld [vmem:[%s2093 + $0x2c] sm:$0xf]
  %v2106 = vld [vmem:[%s2093 + $0x30] sm:$0xf]
  %v2107 = vld [vmem:[%s2093 + $0x34] sm:$0xf]
  %v2108 = vld [vmem:[%s2093 + $0x38] sm:$0xf]
  %v2109 = vld [vmem:[%s2093 + $0x3c] sm:$0xf]
  %v2111 = vunpack.c.l.b16 %v2092
  %v2112 = vpack.c.b16 %v1844, %v2111
  %v2113 = vrot.slane %v2112, 2
  %v2114 = vrot.slane %v1852, 2
  %v2115 = vsel %vm627, %v2113, %v2114
  %v2116 = vrot.slane %v1853, 2
  %v2117 = vsel %vm627, %v2114, %v2116
  %v2118 = vrot.slane %v1854, 2
  %v2119 = vsel %vm627, %v2116, %v2118
  %v2140 = vunpack.c.l.b16 %v2094
  %v2141 = vunpack.c.l.b16 %v2095
  %v2142 = vunpack.c.l.b16 %v2096
  %v2143 = vunpack.c.l.b16 %v2097
  %v2144 = vunpack.c.l.b16 %v2098
  %v2145 = vunpack.c.l.b16 %v2099
  %v2146 = vunpack.c.l.b16 %v2100
  %v2147 = vunpack.c.l.b16 %v2101
  %v2148 = vunpack.c.l.b16 %v2102
  %v2149 = vunpack.c.l.b16 %v2103
  %v2150 = vunpack.c.l.b16 %v2104
  %v2151 = vunpack.c.l.b16 %v2105
  %v2152 = vunpack.c.l.b16 %v2106
  %v2153 = vunpack.c.l.b16 %v2107
  %v2154 = vunpack.c.l.b16 %v2108
  %v2155 = vunpack.c.l.b16 %v2109
  %v2156 = vpack.c.b16 %v2141, %v2140
  %v2157 = vpack.c.b16 %v2143, %v2142
  %v2158 = vpack.c.b16 %v2145, %v2144
  %v2159 = vpack.c.b16 %v2147, %v2146
  %v2160 = vpack.c.b16 %v2149, %v2148
  %v2161 = vpack.c.b16 %v2151, %v2150
  %v2162 = vpack.c.b16 %v2153, %v2152
  %v2163 = vpack.c.b16 %v2155, %v2154
  %2172 = vmatpush.bf16.msra.mxu0 %v2163
  %2173 = vmatpush.bf16.msra.mxu0 %v2162
  %2174 = vmatpush.bf16.msra.mxu0 %v2161
  %2175 = vmatpush.bf16.msra.mxu0 %v2160
  %2176 = vmatpush.bf16.msra.mxu0 %v2159
  %2177 = vmatpush.bf16.msra.mxu0 %v2158
  %2178 = vmatpush.bf16.msra.mxu0 %v2157
  %2179 = vmatpush.bf16.msra.mxu0 %v2156
  %2180 = vmatmul.bf16.gmra.mxu0 %v2115
  %v2181 = vpop.f32.mrf.mxu0
  %v2182 = vadd.f32 0.0, %v2181
  %v2183 = vpop.f32.mrf.mxu0
  %v2184 = vadd.f32 0.0, %v2183
  %2185 = vmatmul.bf16.gmra.mxu0 %v2117
  %v2186 = vpop.f32.mrf.mxu0
  %v2187 = vadd.f32 0.0, %v2186
  %v2188 = vpop.f32.mrf.mxu0
  %v2189 = vadd.f32 0.0, %v2188
  %2190 = vmatmul.bf16.gmra.mxu0 %v2119
  %v2191 = vpop.f32.mrf.mxu0
  %v2192 = vadd.f32 0.0, %v2191
  %v2193 = vpop.f32.mrf.mxu0
  %v2194 = vadd.f32 0.0, %v2193
  %2195 = vmatmul.bf16.gmra.mxu0 %v2118
  %v2196 = vpop.f32.mrf.mxu0
  %v2197 = vadd.f32 0.0, %v2196
  %v2198 = vpop.f32.mrf.mxu0
  %2199 = vdwg.mxu0
  %v2200 = vadd.f32 %v2085, %v2182
  %v2201 = vadd.f32 %v2086, %v2184
  %v2202 = vadd.f32 %v2087, %v2187
  %v2203 = vadd.f32 %v2088, %v2189
  %v2204 = vadd.f32 %v2089, %v2192
  %v2205 = vadd.f32 %v2090, %v2194
  %v2206 = vadd.f32 %v2091, %v2197
  %v2207 = vld [vmem:[%s4] sm:$0xff]
  %v2208 = vld [vmem:[%s4 + $0x8] sm:$0xff]
  %v2209 = vld [vmem:[%s4 + $0x10] sm:$0xff]
  %v2210 = vld [vmem:[%s4 + $0x18] sm:$0xff]
  %v2211 = vld [vmem:[%s4 + $0x20] sm:$0xff]
  %v2212 = vld [vmem:[%s4 + $0x28] sm:$0xff]
  %v2213 = vld [vmem:[%s4 + $0x30] sm:$0xff]
  %v2214 = vld [vmem:[%s2] sm:$0x1]
  %v2215 = vld [vmem:[%s3] sm:$0x1]
  %2217 = vset.pattern.permute.xlu0 0
  %2218 = vperm.xlu0 %2217, %v2207
  %v2219 = vpop.permute.xlu0 %2218
  %2222 = vset.pattern.permute.xlu0 0
  %2223 = vperm.xlu0 %2222, %v2208
  %v2224 = vpop.permute.xlu0 %2223
  %2227 = vset.pattern.permute.xlu0 0
  %2228 = vperm.xlu0 %2227, %v2209
  %v2229 = vpop.permute.xlu0 %2228
  %2232 = vset.pattern.permute.xlu0 0
  %2233 = vperm.xlu0 %2232, %v2210
  %v2234 = vpop.permute.xlu0 %2233
  %2237 = vset.pattern.permute.xlu0 0
  %2238 = vperm.xlu0 %2237, %v2211
  %v2239 = vpop.permute.xlu0 %2238
  %2242 = vset.pattern.permute.xlu0 0
  %2243 = vperm.xlu0 %2242, %v2212
  %v2244 = vpop.permute.xlu0 %2243
  %2247 = vset.pattern.permute.xlu0 0
  %2248 = vperm.xlu0 %2247, %v2213
  %v2249 = vpop.permute.xlu0 %2248
  %v2251 = vmul.f32 %v2200, %v2219
  %v2252 = vmul.f32 %v2201, %v2224
  %v2253 = vmul.f32 %v2202, %v2229
  %v2254 = vmul.f32 %v2203, %v2234
  %v2255 = vmul.f32 %v2204, %v2239
  %v2256 = vmul.f32 %v2205, %v2244
  %v2257 = vmul.f32 %v2206, %v2249
  %v2258 = vadd.f32 %v2251, %v2252
  %v2259 = vadd.f32 %v2258, %v2253
  %v2260 = vadd.f32 %v2259, %v2254
  %v2261 = vadd.f32 %v2260, %v2255
  %v2262 = vadd.f32 %v2261, %v2256
  %v2263 = vadd.f32 %v2262, %v2257
  %v2264 = vrot.slane %v2263, 4
  %v2265 = vadd.f32 %v2263, %v2264
  %v2266 = vrot.slane %v2265, 2
  %v2267 = vadd.f32 %v2265, %v2266
  %v2268 = vrot.slane %v2267, 1
  %v2269 = vadd.f32 %v2267, %v2268
  %v2270 = vrcp.pop 32.0
  %v2271 = vmul.f32 32.0, %v2270
  %v2272 = vsub.f32 1.0, %v2271
  %v2273 = vmul.f32 %v2270, %v2272
  %v2274 = vadd.f32 %v2270, %v2273
  %vm2275 = vweird.f32 %v2270
  %v2276 = vsel %vm2275, %v2270, %v2274
  %v2277 = vmul.f32 %v2269, %v2276
  %v2278 = vsub.f32 %v2200, %v2277
  %v2279 = vsub.f32 %v2201, %v2277
  %v2280 = vsub.f32 %v2202, %v2277
  %v2281 = vsub.f32 %v2203, %v2277
  %v2282 = vsub.f32 %v2204, %v2277
  %v2283 = vsub.f32 %v2205, %v2277
  %v2284 = vsub.f32 %v2206, %v2277
  %v2285 = vmul.f32 %v2278, %v2219
  %v2286 = vmul.f32 %v2279, %v2224
  %v2287 = vmul.f32 %v2280, %v2229
  %v2288 = vmul.f32 %v2281, %v2234
  %v2289 = vmul.f32 %v2282, %v2239
  %v2290 = vmul.f32 %v2283, %v2244
  %v2291 = vmul.f32 %v2284, %v2249
  %v2292 = vmul.f32 %v2285, %v2285
  %v2293 = vmul.f32 %v2286, %v2286
  %v2294 = vmul.f32 %v2287, %v2287
  %v2295 = vmul.f32 %v2288, %v2288
  %v2296 = vmul.f32 %v2289, %v2289
  %v2297 = vmul.f32 %v2290, %v2290
  %v2298 = vmul.f32 %v2291, %v2291
  %v2299 = vadd.f32 %v2292, %v2293
  %v2300 = vadd.f32 %v2299, %v2294
  %v2301 = vadd.f32 %v2300, %v2295
  %v2302 = vadd.f32 %v2301, %v2296
  %v2303 = vadd.f32 %v2302, %v2297
  %v2304 = vadd.f32 %v2303, %v2298
  %v2305 = vrot.slane %v2304, 4
  %v2306 = vadd.f32 %v2304, %v2305
  %v2307 = vrot.slane %v2306, 2
  %v2308 = vadd.f32 %v2306, %v2307
  %v2309 = vrot.slane %v2308, 1
  %v2310 = vadd.f32 %v2308, %v2309
  %v2311 = vmul.f32 %v2310, %v2276
  %v2312 = vadd.f32 %v2311, 1e-05
  %v2313 = vrsqrt.pop %v2312
  %v2314 = vmul.f32 %v2313, %v2312
  %v2315 = vmul.f32 %v2314, %v2313
  %v2316 = vmul.f32 0.5, %v2315
  %v2317 = vsub.f32 1.5, %v2316
  %v2318 = vmul.f32 %v2313, %v2317
  %vm2319 = vweird.f32 %v2312
  %vm2320 = vweird.f32 %v2313
  %vm2321 = vmor %vm2319, %vm2320
  %v2322 = vsel %vm2321, %v2313, %v2318
  %v2323 = vmul.f32 %v2278, %v2322
  %v2324 = vmul.f32 %v2279, %v2322
  %v2325 = vmul.f32 %v2280, %v2322
  %v2326 = vmul.f32 %v2281, %v2322
  %v2327 = vmul.f32 %v2282, %v2322
  %v2328 = vmul.f32 %v2283, %v2322
  %v2329 = vmul.f32 %v2284, %v2322
  %v2331 = vperm.slane %v2214, 0
  %v2333 = vmul.f32 %v2323, %v2331
  %v2334 = vmul.f32 %v2324, %v2331
  %v2335 = vmul.f32 %v2325, %v2331
  %v2336 = vmul.f32 %v2326, %v2331
  %v2337 = vmul.f32 %v2327, %v2331
  %v2338 = vmul.f32 %v2328, %v2331
  %v2339 = vmul.f32 %v2329, %v2331
  %v2341 = vperm.slane %v2215, 0
  %v2343 = vadd.f32 %v2333, %v2341
  %v2344 = vadd.f32 %v2334, %v2341
  %v2345 = vadd.f32 %v2335, %v2341
  %v2346 = vadd.f32 %v2336, %v2341
  %v2347 = vadd.f32 %v2337, %v2341
  %v2348 = vadd.f32 %v2338, %v2341
  %v2349 = vadd.f32 %v2339, %v2341
  %vm2350 = vcmp.ge.f32.partialorder %v2343, 0.0
  %vm2351 = vcmp.ge.f32.partialorder %v2344, 0.0
  %vm2352 = vcmp.ge.f32.partialorder %v2345, 0.0
  %vm2353 = vcmp.ge.f32.partialorder %v2346, 0.0
  %vm2354 = vcmp.ge.f32.partialorder %v2347, 0.0
  %vm2355 = vcmp.ge.f32.partialorder %v2348, 0.0
  %vm2356 = vcmp.ge.f32.partialorder %v2349, 0.0
  %v2357 = vmul.f32 %v2343, 0.2
  %v2358 = vmul.f32 %v2344, 0.2
  %v2359 = vmul.f32 %v2345, 0.2
  %v2360 = vmul.f32 %v2346, 0.2
  %v2361 = vmul.f32 %v2347, 0.2
  %v2362 = vmul.f32 %v2348, 0.2
  %v2363 = vmul.f32 %v2349, 0.2
  %v2364 = vsel %vm2350, %v2343, %v2357
  %v2365 = vsel %vm2351, %v2344, %v2358
  %v2366 = vsel %vm2352, %v2345, %v2359
  %v2367 = vsel %vm2353, %v2346, %v2360
  %v2368 = vsel %vm2354, %v2347, %v2361
  %v2369 = vsel %vm2355, %v2348, %v2362
  %v2370 = vsel %vm2356, %v2349, %v2363
  %2371 = vst [vmem:[%s5] sm:$0xff] %v2364
  %2372 = vst [vmem:[%s5 + $0x8] sm:$0xff] %v2365
  %2373 = vst [vmem:[%s5 + $0x10] sm:$0xff] %v2366
  %2374 = vst [vmem:[%s5 + $0x18] sm:$0xff] %v2367
  %2375 = vst [vmem:[%s5 + $0x20] sm:$0xff] %v2368
  %2376 = vst [vmem:[%s5 + $0x28] sm:$0xff] %v2369
  %2377 = vst [vmem:[%s5 + $0x30] sm:$0xff] %v2370
  // Predicated region
  $region22: #{encoder_forward.7} parent=0 // pred_check
    _
  $region23: #{encoder_forward.7} parent=0 // pred_check_branch
    %2379 = sbr.rel (0) target = $region25
  $region24: #{encoder_forward.7} parent=0 // pred_region
    _
  $region25: #{encoder_forward.7} parent=0 // pred_fallthru
    _
  // Predicated region
  $region26: #{encoder_forward.7} parent=0 // pred_check
    _
  $region27: #{encoder_forward.7} parent=0 // pred_check_branch
    %2381 = sbr.rel (0) target = $region29
  $region28: #{encoder_forward.7} parent=0 // pred_region
    _
  $region29: #{encoder_forward.7} parent=0 // pred_fallthru
    _

// kernel: encoder_forward.9
$region0: #{encoder_forward.9}
  #allocation0 [shape = 'u32[]', space=smem, size = 0x4, offset = 0x4, fixed_abs, tag = 'smem constant byte address 0x4 - core index']
  #allocation1 [shape = 'u32[72,128]{1,0:T(1,128)}', space=vmem, size = 0x9000, scoped, tag = 'internal scratch']
  %s0 = inlined_call_operand.vmem [shape: bf16[8,2048], index: 0, kind: input, shape index: {}]
  %s1 = inlined_call_operand.vmem [shape: bf16[2048,128], index: 1, kind: input, shape index: {}]
  %s2 = inlined_call_operand.vmem [shape: f32[1,128], index: 2, kind: input, shape index: {}, may-alias: {2,3}]
  %s3 = inlined_call_operand.vmem [shape: f32[1,128], index: 3, kind: input, shape index: {}, may-alias: {2,3}]
  %s4 = inlined_call_operand.vmem [shape: f32[8,1], index: 4, kind: input, shape index: {}]
  %s5 = inlined_call_operand.vmem [shape: f32[8,128], index: 5, kind: output, shape index: {}]
  %s6 = sld [smem:[#allocation0]]
  $region30: #{encoder_forward.9} parent=0
    _
  %s8 = ssub.s32 1, %s6
  %s9 = scalar_select 0, %s8, %s6
  // Predicated region
  $region2: #{encoder_forward.9} parent=0 // pred_check
    _
  $region3: #{encoder_forward.9} parent=0 // pred_check_branch
    %11 = sbr.rel (0) target = $region5
  $region4: #{encoder_forward.9} parent=0 // pred_region
    _
  $region5: #{encoder_forward.9} parent=0 // pred_fallthru
    _
  // Predicated region
  $region6: #{encoder_forward.9} parent=0 // pred_check
    _
  $region7: #{encoder_forward.9} parent=0 // pred_check_branch
    %13 = sbr.rel (0) target = $region9
  $region8: #{encoder_forward.9} parent=0 // pred_region
    _
  $region9: #{encoder_forward.9} parent=0 // pred_fallthru
    _
  // Predicated region
  $region10: #{encoder_forward.9} parent=0 // pred_check
    _
  $region11: #{encoder_forward.9} parent=0 // pred_check_branch
    %15 = sbr.rel (0) target = $region13
  $region12: #{encoder_forward.9} parent=0 // pred_region
    _
  $region13: #{encoder_forward.9} parent=0 // pred_fallthru
    _
  // Predicated region
  $region14: #{encoder_forward.9} parent=0 // pred_check
    _
  $region15: #{encoder_forward.9} parent=0 // pred_check_branch
    %17 = sbr.rel (0) target = $region17
  $region16: #{encoder_forward.9} parent=0 // pred_region
    _
  $region17: #{encoder_forward.9} parent=0 // pred_fallthru
    _
  // Predicated region
  $region18: #{encoder_forward.9} parent=0 // pred_check
    _
  $region19: #{encoder_forward.9} parent=0 // pred_check_branch
    %19 = sbr.rel (0) target = $region21
  $region20: #{encoder_forward.9} parent=0 // pred_region
    _
  $region21: #{encoder_forward.9} parent=0 // pred_fallthru
    _
  %v20 = vld [vmem:[%s0] sm:$0xff]
  %v21 = vld [vmem:[%s0 + $0x8] sm:$0xff]
  %v22 = vld [vmem:[%s0 + $0x10] sm:$0xff]
  %v23 = vld [vmem:[%s0 + $0x18] sm:$0xff]
  %v24 = vld [vmem:[%s0 + $0x20] sm:$0xff]
  %v25 = vld [vmem:[%s0 + $0x28] sm:$0xff]
  %v26 = vld [vmem:[%s0 + $0x30] sm:$0xff]
  %v27 = vld [vmem:[%s0 + $0x38] sm:$0xff]
  %v28 = vld [vmem:[%s1] sm:$0xf]
  %v29 = vld [vmem:[%s1 + $0x4] sm:$0xf]
  %v30 = vld [vmem:[%s1 + $0x8] sm:$0xf]
  %v31 = vld [vmem:[%s1 + $0xc] sm:$0xf]
  %v32 = vld [vmem:[%s1 + $0x10] sm:$0xf]
  %v33 = vld [vmem:[%s1 + $0x14] sm:$0xf]
  %v34 = vld [vmem:[%s1 + $0x18] sm:$0xf]
  %v35 = vld [vmem:[%s1 + $0x1c] sm:$0xf]
  %v36 = vld [vmem:[%s1 + $0x20] sm:$0xf]
  %v37 = vld [vmem:[%s1 + $0x24] sm:$0xf]
  %v38 = vld [vmem:[%s1 + $0x28] sm:$0xf]
  %v39 = vld [vmem:[%s1 + $0x2c] sm:$0xf]
  %v40 = vld [vmem:[%s1 + $0x30] sm:$0xf]
  %v41 = vld [vmem:[%s1 + $0x34] sm:$0xf]
  %v42 = vld [vmem:[%s1 + $0x38] sm:$0xf]
  %v43 = vld [vmem:[%s1 + $0x3c] sm:$0xf]
  %v44 = vld [vmem:[%s1 + $0x40] sm:$0xf]
  %v45 = vld [vmem:[%s1 + $0x44] sm:$0xf]
  %v46 = vld [vmem:[%s1 + $0x48] sm:$0xf]
  %v47 = vld [vmem:[%s1 + $0x4c] sm:$0xf]
  %v48 = vld [vmem:[%s1 + $0x50] sm:$0xf]
  %v49 = vld [vmem:[%s1 + $0x54] sm:$0xf]
  %v50 = vld [vmem:[%s1 + $0x58] sm:$0xf]
  %v51 = vld [vmem:[%s1 + $0x5c] sm:$0xf]
  %v52 = vld [vmem:[%s1 + $0x60] sm:$0xf]
  %v53 = vld [vmem:[%s1 + $0x64] sm:$0xf]
  %v54 = vld [vmem:[%s1 + $0x68] sm:$0xf]
  %v55 = vld [vmem:[%s1 + $0x6c] sm:$0xf]
  %v56 = vld [vmem:[%s1 + $0x70] sm:$0xf]
  %v57 = vld [vmem:[%s1 + $0x74] sm:$0xf]
  %v58 = vld [vmem:[%s1 + $0x78] sm:$0xf]
  %v59 = vld [vmem:[%s1 + $0x7c] sm:$0xf]
  %v60 = vld [vmem:[%s1 + $0x80] sm:$0xf]
  %v61 = vld [vmem:[%s1 + $0x84] sm:$0xf]
  %v62 = vld [vmem:[%s1 + $0x88] sm:$0xf]
  %v63 = vld [vmem:[%s1 + $0x8c] sm:$0xf]
  %v64 = vld [vmem:[%s1 + $0x90] sm:$0xf]
  %v65 = vld [vmem:[%s1 + $0x94] sm:$0xf]
  %v66 = vld [vmem:[%s1 + $0x98] sm:$0xf]
  %v67 = vld [vmem:[%s1 + $0x9c] sm:$0xf]
  %v68 = vld [vmem:[%s1 + $0xa0] sm:$0xf]
  %v69 = vld [vmem:[%s1 + $0xa4] sm:$0xf]
  %v70 = vld [vmem:[%s1 + $0xa8] sm:$0xf]
  %v71 = vld [vmem:[%s1 + $0xac] sm:$0xf]
  %v72 = vld [vmem:[%s1 + $0xb0] sm:$0xf]
  %v73 = vld [vmem:[%s1 + $0xb4] sm:$0xf]
  %v74 = vld [vmem:[%s1 + $0xb8] sm:$0xf]
  %v75 = vld [vmem:[%s1 + $0xbc] sm:$0xf]
  %v76 = vld [vmem:[%s1 + $0xc0] sm:$0xf]
  %v77 = vld [vmem:[%s1 + $0xc4] sm:$0xf]
  %v78 = vld [vmem:[%s1 + $0xc8] sm:$0xf]
  %v79 = vld [vmem:[%s1 + $0xcc] sm:$0xf]
  %v80 = vld [vmem:[%s1 + $0xd0] sm:$0xf]
  %v81 = vld [vmem:[%s1 + $0xd4] sm:$0xf]
  %v82 = vld [vmem:[%s1 + $0xd8] sm:$0xf]
  %v83 = vld [vmem:[%s1 + $0xdc] sm:$0xf]
  %v84 = vld [vmem:[%s1 + $0xe0] sm:$0xf]
  %v85 = vld [vmem:[%s1 + $0xe4] sm:$0xf]
  %v86 = vld [vmem:[%s1 + $0xe8] sm:$0xf]
  %v87 = vld [vmem:[%s1 + $0xec] sm:$0xf]
  %v88 = vld [vmem:[%s1 + $0xf0] sm:$0xf]
  %v89 = vld [vmem:[%s1 + $0xf4] sm:$0xf]
  %v90 = vld [vmem:[%s1 + $0xf8] sm:$0xf]
  %v91 = vld [vmem:[%s1 + $0xfc] sm:$0xf]
  %v92 = vld [vmem:[%s1 + $0x100] sm:$0xf]
  %v93 = vld [vmem:[%s1 + $0x104] sm:$0xf]
  %v94 = vld [vmem:[%s1 + $0x108] sm:$0xf]
  %v95 = vld [vmem:[%s1 + $0x10c] sm:$0xf]
  %v96 = vld [vmem:[%s1 + $0x110] sm:$0xf]
  %v97 = vld [vmem:[%s1 + $0x114] sm:$0xf]
  %v98 = vld [vmem:[%s1 + $0x118] sm:$0xf]
  %v99 = vld [vmem:[%s1 + $0x11c] sm:$0xf]
  %v100 = vld [vmem:[%s1 + $0x120] sm:$0xf]
  %v101 = vld [vmem:[%s1 + $0x124] sm:$0xf]
  %v102 = vld [vmem:[%s1 + $0x128] sm:$0xf]
  %v103 = vld [vmem:[%s1 + $0x12c] sm:$0xf]
  %v104 = vld [vmem:[%s1 + $0x130] sm:$0xf]
  %v105 = vld [vmem:[%s1 + $0x134] sm:$0xf]
  %v106 = vld [vmem:[%s1 + $0x138] sm:$0xf]
  %v107 = vld [vmem:[%s1 + $0x13c] sm:$0xf]
  %v108 = vld [vmem:[%s1 + $0x140] sm:$0xf]
  %v109 = vld [vmem:[%s1 + $0x144] sm:$0xf]
  %v110 = vld [vmem:[%s1 + $0x148] sm:$0xf]
  %v111 = vld [vmem:[%s1 + $0x14c] sm:$0xf]
  %v112 = vld [vmem:[%s1 + $0x150] sm:$0xf]
  %v113 = vld [vmem:[%s1 + $0x154] sm:$0xf]
  %v114 = vld [vmem:[%s1 + $0x158] sm:$0xf]
  %v115 = vld [vmem:[%s1 + $0x15c] sm:$0xf]
  %v116 = vld [vmem:[%s1 + $0x160] sm:$0xf]
  %v117 = vld [vmem:[%s1 + $0x164] sm:$0xf]
  %v118 = vld [vmem:[%s1 + $0x168] sm:$0xf]
  %v119 = vld [vmem:[%s1 + $0x16c] sm:$0xf]
  %v120 = vld [vmem:[%s1 + $0x170] sm:$0xf]
  %v121 = vld [vmem:[%s1 + $0x174] sm:$0xf]
  %v122 = vld [vmem:[%s1 + $0x178] sm:$0xf]
  %v123 = vld [vmem:[%s1 + $0x17c] sm:$0xf]
  %v124 = vld [vmem:[%s1 + $0x180] sm:$0xf]
  %v125 = vld [vmem:[%s1 + $0x184] sm:$0xf]
  %v126 = vld [vmem:[%s1 + $0x188] sm:$0xf]
  %v127 = vld [vmem:[%s1 + $0x18c] sm:$0xf]
  %v128 = vld [vmem:[%s1 + $0x190] sm:$0xf]
  %v129 = vld [vmem:[%s1 + $0x194] sm:$0xf]
  %v130 = vld [vmem:[%s1 + $0x198] sm:$0xf]
  %v131 = vld [vmem:[%s1 + $0x19c] sm:$0xf]
  %v132 = vld [vmem:[%s1 + $0x1a0] sm:$0xf]
  %v133 = vld [vmem:[%s1 + $0x1a4] sm:$0xf]
  %v134 = vld [vmem:[%s1 + $0x1a8] sm:$0xf]
  %v135 = vld [vmem:[%s1 + $0x1ac] sm:$0xf]
  %v136 = vld [vmem:[%s1 + $0x1b0] sm:$0xf]
  %v137 = vld [vmem:[%s1 + $0x1b4] sm:$0xf]
  %v138 = vld [vmem:[%s1 + $0x1b8] sm:$0xf]
  %v139 = vld [vmem:[%s1 + $0x1bc] sm:$0xf]
  %v140 = vld [vmem:[%s1 + $0x1c0] sm:$0xf]
  %v141 = vld [vmem:[%s1 + $0x1c4] sm:$0xf]
  %v142 = vld [vmem:[%s1 + $0x1c8] sm:$0xf]
  %v143 = vld [vmem:[%s1 + $0x1cc] sm:$0xf]
  %v144 = vld [vmem:[%s1 + $0x1d0] sm:$0xf]
  %v145 = vld [vmem:[%s1 + $0x1d4] sm:$0xf]
  %v146 = vld [vmem:[%s1 + $0x1d8] sm:$0xf]
  %v147 = vld [vmem:[%s1 + $0x1dc] sm:$0xf]
  %v148 = vld [vmem:[%s1 + $0x1e0] sm:$0xf]
  %v149 = vld [vmem:[%s1 + $0x1e4] sm:$0xf]
  %v150 = vld [vmem:[%s1 + $0x1e8] sm:$0xf]
  %v151 = vld [vmem:[%s1 + $0x1ec] sm:$0xf]
  %v152 = vld [vmem:[%s1 + $0x1f0] sm:$0xf]
  %v153 = vld [vmem:[%s1 + $0x1f4] sm:$0xf]
  %v154 = vld [vmem:[%s1 + $0x1f8] sm:$0xf]
  %v155 = vld [vmem:[%s1 + $0x1fc] sm:$0xf]
  %v156 = vld [vmem:[%s1 + $0x200] sm:$0xf]
  %v157 = vld [vmem:[%s1 + $0x204] sm:$0xf]
  %v158 = vld [vmem:[%s1 + $0x208] sm:$0xf]
  %v159 = vld [vmem:[%s1 + $0x20c] sm:$0xf]
  %v160 = vld [vmem:[%s1 + $0x210] sm:$0xf]
  %v161 = vld [vmem:[%s1 + $0x214] sm:$0xf]
  %v162 = vld [vmem:[%s1 + $0x218] sm:$0xf]
  %v163 = vld [vmem:[%s1 + $0x21c] sm:$0xf]
  %v164 = vld [vmem:[%s1 + $0x220] sm:$0xf]
  %v165 = vld [vmem:[%s1 + $0x224] sm:$0xf]
  %v166 = vld [vmem:[%s1 + $0x228] sm:$0xf]
  %v167 = vld [vmem:[%s1 + $0x22c] sm:$0xf]
  %v168 = vld [vmem:[%s1 + $0x230] sm:$0xf]
  %v169 = vld [vmem:[%s1 + $0x234] sm:$0xf]
  %v170 = vld [vmem:[%s1 + $0x238] sm:$0xf]
  %v171 = vld [vmem:[%s1 + $0x23c] sm:$0xf]
  %v172 = vld [vmem:[%s1 + $0x240] sm:$0xf]
  %v173 = vld [vmem:[%s1 + $0x244] sm:$0xf]
  %v174 = vld [vmem:[%s1 + $0x248] sm:$0xf]
  %v175 = vld [vmem:[%s1 + $0x24c] sm:$0xf]
  %v176 = vld [vmem:[%s1 + $0x250] sm:$0xf]
  %v177 = vld [vmem:[%s1 + $0x254] sm:$0xf]
  %v178 = vld [vmem:[%s1 + $0x258] sm:$0xf]
  %v179 = vld [vmem:[%s1 + $0x25c] sm:$0xf]
  %v180 = vld [vmem:[%s1 + $0x260] sm:$0xf]
  %v181 = vld [vmem:[%s1 + $0x264] sm:$0xf]
  %v182 = vld [vmem:[%s1 + $0x268] sm:$0xf]
  %v183 = vld [vmem:[%s1 + $0x26c] sm:$0xf]
  %v184 = vld [vmem:[%s1 + $0x270] sm:$0xf]
  %v185 = vld [vmem:[%s1 + $0x274] sm:$0xf]
  %v186 = vld [vmem:[%s1 + $0x278] sm:$0xf]
  %v187 = vld [vmem:[%s1 + $0x27c] sm:$0xf]
  %v188 = vld [vmem:[%s1 + $0x280] sm:$0xf]
  %v189 = vld [vmem:[%s1 + $0x284] sm:$0xf]
  %v190 = vld [vmem:[%s1 + $0x288] sm:$0xf]
  %v191 = vld [vmem:[%s1 + $0x28c] sm:$0xf]
  %v192 = vld [vmem:[%s1 + $0x290] sm:$0xf]
  %v193 = vld [vmem:[%s1 + $0x294] sm:$0xf]
  %v194 = vld [vmem:[%s1 + $0x298] sm:$0xf]
  %v195 = vld [vmem:[%s1 + $0x29c] sm:$0xf]
  %v196 = vld [vmem:[%s1 + $0x2a0] sm:$0xf]
  %v197 = vld [vmem:[%s1 + $0x2a4] sm:$0xf]
  %v198 = vld [vmem:[%s1 + $0x2a8] sm:$0xf]
  %v199 = vld [vmem:[%s1 + $0x2ac] sm:$0xf]
  %v200 = vld [vmem:[%s1 + $0x2b0] sm:$0xf]
  %v201 = vld [vmem:[%s1 + $0x2b4] sm:$0xf]
  %v202 = vld [vmem:[%s1 + $0x2b8] sm:$0xf]
  %v203 = vld [vmem:[%s1 + $0x2bc] sm:$0xf]
  %v204 = vld [vmem:[%s1 + $0x2c0] sm:$0xf]
  %v205 = vld [vmem:[%s1 + $0x2c4] sm:$0xf]
  %v206 = vld [vmem:[%s1 + $0x2c8] sm:$0xf]
  %v207 = vld [vmem:[%s1 + $0x2cc] sm:$0xf]
  %v208 = vld [vmem:[%s1 + $0x2d0] sm:$0xf]
  %v209 = vld [vmem:[%s1 + $0x2d4] sm:$0xf]
  %v210 = vld [vmem:[%s1 + $0x2d8] sm:$0xf]
  %v211 = vld [vmem:[%s1 + $0x2dc] sm:$0xf]
  %v212 = vld [vmem:[%s1 + $0x2e0] sm:$0xf]
  %v213 = vld [vmem:[%s1 + $0x2e4] sm:$0xf]
  %v214 = vld [vmem:[%s1 + $0x2e8] sm:$0xf]
  %v215 = vld [vmem:[%s1 + $0x2ec] sm:$0xf]
  %v216 = vld [vmem:[%s1 + $0x2f0] sm:$0xf]
  %v217 = vld [vmem:[%s1 + $0x2f4] sm:$0xf]
  %v218 = vld [vmem:[%s1 + $0x2f8] sm:$0xf]
  %v219 = vld [vmem:[%s1 + $0x2fc] sm:$0xf]
  %v220 = vld [vmem:[%s1 + $0x300] sm:$0xf]
  %v221 = vld [vmem:[%s1 + $0x304] sm:$0xf]
  %v222 = vld [vmem:[%s1 + $0x308] sm:$0xf]
  %v223 = vld [vmem:[%s1 + $0x30c] sm:$0xf]
  %v224 = vld [vmem:[%s1 + $0x310] sm:$0xf]
  %v225 = vld [vmem:[%s1 + $0x314] sm:$0xf]
  %v226 = vld [vmem:[%s1 + $0x318] sm:$0xf]
  %v227 = vld [vmem:[%s1 + $0x31c] sm:$0xf]
  %v228 = vld [vmem:[%s1 + $0x320] sm:$0xf]
  %v229 = vld [vmem:[%s1 + $0x324] sm:$0xf]
  %v230 = vld [vmem:[%s1 + $0x328] sm:$0xf]
  %v231 = vld [vmem:[%s1 + $0x32c] sm:$0xf]
  %v232 = vld [vmem:[%s1 + $0x330] sm:$0xf]
  %v233 = vld [vmem:[%s1 + $0x334] sm:$0xf]
  %v234 = vld [vmem:[%s1 + $0x338] sm:$0xf]
  %v235 = vld [vmem:[%s1 + $0x33c] sm:$0xf]
  %v236 = vld [vmem:[%s1 + $0x340] sm:$0xf]
  %v237 = vld [vmem:[%s1 + $0x344] sm:$0xf]
  %v238 = vld [vmem:[%s1 + $0x348] sm:$0xf]
  %v239 = vld [vmem:[%s1 + $0x34c] sm:$0xf]
  %v240 = vld [vmem:[%s1 + $0x350] sm:$0xf]
  %v241 = vld [vmem:[%s1 + $0x354] sm:$0xf]
  %v242 = vld [vmem:[%s1 + $0x358] sm:$0xf]
  %v243 = vld [vmem:[%s1 + $0x35c] sm:$0xf]
  %v244 = vld [vmem:[%s1 + $0x360] sm:$0xf]
  %v245 = vld [vmem:[%s1 + $0x364] sm:$0xf]
  %v246 = vld [vmem:[%s1 + $0x368] sm:$0xf]
  %v247 = vld [vmem:[%s1 + $0x36c] sm:$0xf]
  %v248 = vld [vmem:[%s1 + $0x370] sm:$0xf]
  %v249 = vld [vmem:[%s1 + $0x374] sm:$0xf]
  %v250 = vld [vmem:[%s1 + $0x378] sm:$0xf]
  %v251 = vld [vmem:[%s1 + $0x37c] sm:$0xf]
  %v252 = vld [vmem:[%s1 + $0x380] sm:$0xf]
  %v253 = vld [vmem:[%s1 + $0x384] sm:$0xf]
  %v254 = vld [vmem:[%s1 + $0x388] sm:$0xf]
  %v255 = vld [vmem:[%s1 + $0x38c] sm:$0xf]
  %v256 = vld [vmem:[%s1 + $0x390] sm:$0xf]
  %v257 = vld [vmem:[%s1 + $0x394] sm:$0xf]
  %v258 = vld [vmem:[%s1 + $0x398] sm:$0xf]
  %v259 = vld [vmem:[%s1 + $0x39c] sm:$0xf]
  %v260 = vld [vmem:[%s1 + $0x3a0] sm:$0xf]
  %v261 = vld [vmem:[%s1 + $0x3a4] sm:$0xf]
  %v262 = vld [vmem:[%s1 + $0x3a8] sm:$0xf]
  %v263 = vld [vmem:[%s1 + $0x3ac] sm:$0xf]
  %v264 = vld [vmem:[%s1 + $0x3b0] sm:$0xf]
  %v265 = vld [vmem:[%s1 + $0x3b4] sm:$0xf]
  %v266 = vld [vmem:[%s1 + $0x3b8] sm:$0xf]
  %v267 = vld [vmem:[%s1 + $0x3bc] sm:$0xf]
  %v268 = vld [vmem:[%s1 + $0x3c0] sm:$0xf]
  %v269 = vld [vmem:[%s1 + $0x3c4] sm:$0xf]
  %v270 = vld [vmem:[%s1 + $0x3c8] sm:$0xf]
  %v271 = vld [vmem:[%s1 + $0x3cc] sm:$0xf]
  %v272 = vld [vmem:[%s1 + $0x3d0] sm:$0xf]
  %v273 = vld [vmem:[%s1 + $0x3d4] sm:$0xf]
  %v274 = vld [vmem:[%s1 + $0x3d8] sm:$0xf]
  %v275 = vld [vmem:[%s1 + $0x3dc] sm:$0xf]
  %v276 = vld [vmem:[%s1 + $0x3e0] sm:$0xf]
  %v277 = vld [vmem:[%s1 + $0x3e4] sm:$0xf]
  %v278 = vld [vmem:[%s1 + $0x3e8] sm:$0xf]
  %v279 = vld [vmem:[%s1 + $0x3ec] sm:$0xf]
  %v280 = vld [vmem:[%s1 + $0x3f0] sm:$0xf]
  %v281 = vld [vmem:[%s1 + $0x3f4] sm:$0xf]
  %v282 = vld [vmem:[%s1 + $0x3f8] sm:$0xf]
  %v283 = vld [vmem:[%s1 + $0x3fc] sm:$0xf]
  %v292 = vunpack.c.l.b16 %v20
  %v293 = vunpack.c.h.b16 %v20
  %v294 = vunpack.c.l.b16 %v21
  %v295 = vunpack.c.h.b16 %v21
  %v296 = vunpack.c.l.b16 %v22
  %v297 = vunpack.c.h.b16 %v22
  %v298 = vunpack.c.l.b16 %v23
  %v299 = vunpack.c.h.b16 %v23
  %v300 = vunpack.c.l.b16 %v24
  %v301 = vunpack.c.h.b16 %v24
  %v302 = vunpack.c.l.b16 %v25
  %v303 = vunpack.c.h.b16 %v25
  %v304 = vunpack.c.l.b16 %v26
  %v305 = vunpack.c.h.b16 %v26
  %v306 = vunpack.c.l.b16 %v27
  %v307 = vunpack.c.h.b16 %v27
  %v308 = vpack.c.b16 %v292, %v292
  %v309 = vpack.c.b16 %v293, %v293
  %v310 = vpack.c.b16 %v294, %v294
  %v311 = vpack.c.b16 %v295, %v295
  %v312 = vpack.c.b16 %v296, %v296
  %v313 = vpack.c.b16 %v297, %v297
  %v314 = vpack.c.b16 %v298, %v298
  %v315 = vpack.c.b16 %v299, %v299
  %v316 = vpack.c.b16 %v300, %v300
  %v317 = vpack.c.b16 %v301, %v301
  %v318 = vpack.c.b16 %v302, %v302
  %v319 = vpack.c.b16 %v303, %v303
  %v320 = vpack.c.b16 %v304, %v304
  %v321 = vpack.c.b16 %v305, %v305
  %v322 = vpack.c.b16 %v306, %v306
  %v323 = vpack.c.b16 %v307, %v307
  %v596 = vunpack.c.l.b16 %v28
  %v597 = vunpack.c.l.b16 %v29
  %v598 = vunpack.c.l.b16 %v30
  %v599 = vunpack.c.l.b16 %v31
  %v600 = vunpack.c.l.b16 %v32
  %v601 = vunpack.c.l.b16 %v33
  %v602 = vunpack.c.l.b16 %v34
  %v603 = vunpack.c.l.b16 %v35
  %v604 = vunpack.c.l.b16 %v36
  %v605 = vunpack.c.l.b16 %v37
  %v606 = vunpack.c.l.b16 %v38
  %v607 = vunpack.c.l.b16 %v39
  %v608 = vunpack.c.l.b16 %v40
  %v609 = vunpack.c.l.b16 %v41
  %v610 = vunpack.c.l.b16 %v42
  %v611 = vunpack.c.l.b16 %v43
  %v612 = vunpack.c.l.b16 %v44
  %v613 = vunpack.c.l.b16 %v45
  %v614 = vunpack.c.l.b16 %v46
  %v615 = vunpack.c.l.b16 %v47
  %v616 = vunpack.c.l.b16 %v48
  %v617 = vunpack.c.l.b16 %v49
  %v618 = vunpack.c.l.b16 %v50
  %v619 = vunpack.c.l.b16 %v51
  %v620 = vunpack.c.l.b16 %v52
  %v621 = vunpack.c.l.b16 %v53
  %v622 = vunpack.c.l.b16 %v54
  %v623 = vunpack.c.l.b16 %v55
  %v624 = vunpack.c.l.b16 %v56
  %v625 = vunpack.c.l.b16 %v57
  %v626 = vunpack.c.l.b16 %v58
  %v627 = vunpack.c.l.b16 %v59
  %v628 = vunpack.c.l.b16 %v60
  %v629 = vunpack.c.l.b16 %v61
  %v630 = vunpack.c.l.b16 %v62
  %v631 = vunpack.c.l.b16 %v63
  %v632 = vunpack.c.l.b16 %v64
  %v633 = vunpack.c.l.b16 %v65
  %v634 = vunpack.c.l.b16 %v66
  %v635 = vunpack.c.l.b16 %v67
  %v636 = vunpack.c.l.b16 %v68
  %v637 = vunpack.c.l.b16 %v69
  %v638 = vunpack.c.l.b16 %v70
  %v639 = vunpack.c.l.b16 %v71
  %v640 = vunpack.c.l.b16 %v72
  %v641 = vunpack.c.l.b16 %v73
  %v642 = vunpack.c.l.b16 %v74
  %v643 = vunpack.c.l.b16 %v75
  %v644 = vunpack.c.l.b16 %v76
  %v645 = vunpack.c.l.b16 %v77
  %v646 = vunpack.c.l.b16 %v78
  %v647 = vunpack.c.l.b16 %v79
  %v648 = vunpack.c.l.b16 %v80
  %v649 = vunpack.c.l.b16 %v81
  %v650 = vunpack.c.l.b16 %v82
  %v651 = vunpack.c.l.b16 %v83
  %v652 = vunpack.c.l.b16 %v84
  %v653 = vunpack.c.l.b16 %v85
  %v654 = vunpack.c.l.b16 %v86
  %v655 = vunpack.c.l.b16 %v87
  %v656 = vunpack.c.l.b16 %v88
  %v657 = vunpack.c.l.b16 %v89
  %v658 = vunpack.c.l.b16 %v90
  %v659 = vunpack.c.l.b16 %v91
  %v660 = vunpack.c.l.b16 %v92
  %v661 = vunpack.c.l.b16 %v93
  %v662 = vunpack.c.l.b16 %v94
  %v663 = vunpack.c.l.b16 %v95
  %v664 = vunpack.c.l.b16 %v96
  %v665 = vunpack.c.l.b16 %v97
  %v666 = vunpack.c.l.b16 %v98
  %v667 = vunpack.c.l.b16 %v99
  %v668 = vunpack.c.l.b16 %v100
  %v669 = vunpack.c.l.b16 %v101
  %v670 = vunpack.c.l.b16 %v102
  %v671 = vunpack.c.l.b16 %v103
  %v672 = vunpack.c.l.b16 %v104
  %v673 = vunpack.c.l.b16 %v105
  %v674 = vunpack.c.l.b16 %v106
  %v675 = vunpack.c.l.b16 %v107
  %v676 = vunpack.c.l.b16 %v108
  %v677 = vunpack.c.l.b16 %v109
  %v678 = vunpack.c.l.b16 %v110
  %v679 = vunpack.c.l.b16 %v111
  %v680 = vunpack.c.l.b16 %v112
  %v681 = vunpack.c.l.b16 %v113
  %v682 = vunpack.c.l.b16 %v114
  %v683 = vunpack.c.l.b16 %v115
  %v684 = vunpack.c.l.b16 %v116
  %v685 = vunpack.c.l.b16 %v117
  %v686 = vunpack.c.l.b16 %v118
  %v687 = vunpack.c.l.b16 %v119
  %v688 = vunpack.c.l.b16 %v120
  %v689 = vunpack.c.l.b16 %v121
  %v690 = vunpack.c.l.b16 %v122
  %v691 = vunpack.c.l.b16 %v123
  %v692 = vunpack.c.l.b16 %v124
  %v693 = vunpack.c.l.b16 %v125
  %v694 = vunpack.c.l.b16 %v126
  %v695 = vunpack.c.l.b16 %v127
  %v696 = vunpack.c.l.b16 %v128
  %v697 = vunpack.c.l.b16 %v129
  %v698 = vunpack.c.l.b16 %v130
  %v699 = vunpack.c.l.b16 %v131
  %v700 = vunpack.c.l.b16 %v132
  %v701 = vunpack.c.l.b16 %v133
  %v702 = vunpack.c.l.b16 %v134
  %v703 = vunpack.c.l.b16 %v135
  %v704 = vunpack.c.l.b16 %v136
  %v705 = vunpack.c.l.b16 %v137
  %v706 = vunpack.c.l.b16 %v138
  %v707 = vunpack.c.l.b16 %v139
  %v708 = vunpack.c.l.b16 %v140
  %v709 = vunpack.c.l.b16 %v141
  %v710 = vunpack.c.l.b16 %v142
  %v711 = vunpack.c.l.b16 %v143
  %v712 = vunpack.c.l.b16 %v144
  %v713 = vunpack.c.l.b16 %v145
  %v714 = vunpack.c.l.b16 %v146
  %v715 = vunpack.c.l.b16 %v147
  %v716 = vunpack.c.l.b16 %v148
  %v717 = vunpack.c.l.b16 %v149
  %v718 = vunpack.c.l.b16 %v150
  %v719 = vunpack.c.l.b16 %v151
  %v720 = vunpack.c.l.b16 %v152
  %v721 = vunpack.c.l.b16 %v153
  %v722 = vunpack.c.l.b16 %v154
  %v723 = vunpack.c.l.b16 %v155
  %v724 = vunpack.c.l.b16 %v156
  %v725 = vunpack.c.l.b16 %v157
  %v726 = vunpack.c.l.b16 %v158
  %v727 = vunpack.c.l.b16 %v159
  %v728 = vunpack.c.l.b16 %v160
  %v729 = vunpack.c.l.b16 %v161
  %v730 = vunpack.c.l.b16 %v162
  %v731 = vunpack.c.l.b16 %v163
  %v732 = vunpack.c.l.b16 %v164
  %v733 = vunpack.c.l.b16 %v165
  %v734 = vunpack.c.l.b16 %v166
  %v735 = vunpack.c.l.b16 %v167
  %v736 = vunpack.c.l.b16 %v168
  %v737 = vunpack.c.l.b16 %v169
  %v738 = vunpack.c.l.b16 %v170
  %v739 = vunpack.c.l.b16 %v171
  %v740 = vunpack.c.l.b16 %v172
  %v741 = vunpack.c.l.b16 %v173
  %v742 = vunpack.c.l.b16 %v174
  %v743 = vunpack.c.l.b16 %v175
  %v744 = vunpack.c.l.b16 %v176
  %v745 = vunpack.c.l.b16 %v177
  %v746 = vunpack.c.l.b16 %v178
  %v747 = vunpack.c.l.b16 %v179
  %v748 = vunpack.c.l.b16 %v180
  %v749 = vunpack.c.l.b16 %v181
  %v750 = vunpack.c.l.b16 %v182
  %v751 = vunpack.c.l.b16 %v183
  %v752 = vunpack.c.l.b16 %v184
  %v753 = vunpack.c.l.b16 %v185
  %v754 = vunpack.c.l.b16 %v186
  %v755 = vunpack.c.l.b16 %v187
  %v756 = vunpack.c.l.b16 %v188
  %v757 = vunpack.c.l.b16 %v189
  %v758 = vunpack.c.l.b16 %v190
  %v759 = vunpack.c.l.b16 %v191
  %v760 = vunpack.c.l.b16 %v192
  %v761 = vunpack.c.l.b16 %v193
  %v762 = vunpack.c.l.b16 %v194
  %v763 = vunpack.c.l.b16 %v195
  %v764 = vunpack.c.l.b16 %v196
  %v765 = vunpack.c.l.b16 %v197
  %v766 = vunpack.c.l.b16 %v198
  %v767 = vunpack.c.l.b16 %v199
  %v768 = vunpack.c.l.b16 %v200
  %v769 = vunpack.c.l.b16 %v201
  %v770 = vunpack.c.l.b16 %v202
  %v771 = vunpack.c.l.b16 %v203
  %v772 = vunpack.c.l.b16 %v204
  %v773 = vunpack.c.l.b16 %v205
  %v774 = vunpack.c.l.b16 %v206
  %v775 = vunpack.c.l.b16 %v207
  %v776 = vunpack.c.l.b16 %v208
  %v777 = vunpack.c.l.b16 %v209
  %v778 = vunpack.c.l.b16 %v210
  %v779 = vunpack.c.l.b16 %v211
  %v780 = vunpack.c.l.b16 %v212
  %v781 = vunpack.c.l.b16 %v213
  %v782 = vunpack.c.l.b16 %v214
  %v783 = vunpack.c.l.b16 %v215
  %v784 = vunpack.c.l.b16 %v216
  %v785 = vunpack.c.l.b16 %v217
  %v786 = vunpack.c.l.b16 %v218
  %v787 = vunpack.c.l.b16 %v219
  %v788 = vunpack.c.l.b16 %v220
  %v789 = vunpack.c.l.b16 %v221
  %v790 = vunpack.c.l.b16 %v222
  %v791 = vunpack.c.l.b16 %v223
  %v792 = vunpack.c.l.b16 %v224
  %v793 = vunpack.c.l.b16 %v225
  %v794 = vunpack.c.l.b16 %v226
  %v795 = vunpack.c.l.b16 %v227
  %v796 = vunpack.c.l.b16 %v228
  %v797 = vunpack.c.l.b16 %v229
  %v798 = vunpack.c.l.b16 %v230
  %v799 = vunpack.c.l.b16 %v231
  %v800 = vunpack.c.l.b16 %v232
  %v801 = vunpack.c.l.b16 %v233
  %v802 = vunpack.c.l.b16 %v234
  %v803 = vunpack.c.l.b16 %v235
  %v804 = vunpack.c.l.b16 %v236
  %v805 = vunpack.c.l.b16 %v237
  %v806 = vunpack.c.l.b16 %v238
  %v807 = vunpack.c.l.b16 %v239
  %v808 = vunpack.c.l.b16 %v240
  %v809 = vunpack.c.l.b16 %v241
  %v810 = vunpack.c.l.b16 %v242
  %v811 = vunpack.c.l.b16 %v243
  %v812 = vunpack.c.l.b16 %v244
  %v813 = vunpack.c.l.b16 %v245
  %v814 = vunpack.c.l.b16 %v246
  %v815 = vunpack.c.l.b16 %v247
  %v816 = vunpack.c.l.b16 %v248
  %v817 = vunpack.c.l.b16 %v249
  %v818 = vunpack.c.l.b16 %v250
  %v819 = vunpack.c.l.b16 %v251
  %v820 = vunpack.c.l.b16 %v252
  %v821 = vunpack.c.l.b16 %v253
  %v822 = vunpack.c.l.b16 %v254
  %v823 = vunpack.c.l.b16 %v255
  %v824 = vunpack.c.l.b16 %v256
  %v825 = vunpack.c.l.b16 %v257
  %v826 = vunpack.c.l.b16 %v258
  %v827 = vunpack.c.l.b16 %v259
  %v828 = vunpack.c.l.b16 %v260
  %v829 = vunpack.c.l.b16 %v261
  %v830 = vunpack.c.l.b16 %v262
  %v831 = vunpack.c.l.b16 %v263
  %v832 = vunpack.c.l.b16 %v264
  %v833 = vunpack.c.l.b16 %v265
  %v834 = vunpack.c.l.b16 %v266
  %v835 = vunpack.c.l.b16 %v267
  %v836 = vunpack.c.l.b16 %v268
  %v837 = vunpack.c.l.b16 %v269
  %v838 = vunpack.c.l.b16 %v270
  %v839 = vunpack.c.l.b16 %v271
  %v840 = vunpack.c.l.b16 %v272
  %v841 = vunpack.c.l.b16 %v273
  %v842 = vunpack.c.l.b16 %v274
  %v843 = vunpack.c.l.b16 %v275
  %v844 = vunpack.c.l.b16 %v276
  %v845 = vunpack.c.l.b16 %v277
  %v846 = vunpack.c.l.b16 %v278
  %v847 = vunpack.c.l.b16 %v279
  %v848 = vunpack.c.l.b16 %v280
  %v849 = vunpack.c.l.b16 %v281
  %v850 = vunpack.c.l.b16 %v282
  %v851 = vunpack.c.l.b16 %v283
  %v852 = vpack.c.b16 %v597, %v596
  %v853 = vpack.c.b16 %v599, %v598
  %v854 = vpack.c.b16 %v601, %v600
  %v855 = vpack.c.b16 %v603, %v602
  %v856 = vpack.c.b16 %v605, %v604
  %v857 = vpack.c.b16 %v607, %v606
  %v858 = vpack.c.b16 %v609, %v608
  %v859 = vpack.c.b16 %v611, %v610
  %v860 = vpack.c.b16 %v613, %v612
  %v861 = vpack.c.b16 %v615, %v614
  %v862 = vpack.c.b16 %v617, %v616
  %v863 = vpack.c.b16 %v619, %v618
  %v864 = vpack.c.b16 %v621, %v620
  %v865 = vpack.c.b16 %v623, %v622
  %v866 = vpack.c.b16 %v625, %v624
  %v867 = vpack.c.b16 %v627, %v626
  %v868 = vpack.c.b16 %v629, %v628
  %v869 = vpack.c.b16 %v631, %v630
  %v870 = vpack.c.b16 %v633, %v632
  %v871 = vpack.c.b16 %v635, %v634
  %v872 = vpack.c.b16 %v637, %v636
  %v873 = vpack.c.b16 %v639, %v638
  %v874 = vpack.c.b16 %v641, %v640
  %v875 = vpack.c.b16 %v643, %v642
  %v876 = vpack.c.b16 %v645, %v644
  %v877 = vpack.c.b16 %v647, %v646
  %v878 = vpack.c.b16 %v649, %v648
  %v879 = vpack.c.b16 %v651, %v650
  %v880 = vpack.c.b16 %v653, %v652
  %v881 = vpack.c.b16 %v655, %v654
  %v882 = vpack.c.b16 %v657, %v656
  %v883 = vpack.c.b16 %v659, %v658
  %v884 = vpack.c.b16 %v661, %v660
  %v885 = vpack.c.b16 %v663, %v662
  %v886 = vpack.c.b16 %v665, %v664
  %v887 = vpack.c.b16 %v667, %v666
  %v888 = vpack.c.b16 %v669, %v668
  %v889 = vpack.c.b16 %v671, %v670
  %v890 = vpack.c.b16 %v673, %v672
  %v891 = vpack.c.b16 %v675, %v674
  %v892 = vpack.c.b16 %v677, %v676
  %v893 = vpack.c.b16 %v679, %v678
  %v894 = vpack.c.b16 %v681, %v680
  %v895 = vpack.c.b16 %v683, %v682
  %v896 = vpack.c.b16 %v685, %v684
  %v897 = vpack.c.b16 %v687, %v686
  %v898 = vpack.c.b16 %v689, %v688
  %v899 = vpack.c.b16 %v691, %v690
  %v900 = vpack.c.b16 %v693, %v692
  %v901 = vpack.c.b16 %v695, %v694
  %v902 = vpack.c.b16 %v697, %v696
  %v903 = vpack.c.b16 %v699, %v698
  %v904 = vpack.c.b16 %v701, %v700
  %v905 = vpack.c.b16 %v703, %v702
  %v906 = vpack.c.b16 %v705, %v704
  %v907 = vpack.c.b16 %v707, %v706
  %v908 = vpack.c.b16 %v709, %v708
  %v909 = vpack.c.b16 %v711, %v710
  %v910 = vpack.c.b16 %v713, %v712
  %v911 = vpack.c.b16 %v715, %v714
  %v912 = vpack.c.b16 %v717, %v716
  %v913 = vpack.c.b16 %v719, %v718
  %v914 = vpack.c.b16 %v721, %v720
  %v915 = vpack.c.b16 %v723, %v722
  %v916 = vpack.c.b16 %v725, %v724
  %v917 = vpack.c.b16 %v727, %v726
  %v918 = vpack.c.b16 %v729, %v728
  %v919 = vpack.c.b16 %v731, %v730
  %v920 = vpack.c.b16 %v733, %v732
  %v921 = vpack.c.b16 %v735, %v734
  %v922 = vpack.c.b16 %v737, %v736
  %v923 = vpack.c.b16 %v739, %v738
  %v924 = vpack.c.b16 %v741, %v740
  %v925 = vpack.c.b16 %v743, %v742
  %v926 = vpack.c.b16 %v745, %v744
  %v927 = vpack.c.b16 %v747, %v746
  %v928 = vpack.c.b16 %v749, %v748
  %v929 = vpack.c.b16 %v751, %v750
  %v930 = vpack.c.b16 %v753, %v752
  %v931 = vpack.c.b16 %v755, %v754
  %v932 = vpack.c.b16 %v757, %v756
  %v933 = vpack.c.b16 %v759, %v758
  %v934 = vpack.c.b16 %v761, %v760
  %v935 = vpack.c.b16 %v763, %v762
  %v936 = vpack.c.b16 %v765, %v764
  %v937 = vpack.c.b16 %v767, %v766
  %v938 = vpack.c.b16 %v769, %v768
  %v939 = vpack.c.b16 %v771, %v770
  %v940 = vpack.c.b16 %v773, %v772
  %v941 = vpack.c.b16 %v775, %v774
  %v942 = vpack.c.b16 %v777, %v776
  %v943 = vpack.c.b16 %v779, %v778
  %v944 = vpack.c.b16 %v781, %v780
  %v945 = vpack.c.b16 %v783, %v782
  %v946 = vpack.c.b16 %v785, %v784
  %v947 = vpack.c.b16 %v787, %v786
  %v948 = vpack.c.b16 %v789, %v788
  %v949 = vpack.c.b16 %v791, %v790
  %v950 = vpack.c.b16 %v793, %v792
  %v951 = vpack.c.b16 %v795, %v794
  %v952 = vpack.c.b16 %v797, %v796
  %v953 = vpack.c.b16 %v799, %v798
  %v954 = vpack.c.b16 %v801, %v800
  %v955 = vpack.c.b16 %v803, %v802
  %v956 = vpack.c.b16 %v805, %v804
  %v957 = vpack.c.b16 %v807, %v806
  %v958 = vpack.c.b16 %v809, %v808
  %v959 = vpack.c.b16 %v811, %v810
  %v960 = vpack.c.b16 %v813, %v812
  %v961 = vpack.c.b16 %v815, %v814
  %v962 = vpack.c.b16 %v817, %v816
  %v963 = vpack.c.b16 %v819, %v818
  %v964 = vpack.c.b16 %v821, %v820
  %v965 = vpack.c.b16 %v823, %v822
  %v966 = vpack.c.b16 %v825, %v824
  %v967 = vpack.c.b16 %v827, %v826
  %v968 = vpack.c.b16 %v829, %v828
  %v969 = vpack.c.b16 %v831, %v830
  %v970 = vpack.c.b16 %v833, %v832
  %v971 = vpack.c.b16 %v835, %v834
  %v972 = vpack.c.b16 %v837, %v836
  %v973 = vpack.c.b16 %v839, %v838
  %v974 = vpack.c.b16 %v841, %v840
  %v975 = vpack.c.b16 %v843, %v842
  %v976 = vpack.c.b16 %v845, %v844
  %v977 = vpack.c.b16 %v847, %v846
  %v978 = vpack.c.b16 %v849, %v848
  %v979 = vpack.c.b16 %v851, %v850
  %1108 = vmatpush.bf16.msra.mxu0 %v859
  %1109 = vmatpush.bf16.msra.mxu0 %v858
  %1110 = vmatpush.bf16.msra.mxu0 %v857
  %1111 = vmatpush.bf16.msra.mxu0 %v856
  %1112 = vmatpush.bf16.msra.mxu0 %v855
  %1113 = vmatpush.bf16.msra.mxu0 %v854
  %1114 = vmatpush.bf16.msra.mxu0 %v853
  %1115 = vmatpush.bf16.msra.mxu0 %v852
  %1116 = vmatmul.bf16.gmra.mxu0 %v308
  %v1117 = vpop.f32.mrf.mxu0
  %v1118 = vadd.f32 0.0, %v1117
  %v1119 = vpop.f32.mrf.mxu0
  %1120 = vdwg.mxu0
  %1121 = vmatpush.bf16.msra.mxu0 %v867
  %1122 = vmatpush.bf16.msra.mxu0 %v866
  %1123 = vmatpush.bf16.msra.mxu0 %v865
  %1124 = vmatpush.bf16.msra.mxu0 %v864
  %1125 = vmatpush.bf16.msra.mxu0 %v863
  %1126 = vmatpush.bf16.msra.mxu0 %v862
  %1127 = vmatpush.bf16.msra.mxu0 %v861
  %1128 = vmatpush.bf16.msra.mxu0 %v860
  %1129 = vmatmul.bf16.gmra.mxu0 %v309
  %v1130 = vpop.f32.mrf.mxu0
  %v1131 = vadd.f32 %v1118, %v1130
  %v1132 = vpop.f32.mrf.mxu0
  %1133 = vdwg.mxu0
  %1134 = vmatpush.bf16.msra.mxu0 %v875
  %1135 = vmatpush.bf16.msra.mxu0 %v874
  %1136 = vmatpush.bf16.msra.mxu0 %v873
  %1137 = vmatpush.bf16.msra.mxu0 %v872
  %1138 = vmatpush.bf16.msra.mxu0 %v871
  %1139 = vmatpush.bf16.msra.mxu0 %v870
  %1140 = vmatpush.bf16.msra.mxu0 %v869
  %1141 = vmatpush.bf16.msra.mxu0 %v868
  %1142 = vmatmul.bf16.gmra.mxu0 %v310
  %v1143 = vpop.f32.mrf.mxu0
  %v1144 = vadd.f32 %v1131, %v1143
  %v1145 = vpop.f32.mrf.mxu0
  %1146 = vdwg.mxu0
  %1147 = vmatpush.bf16.msra.mxu0 %v883
  %1148 = vmatpush.bf16.msra.mxu0 %v882
  %1149 = vmatpush.bf16.msra.mxu0 %v881
  %1150 = vmatpush.bf16.msra.mxu0 %v880
  %1151 = vmatpush.bf16.msra.mxu0 %v879
  %1152 = vmatpush.bf16.msra.mxu0 %v878
  %1153 = vmatpush.bf16.msra.mxu0 %v877
  %1154 = vmatpush.bf16.msra.mxu0 %v876
  %1155 = vmatmul.bf16.gmra.mxu0 %v311
  %v1156 = vpop.f32.mrf.mxu0
  %v1157 = vadd.f32 %v1144, %v1156
  %v1158 = vpop.f32.mrf.mxu0
  %1159 = vdwg.mxu0
  %1160 = vmatpush.bf16.msra.mxu0 %v891
  %1161 = vmatpush.bf16.msra.mxu0 %v890
  %1162 = vmatpush.bf16.msra.mxu0 %v889
  %1163 = vmatpush.bf16.msra.mxu0 %v888
  %1164 = vmatpush.bf16.msra.mxu0 %v887
  %1165 = vmatpush.bf16.msra.mxu0 %v886
  %1166 = vmatpush.bf16.msra.mxu0 %v885
  %1167 = vmatpush.bf16.msra.mxu0 %v884
  %1168 = vmatmul.bf16.gmra.mxu0 %v312
  %v1169 = vpop.f32.mrf.mxu0
  %v1170 = vadd.f32 %v1157, %v1169
  %v1171 = vpop.f32.mrf.mxu0
  %1172 = vdwg.mxu0
  %1173 = vmatpush.bf16.msra.mxu0 %v899
  %1174 = vmatpush.bf16.msra.mxu0 %v898
  %1175 = vmatpush.bf16.msra.mxu0 %v897
  %1176 = vmatpush.bf16.msra.mxu0 %v896
  %1177 = vmatpush.bf16.msra.mxu0 %v895
  %1178 = vmatpush.bf16.msra.mxu0 %v894
  %1179 = vmatpush.bf16.msra.mxu0 %v893
  %1180 = vmatpush.bf16.msra.mxu0 %v892
  %1181 = vmatmul.bf16.gmra.mxu0 %v313
  %v1182 = vpop.f32.mrf.mxu0
  %v1183 = vadd.f32 %v1170, %v1182
  %v1184 = vpop.f32.mrf.mxu0
  %1185 = vdwg.mxu0
  %1186 = vmatpush.bf16.msra.mxu0 %v907
  %1187 = vmatpush.bf16.msra.mxu0 %v906
  %1188 = vmatpush.bf16.msra.mxu0 %v905
  %1189 = vmatpush.bf16.msra.mxu0 %v904
  %1190 = vmatpush.bf16.msra.mxu0 %v903
  %1191 = vmatpush.bf16.msra.mxu0 %v902
  %1192 = vmatpush.bf16.msra.mxu0 %v901
  %1193 = vmatpush.bf16.msra.mxu0 %v900
  %1194 = vmatmul.bf16.gmra.mxu0 %v314
  %v1195 = vpop.f32.mrf.mxu0
  %v1196 = vadd.f32 %v1183, %v1195
  %v1197 = vpop.f32.mrf.mxu0
  %1198 = vdwg.mxu0
  %1199 = vmatpush.bf16.msra.mxu0 %v915
  %1200 = vmatpush.bf16.msra.mxu0 %v914
  %1201 = vmatpush.bf16.msra.mxu0 %v913
  %1202 = vmatpush.bf16.msra.mxu0 %v912
  %1203 = vmatpush.bf16.msra.mxu0 %v911
  %1204 = vmatpush.bf16.msra.mxu0 %v910
  %1205 = vmatpush.bf16.msra.mxu0 %v909
  %1206 = vmatpush.bf16.msra.mxu0 %v908
  %1207 = vmatmul.bf16.gmra.mxu0 %v315
  %v1208 = vpop.f32.mrf.mxu0
  %v1209 = vadd.f32 %v1196, %v1208
  %v1210 = vpop.f32.mrf.mxu0
  %1211 = vdwg.mxu0
  %1212 = vmatpush.bf16.msra.mxu0 %v923
  %1213 = vmatpush.bf16.msra.mxu0 %v922
  %1214 = vmatpush.bf16.msra.mxu0 %v921
  %1215 = vmatpush.bf16.msra.mxu0 %v920
  %1216 = vmatpush.bf16.msra.mxu0 %v919
  %1217 = vmatpush.bf16.msra.mxu0 %v918
  %1218 = vmatpush.bf16.msra.mxu0 %v917
  %1219 = vmatpush.bf16.msra.mxu0 %v916
  %1220 = vmatmul.bf16.gmra.mxu0 %v316
  %v1221 = vpop.f32.mrf.mxu0
  %v1222 = vadd.f32 %v1209, %v1221
  %v1223 = vpop.f32.mrf.mxu0
  %1224 = vdwg.mxu0
  %1225 = vmatpush.bf16.msra.mxu0 %v931
  %1226 = vmatpush.bf16.msra.mxu0 %v930
  %1227 = vmatpush.bf16.msra.mxu0 %v929
  %1228 = vmatpush.bf16.msra.mxu0 %v928
  %1229 = vmatpush.bf16.msra.mxu0 %v927
  %1230 = vmatpush.bf16.msra.mxu0 %v926
  %1231 = vmatpush.bf16.msra.mxu0 %v925
  %1232 = vmatpush.bf16.msra.mxu0 %v924
  %1233 = vmatmul.bf16.gmra.mxu0 %v317
  %v1234 = vpop.f32.mrf.mxu0
  %v1235 = vadd.f32 %v1222, %v1234
  %v1236 = vpop.f32.mrf.mxu0
  %1237 = vdwg.mxu0
  %1238 = vmatpush.bf16.msra.mxu0 %v939
  %1239 = vmatpush.bf16.msra.mxu0 %v938
  %1240 = vmatpush.bf16.msra.mxu0 %v937
  %1241 = vmatpush.bf16.msra.mxu0 %v936
  %1242 = vmatpush.bf16.msra.mxu0 %v935
  %1243 = vmatpush.bf16.msra.mxu0 %v934
  %1244 = vmatpush.bf16.msra.mxu0 %v933
  %1245 = vmatpush.bf16.msra.mxu0 %v932
  %1246 = vmatmul.bf16.gmra.mxu0 %v318
  %v1247 = vpop.f32.mrf.mxu0
  %v1248 = vadd.f32 %v1235, %v1247
  %v1249 = vpop.f32.mrf.mxu0
  %1250 = vdwg.mxu0
  %1251 = vmatpush.bf16.msra.mxu0 %v947
  %1252 = vmatpush.bf16.msra.mxu0 %v946
  %1253 = vmatpush.bf16.msra.mxu0 %v945
  %1254 = vmatpush.bf16.msra.mxu0 %v944
  %1255 = vmatpush.bf16.msra.mxu0 %v943
  %1256 = vmatpush.bf16.msra.mxu0 %v942
  %1257 = vmatpush.bf16.msra.mxu0 %v941
  %1258 = vmatpush.bf16.msra.mxu0 %v940
  %1259 = vmatmul.bf16.gmra.mxu0 %v319
  %v1260 = vpop.f32.mrf.mxu0
  %v1261 = vadd.f32 %v1248, %v1260
  %v1262 = vpop.f32.mrf.mxu0
  %1263 = vdwg.mxu0
  %1264 = vmatpush.bf16.msra.mxu0 %v955
  %1265 = vmatpush.bf16.msra.mxu0 %v954
  %1266 = vmatpush.bf16.msra.mxu0 %v953
  %1267 = vmatpush.bf16.msra.mxu0 %v952
  %1268 = vmatpush.bf16.msra.mxu0 %v951
  %1269 = vmatpush.bf16.msra.mxu0 %v950
  %1270 = vmatpush.bf16.msra.mxu0 %v949
  %1271 = vmatpush.bf16.msra.mxu0 %v948
  %1272 = vmatmul.bf16.gmra.mxu0 %v320
  %v1273 = vpop.f32.mrf.mxu0
  %v1274 = vadd.f32 %v1261, %v1273
  %v1275 = vpop.f32.mrf.mxu0
  %1276 = vdwg.mxu0
  %1277 = vmatpush.bf16.msra.mxu0 %v963
  %1278 = vmatpush.bf16.msra.mxu0 %v962
  %1279 = vmatpush.bf16.msra.mxu0 %v961
  %1280 = vmatpush.bf16.msra.mxu0 %v960
  %1281 = vmatpush.bf16.msra.mxu0 %v959
  %1282 = vmatpush.bf16.msra.mxu0 %v958
  %1283 = vmatpush.bf16.msra.mxu0 %v957
  %1284 = vmatpush.bf16.msra.mxu0 %v956
  %1285 = vmatmul.bf16.gmra.mxu0 %v321
  %v1286 = vpop.f32.mrf.mxu0
  %v1287 = vadd.f32 %v1274, %v1286
  %v1288 = vpop.f32.mrf.mxu0
  %1289 = vdwg.mxu0
  %1290 = vmatpush.bf16.msra.mxu0 %v971
  %1291 = vmatpush.bf16.msra.mxu0 %v970
  %1292 = vmatpush.bf16.msra.mxu0 %v969
  %1293 = vmatpush.bf16.msra.mxu0 %v968
  %1294 = vmatpush.bf16.msra.mxu0 %v967
  %1295 = vmatpush.bf16.msra.mxu0 %v966
  %1296 = vmatpush.bf16.msra.mxu0 %v965
  %1297 = vmatpush.bf16.msra.mxu0 %v964
  %1298 = vmatmul.bf16.gmra.mxu0 %v322
  %v1299 = vpop.f32.mrf.mxu0
  %v1300 = vadd.f32 %v1287, %v1299
  %v1301 = vpop.f32.mrf.mxu0
  %1302 = vdwg.mxu0
  %1303 = vmatpush.bf16.msra.mxu0 %v979
  %1304 = vmatpush.bf16.msra.mxu0 %v978
  %1305 = vmatpush.bf16.msra.mxu0 %v977
  %1306 = vmatpush.bf16.msra.mxu0 %v976
  %1307 = vmatpush.bf16.msra.mxu0 %v975
  %1308 = vmatpush.bf16.msra.mxu0 %v974
  %1309 = vmatpush.bf16.msra.mxu0 %v973
  %1310 = vmatpush.bf16.msra.mxu0 %v972
  %1311 = vmatmul.bf16.gmra.mxu0 %v323
  %v1312 = vpop.f32.mrf.mxu0
  %v1313 = vadd.f32 %v1300, %v1312
  %v1314 = vpop.f32.mrf.mxu0
  %1315 = vdwg.mxu0
  %1316 = vst [vmem:[%s5] sm:$0xff] %v1313
  // Predicated region
  $region22: #{encoder_forward.9} parent=0 // pred_check
    _
  $region23: #{encoder_forward.9} parent=0 // pred_check_branch
    %1318 = sbr.rel (0) target = $region25
  $region24: #{encoder_forward.9} parent=0 // pred_region
    _
  $region25: #{encoder_forward.9} parent=0 // pred_fallthru
    _
  // Predicated region
  $region26: #{encoder_forward.9} parent=0 // pred_check
    _
  $region27: #{encoder_forward.9} parent=0 // pred_check_branch
    %1320 = sbr.rel (0) target = $region29
  $region28: #{encoder_forward.9} parent=0 // pred_region
    _
  $region29: #{encoder_forward.9} parent=0 // pred_fallthru
    _

// kernel: encoder_forward.8
$region0: #{encoder_forward.8}
  #allocation0 [shape = 'u32[]', space=smem, size = 0x4, offset = 0x4, fixed_abs, tag = 'smem constant byte address 0x4 - core index']
  #allocation1 [shape = 'u32[72,128]{1,0:T(1,128)}', space=vmem, size = 0x9000, scoped, tag = 'internal scratch']
  #allocation2 [shape = 'bf16[100,128]{1,0:T(8,128)(2,1)}', space=vmem, size = 0x6800, scoped, tag = 'scratch operand']
  #allocation3 [shape = 'bf16[100,128]{1,0:T(8,128)(2,1)}', space=vmem, size = 0x6800, scoped, tag = 'scratch operand']
  %s0 = inlined_call_operand.vmem [shape: f32[100,128], index: 0, kind: input, shape index: {}]
  %s1 = inlined_call_operand.vmem [shape: f32[128,8], index: 1, kind: input, shape index: {}]
  %s2 = inlined_call_operand.vmem [shape: f32[1,8], index: 2, kind: input, shape index: {}]
  %s3 = inlined_call_operand.vmem [shape: f32[8,128], index: 3, kind: input, shape index: {}]
  %s4 = inlined_call_operand.vmem [shape: f32[1,128], index: 4, kind: input, shape index: {}]
  %s5 = inlined_call_operand.vmem [shape: bf16[9,128,128], index: 5, kind: input, shape index: {}]
  %s6 = inlined_call_operand.vmem [shape: f32[1,128], index: 6, kind: input, shape index: {}]
  %s7 = inlined_call_operand.vmem [shape: f32[1,128], index: 7, kind: input, shape index: {}]
  %s8 = inlined_call_operand.vmem [shape: bf16[9,128,128], index: 8, kind: input, shape index: {}]
  %s9 = inlined_call_operand.vmem [shape: f32[1,128], index: 9, kind: input, shape index: {}]
  %s10 = inlined_call_operand.vmem [shape: f32[1,128], index: 10, kind: input, shape index: {}]
  %s11 = inlined_call_operand.vmem [shape: f32[72,1], index: 11, kind: input, shape index: {}]
  %s12 = inlined_call_operand.vmem [shape: f32[72,128], index: 12, kind: output, shape index: {}]
  %s13 = sld [smem:[#allocation0]]
  $region58: #{encoder_forward.8} parent=0
    _
  %s15 = ssub.s32 1, %s13
  %s16 = scalar_select 0, %s15, %s13
  // Predicated region
  $region2: #{encoder_forward.8} parent=0 // pred_check
    _
  $region3: #{encoder_forward.8} parent=0 // pred_check_branch
    %18 = sbr.rel (0) target = $region5
  $region4: #{encoder_forward.8} parent=0 // pred_region
    _
  $region5: #{encoder_forward.8} parent=0 // pred_fallthru
    _
  // Predicated region
  $region6: #{encoder_forward.8} parent=0 // pred_check
    _
  $region7: #{encoder_forward.8} parent=0 // pred_check_branch
    %20 = sbr.rel (0) target = $region9
  $region8: #{encoder_forward.8} parent=0 // pred_region
    _
  $region9: #{encoder_forward.8} parent=0 // pred_fallthru
    _
  // Predicated region
  $region10: #{encoder_forward.8} parent=0 // pred_check
    _
  $region11: #{encoder_forward.8} parent=0 // pred_check_branch
    %22 = sbr.rel (0) target = $region13
  $region12: #{encoder_forward.8} parent=0 // pred_region
    _
  $region13: #{encoder_forward.8} parent=0 // pred_fallthru
    _
  // Predicated region
  $region14: #{encoder_forward.8} parent=0 // pred_check
    _
  $region15: #{encoder_forward.8} parent=0 // pred_check_branch
    %24 = sbr.rel (0) target = $region17
  $region16: #{encoder_forward.8} parent=0 // pred_region
    _
  $region17: #{encoder_forward.8} parent=0 // pred_fallthru
    _
  // Predicated region
  $region18: #{encoder_forward.8} parent=0 // pred_check
    _
  $region19: #{encoder_forward.8} parent=0 // pred_check_branch
    %26 = sbr.rel (0) target = $region21
  $region20: #{encoder_forward.8} parent=0 // pred_region
    _
  $region21: #{encoder_forward.8} parent=0 // pred_fallthru
    _
  // Predicated region
  $region22: #{encoder_forward.8} parent=0 // pred_check
    _
  $region23: #{encoder_forward.8} parent=0 // pred_check_branch
    %28 = sbr.rel (0) target = $region25
  $region24: #{encoder_forward.8} parent=0 // pred_region
    _
  $region25: #{encoder_forward.8} parent=0 // pred_fallthru
    _
  // Predicated region
  $region26: #{encoder_forward.8} parent=0 // pred_check
    _
  $region27: #{encoder_forward.8} parent=0 // pred_check_branch
    %30 = sbr.rel (0) target = $region29
  $region28: #{encoder_forward.8} parent=0 // pred_region
    _
  $region29: #{encoder_forward.8} parent=0 // pred_fallthru
    _
  // Predicated region
  $region30: #{encoder_forward.8} parent=0 // pred_check
    _
  $region31: #{encoder_forward.8} parent=0 // pred_check_branch
    %32 = sbr.rel (0) target = $region33
  $region32: #{encoder_forward.8} parent=0 // pred_region
    _
  $region33: #{encoder_forward.8} parent=0 // pred_fallthru
    _
  // Predicated region
  $region34: #{encoder_forward.8} parent=0 // pred_check
    _
  $region35: #{encoder_forward.8} parent=0 // pred_check_branch
    %34 = sbr.rel (0) target = $region37
  $region36: #{encoder_forward.8} parent=0 // pred_region
    _
  $region37: #{encoder_forward.8} parent=0 // pred_fallthru
    _
  // Predicated region
  $region38: #{encoder_forward.8} parent=0 // pred_check
    _
  $region39: #{encoder_forward.8} parent=0 // pred_check_branch
    %36 = sbr.rel (0) target = $region41
  $region40: #{encoder_forward.8} parent=0 // pred_region
    _
  $region41: #{encoder_forward.8} parent=0 // pred_fallthru
    _
  // Predicated region
  $region42: #{encoder_forward.8} parent=0 // pred_check
    _
  $region43: #{encoder_forward.8} parent=0 // pred_check_branch
    %38 = sbr.rel (0) target = $region45
  $region44: #{encoder_forward.8} parent=0 // pred_region
    _
  $region45: #{encoder_forward.8} parent=0 // pred_fallthru
    _
  // Predicated region
  $region46: #{encoder_forward.8} parent=0 // pred_check
    _
  $region47: #{encoder_forward.8} parent=0 // pred_check_branch
    %40 = sbr.rel (0) target = $region49
  $region48: #{encoder_forward.8} parent=0 // pred_region
    _
  $region49: #{encoder_forward.8} parent=0 // pred_fallthru
    _
  %v42 = vld [vmem:[%s11] sm:$0xff]
  %v43 = vld [vmem:[%s11 + $0x8] sm:$0xff]
  %v44 = vld [vmem:[%s11 + $0x10] sm:$0xff]
  %v45 = vld [vmem:[%s11 + $0x18] sm:$0xff]
  %v46 = vld [vmem:[%s11 + $0x20] sm:$0xff]
  %v47 = vld [vmem:[%s11 + $0x28] sm:$0xff]
  %v48 = vld [vmem:[%s11 + $0x30] sm:$0xff]
  %v49 = vld [vmem:[%s11 + $0x38] sm:$0xff]
  %v50 = vld [vmem:[%s11 + $0x40] sm:$0xff]
  %v51 = vld [vmem:[%s0] sm:$0xff]
  %v52 = vld [vmem:[%s0 + $0x8] sm:$0xff]
  %v53 = vld [vmem:[%s0 + $0x10] sm:$0xff]
  %v54 = vld [vmem:[%s0 + $0x18] sm:$0xff]
  %v55 = vld [vmem:[%s0 + $0x20] sm:$0xf]
  %v56 = vadd.f32 %v51, %v52
  %v57 = vadd.f32 %v56, %v53
  %v58 = vadd.f32 %v57, %v54
  %vm59 = vcmask 1043456
  %v60 = vsel %vm59, %v55, 0.0
  %v61 = vadd.f32 %v58, %v60
  %v62 = vrot.slane %v61, 4
  %v63 = vadd.f32 %v61, %v62
  %v64 = vrot.slane %v63, 2
  %v65 = vadd.f32 %v63, %v64
  %v66 = vrot.slane %v65, 1
  %v67 = vadd.f32 %v65, %v66
  %v68 = vmul.f32 %v67, 0.0625
  %v69 = vld [vmem:[%s0 + $0x24] sm:$0xff]
  %v70 = vld [vmem:[%s0 + $0x2c] sm:$0xff]
  %v71 = vld [vmem:[%s0 + $0x34] sm:$0xff]
  %v72 = vld [vmem:[%s0 + $0x3c] sm:$0xff]
  %v73 = vld [vmem:[%s0 + $0x44] sm:$0xf]
  %v74 = vadd.f32 %v69, %v70
  %v75 = vadd.f32 %v74, %v71
  %v76 = vadd.f32 %v75, %v72
  %v77 = vsel %vm59, %v73, 0.0
  %v78 = vadd.f32 %v76, %v77
  %v79 = vrot.slane %v78, 4
  %v80 = vadd.f32 %v78, %v79
  %v81 = vrot.slane %v80, 2
  %v82 = vadd.f32 %v80, %v81
  %v83 = vrot.slane %v82, 1
  %v84 = vadd.f32 %v82, %v83
  %v85 = vmul.f32 %v84, 0.0625
  %vm86 = vcmask 1040384
  %v87 = vsel %vm86, %v68, %v85
  %v88 = vld [vmem:[%s1] sm:$0xff]
  %v89 = vld [vmem:[%s1 + $0x8] sm:$0xff]
  %v90 = vld [vmem:[%s1 + $0x10] sm:$0xff]
  %v91 = vld [vmem:[%s1 + $0x18] sm:$0xff]
  %v92 = vld [vmem:[%s1 + $0x20] sm:$0xff]
  %v93 = vld [vmem:[%s1 + $0x28] sm:$0xff]
  %v94 = vld [vmem:[%s1 + $0x30] sm:$0xff]
  %v95 = vld [vmem:[%s1 + $0x38] sm:$0xff]
  %v96 = vld [vmem:[%s1 + $0x40] sm:$0xff]
  %v97 = vld [vmem:[%s1 + $0x48] sm:$0xff]
  %v98 = vld [vmem:[%s1 + $0x50] sm:$0xff]
  %v99 = vld [vmem:[%s1 + $0x58] sm:$0xff]
  %v100 = vld [vmem:[%s1 + $0x60] sm:$0xff]
  %v101 = vld [vmem:[%s1 + $0x68] sm:$0xff]
  %v102 = vld [vmem:[%s1 + $0x70] sm:$0xff]
  %v103 = vld [vmem:[%s1 + $0x78] sm:$0xff]
  %v104 = vld [vmem:[%s2] sm:$0x1]
  %v106 = vperm.slane %v104, 0
  %108 = vmatpush.msra.mxu0 %v103
  %109 = vmatpush.msra.mxu0 %v102
  %110 = vmatpush.msra.mxu0 %v101
  %111 = vmatpush.msra.mxu0 %v100
  %112 = vmatpush.msra.mxu0 %v99
  %113 = vmatpush.msra.mxu0 %v98
  %114 = vmatpush.msra.mxu0 %v97
  %115 = vmatpush.msra.mxu0 %v96
  %116 = vmatpush.msra.mxu0 %v95
  %117 = vmatpush.msra.mxu0 %v94
  %118 = vmatpush.msra.mxu0 %v93
  %119 = vmatpush.msra.mxu0 %v92
  %120 = vmatpush.msra.mxu0 %v91
  %121 = vmatpush.msra.mxu0 %v90
  %122 = vmatpush.msra.mxu0 %v89
  %123 = vmatpush.msra.mxu0 %v88
  %124 = vmatmul.f32.gmra.mxu0 %v87
  %v125 = vpop.f32.mrf.mxu0
  %v126 = vadd.f32 %v106, %v125
  %127 = vdwg.mxu0
  %v128 = vmax.f32 %v126, 0.0
  %v129 = vld [vmem:[%s3] sm:$0xff]
  %v130 = vld [vmem:[%s4] sm:$0x1]
  %v132 = vperm.slane %v130, 0
  %vm134 = vcmask 64512
  %v136 = vsel %vm134, %v128, 0
  %138 = vmatpush.msra.mxu0 0.0
  %139 = vmatpush.msra.mxu0 0.0
  %140 = vmatpush.msra.mxu0 0.0
  %141 = vmatpush.msra.mxu0 0.0
  %142 = vmatpush.msra.mxu0 0.0
  %143 = vmatpush.msra.mxu0 0.0
  %144 = vmatpush.msra.mxu0 0.0
  %145 = vmatpush.msra.mxu0 0.0
  %146 = vmatpush.msra.mxu0 0.0
  %147 = vmatpush.msra.mxu0 0.0
  %148 = vmatpush.msra.mxu0 0.0
  %149 = vmatpush.msra.mxu0 0.0
  %150 = vmatpush.msra.mxu0 0.0
  %151 = vmatpush.msra.mxu0 0.0
  %152 = vmatpush.msra.mxu0 0.0
  %153 = vmatpush.msra.mxu0 %v129
  %154 = vmatmul.f32.gmra.mxu0 %v136
  %v155 = vpop.f32.mrf.mxu0
  %v156 = vadd.f32 %v132, %v155
  %157 = vdwg.mxu0
  %v158 = vsub.f32 0.0, %v156
  %v159 = vmul.f32 %v158, 1.442695
  %v160 = vpow.pop %v159
  %v161 = vadd.f32 %v160, 1.0
  %v162 = vrcp.pop %v161
  %v163 = vmul.f32 %v161, %v162
  %v164 = vsub.f32 1.0, %v163
  %v165 = vmul.f32 %v162, %v164
  %v166 = vadd.f32 %v162, %v165
  %vm167 = vweird.f32 %v161
  %vm168 = vweird.f32 %v162
  %vm169 = vmor %vm167, %vm168
  %v170 = vsel %vm169, %v162, %v166
  %v171 = vand.u32 2147483647, %v161
  %vm172 = vcmp.eq.f32.partialorder %v171, 8.507059e+37
  %v173 = vand.u32 %v161, 2147483648
  %v174 = vor.u32 1.1754944e-38, %v173
  %v175 = vsel %vm172, %v174, %v170
  %v176 = vmul.f32 1.0, %v175
  %v177 = vperm.slane %v176, 0
  %v178 = vmul.f32 %v51, %v177
  %v179 = vmul.f32 %v52, %v177
  %v180 = vmul.f32 %v53, %v177
  %v181 = vmul.f32 %v54, %v177
  %v182 = vmul.f32 %v55, %v177
  %v183 = vpack.c.bf16 %v178, %v178
  %v184 = vpack.c.bf16 %v179, %v179
  %v185 = vpack.c.bf16 %v180, %v180
  %v186 = vpack.c.bf16 %v181, %v181
  %v187 = vpack.c.bf16 %v182, %v182
  %188 = vst [vmem:[#allocation2] sm:$0xf] %v183
  %189 = vst [vmem:[#allocation2 + $0x4] sm:$0xf] %v184
  %190 = vst [vmem:[#allocation2 + $0x8] sm:$0xf] %v185
  %191 = vst [vmem:[#allocation2 + $0xc] sm:$0xf] %v186
  %192 = vst [vmem:[#allocation2 + $0x10] sm:$0x3] %v187
  %v193 = vld [vmem:[%s0 + $0x24] sm:$0xff]
  %v194 = vld [vmem:[%s0 + $0x2c] sm:$0xff]
  %v195 = vld [vmem:[%s0 + $0x34] sm:$0xff]
  %v196 = vld [vmem:[%s0 + $0x3c] sm:$0xff]
  %v197 = vld [vmem:[%s0 + $0x44] sm:$0xf]
  %v198 = vperm.slane %v176, 1
  %v199 = vmul.f32 %v193, %v198
  %v200 = vmul.f32 %v194, %v198
  %v201 = vmul.f32 %v195, %v198
  %v202 = vmul.f32 %v196, %v198
  %v203 = vmul.f32 %v197, %v198
  %v204 = vpack.c.bf16 %v199, %v199
  %v205 = vpack.c.bf16 %v200, %v200
  %v206 = vpack.c.bf16 %v201, %v201
  %v207 = vpack.c.bf16 %v202, %v202
  %v208 = vpack.c.bf16 %v203, %v203
  %vm214 = vcmask 1041408
  %vm215 = vcmask 1045508
  %vm216 = vmor %vm214, %vm215
  %v217 = vrot.slane %v204, 6
  %v218 = vrot.slane %v217, 4
  %v219 = vrot.slane %v205, 6
  %v220 = vsel %vm216, %v218, %v219
  %v221 = vrot.slane %v219, 4
  %v222 = vrot.slane %v206, 6
  %v223 = vsel %vm216, %v221, %v222
  %v224 = vrot.slane %v222, 4
  %v225 = vrot.slane %v207, 6
  %v226 = vsel %vm216, %v224, %v225
  %v227 = vrot.slane %v225, 4
  %v228 = vrot.slane %v208, 6
  %v229 = vsel %vm216, %v227, %v228
  %235 = vst [vmem:[#allocation2 + $0x10] sm:$0xc] %v217
  %236 = vst [vmem:[#allocation2 + $0x14] sm:$0xf] %v220
  %237 = vst [vmem:[#allocation2 + $0x18] sm:$0xf] %v223
  %238 = vst [vmem:[#allocation2 + $0x1c] sm:$0xf] %v226
  %239 = vst [vmem:[#allocation2 + $0x20] sm:$0xf] %v229
  %240 = vst [vmem:[#allocation2 + $0x24] sm:$0xf] 0
  %241 = vst [vmem:[#allocation2 + $0x28] sm:$0xf] 0
  %242 = vst [vmem:[#allocation2 + $0x2c] sm:$0xf] 0
  %243 = vst [vmem:[#allocation2 + $0x30] sm:$0x3] 0
  %v244 = vld [vmem:[#allocation2] sm:$0xf]
  %v245 = vld [vmem:[#allocation2 + $0x4] sm:$0xf]
  %v246 = vld [vmem:[#allocation2 + $0x8] sm:$0xf]
  %v247 = vld [vmem:[#allocation2 + $0xc] sm:$0xf]
  %v248 = vld [vmem:[#allocation2 + $0x10] sm:$0xf]
  %v249 = vld [vmem:[#allocation2 + $0x14] sm:$0xf]
  %v250 = vld [vmem:[#allocation2 + $0x18] sm:$0xf]
  %v251 = vld [vmem:[#allocation2 + $0x1c] sm:$0xf]
  %v252 = vld [vmem:[#allocation2 + $0x20] sm:$0xf]
  %v253 = vld [vmem:[%s5] sm:$0xf]
  %v254 = vld [vmem:[%s5 + $0x4] sm:$0xf]
  %v255 = vld [vmem:[%s5 + $0x8] sm:$0xf]
  %v256 = vld [vmem:[%s5 + $0xc] sm:$0xf]
  %v257 = vld [vmem:[%s5 + $0x10] sm:$0xf]
  %v258 = vld [vmem:[%s5 + $0x14] sm:$0xf]
  %v259 = vld [vmem:[%s5 + $0x18] sm:$0xf]
  %v260 = vld [vmem:[%s5 + $0x1c] sm:$0xf]
  %v261 = vld [vmem:[%s5 + $0x20] sm:$0xf]
  %v262 = vld [vmem:[%s5 + $0x24] sm:$0xf]
  %v263 = vld [vmem:[%s5 + $0x28] sm:$0xf]
  %v264 = vld [vmem:[%s5 + $0x2c] sm:$0xf]
  %v265 = vld [vmem:[%s5 + $0x30] sm:$0xf]
  %v266 = vld [vmem:[%s5 + $0x34] sm:$0xf]
  %v267 = vld [vmem:[%s5 + $0x38] sm:$0xf]
  %v268 = vld [vmem:[%s5 + $0x3c] sm:$0xf]
  %v269 = vld [vmem:[#allocation2 + $0x24] sm:$0x1]
  %s270 = scalar_lea.vmem %s5, 64
  %v271 = vld [vmem:[%s270] sm:$0xf]
  %v272 = vld [vmem:[%s270 + $0x4] sm:$0xf]
  %v273 = vld [vmem:[%s270 + $0x8] sm:$0xf]
  %v274 = vld [vmem:[%s270 + $0xc] sm:$0xf]
  %v275 = vld [vmem:[%s270 + $0x10] sm:$0xf]
  %v276 = vld [vmem:[%s270 + $0x14] sm:$0xf]
  %v277 = vld [vmem:[%s270 + $0x18] sm:$0xf]
  %v278 = vld [vmem:[%s270 + $0x1c] sm:$0xf]
  %v279 = vld [vmem:[%s270 + $0x20] sm:$0xf]
  %v280 = vld [vmem:[%s270 + $0x24] sm:$0xf]
  %v281 = vld [vmem:[%s270 + $0x28] sm:$0xf]
  %v282 = vld [vmem:[%s270 + $0x2c] sm:$0xf]
  %v283 = vld [vmem:[%s270 + $0x30] sm:$0xf]
  %v284 = vld [vmem:[%s270 + $0x34] sm:$0xf]
  %v285 = vld [vmem:[%s270 + $0x38] sm:$0xf]
  %v286 = vld [vmem:[%s270 + $0x3c] sm:$0xf]
  %v297 = vunpack.c.l.b16 %v244
  %v298 = vunpack.c.l.b16 %v245
  %v299 = vunpack.c.l.b16 %v246
  %v300 = vunpack.c.l.b16 %v247
  %v301 = vunpack.c.l.b16 %v248
  %v302 = vunpack.c.l.b16 %v249
  %v303 = vunpack.c.l.b16 %v250
  %v304 = vunpack.c.l.b16 %v251
  %v305 = vunpack.c.l.b16 %v252
  %v306 = vunpack.c.l.b16 %v269
  %v307 = vpack.c.b16 %v298, %v297
  %v308 = vpack.c.b16 %v300, %v299
  %v309 = vpack.c.b16 %v302, %v301
  %v310 = vpack.c.b16 %v304, %v303
  %v311 = vpack.c.b16 %v306, %v305
  %vm312 = vsmask.f32 7424
  %v314 = vshrl.u32 %v307, 16
  %v316 = vshll.u32 %v307, 16
  %v318 = vrot.slane %v316, 1
  %v319 = vor.u32 %v314, %v318
  %v321 = vshll.u32 %v308, 16
  %v323 = vrot.slane %v321, 1
  %v324 = vsel %vm312, %v319, %v323
  %v325 = vshrl.u32 %v308, 16
  %v327 = vor.u32 %v325, %v323
  %v329 = vshll.u32 %v309, 16
  %v331 = vrot.slane %v329, 1
  %v332 = vsel %vm312, %v327, %v331
  %v333 = vshrl.u32 %v309, 16
  %v335 = vor.u32 %v333, %v331
  %v337 = vshll.u32 %v310, 16
  %v339 = vrot.slane %v337, 1
  %v340 = vsel %vm312, %v335, %v339
  %v341 = vshrl.u32 %v310, 16
  %v343 = vor.u32 %v341, %v339
  %v345 = vshll.u32 %v311, 16
  %v347 = vrot.slane %v345, 1
  %v348 = vsel %vm312, %v343, %v347
  %v349 = vshrl.u32 %v311, 16
  %v351 = vor.u32 %v349, %v347
  %v373 = vunpack.c.l.b16 %v271
  %v374 = vunpack.c.l.b16 %v272
  %v375 = vunpack.c.l.b16 %v273
  %v376 = vunpack.c.l.b16 %v274
  %v377 = vunpack.c.l.b16 %v275
  %v378 = vunpack.c.l.b16 %v276
  %v379 = vunpack.c.l.b16 %v277
  %v380 = vunpack.c.l.b16 %v278
  %v381 = vunpack.c.l.b16 %v279
  %v382 = vunpack.c.l.b16 %v280
  %v383 = vunpack.c.l.b16 %v281
  %v384 = vunpack.c.l.b16 %v282
  %v385 = vunpack.c.l.b16 %v283
  %v386 = vunpack.c.l.b16 %v284
  %v387 = vunpack.c.l.b16 %v285
  %v388 = vunpack.c.l.b16 %v286
  %v389 = vpack.c.b16 %v374, %v373
  %v390 = vpack.c.b16 %v376, %v375
  %v391 = vpack.c.b16 %v378, %v377
  %v392 = vpack.c.b16 %v380, %v379
  %v393 = vpack.c.b16 %v382, %v381
  %v394 = vpack.c.b16 %v384, %v383
  %v395 = vpack.c.b16 %v386, %v385
  %v396 = vpack.c.b16 %v388, %v387
  %405 = vmatpush.bf16.msra.mxu0 %v396
  %406 = vmatpush.bf16.msra.mxu0 %v395
  %407 = vmatpush.bf16.msra.mxu0 %v394
  %408 = vmatpush.bf16.msra.mxu0 %v393
  %409 = vmatpush.bf16.msra.mxu0 %v392
  %410 = vmatpush.bf16.msra.mxu0 %v391
  %411 = vmatpush.bf16.msra.mxu0 %v390
  %412 = vmatpush.bf16.msra.mxu0 %v389
  %413 = vmatmul.bf16.gmra.mxu0 %v324
  %v414 = vpop.f32.mrf.mxu0
  %v415 = vadd.f32 0.0, %v414
  %v416 = vpop.f32.mrf.mxu0
  %v417 = vadd.f32 0.0, %v416
  %418 = vmatmul.bf16.gmra.mxu0 %v332
  %v419 = vpop.f32.mrf.mxu0
  %v420 = vadd.f32 0.0, %v419
  %v421 = vpop.f32.mrf.mxu0
  %v422 = vadd.f32 0.0, %v421
  %423 = vmatmul.bf16.gmra.mxu0 %v340
  %v424 = vpop.f32.mrf.mxu0
  %v425 = vadd.f32 0.0, %v424
  %v426 = vpop.f32.mrf.mxu0
  %v427 = vadd.f32 0.0, %v426
  %428 = vmatmul.bf16.gmra.mxu0 %v348
  %v429 = vpop.f32.mrf.mxu0
  %v430 = vadd.f32 0.0, %v429
  %v431 = vpop.f32.mrf.mxu0
  %v432 = vadd.f32 0.0, %v431
  %433 = vmatmul.bf16.gmra.mxu0 %v351
  %v434 = vpop.f32.mrf.mxu0
  %v435 = vadd.f32 0.0, %v434
  %v436 = vpop.f32.mrf.mxu0
  %437 = vdwg.mxu0
  %v438 = vpack.c.b16 %v305, %v305
  %v460 = vunpack.c.l.b16 %v253
  %v461 = vunpack.c.l.b16 %v254
  %v462 = vunpack.c.l.b16 %v255
  %v463 = vunpack.c.l.b16 %v256
  %v464 = vunpack.c.l.b16 %v257
  %v465 = vunpack.c.l.b16 %v258
  %v466 = vunpack.c.l.b16 %v259
  %v467 = vunpack.c.l.b16 %v260
  %v468 = vunpack.c.l.b16 %v261
  %v469 = vunpack.c.l.b16 %v262
  %v470 = vunpack.c.l.b16 %v263
  %v471 = vunpack.c.l.b16 %v264
  %v472 = vunpack.c.l.b16 %v265
  %v473 = vunpack.c.l.b16 %v266
  %v474 = vunpack.c.l.b16 %v267
  %v475 = vunpack.c.l.b16 %v268
  %v476 = vpack.c.b16 %v461, %v460
  %v477 = vpack.c.b16 %v463, %v462
  %v478 = vpack.c.b16 %v465, %v464
  %v479 = vpack.c.b16 %v467, %v466
  %v480 = vpack.c.b16 %v469, %v468
  %v481 = vpack.c.b16 %v471, %v470
  %v482 = vpack.c.b16 %v473, %v472
  %v483 = vpack.c.b16 %v475, %v474
  %492 = vmatpush.bf16.msra.mxu0 %v483
  %493 = vmatpush.bf16.msra.mxu0 %v482
  %494 = vmatpush.bf16.msra.mxu0 %v481
  %495 = vmatpush.bf16.msra.mxu0 %v480
  %496 = vmatpush.bf16.msra.mxu0 %v479
  %497 = vmatpush.bf16.msra.mxu0 %v478
  %498 = vmatpush.bf16.msra.mxu0 %v477
  %499 = vmatpush.bf16.msra.mxu0 %v476
  %500 = vmatmul.bf16.gmra.mxu0 %v307
  %v501 = vpop.f32.mrf.mxu0
  %v502 = vadd.f32 %v415, %v501
  %v503 = vpop.f32.mrf.mxu0
  %v504 = vadd.f32 %v417, %v503
  %505 = vmatmul.bf16.gmra.mxu0 %v308
  %v506 = vpop.f32.mrf.mxu0
  %v507 = vadd.f32 %v420, %v506
  %v508 = vpop.f32.mrf.mxu0
  %v509 = vadd.f32 %v422, %v508
  %510 = vmatmul.bf16.gmra.mxu0 %v309
  %v511 = vpop.f32.mrf.mxu0
  %v512 = vadd.f32 %v425, %v511
  %v513 = vpop.f32.mrf.mxu0
  %v514 = vadd.f32 %v427, %v513
  %515 = vmatmul.bf16.gmra.mxu0 %v310
  %v516 = vpop.f32.mrf.mxu0
  %v517 = vadd.f32 %v430, %v516
  %v518 = vpop.f32.mrf.mxu0
  %v519 = vadd.f32 %v432, %v518
  %520 = vmatmul.bf16.gmra.mxu0 %v438
  %v521 = vpop.f32.mrf.mxu0
  %v522 = vadd.f32 %v435, %v521
  %v523 = vpop.f32.mrf.mxu0
  %524 = vdwg.mxu0
  %v525 = vld [vmem:[#allocation2] sm:$0xe]
  %s526 = scalar_lea.vmem %s5, 128
  %v527 = vld [vmem:[%s526] sm:$0xf]
  %v528 = vld [vmem:[%s526 + $0x4] sm:$0xf]
  %v529 = vld [vmem:[%s526 + $0x8] sm:$0xf]
  %v530 = vld [vmem:[%s526 + $0xc] sm:$0xf]
  %v531 = vld [vmem:[%s526 + $0x10] sm:$0xf]
  %v532 = vld [vmem:[%s526 + $0x14] sm:$0xf]
  %v533 = vld [vmem:[%s526 + $0x18] sm:$0xf]
  %v534 = vld [vmem:[%s526 + $0x1c] sm:$0xf]
  %v535 = vld [vmem:[%s526 + $0x20] sm:$0xf]
  %v536 = vld [vmem:[%s526 + $0x24] sm:$0xf]
  %v537 = vld [vmem:[%s526 + $0x28] sm:$0xf]
  %v538 = vld [vmem:[%s526 + $0x2c] sm:$0xf]
  %v539 = vld [vmem:[%s526 + $0x30] sm:$0xf]
  %v540 = vld [vmem:[%s526 + $0x34] sm:$0xf]
  %v541 = vld [vmem:[%s526 + $0x38] sm:$0xf]
  %v542 = vld [vmem:[%s526 + $0x3c] sm:$0xf]
  %v544 = vunpack.c.l.b16 %v525
  %v545 = vpack.c.b16 %v298, %v544
  %vm546 = vcmask 1046528
  %v547 = vrot.slane %v545, 1
  %v548 = vrot.slane %v308, 1
  %v549 = vsel %vm546, %v547, %v548
  %v550 = vrot.slane %v309, 1
  %v551 = vsel %vm546, %v548, %v550
  %v552 = vrot.slane %v310, 1
  %v553 = vsel %vm546, %v550, %v552
  %v554 = vrot.slane %v311, 1
  %v555 = vsel %vm546, %v552, %v554
  %v577 = vunpack.c.l.b16 %v527
  %v578 = vunpack.c.l.b16 %v528
  %v579 = vunpack.c.l.b16 %v529
  %v580 = vunpack.c.l.b16 %v530
  %v581 = vunpack.c.l.b16 %v531
  %v582 = vunpack.c.l.b16 %v532
  %v583 = vunpack.c.l.b16 %v533
  %v584 = vunpack.c.l.b16 %v534
  %v585 = vunpack.c.l.b16 %v535
  %v586 = vunpack.c.l.b16 %v536
  %v587 = vunpack.c.l.b16 %v537
  %v588 = vunpack.c.l.b16 %v538
  %v589 = vunpack.c.l.b16 %v539
  %v590 = vunpack.c.l.b16 %v540
  %v591 = vunpack.c.l.b16 %v541
  %v592 = vunpack.c.l.b16 %v542
  %v593 = vpack.c.b16 %v578, %v577
  %v594 = vpack.c.b16 %v580, %v579
  %v595 = vpack.c.b16 %v582, %v581
  %v596 = vpack.c.b16 %v584, %v583
  %v597 = vpack.c.b16 %v586, %v585
  %v598 = vpack.c.b16 %v588, %v587
  %v599 = vpack.c.b16 %v590, %v589
  %v600 = vpack.c.b16 %v592, %v591
  %609 = vmatpush.bf16.msra.mxu0 %v600
  %610 = vmatpush.bf16.msra.mxu0 %v599
  %611 = vmatpush.bf16.msra.mxu0 %v598
  %612 = vmatpush.bf16.msra.mxu0 %v597
  %613 = vmatpush.bf16.msra.mxu0 %v596
  %614 = vmatpush.bf16.msra.mxu0 %v595
  %615 = vmatpush.bf16.msra.mxu0 %v594
  %616 = vmatpush.bf16.msra.mxu0 %v593
  %617 = vmatmul.bf16.gmra.mxu0 %v549
  %v618 = vpop.f32.mrf.mxu0
  %v619 = vadd.f32 0.0, %v618
  %v620 = vpop.f32.mrf.mxu0
  %v621 = vadd.f32 0.0, %v620
  %622 = vmatmul.bf16.gmra.mxu0 %v551
  %v623 = vpop.f32.mrf.mxu0
  %v624 = vadd.f32 0.0, %v623
  %v625 = vpop.f32.mrf.mxu0
  %v626 = vadd.f32 0.0, %v625
  %627 = vmatmul.bf16.gmra.mxu0 %v553
  %v628 = vpop.f32.mrf.mxu0
  %v629 = vadd.f32 0.0, %v628
  %v630 = vpop.f32.mrf.mxu0
  %v631 = vadd.f32 0.0, %v630
  %632 = vmatmul.bf16.gmra.mxu0 %v555
  %v633 = vpop.f32.mrf.mxu0
  %v634 = vadd.f32 0.0, %v633
  %v635 = vpop.f32.mrf.mxu0
  %v636 = vadd.f32 0.0, %v635
  %637 = vmatmul.bf16.gmra.mxu0 %v554
  %v638 = vpop.f32.mrf.mxu0
  %v639 = vadd.f32 0.0, %v638
  %v640 = vpop.f32.mrf.mxu0
  %641 = vdwg.mxu0
  %v642 = vadd.f32 %v502, %v619
  %v643 = vadd.f32 %v504, %v621
  %v644 = vadd.f32 %v507, %v624
  %v645 = vadd.f32 %v509, %v626
  %v646 = vadd.f32 %v512, %v629
  %v647 = vadd.f32 %v514, %v631
  %v648 = vadd.f32 %v517, %v634
  %v649 = vadd.f32 %v519, %v636
  %v650 = vadd.f32 %v522, %v639
  %v651 = vld [vmem:[#allocation2] sm:$0x8]
  %v652 = vld [vmem:[#allocation2 + $0x24] sm:$0x7]
  %s653 = scalar_lea.vmem %s5, 192
  %v654 = vld [vmem:[%s653] sm:$0xf]
  %v655 = vld [vmem:[%s653 + $0x4] sm:$0xf]
  %v656 = vld [vmem:[%s653 + $0x8] sm:$0xf]
  %v657 = vld [vmem:[%s653 + $0xc] sm:$0xf]
  %v658 = vld [vmem:[%s653 + $0x10] sm:$0xf]
  %v659 = vld [vmem:[%s653 + $0x14] sm:$0xf]
  %v660 = vld [vmem:[%s653 + $0x18] sm:$0xf]
  %v661 = vld [vmem:[%s653 + $0x1c] sm:$0xf]
  %v662 = vld [vmem:[%s653 + $0x20] sm:$0xf]
  %v663 = vld [vmem:[%s653 + $0x24] sm:$0xf]
  %v664 = vld [vmem:[%s653 + $0x28] sm:$0xf]
  %v665 = vld [vmem:[%s653 + $0x2c] sm:$0xf]
  %v666 = vld [vmem:[%s653 + $0x30] sm:$0xf]
  %v667 = vld [vmem:[%s653 + $0x34] sm:$0xf]
  %v668 = vld [vmem:[%s653 + $0x38] sm:$0xf]
  %v669 = vld [vmem:[%s653 + $0x3c] sm:$0xf]
  %v672 = vunpack.c.l.b16 %v651
  %v673 = vunpack.c.l.b16 %v652
  %v674 = vpack.c.b16 %v298, %v672
  %v675 = vpack.c.b16 %v673, %v305
  %vm676 = vcmask 1044480
  %v677 = vrot.slane %v674, 3
  %v678 = vrot.slane %v308, 3
  %v679 = vsel %vm676, %v677, %v678
  %v680 = vrot.slane %v309, 3
  %v681 = vsel %vm676, %v678, %v680
  %v682 = vrot.slane %v310, 3
  %v683 = vsel %vm676, %v680, %v682
  %v684 = vrot.slane %v675, 3
  %v685 = vsel %vm676, %v682, %v684
  %v707 = vunpack.c.l.b16 %v654
  %v708 = vunpack.c.l.b16 %v655
  %v709 = vunpack.c.l.b16 %v656
  %v710 = vunpack.c.l.b16 %v657
  %v711 = vunpack.c.l.b16 %v658
  %v712 = vunpack.c.l.b16 %v659
  %v713 = vunpack.c.l.b16 %v660
  %v714 = vunpack.c.l.b16 %v661
  %v715 = vunpack.c.l.b16 %v662
  %v716 = vunpack.c.l.b16 %v663
  %v717 = vunpack.c.l.b16 %v664
  %v718 = vunpack.c.l.b16 %v665
  %v719 = vunpack.c.l.b16 %v666
  %v720 = vunpack.c.l.b16 %v667
  %v721 = vunpack.c.l.b16 %v668
  %v722 = vunpack.c.l.b16 %v669
  %v723 = vpack.c.b16 %v708, %v707
  %v724 = vpack.c.b16 %v710, %v709
  %v725 = vpack.c.b16 %v712, %v711
  %v726 = vpack.c.b16 %v714, %v713
  %v727 = vpack.c.b16 %v716, %v715
  %v728 = vpack.c.b16 %v718, %v717
  %v729 = vpack.c.b16 %v720, %v719
  %v730 = vpack.c.b16 %v722, %v721
  %739 = vmatpush.bf16.msra.mxu0 %v730
  %740 = vmatpush.bf16.msra.mxu0 %v729
  %741 = vmatpush.bf16.msra.mxu0 %v728
  %742 = vmatpush.bf16.msra.mxu0 %v727
  %743 = vmatpush.bf16.msra.mxu0 %v726
  %744 = vmatpush.bf16.msra.mxu0 %v725
  %745 = vmatpush.bf16.msra.mxu0 %v724
  %746 = vmatpush.bf16.msra.mxu0 %v723
  %747 = vmatmul.bf16.gmra.mxu0 %v679
  %v748 = vpop.f32.mrf.mxu0
  %v749 = vadd.f32 0.0, %v748
  %v750 = vpop.f32.mrf.mxu0
  %v751 = vadd.f32 0.0, %v750
  %752 = vmatmul.bf16.gmra.mxu0 %v681
  %v753 = vpop.f32.mrf.mxu0
  %v754 = vadd.f32 0.0, %v753
  %v755 = vpop.f32.mrf.mxu0
  %v756 = vadd.f32 0.0, %v755
  %757 = vmatmul.bf16.gmra.mxu0 %v683
  %v758 = vpop.f32.mrf.mxu0
  %v759 = vadd.f32 0.0, %v758
  %v760 = vpop.f32.mrf.mxu0
  %v761 = vadd.f32 0.0, %v760
  %762 = vmatmul.bf16.gmra.mxu0 %v685
  %v763 = vpop.f32.mrf.mxu0
  %v764 = vadd.f32 0.0, %v763
  %v765 = vpop.f32.mrf.mxu0
  %v766 = vadd.f32 0.0, %v765
  %767 = vmatmul.bf16.gmra.mxu0 %v684
  %v768 = vpop.f32.mrf.mxu0
  %v769 = vadd.f32 0.0, %v768
  %v770 = vpop.f32.mrf.mxu0
  %771 = vdwg.mxu0
  %v772 = vadd.f32 %v642, %v749
  %v773 = vadd.f32 %v643, %v751
  %v774 = vadd.f32 %v644, %v754
  %v775 = vadd.f32 %v645, %v756
  %v776 = vadd.f32 %v646, %v759
  %v777 = vadd.f32 %v647, %v761
  %v778 = vadd.f32 %v648, %v764
  %v779 = vadd.f32 %v649, %v766
  %v780 = vadd.f32 %v650, %v769
  %v781 = vld [vmem:[#allocation2 + $0x24] sm:$0xf]
  %s782 = scalar_lea.vmem %s5, 256
  %v783 = vld [vmem:[%s782] sm:$0xf]
  %v784 = vld [vmem:[%s782 + $0x4] sm:$0xf]
  %v785 = vld [vmem:[%s782 + $0x8] sm:$0xf]
  %v786 = vld [vmem:[%s782 + $0xc] sm:$0xf]
  %v787 = vld [vmem:[%s782 + $0x10] sm:$0xf]
  %v788 = vld [vmem:[%s782 + $0x14] sm:$0xf]
  %v789 = vld [vmem:[%s782 + $0x18] sm:$0xf]
  %v790 = vld [vmem:[%s782 + $0x1c] sm:$0xf]
  %v791 = vld [vmem:[%s782 + $0x20] sm:$0xf]
  %v792 = vld [vmem:[%s782 + $0x24] sm:$0xf]
  %v793 = vld [vmem:[%s782 + $0x28] sm:$0xf]
  %v794 = vld [vmem:[%s782 + $0x2c] sm:$0xf]
  %v795 = vld [vmem:[%s782 + $0x30] sm:$0xf]
  %v796 = vld [vmem:[%s782 + $0x34] sm:$0xf]
  %v797 = vld [vmem:[%s782 + $0x38] sm:$0xf]
  %v798 = vld [vmem:[%s782 + $0x3c] sm:$0xf]
  %v800 = vunpack.c.l.b16 %v781
  %v801 = vpack.c.b16 %v800, %v305
  %vm802 = vsmask.f32 4352
  %v804 = vshrl.u32 %v674, 16
  %v806 = vrot.slane %v804, 3
  %v807 = vshll.u32 %v674, 16
  %v809 = vrot.slane %v807, 4
  %v810 = vor.u32 %v806, %v809
  %v811 = vrot.slane %v325, 3
  %v812 = vrot.slane %v321, 4
  %v813 = vor.u32 %v811, %v812
  %v814 = vsel %vm802, %v810, %v813
  %v815 = vrot.slane %v333, 3
  %v816 = vrot.slane %v329, 4
  %v817 = vor.u32 %v815, %v816
  %v818 = vsel %vm802, %v813, %v817
  %v819 = vrot.slane %v341, 3
  %v820 = vrot.slane %v337, 4
  %v821 = vor.u32 %v819, %v820
  %v822 = vsel %vm802, %v817, %v821
  %v824 = vshrl.u32 %v801, 16
  %v826 = vrot.slane %v824, 3
  %v827 = vshll.u32 %v801, 16
  %v829 = vrot.slane %v827, 4
  %v830 = vor.u32 %v826, %v829
  %v831 = vsel %vm802, %v821, %v830
  %v853 = vunpack.c.l.b16 %v783
  %v854 = vunpack.c.l.b16 %v784
  %v855 = vunpack.c.l.b16 %v785
  %v856 = vunpack.c.l.b16 %v786
  %v857 = vunpack.c.l.b16 %v787
  %v858 = vunpack.c.l.b16 %v788
  %v859 = vunpack.c.l.b16 %v789
  %v860 = vunpack.c.l.b16 %v790
  %v861 = vunpack.c.l.b16 %v791
  %v862 = vunpack.c.l.b16 %v792
  %v863 = vunpack.c.l.b16 %v793
  %v864 = vunpack.c.l.b16 %v794
  %v865 = vunpack.c.l.b16 %v795
  %v866 = vunpack.c.l.b16 %v796
  %v867 = vunpack.c.l.b16 %v797
  %v868 = vunpack.c.l.b16 %v798
  %v869 = vpack.c.b16 %v854, %v853
  %v870 = vpack.c.b16 %v856, %v855
  %v871 = vpack.c.b16 %v858, %v857
  %v872 = vpack.c.b16 %v860, %v859
  %v873 = vpack.c.b16 %v862, %v861
  %v874 = vpack.c.b16 %v864, %v863
  %v875 = vpack.c.b16 %v866, %v865
  %v876 = vpack.c.b16 %v868, %v867
  %885 = vmatpush.bf16.msra.mxu0 %v876
  %886 = vmatpush.bf16.msra.mxu0 %v875
  %887 = vmatpush.bf16.msra.mxu0 %v874
  %888 = vmatpush.bf16.msra.mxu0 %v873
  %889 = vmatpush.bf16.msra.mxu0 %v872
  %890 = vmatpush.bf16.msra.mxu0 %v871
  %891 = vmatpush.bf16.msra.mxu0 %v870
  %892 = vmatpush.bf16.msra.mxu0 %v869
  %893 = vmatmul.bf16.gmra.mxu0 %v814
  %v894 = vpop.f32.mrf.mxu0
  %v895 = vadd.f32 0.0, %v894
  %v896 = vpop.f32.mrf.mxu0
  %v897 = vadd.f32 0.0, %v896
  %898 = vmatmul.bf16.gmra.mxu0 %v818
  %v899 = vpop.f32.mrf.mxu0
  %v900 = vadd.f32 0.0, %v899
  %v901 = vpop.f32.mrf.mxu0
  %v902 = vadd.f32 0.0, %v901
  %903 = vmatmul.bf16.gmra.mxu0 %v822
  %v904 = vpop.f32.mrf.mxu0
  %v905 = vadd.f32 0.0, %v904
  %v906 = vpop.f32.mrf.mxu0
  %v907 = vadd.f32 0.0, %v906
  %908 = vmatmul.bf16.gmra.mxu0 %v831
  %v909 = vpop.f32.mrf.mxu0
  %v910 = vadd.f32 0.0, %v909
  %v911 = vpop.f32.mrf.mxu0
  %v912 = vadd.f32 0.0, %v911
  %913 = vmatmul.bf16.gmra.mxu0 %v830
  %v914 = vpop.f32.mrf.mxu0
  %v915 = vadd.f32 0.0, %v914
  %v916 = vpop.f32.mrf.mxu0
  %917 = vdwg.mxu0
  %v918 = vadd.f32 %v772, %v895
  %v919 = vadd.f32 %v773, %v897
  %v920 = vadd.f32 %v774, %v900
  %v921 = vadd.f32 %v775, %v902
  %v922 = vadd.f32 %v776, %v905
  %v923 = vadd.f32 %v777, %v907
  %v924 = vadd.f32 %v778, %v910
  %v925 = vadd.f32 %v779, %v912
  %v926 = vadd.f32 %v780, %v915
  %s927 = scalar_lea.vmem %s5, 320
  %v928 = vld [vmem:[%s927] sm:$0xf]
  %v929 = vld [vmem:[%s927 + $0x4] sm:$0xf]
  %v930 = vld [vmem:[%s927 + $0x8] sm:$0xf]
  %v931 = vld [vmem:[%s927 + $0xc] sm:$0xf]
  %v932 = vld [vmem:[%s927 + $0x10] sm:$0xf]
  %v933 = vld [vmem:[%s927 + $0x14] sm:$0xf]
  %v934 = vld [vmem:[%s927 + $0x18] sm:$0xf]
  %v935 = vld [vmem:[%s927 + $0x1c] sm:$0xf]
  %v936 = vld [vmem:[%s927 + $0x20] sm:$0xf]
  %v937 = vld [vmem:[%s927 + $0x24] sm:$0xf]
  %v938 = vld [vmem:[%s927 + $0x28] sm:$0xf]
  %v939 = vld [vmem:[%s927 + $0x2c] sm:$0xf]
  %v940 = vld [vmem:[%s927 + $0x30] sm:$0xf]
  %v941 = vld [vmem:[%s927 + $0x34] sm:$0xf]
  %v942 = vld [vmem:[%s927 + $0x38] sm:$0xf]
  %v943 = vld [vmem:[%s927 + $0x3c] sm:$0xf]
  %v944 = vpack.c.b16 %v299, %v298
  %v945 = vpack.c.b16 %v301, %v300
  %v946 = vpack.c.b16 %v303, %v302
  %v947 = vpack.c.b16 %v305, %v304
  %v948 = vpack.c.b16 %v800, %v800
  %v970 = vunpack.c.l.b16 %v928
  %v971 = vunpack.c.l.b16 %v929
  %v972 = vunpack.c.l.b16 %v930
  %v973 = vunpack.c.l.b16 %v931
  %v974 = vunpack.c.l.b16 %v932
  %v975 = vunpack.c.l.b16 %v933
  %v976 = vunpack.c.l.b16 %v934
  %v977 = vunpack.c.l.b16 %v935
  %v978 = vunpack.c.l.b16 %v936
  %v979 = vunpack.c.l.b16 %v937
  %v980 = vunpack.c.l.b16 %v938
  %v981 = vunpack.c.l.b16 %v939
  %v982 = vunpack.c.l.b16 %v940
  %v983 = vunpack.c.l.b16 %v941
  %v984 = vunpack.c.l.b16 %v942
  %v985 = vunpack.c.l.b16 %v943
  %v986 = vpack.c.b16 %v971, %v970
  %v987 = vpack.c.b16 %v973, %v972
  %v988 = vpack.c.b16 %v975, %v974
  %v989 = vpack.c.b16 %v977, %v976
  %v990 = vpack.c.b16 %v979, %v978
  %v991 = vpack.c.b16 %v981, %v980
  %v992 = vpack.c.b16 %v983, %v982
  %v993 = vpack.c.b16 %v985, %v984
  %1002 = vmatpush.bf16.msra.mxu0 %v993
  %1003 = vmatpush.bf16.msra.mxu0 %v992
  %1004 = vmatpush.bf16.msra.mxu0 %v991
  %1005 = vmatpush.bf16.msra.mxu0 %v990
  %1006 = vmatpush.bf16.msra.mxu0 %v989
  %1007 = vmatpush.bf16.msra.mxu0 %v988
  %1008 = vmatpush.bf16.msra.mxu0 %v987
  %1009 = vmatpush.bf16.msra.mxu0 %v986
  %1010 = vmatmul.bf16.gmra.mxu0 %v944
  %v1011 = vpop.f32.mrf.mxu0
  %v1012 = vadd.f32 0.0, %v1011
  %v1013 = vpop.f32.mrf.mxu0
  %v1014 = vadd.f32 0.0, %v1013
  %1015 = vmatmul.bf16.gmra.mxu0 %v945
  %v1016 = vpop.f32.mrf.mxu0
  %v1017 = vadd.f32 0.0, %v1016
  %v1018 = vpop.f32.mrf.mxu0
  %v1019 = vadd.f32 0.0, %v1018
  %1020 = vmatmul.bf16.gmra.mxu0 %v946
  %v1021 = vpop.f32.mrf.mxu0
  %v1022 = vadd.f32 0.0, %v1021
  %v1023 = vpop.f32.mrf.mxu0
  %v1024 = vadd.f32 0.0, %v1023
  %1025 = vmatmul.bf16.gmra.mxu0 %v947
  %v1026 = vpop.f32.mrf.mxu0
  %v1027 = vadd.f32 0.0, %v1026
  %v1028 = vpop.f32.mrf.mxu0
  %v1029 = vadd.f32 0.0, %v1028
  %1030 = vmatmul.bf16.gmra.mxu0 %v948
  %v1031 = vpop.f32.mrf.mxu0
  %v1032 = vadd.f32 0.0, %v1031
  %v1033 = vpop.f32.mrf.mxu0
  %1034 = vdwg.mxu0
  %v1035 = vadd.f32 %v918, %v1012
  %v1036 = vadd.f32 %v919, %v1014
  %v1037 = vadd.f32 %v920, %v1017
  %v1038 = vadd.f32 %v921, %v1019
  %v1039 = vadd.f32 %v922, %v1022
  %v1040 = vadd.f32 %v923, %v1024
  %v1041 = vadd.f32 %v924, %v1027
  %v1042 = vadd.f32 %v925, %v1029
  %v1043 = vadd.f32 %v926, %v1032
  %v1044 = vld [vmem:[#allocation2 + $0x4] sm:$0xc]
  %v1045 = vld [vmem:[#allocation2 + $0x8] sm:$0xf]
  %v1046 = vld [vmem:[#allocation2 + $0xc] sm:$0xf]
  %v1047 = vld [vmem:[#allocation2 + $0x10] sm:$0xf]
  %v1048 = vld [vmem:[#allocation2 + $0x14] sm:$0xf]
  %v1049 = vld [vmem:[#allocation2 + $0x18] sm:$0xf]
  %v1050 = vld [vmem:[#allocation2 + $0x1c] sm:$0xf]
  %v1051 = vld [vmem:[#allocation2 + $0x20] sm:$0xf]
  %v1052 = vld [vmem:[#allocation2 + $0x24] sm:$0xf]
  %v1053 = vld [vmem:[#allocation2 + $0x28] sm:$0x3]
  %s1054 = scalar_lea.vmem %s5, 384
  %v1055 = vld [vmem:[%s1054] sm:$0xf]
  %v1056 = vld [vmem:[%s1054 + $0x4] sm:$0xf]
  %v1057 = vld [vmem:[%s1054 + $0x8] sm:$0xf]
  %v1058 = vld [vmem:[%s1054 + $0xc] sm:$0xf]
  %v1059 = vld [vmem:[%s1054 + $0x10] sm:$0xf]
  %v1060 = vld [vmem:[%s1054 + $0x14] sm:$0xf]
  %v1061 = vld [vmem:[%s1054 + $0x18] sm:$0xf]
  %v1062 = vld [vmem:[%s1054 + $0x1c] sm:$0xf]
  %v1063 = vld [vmem:[%s1054 + $0x20] sm:$0xf]
  %v1064 = vld [vmem:[%s1054 + $0x24] sm:$0xf]
  %v1065 = vld [vmem:[%s1054 + $0x28] sm:$0xf]
  %v1066 = vld [vmem:[%s1054 + $0x2c] sm:$0xf]
  %v1067 = vld [vmem:[%s1054 + $0x30] sm:$0xf]
  %v1068 = vld [vmem:[%s1054 + $0x34] sm:$0xf]
  %v1069 = vld [vmem:[%s1054 + $0x38] sm:$0xf]
  %v1070 = vld [vmem:[%s1054 + $0x3c] sm:$0xf]
  %v1081 = vunpack.c.l.b16 %v1044
  %v1082 = vunpack.c.l.b16 %v1045
  %v1083 = vunpack.c.l.b16 %v1046
  %v1084 = vunpack.c.l.b16 %v1047
  %v1085 = vunpack.c.l.b16 %v1048
  %v1086 = vunpack.c.l.b16 %v1049
  %v1087 = vunpack.c.l.b16 %v1050
  %v1088 = vunpack.c.l.b16 %v1051
  %v1089 = vunpack.c.l.b16 %v1052
  %v1090 = vunpack.c.l.b16 %v1053
  %v1091 = vpack.c.b16 %v1082, %v1081
  %v1092 = vpack.c.b16 %v1084, %v1083
  %v1093 = vpack.c.b16 %v1086, %v1085
  %v1094 = vpack.c.b16 %v1088, %v1087
  %v1095 = vpack.c.b16 %v1090, %v1089
  %vm1096 = vcmask 1045504
  %v1097 = vrot.slane %v1091, 2
  %v1098 = vrot.slane %v1092, 2
  %v1099 = vsel %vm1096, %v1097, %v1098
  %v1100 = vrot.slane %v1093, 2
  %v1101 = vsel %vm1096, %v1098, %v1100
  %v1102 = vrot.slane %v1094, 2
  %v1103 = vsel %vm1096, %v1100, %v1102
  %v1104 = vrot.slane %v1095, 2
  %v1105 = vsel %vm1096, %v1102, %v1104
  %v1127 = vunpack.c.l.b16 %v1055
  %v1128 = vunpack.c.l.b16 %v1056
  %v1129 = vunpack.c.l.b16 %v1057
  %v1130 = vunpack.c.l.b16 %v1058
  %v1131 = vunpack.c.l.b16 %v1059
  %v1132 = vunpack.c.l.b16 %v1060
  %v1133 = vunpack.c.l.b16 %v1061
  %v1134 = vunpack.c.l.b16 %v1062
  %v1135 = vunpack.c.l.b16 %v1063
  %v1136 = vunpack.c.l.b16 %v1064
  %v1137 = vunpack.c.l.b16 %v1065
  %v1138 = vunpack.c.l.b16 %v1066
  %v1139 = vunpack.c.l.b16 %v1067
  %v1140 = vunpack.c.l.b16 %v1068
  %v1141 = vunpack.c.l.b16 %v1069
  %v1142 = vunpack.c.l.b16 %v1070
  %v1143 = vpack.c.b16 %v1128, %v1127
  %v1144 = vpack.c.b16 %v1130, %v1129
  %v1145 = vpack.c.b16 %v1132, %v1131
  %v1146 = vpack.c.b16 %v1134, %v1133
  %v1147 = vpack.c.b16 %v1136, %v1135
  %v1148 = vpack.c.b16 %v1138, %v1137
  %v1149 = vpack.c.b16 %v1140, %v1139
  %v1150 = vpack.c.b16 %v1142, %v1141
  %1159 = vmatpush.bf16.msra.mxu0 %v1150
  %1160 = vmatpush.bf16.msra.mxu0 %v1149
  %1161 = vmatpush.bf16.msra.mxu0 %v1148
  %1162 = vmatpush.bf16.msra.mxu0 %v1147
  %1163 = vmatpush.bf16.msra.mxu0 %v1146
  %1164 = vmatpush.bf16.msra.mxu0 %v1145
  %1165 = vmatpush.bf16.msra.mxu0 %v1144
  %1166 = vmatpush.bf16.msra.mxu0 %v1143
  %1167 = vmatmul.bf16.gmra.mxu0 %v1099
  %v1168 = vpop.f32.mrf.mxu0
  %v1169 = vadd.f32 0.0, %v1168
  %v1170 = vpop.f32.mrf.mxu0
  %v1171 = vadd.f32 0.0, %v1170
  %1172 = vmatmul.bf16.gmra.mxu0 %v1101
  %v1173 = vpop.f32.mrf.mxu0
  %v1174 = vadd.f32 0.0, %v1173
  %v1175 = vpop.f32.mrf.mxu0
  %v1176 = vadd.f32 0.0, %v1175
  %1177 = vmatmul.bf16.gmra.mxu0 %v1103
  %v1178 = vpop.f32.mrf.mxu0
  %v1179 = vadd.f32 0.0, %v1178
  %v1180 = vpop.f32.mrf.mxu0
  %v1181 = vadd.f32 0.0, %v1180
  %1182 = vmatmul.bf16.gmra.mxu0 %v1105
  %v1183 = vpop.f32.mrf.mxu0
  %v1184 = vadd.f32 0.0, %v1183
  %v1185 = vpop.f32.mrf.mxu0
  %v1186 = vadd.f32 0.0, %v1185
  %1187 = vmatmul.bf16.gmra.mxu0 %v1104
  %v1188 = vpop.f32.mrf.mxu0
  %v1189 = vadd.f32 0.0, %v1188
  %v1190 = vpop.f32.mrf.mxu0
  %1191 = vdwg.mxu0
  %v1192 = vadd.f32 %v1035, %v1169
  %v1193 = vadd.f32 %v1036, %v1171
  %v1194 = vadd.f32 %v1037, %v1174
  %v1195 = vadd.f32 %v1038, %v1176
  %v1196 = vadd.f32 %v1039, %v1179
  %v1197 = vadd.f32 %v1040, %v1181
  %v1198 = vadd.f32 %v1041, %v1184
  %v1199 = vadd.f32 %v1042, %v1186
  %v1200 = vadd.f32 %v1043, %v1189
  %v1201 = vld [vmem:[#allocation2 + $0x28] sm:$0x7]
  %s1202 = scalar_lea.vmem %s5, 448
  %v1203 = vld [vmem:[%s1202] sm:$0xf]
  %v1204 = vld [vmem:[%s1202 + $0x4] sm:$0xf]
  %v1205 = vld [vmem:[%s1202 + $0x8] sm:$0xf]
  %v1206 = vld [vmem:[%s1202 + $0xc] sm:$0xf]
  %v1207 = vld [vmem:[%s1202 + $0x10] sm:$0xf]
  %v1208 = vld [vmem:[%s1202 + $0x14] sm:$0xf]
  %v1209 = vld [vmem:[%s1202 + $0x18] sm:$0xf]
  %v1210 = vld [vmem:[%s1202 + $0x1c] sm:$0xf]
  %v1211 = vld [vmem:[%s1202 + $0x20] sm:$0xf]
  %v1212 = vld [vmem:[%s1202 + $0x24] sm:$0xf]
  %v1213 = vld [vmem:[%s1202 + $0x28] sm:$0xf]
  %v1214 = vld [vmem:[%s1202 + $0x2c] sm:$0xf]
  %v1215 = vld [vmem:[%s1202 + $0x30] sm:$0xf]
  %v1216 = vld [vmem:[%s1202 + $0x34] sm:$0xf]
  %v1217 = vld [vmem:[%s1202 + $0x38] sm:$0xf]
  %v1218 = vld [vmem:[%s1202 + $0x3c] sm:$0xf]
  %v1220 = vunpack.c.l.b16 %v1201
  %v1221 = vpack.c.b16 %v1220, %v1089
  %vm1222 = vsmask.f32 5376
  %v1224 = vshrl.u32 %v1091, 16
  %v1226 = vrot.slane %v1224, 2
  %v1227 = vshll.u32 %v1091, 16
  %v1229 = vrot.slane %v1227, 3
  %v1230 = vor.u32 %v1226, %v1229
  %v1232 = vshrl.u32 %v1092, 16
  %v1234 = vrot.slane %v1232, 2
  %v1235 = vshll.u32 %v1092, 16
  %v1237 = vrot.slane %v1235, 3
  %v1238 = vor.u32 %v1234, %v1237
  %v1239 = vsel %vm1222, %v1230, %v1238
  %v1241 = vshrl.u32 %v1093, 16
  %v1243 = vrot.slane %v1241, 2
  %v1244 = vshll.u32 %v1093, 16
  %v1246 = vrot.slane %v1244, 3
  %v1247 = vor.u32 %v1243, %v1246
  %v1248 = vsel %vm1222, %v1238, %v1247
  %v1250 = vshrl.u32 %v1094, 16
  %v1252 = vrot.slane %v1250, 2
  %v1253 = vshll.u32 %v1094, 16
  %v1255 = vrot.slane %v1253, 3
  %v1256 = vor.u32 %v1252, %v1255
  %v1257 = vsel %vm1222, %v1247, %v1256
  %v1259 = vshrl.u32 %v1221, 16
  %v1261 = vrot.slane %v1259, 2
  %v1262 = vshll.u32 %v1221, 16
  %v1264 = vrot.slane %v1262, 3
  %v1265 = vor.u32 %v1261, %v1264
  %v1266 = vsel %vm1222, %v1256, %v1265
  %v1288 = vunpack.c.l.b16 %v1203
  %v1289 = vunpack.c.l.b16 %v1204
  %v1290 = vunpack.c.l.b16 %v1205
  %v1291 = vunpack.c.l.b16 %v1206
  %v1292 = vunpack.c.l.b16 %v1207
  %v1293 = vunpack.c.l.b16 %v1208
  %v1294 = vunpack.c.l.b16 %v1209
  %v1295 = vunpack.c.l.b16 %v1210
  %v1296 = vunpack.c.l.b16 %v1211
  %v1297 = vunpack.c.l.b16 %v1212
  %v1298 = vunpack.c.l.b16 %v1213
  %v1299 = vunpack.c.l.b16 %v1214
  %v1300 = vunpack.c.l.b16 %v1215
  %v1301 = vunpack.c.l.b16 %v1216
  %v1302 = vunpack.c.l.b16 %v1217
  %v1303 = vunpack.c.l.b16 %v1218
  %v1304 = vpack.c.b16 %v1289, %v1288
  %v1305 = vpack.c.b16 %v1291, %v1290
  %v1306 = vpack.c.b16 %v1293, %v1292
  %v1307 = vpack.c.b16 %v1295, %v1294
  %v1308 = vpack.c.b16 %v1297, %v1296
  %v1309 = vpack.c.b16 %v1299, %v1298
  %v1310 = vpack.c.b16 %v1301, %v1300
  %v1311 = vpack.c.b16 %v1303, %v1302
  %1320 = vmatpush.bf16.msra.mxu0 %v1311
  %1321 = vmatpush.bf16.msra.mxu0 %v1310
  %1322 = vmatpush.bf16.msra.mxu0 %v1309
  %1323 = vmatpush.bf16.msra.mxu0 %v1308
  %1324 = vmatpush.bf16.msra.mxu0 %v1307
  %1325 = vmatpush.bf16.msra.mxu0 %v1306
  %1326 = vmatpush.bf16.msra.mxu0 %v1305
  %1327 = vmatpush.bf16.msra.mxu0 %v1304
  %1328 = vmatmul.bf16.gmra.mxu0 %v1239
  %v1329 = vpop.f32.mrf.mxu0
  %v1330 = vadd.f32 0.0, %v1329
  %v1331 = vpop.f32.mrf.mxu0
  %v1332 = vadd.f32 0.0, %v1331
  %1333 = vmatmul.bf16.gmra.mxu0 %v1248
  %v1334 = vpop.f32.mrf.mxu0
  %v1335 = vadd.f32 0.0, %v1334
  %v1336 = vpop.f32.mrf.mxu0
  %v1337 = vadd.f32 0.0, %v1336
  %1338 = vmatmul.bf16.gmra.mxu0 %v1257
  %v1339 = vpop.f32.mrf.mxu0
  %v1340 = vadd.f32 0.0, %v1339
  %v1341 = vpop.f32.mrf.mxu0
  %v1342 = vadd.f32 0.0, %v1341
  %1343 = vmatmul.bf16.gmra.mxu0 %v1266
  %v1344 = vpop.f32.mrf.mxu0
  %v1345 = vadd.f32 0.0, %v1344
  %v1346 = vpop.f32.mrf.mxu0
  %v1347 = vadd.f32 0.0, %v1346
  %1348 = vmatmul.bf16.gmra.mxu0 %v1265
  %v1349 = vpop.f32.mrf.mxu0
  %v1350 = vadd.f32 0.0, %v1349
  %v1351 = vpop.f32.mrf.mxu0
  %1352 = vdwg.mxu0
  %v1353 = vadd.f32 %v1192, %v1330
  %v1354 = vadd.f32 %v1193, %v1332
  %v1355 = vadd.f32 %v1194, %v1335
  %v1356 = vadd.f32 %v1195, %v1337
  %v1357 = vadd.f32 %v1196, %v1340
  %v1358 = vadd.f32 %v1197, %v1342
  %v1359 = vadd.f32 %v1198, %v1345
  %v1360 = vadd.f32 %v1199, %v1347
  %v1361 = vadd.f32 %v1200, %v1350
  %v1362 = vld [vmem:[#allocation2 + $0x4] sm:$0x8]
  %s1363 = scalar_lea.vmem %s5, 512
  %v1364 = vld [vmem:[%s1363] sm:$0xf]
  %v1365 = vld [vmem:[%s1363 + $0x4] sm:$0xf]
  %v1366 = vld [vmem:[%s1363 + $0x8] sm:$0xf]
  %v1367 = vld [vmem:[%s1363 + $0xc] sm:$0xf]
  %v1368 = vld [vmem:[%s1363 + $0x10] sm:$0xf]
  %v1369 = vld [vmem:[%s1363 + $0x14] sm:$0xf]
  %v1370 = vld [vmem:[%s1363 + $0x18] sm:$0xf]
  %v1371 = vld [vmem:[%s1363 + $0x1c] sm:$0xf]
  %v1372 = vld [vmem:[%s1363 + $0x20] sm:$0xf]
  %v1373 = vld [vmem:[%s1363 + $0x24] sm:$0xf]
  %v1374 = vld [vmem:[%s1363 + $0x28] sm:$0xf]
  %v1375 = vld [vmem:[%s1363 + $0x2c] sm:$0xf]
  %v1376 = vld [vmem:[%s1363 + $0x30] sm:$0xf]
  %v1377 = vld [vmem:[%s1363 + $0x34] sm:$0xf]
  %v1378 = vld [vmem:[%s1363 + $0x38] sm:$0xf]
  %v1379 = vld [vmem:[%s1363 + $0x3c] sm:$0xf]
  %v1381 = vunpack.c.l.b16 %v1362
  %v1382 = vpack.c.b16 %v1082, %v1381
  %v1383 = vrot.slane %v1382, 3
  %v1384 = vrot.slane %v1092, 3
  %v1385 = vsel %vm676, %v1383, %v1384
  %v1386 = vrot.slane %v1093, 3
  %v1387 = vsel %vm676, %v1384, %v1386
  %v1388 = vrot.slane %v1094, 3
  %v1389 = vsel %vm676, %v1386, %v1388
  %v1390 = vrot.slane %v1221, 3
  %v1391 = vsel %vm676, %v1388, %v1390
  %v1413 = vunpack.c.l.b16 %v1364
  %v1414 = vunpack.c.l.b16 %v1365
  %v1415 = vunpack.c.l.b16 %v1366
  %v1416 = vunpack.c.l.b16 %v1367
  %v1417 = vunpack.c.l.b16 %v1368
  %v1418 = vunpack.c.l.b16 %v1369
  %v1419 = vunpack.c.l.b16 %v1370
  %v1420 = vunpack.c.l.b16 %v1371
  %v1421 = vunpack.c.l.b16 %v1372
  %v1422 = vunpack.c.l.b16 %v1373
  %v1423 = vunpack.c.l.b16 %v1374
  %v1424 = vunpack.c.l.b16 %v1375
  %v1425 = vunpack.c.l.b16 %v1376
  %v1426 = vunpack.c.l.b16 %v1377
  %v1427 = vunpack.c.l.b16 %v1378
  %v1428 = vunpack.c.l.b16 %v1379
  %v1429 = vpack.c.b16 %v1414, %v1413
  %v1430 = vpack.c.b16 %v1416, %v1415
  %v1431 = vpack.c.b16 %v1418, %v1417
  %v1432 = vpack.c.b16 %v1420, %v1419
  %v1433 = vpack.c.b16 %v1422, %v1421
  %v1434 = vpack.c.b16 %v1424, %v1423
  %v1435 = vpack.c.b16 %v1426, %v1425
  %v1436 = vpack.c.b16 %v1428, %v1427
  %1445 = vmatpush.bf16.msra.mxu0 %v1436
  %1446 = vmatpush.bf16.msra.mxu0 %v1435
  %1447 = vmatpush.bf16.msra.mxu0 %v1434
  %1448 = vmatpush.bf16.msra.mxu0 %v1433
  %1449 = vmatpush.bf16.msra.mxu0 %v1432
  %1450 = vmatpush.bf16.msra.mxu0 %v1431
  %1451 = vmatpush.bf16.msra.mxu0 %v1430
  %1452 = vmatpush.bf16.msra.mxu0 %v1429
  %1453 = vmatmul.bf16.gmra.mxu0 %v1385
  %v1454 = vpop.f32.mrf.mxu0
  %v1455 = vadd.f32 0.0, %v1454
  %v1456 = vpop.f32.mrf.mxu0
  %v1457 = vadd.f32 0.0, %v1456
  %1458 = vmatmul.bf16.gmra.mxu0 %v1387
  %v1459 = vpop.f32.mrf.mxu0
  %v1460 = vadd.f32 0.0, %v1459
  %v1461 = vpop.f32.mrf.mxu0
  %v1462 = vadd.f32 0.0, %v1461
  %1463 = vmatmul.bf16.gmra.mxu0 %v1389
  %v1464 = vpop.f32.mrf.mxu0
  %v1465 = vadd.f32 0.0, %v1464
  %v1466 = vpop.f32.mrf.mxu0
  %v1467 = vadd.f32 0.0, %v1466
  %1468 = vmatmul.bf16.gmra.mxu0 %v1391
  %v1469 = vpop.f32.mrf.mxu0
  %v1470 = vadd.f32 0.0, %v1469
  %v1471 = vpop.f32.mrf.mxu0
  %v1472 = vadd.f32 0.0, %v1471
  %1473 = vmatmul.bf16.gmra.mxu0 %v1390
  %v1474 = vpop.f32.mrf.mxu0
  %v1475 = vadd.f32 0.0, %v1474
  %v1476 = vpop.f32.mrf.mxu0
  %1477 = vdwg.mxu0
  %v1478 = vadd.f32 %v1353, %v1455
  %v1479 = vadd.f32 %v1354, %v1457
  %v1480 = vadd.f32 %v1355, %v1460
  %v1481 = vadd.f32 %v1356, %v1462
  %v1482 = vadd.f32 %v1357, %v1465
  %v1483 = vadd.f32 %v1358, %v1467
  %v1484 = vadd.f32 %v1359, %v1470
  %v1485 = vadd.f32 %v1360, %v1472
  %v1486 = vadd.f32 %v1361, %v1475
  %v1487 = vld [vmem:[%s6] sm:$0x1]
  %v1488 = vld [vmem:[%s7] sm:$0x1]
  %1490 = vset.pattern.permute.xlu0 0
  %1491 = vperm.xlu0 %1490, %v42
  %v1492 = vpop.permute.xlu0 %1491
  %1495 = vset.pattern.permute.xlu0 0
  %1496 = vperm.xlu0 %1495, %v43
  %v1497 = vpop.permute.xlu0 %1496
  %1500 = vset.pattern.permute.xlu0 0
  %1501 = vperm.xlu0 %1500, %v44
  %v1502 = vpop.permute.xlu0 %1501
  %1505 = vset.pattern.permute.xlu0 0
  %1506 = vperm.xlu0 %1505, %v45
  %v1507 = vpop.permute.xlu0 %1506
  %1510 = vset.pattern.permute.xlu0 0
  %1511 = vperm.xlu0 %1510, %v46
  %v1512 = vpop.permute.xlu0 %1511
  %1515 = vset.pattern.permute.xlu0 0
  %1516 = vperm.xlu0 %1515, %v47
  %v1517 = vpop.permute.xlu0 %1516
  %1520 = vset.pattern.permute.xlu0 0
  %1521 = vperm.xlu0 %1520, %v48
  %v1522 = vpop.permute.xlu0 %1521
  %1525 = vset.pattern.permute.xlu0 0
  %1526 = vperm.xlu0 %1525, %v49
  %v1527 = vpop.permute.xlu0 %1526
  %1530 = vset.pattern.permute.xlu0 0
  %1531 = vperm.xlu0 %1530, %v50
  %v1532 = vpop.permute.xlu0 %1531
  %v1534 = vmul.f32 %v1478, %v1492
  %v1535 = vmul.f32 %v1479, %v1497
  %v1536 = vmul.f32 %v1480, %v1502
  %v1537 = vmul.f32 %v1481, %v1507
  %v1538 = vmul.f32 %v1482, %v1512
  %v1539 = vmul.f32 %v1483, %v1517
  %v1540 = vmul.f32 %v1484, %v1522
  %v1541 = vmul.f32 %v1485, %v1527
  %v1542 = vmul.f32 %v1486, %v1532
  %v1543 = vadd.f32 %v1534, %v1535
  %v1544 = vadd.f32 %v1543, %v1536
  %v1545 = vadd.f32 %v1544, %v1537
  %v1546 = vadd.f32 %v1545, %v1538
  %v1547 = vadd.f32 %v1546, %v1539
  %v1548 = vadd.f32 %v1547, %v1540
  %v1549 = vadd.f32 %v1548, %v1541
  %v1550 = vadd.f32 %v1549, %v1542
  %v1551 = vrot.slane %v1550, 4
  %v1552 = vadd.f32 %v1550, %v1551
  %v1553 = vrot.slane %v1552, 2
  %v1554 = vadd.f32 %v1552, %v1553
  %v1555 = vrot.slane %v1554, 1
  %v1556 = vadd.f32 %v1554, %v1555
  %v1557 = vrcp.pop 32.0
  %v1558 = vmul.f32 32.0, %v1557
  %v1559 = vsub.f32 1.0, %v1558
  %v1560 = vmul.f32 %v1557, %v1559
  %v1561 = vadd.f32 %v1557, %v1560
  %vm1562 = vweird.f32 %v1557
  %v1563 = vsel %vm1562, %v1557, %v1561
  %v1564 = vmul.f32 %v1556, %v1563
  %v1565 = vsub.f32 %v1478, %v1564
  %v1566 = vsub.f32 %v1479, %v1564
  %v1567 = vsub.f32 %v1480, %v1564
  %v1568 = vsub.f32 %v1481, %v1564
  %v1569 = vsub.f32 %v1482, %v1564
  %v1570 = vsub.f32 %v1483, %v1564
  %v1571 = vsub.f32 %v1484, %v1564
  %v1572 = vsub.f32 %v1485, %v1564
  %v1573 = vsub.f32 %v1486, %v1564
  %v1574 = vmul.f32 %v1565, %v1492
  %v1575 = vmul.f32 %v1566, %v1497
  %v1576 = vmul.f32 %v1567, %v1502
  %v1577 = vmul.f32 %v1568, %v1507
  %v1578 = vmul.f32 %v1569, %v1512
  %v1579 = vmul.f32 %v1570, %v1517
  %v1580 = vmul.f32 %v1571, %v1522
  %v1581 = vmul.f32 %v1572, %v1527
  %v1582 = vmul.f32 %v1573, %v1532
  %v1583 = vmul.f32 %v1574, %v1574
  %v1584 = vmul.f32 %v1575, %v1575
  %v1585 = vmul.f32 %v1576, %v1576
  %v1586 = vmul.f32 %v1577, %v1577
  %v1587 = vmul.f32 %v1578, %v1578
  %v1588 = vmul.f32 %v1579, %v1579
  %v1589 = vmul.f32 %v1580, %v1580
  %v1590 = vmul.f32 %v1581, %v1581
  %v1591 = vmul.f32 %v1582, %v1582
  %v1592 = vadd.f32 %v1583, %v1584
  %v1593 = vadd.f32 %v1592, %v1585
  %v1594 = vadd.f32 %v1593, %v1586
  %v1595 = vadd.f32 %v1594, %v1587
  %v1596 = vadd.f32 %v1595, %v1588
  %v1597 = vadd.f32 %v1596, %v1589
  %v1598 = vadd.f32 %v1597, %v1590
  %v1599 = vadd.f32 %v1598, %v1591
  %v1600 = vrot.slane %v1599, 4
  %v1601 = vadd.f32 %v1599, %v1600
  %v1602 = vrot.slane %v1601, 2
  %v1603 = vadd.f32 %v1601, %v1602
  %v1604 = vrot.slane %v1603, 1
  %v1605 = vadd.f32 %v1603, %v1604
  %v1606 = vmul.f32 %v1605, %v1563
  %v1607 = vadd.f32 %v1606, 1e-05
  %v1608 = vrsqrt.pop %v1607
  %v1609 = vmul.f32 %v1608, %v1607
  %v1610 = vmul.f32 %v1609, %v1608
  %v1611 = vmul.f32 0.5, %v1610
  %v1612 = vsub.f32 1.5, %v1611
  %v1613 = vmul.f32 %v1608, %v1612
  %vm1614 = vweird.f32 %v1607
  %vm1615 = vweird.f32 %v1608
  %vm1616 = vmor %vm1614, %vm1615
  %v1617 = vsel %vm1616, %v1608, %v1613
  %v1618 = vmul.f32 %v1565, %v1617
  %v1619 = vmul.f32 %v1566, %v1617
  %v1620 = vmul.f32 %v1567, %v1617
  %v1621 = vmul.f32 %v1568, %v1617
  %v1622 = vmul.f32 %v1569, %v1617
  %v1623 = vmul.f32 %v1570, %v1617
  %v1624 = vmul.f32 %v1571, %v1617
  %v1625 = vmul.f32 %v1572, %v1617
  %v1626 = vmul.f32 %v1573, %v1617
  %v1628 = vperm.slane %v1487, 0
  %v1630 = vmul.f32 %v1618, %v1628
  %v1631 = vmul.f32 %v1619, %v1628
  %v1632 = vmul.f32 %v1620, %v1628
  %v1633 = vmul.f32 %v1621, %v1628
  %v1634 = vmul.f32 %v1622, %v1628
  %v1635 = vmul.f32 %v1623, %v1628
  %v1636 = vmul.f32 %v1624, %v1628
  %v1637 = vmul.f32 %v1625, %v1628
  %v1638 = vmul.f32 %v1626, %v1628
  %v1640 = vperm.slane %v1488, 0
  %v1642 = vadd.f32 %v1630, %v1640
  %v1643 = vadd.f32 %v1631, %v1640
  %v1644 = vadd.f32 %v1632, %v1640
  %v1645 = vadd.f32 %v1633, %v1640
  %v1646 = vadd.f32 %v1634, %v1640
  %v1647 = vadd.f32 %v1635, %v1640
  %v1648 = vadd.f32 %v1636, %v1640
  %v1649 = vadd.f32 %v1637, %v1640
  %v1650 = vadd.f32 %v1638, %v1640
  %v1651 = vmax.f32 %v1642, 0.0
  %v1652 = vmax.f32 %v1643, 0.0
  %v1653 = vmax.f32 %v1644, 0.0
  %v1654 = vmax.f32 %v1645, 0.0
  %v1655 = vmax.f32 %v1646, 0.0
  %v1656 = vmax.f32 %v1647, 0.0
  %v1657 = vmax.f32 %v1648, 0.0
  %v1658 = vmax.f32 %v1649, 0.0
  %v1659 = vmax.f32 %v1650, 0.0
  %v1660 = vmul.f32 %v1651, %v1492
  %v1661 = vmul.f32 %v1652, %v1497
  %v1662 = vmul.f32 %v1653, %v1502
  %v1663 = vmul.f32 %v1654, %v1507
  %v1664 = vmul.f32 %v1655, %v1512
  %v1665 = vmul.f32 %v1656, %v1517
  %v1666 = vmul.f32 %v1657, %v1522
  %v1667 = vmul.f32 %v1658, %v1527
  %v1668 = vmul.f32 %v1659, %v1532
  %vm1669 = vcmask 1043456
  %vm1670 = vsmask.f32 3328
  %vm1671 = vmand %vm1669, %vm1670
  %v1672 = vld [vmem:[#allocation3] sm:$0xf]
  %v1673 = vsel %vm1671, 0, %v1672
  %1674 = vst [vmem:[#allocation3] sm:$0xf] %v1673
  %vm1675 = vcmask 1043459
  %vm1676 = vsmask.f32 7950
  %vm1677 = vmand %vm1675, %vm1676
  %v1678 = vld [vmem:[#allocation3 + $0x24] sm:$0x8]
  %v1679 = vsel %vm1677, 0, %v1678
  %1680 = vst [vmem:[#allocation3 + $0x24] sm:$0x8] %v1679
  %1681 = vst [vmem:[#allocation3 + $0x28] sm:$0xf] 0
  %1682 = vst [vmem:[#allocation3 + $0x2c] sm:$0xf] 0
  %1683 = vst [vmem:[#allocation3 + $0x30] sm:$0x3] 0
  %v1684 = vpack.c.bf16 %v1660, %v1660
  %v1685 = vpack.c.bf16 %v1661, %v1661
  %v1686 = vpack.c.bf16 %v1662, %v1662
  %v1687 = vpack.c.bf16 %v1663, %v1663
  %v1688 = vpack.c.bf16 %v1664, %v1664
  %v1689 = vpack.c.bf16 %v1665, %v1665
  %v1690 = vpack.c.bf16 %v1666, %v1666
  %v1691 = vpack.c.bf16 %v1667, %v1667
  %v1692 = vpack.c.bf16 %v1668, %v1668
  %vm1693 = vsmask.f32 7440
  %vm1694 = vmor %vm1670, %vm1693
  %v1696 = vshll.u32 %v1684, 16
  %v1698 = vrot.slane %v1696, 5
  %v1699 = vshrl.u32 %v1684, 16
  %v1701 = vrot.slane %v1699, 4
  %v1702 = vor.u32 %v1701, %v1698
  %v1703 = vrot.slane %v1702, 4
  %v1705 = vshll.u32 %v1685, 16
  %v1707 = vrot.slane %v1705, 5
  %v1708 = vsel %vm1694, %v1703, %v1707
  %v1709 = vshrl.u32 %v1685, 16
  %v1711 = vrot.slane %v1709, 4
  %v1712 = vor.u32 %v1711, %v1707
  %v1713 = vrot.slane %v1712, 4
  %v1715 = vshll.u32 %v1686, 16
  %v1717 = vrot.slane %v1715, 5
  %v1718 = vsel %vm1694, %v1713, %v1717
  %v1719 = vshrl.u32 %v1686, 16
  %v1721 = vrot.slane %v1719, 4
  %v1722 = vor.u32 %v1721, %v1717
  %v1723 = vrot.slane %v1722, 4
  %v1725 = vshll.u32 %v1687, 16
  %v1727 = vrot.slane %v1725, 5
  %v1728 = vsel %vm1694, %v1723, %v1727
  %v1729 = vshrl.u32 %v1687, 16
  %v1731 = vrot.slane %v1729, 4
  %v1732 = vor.u32 %v1731, %v1727
  %v1733 = vrot.slane %v1732, 4
  %v1735 = vshll.u32 %v1688, 16
  %v1737 = vrot.slane %v1735, 5
  %v1738 = vsel %vm1694, %v1733, %v1737
  %v1739 = vshrl.u32 %v1688, 16
  %v1741 = vrot.slane %v1739, 4
  %v1742 = vor.u32 %v1741, %v1737
  %v1743 = vrot.slane %v1742, 4
  %v1745 = vshll.u32 %v1689, 16
  %v1747 = vrot.slane %v1745, 5
  %v1748 = vsel %vm1694, %v1743, %v1747
  %v1749 = vshrl.u32 %v1689, 16
  %v1751 = vrot.slane %v1749, 4
  %v1752 = vor.u32 %v1751, %v1747
  %v1753 = vrot.slane %v1752, 4
  %v1755 = vshll.u32 %v1690, 16
  %v1757 = vrot.slane %v1755, 5
  %v1758 = vsel %vm1694, %v1753, %v1757
  %v1759 = vshrl.u32 %v1690, 16
  %v1761 = vrot.slane %v1759, 4
  %v1762 = vor.u32 %v1761, %v1757
  %v1763 = vrot.slane %v1762, 4
  %v1765 = vshll.u32 %v1691, 16
  %v1767 = vrot.slane %v1765, 5
  %v1768 = vsel %vm1694, %v1763, %v1767
  %v1769 = vshrl.u32 %v1691, 16
  %v1771 = vrot.slane %v1769, 4
  %v1772 = vor.u32 %v1771, %v1767
  %v1773 = vrot.slane %v1772, 4
  %v1775 = vshll.u32 %v1692, 16
  %v1777 = vrot.slane %v1775, 5
  %v1778 = vsel %vm1694, %v1773, %v1777
  %v1779 = vshrl.u32 %v1692, 16
  %v1781 = vrot.slane %v1779, 4
  %v1782 = vor.u32 %v1781, %v1777
  %v1783 = vrot.slane %v1782, 4
  %v1794 = vld [vmem:[#allocation3] sm:$0x8]
  %v1795 = vsel %vm1677, %v1698, %v1794
  %1796 = vst [vmem:[#allocation3] sm:$0x8] %v1795
  %1797 = vst [vmem:[#allocation3 + $0x4] sm:$0xf] %v1708
  %1798 = vst [vmem:[#allocation3 + $0x8] sm:$0xf] %v1718
  %1799 = vst [vmem:[#allocation3 + $0xc] sm:$0xf] %v1728
  %1800 = vst [vmem:[#allocation3 + $0x10] sm:$0xf] %v1738
  %1801 = vst [vmem:[#allocation3 + $0x14] sm:$0xf] %v1748
  %1802 = vst [vmem:[#allocation3 + $0x18] sm:$0xf] %v1758
  %1803 = vst [vmem:[#allocation3 + $0x1c] sm:$0xf] %v1768
  %1804 = vst [vmem:[#allocation3 + $0x20] sm:$0xf] %v1778
  %v1805 = vld [vmem:[#allocation3 + $0x24] sm:$0xf]
  %v1806 = vsel %vm1671, %v1783, %v1805
  %1807 = vst [vmem:[#allocation3 + $0x24] sm:$0xf] %v1806
  %v1808 = vld [vmem:[#allocation3] sm:$0xf]
  %v1809 = vld [vmem:[#allocation3 + $0x4] sm:$0xf]
  %v1810 = vld [vmem:[#allocation3 + $0x8] sm:$0xf]
  %v1811 = vld [vmem:[#allocation3 + $0xc] sm:$0xf]
  %v1812 = vld [vmem:[#allocation3 + $0x10] sm:$0xf]
  %v1813 = vld [vmem:[#allocation3 + $0x14] sm:$0xf]
  %v1814 = vld [vmem:[#allocation3 + $0x18] sm:$0xf]
  %v1815 = vld [vmem:[#allocation3 + $0x1c] sm:$0xf]
  %v1816 = vld [vmem:[#allocation3 + $0x20] sm:$0xf]
  %v1817 = vld [vmem:[%s8] sm:$0xf]
  %v1818 = vld [vmem:[%s8 + $0x4] sm:$0xf]
  %v1819 = vld [vmem:[%s8 + $0x8] sm:$0xf]
  %v1820 = vld [vmem:[%s8 + $0xc] sm:$0xf]
  %v1821 = vld [vmem:[%s8 + $0x10] sm:$0xf]
  %v1822 = vld [vmem:[%s8 + $0x14] sm:$0xf]
  %v1823 = vld [vmem:[%s8 + $0x18] sm:$0xf]
  %v1824 = vld [vmem:[%s8 + $0x1c] sm:$0xf]
  %v1825 = vld [vmem:[%s8 + $0x20] sm:$0xf]
  %v1826 = vld [vmem:[%s8 + $0x24] sm:$0xf]
  %v1827 = vld [vmem:[%s8 + $0x28] sm:$0xf]
  %v1828 = vld [vmem:[%s8 + $0x2c] sm:$0xf]
  %v1829 = vld [vmem:[%s8 + $0x30] sm:$0xf]
  %v1830 = vld [vmem:[%s8 + $0x34] sm:$0xf]
  %v1831 = vld [vmem:[%s8 + $0x38] sm:$0xf]
  %v1832 = vld [vmem:[%s8 + $0x3c] sm:$0xf]
  %v1833 = vld [vmem:[#allocation3 + $0x24] sm:$0x1]
  %s1834 = scalar_lea.vmem %s8, 64
  %v1835 = vld [vmem:[%s1834] sm:$0xf]
  %v1836 = vld [vmem:[%s1834 + $0x4] sm:$0xf]
  %v1837 = vld [vmem:[%s1834 + $0x8] sm:$0xf]
  %v1838 = vld [vmem:[%s1834 + $0xc] sm:$0xf]
  %v1839 = vld [vmem:[%s1834 + $0x10] sm:$0xf]
  %v1840 = vld [vmem:[%s1834 + $0x14] sm:$0xf]
  %v1841 = vld [vmem:[%s1834 + $0x18] sm:$0xf]
  %v1842 = vld [vmem:[%s1834 + $0x1c] sm:$0xf]
  %v1843 = vld [vmem:[%s1834 + $0x20] sm:$0xf]
  %v1844 = vld [vmem:[%s1834 + $0x24] sm:$0xf]
  %v1845 = vld [vmem:[%s1834 + $0x28] sm:$0xf]
  %v1846 = vld [vmem:[%s1834 + $0x2c] sm:$0xf]
  %v1847 = vld [vmem:[%s1834 + $0x30] sm:$0xf]
  %v1848 = vld [vmem:[%s1834 + $0x34] sm:$0xf]
  %v1849 = vld [vmem:[%s1834 + $0x38] sm:$0xf]
  %v1850 = vld [vmem:[%s1834 + $0x3c] sm:$0xf]
  %v1861 = vunpack.c.l.b16 %v1808
  %v1862 = vunpack.c.l.b16 %v1809
  %v1863 = vunpack.c.l.b16 %v1810
  %v1864 = vunpack.c.l.b16 %v1811
  %v1865 = vunpack.c.l.b16 %v1812
  %v1866 = vunpack.c.l.b16 %v1813
  %v1867 = vunpack.c.l.b16 %v1814
  %v1868 = vunpack.c.l.b16 %v1815
  %v1869 = vunpack.c.l.b16 %v1816
  %v1870 = vunpack.c.l.b16 %v1833
  %v1871 = vpack.c.b16 %v1862, %v1861
  %v1872 = vpack.c.b16 %v1864, %v1863
  %v1873 = vpack.c.b16 %v1866, %v1865
  %v1874 = vpack.c.b16 %v1868, %v1867
  %v1875 = vpack.c.b16 %v1870, %v1869
  %v1877 = vshrl.u32 %v1871, 16
  %v1879 = vshll.u32 %v1871, 16
  %v1881 = vrot.slane %v1879, 1
  %v1882 = vor.u32 %v1877, %v1881
  %v1884 = vshll.u32 %v1872, 16
  %v1886 = vrot.slane %v1884, 1
  %v1887 = vsel %vm312, %v1882, %v1886
  %v1888 = vshrl.u32 %v1872, 16
  %v1890 = vor.u32 %v1888, %v1886
  %v1892 = vshll.u32 %v1873, 16
  %v1894 = vrot.slane %v1892, 1
  %v1895 = vsel %vm312, %v1890, %v1894
  %v1896 = vshrl.u32 %v1873, 16
  %v1898 = vor.u32 %v1896, %v1894
  %v1900 = vshll.u32 %v1874, 16
  %v1902 = vrot.slane %v1900, 1
  %v1903 = vsel %vm312, %v1898, %v1902
  %v1904 = vshrl.u32 %v1874, 16
  %v1906 = vor.u32 %v1904, %v1902
  %v1908 = vshll.u32 %v1875, 16
  %v1910 = vrot.slane %v1908, 1
  %v1911 = vsel %vm312, %v1906, %v1910
  %v1912 = vshrl.u32 %v1875, 16
  %v1914 = vor.u32 %v1912, %v1910
  %v1936 = vunpack.c.l.b16 %v1835
  %v1937 = vunpack.c.l.b16 %v1836
  %v1938 = vunpack.c.l.b16 %v1837
  %v1939 = vunpack.c.l.b16 %v1838
  %v1940 = vunpack.c.l.b16 %v1839
  %v1941 = vunpack.c.l.b16 %v1840
  %v1942 = vunpack.c.l.b16 %v1841
  %v1943 = vunpack.c.l.b16 %v1842
  %v1944 = vunpack.c.l.b16 %v1843
  %v1945 = vunpack.c.l.b16 %v1844
  %v1946 = vunpack.c.l.b16 %v1845
  %v1947 = vunpack.c.l.b16 %v1846
  %v1948 = vunpack.c.l.b16 %v1847
  %v1949 = vunpack.c.l.b16 %v1848
  %v1950 = vunpack.c.l.b16 %v1849
  %v1951 = vunpack.c.l.b16 %v1850
  %v1952 = vpack.c.b16 %v1937, %v1936
  %v1953 = vpack.c.b16 %v1939, %v1938
  %v1954 = vpack.c.b16 %v1941, %v1940
  %v1955 = vpack.c.b16 %v1943, %v1942
  %v1956 = vpack.c.b16 %v1945, %v1944
  %v1957 = vpack.c.b16 %v1947, %v1946
  %v1958 = vpack.c.b16 %v1949, %v1948
  %v1959 = vpack.c.b16 %v1951, %v1950
  %1968 = vmatpush.bf16.msra.mxu0 %v1959
  %1969 = vmatpush.bf16.msra.mxu0 %v1958
  %1970 = vmatpush.bf16.msra.mxu0 %v1957
  %1971 = vmatpush.bf16.msra.mxu0 %v1956
  %1972 = vmatpush.bf16.msra.mxu0 %v1955
  %1973 = vmatpush.bf16.msra.mxu0 %v1954
  %1974 = vmatpush.bf16.msra.mxu0 %v1953
  %1975 = vmatpush.bf16.msra.mxu0 %v1952
  %1976 = vmatmul.bf16.gmra.mxu0 %v1887
  %v1977 = vpop.f32.mrf.mxu0
  %v1978 = vadd.f32 0.0, %v1977
  %v1979 = vpop.f32.mrf.mxu0
  %v1980 = vadd.f32 0.0, %v1979
  %1981 = vmatmul.bf16.gmra.mxu0 %v1895
  %v1982 = vpop.f32.mrf.mxu0
  %v1983 = vadd.f32 0.0, %v1982
  %v1984 = vpop.f32.mrf.mxu0
  %v1985 = vadd.f32 0.0, %v1984
  %1986 = vmatmul.bf16.gmra.mxu0 %v1903
  %v1987 = vpop.f32.mrf.mxu0
  %v1988 = vadd.f32 0.0, %v1987
  %v1989 = vpop.f32.mrf.mxu0
  %v1990 = vadd.f32 0.0, %v1989
  %1991 = vmatmul.bf16.gmra.mxu0 %v1911
  %v1992 = vpop.f32.mrf.mxu0
  %v1993 = vadd.f32 0.0, %v1992
  %v1994 = vpop.f32.mrf.mxu0
  %v1995 = vadd.f32 0.0, %v1994
  %1996 = vmatmul.bf16.gmra.mxu0 %v1914
  %v1997 = vpop.f32.mrf.mxu0
  %v1998 = vadd.f32 0.0, %v1997
  %v1999 = vpop.f32.mrf.mxu0
  %2000 = vdwg.mxu0
  %v2001 = vpack.c.b16 %v1869, %v1869
  %v2023 = vunpack.c.l.b16 %v1817
  %v2024 = vunpack.c.l.b16 %v1818
  %v2025 = vunpack.c.l.b16 %v1819
  %v2026 = vunpack.c.l.b16 %v1820
  %v2027 = vunpack.c.l.b16 %v1821
  %v2028 = vunpack.c.l.b16 %v1822
  %v2029 = vunpack.c.l.b16 %v1823
  %v2030 = vunpack.c.l.b16 %v1824
  %v2031 = vunpack.c.l.b16 %v1825
  %v2032 = vunpack.c.l.b16 %v1826
  %v2033 = vunpack.c.l.b16 %v1827
  %v2034 = vunpack.c.l.b16 %v1828
  %v2035 = vunpack.c.l.b16 %v1829
  %v2036 = vunpack.c.l.b16 %v1830
  %v2037 = vunpack.c.l.b16 %v1831
  %v2038 = vunpack.c.l.b16 %v1832
  %v2039 = vpack.c.b16 %v2024, %v2023
  %v2040 = vpack.c.b16 %v2026, %v2025
  %v2041 = vpack.c.b16 %v2028, %v2027
  %v2042 = vpack.c.b16 %v2030, %v2029
  %v2043 = vpack.c.b16 %v2032, %v2031
  %v2044 = vpack.c.b16 %v2034, %v2033
  %v2045 = vpack.c.b16 %v2036, %v2035
  %v2046 = vpack.c.b16 %v2038, %v2037
  %2055 = vmatpush.bf16.msra.mxu0 %v2046
  %2056 = vmatpush.bf16.msra.mxu0 %v2045
  %2057 = vmatpush.bf16.msra.mxu0 %v2044
  %2058 = vmatpush.bf16.msra.mxu0 %v2043
  %2059 = vmatpush.bf16.msra.mxu0 %v2042
  %2060 = vmatpush.bf16.msra.mxu0 %v2041
  %2061 = vmatpush.bf16.msra.mxu0 %v2040
  %2062 = vmatpush.bf16.msra.mxu0 %v2039
  %2063 = vmatmul.bf16.gmra.mxu0 %v1871
  %v2064 = vpop.f32.mrf.mxu0
  %v2065 = vadd.f32 %v1978, %v2064
  %v2066 = vpop.f32.mrf.mxu0
  %v2067 = vadd.f32 %v1980, %v2066
  %2068 = vmatmul.bf16.gmra.mxu0 %v1872
  %v2069 = vpop.f32.mrf.mxu0
  %v2070 = vadd.f32 %v1983, %v2069
  %v2071 = vpop.f32.mrf.mxu0
  %v2072 = vadd.f32 %v1985, %v2071
  %2073 = vmatmul.bf16.gmra.mxu0 %v1873
  %v2074 = vpop.f32.mrf.mxu0
  %v2075 = vadd.f32 %v1988, %v2074
  %v2076 = vpop.f32.mrf.mxu0
  %v2077 = vadd.f32 %v1990, %v2076
  %2078 = vmatmul.bf16.gmra.mxu0 %v1874
  %v2079 = vpop.f32.mrf.mxu0
  %v2080 = vadd.f32 %v1993, %v2079
  %v2081 = vpop.f32.mrf.mxu0
  %v2082 = vadd.f32 %v1995, %v2081
  %2083 = vmatmul.bf16.gmra.mxu0 %v2001
  %v2084 = vpop.f32.mrf.mxu0
  %v2085 = vadd.f32 %v1998, %v2084
  %v2086 = vpop.f32.mrf.mxu0
  %2087 = vdwg.mxu0
  %v2088 = vld [vmem:[#allocation3] sm:$0xe]
  %s2089 = scalar_lea.vmem %s8, 128
  %v2090 = vld [vmem:[%s2089] sm:$0xf]
  %v2091 = vld [vmem:[%s2089 + $0x4] sm:$0xf]
  %v2092 = vld [vmem:[%s2089 + $0x8] sm:$0xf]
  %v2093 = vld [vmem:[%s2089 + $0xc] sm:$0xf]
  %v2094 = vld [vmem:[%s2089 + $0x10] sm:$0xf]
  %v2095 = vld [vmem:[%s2089 + $0x14] sm:$0xf]
  %v2096 = vld [vmem:[%s2089 + $0x18] sm:$0xf]
  %v2097 = vld [vmem:[%s2089 + $0x1c] sm:$0xf]
  %v2098 = vld [vmem:[%s2089 + $0x20] sm:$0xf]
  %v2099 = vld [vmem:[%s2089 + $0x24] sm:$0xf]
  %v2100 = vld [vmem:[%s2089 + $0x28] sm:$0xf]
  %v2101 = vld [vmem:[%s2089 + $0x2c] sm:$0xf]
  %v2102 = vld [vmem:[%s2089 + $0x30] sm:$0xf]
  %v2103 = vld [vmem:[%s2089 + $0x34] sm:$0xf]
  %v2104 = vld [vmem:[%s2089 + $0x38] sm:$0xf]
  %v2105 = vld [vmem:[%s2089 + $0x3c] sm:$0xf]
  %v2107 = vunpack.c.l.b16 %v2088
  %v2108 = vpack.c.b16 %v1862, %v2107
  %v2109 = vrot.slane %v2108, 1
  %v2110 = vrot.slane %v1872, 1
  %v2111 = vsel %vm546, %v2109, %v2110
  %v2112 = vrot.slane %v1873, 1
  %v2113 = vsel %vm546, %v2110, %v2112
  %v2114 = vrot.slane %v1874, 1
  %v2115 = vsel %vm546, %v2112, %v2114
  %v2116 = vrot.slane %v1875, 1
  %v2117 = vsel %vm546, %v2114, %v2116
  %v2139 = vunpack.c.l.b16 %v2090
  %v2140 = vunpack.c.l.b16 %v2091
  %v2141 = vunpack.c.l.b16 %v2092
  %v2142 = vunpack.c.l.b16 %v2093
  %v2143 = vunpack.c.l.b16 %v2094
  %v2144 = vunpack.c.l.b16 %v2095
  %v2145 = vunpack.c.l.b16 %v2096
  %v2146 = vunpack.c.l.b16 %v2097
  %v2147 = vunpack.c.l.b16 %v2098
  %v2148 = vunpack.c.l.b16 %v2099
  %v2149 = vunpack.c.l.b16 %v2100
  %v2150 = vunpack.c.l.b16 %v2101
  %v2151 = vunpack.c.l.b16 %v2102
  %v2152 = vunpack.c.l.b16 %v2103
  %v2153 = vunpack.c.l.b16 %v2104
  %v2154 = vunpack.c.l.b16 %v2105
  %v2155 = vpack.c.b16 %v2140, %v2139
  %v2156 = vpack.c.b16 %v2142, %v2141
  %v2157 = vpack.c.b16 %v2144, %v2143
  %v2158 = vpack.c.b16 %v2146, %v2145
  %v2159 = vpack.c.b16 %v2148, %v2147
  %v2160 = vpack.c.b16 %v2150, %v2149
  %v2161 = vpack.c.b16 %v2152, %v2151
  %v2162 = vpack.c.b16 %v2154, %v2153
  %2171 = vmatpush.bf16.msra.mxu0 %v2162
  %2172 = vmatpush.bf16.msra.mxu0 %v2161
  %2173 = vmatpush.bf16.msra.mxu0 %v2160
  %2174 = vmatpush.bf16.msra.mxu0 %v2159
  %2175 = vmatpush.bf16.msra.mxu0 %v2158
  %2176 = vmatpush.bf16.msra.mxu0 %v2157
  %2177 = vmatpush.bf16.msra.mxu0 %v2156
  %2178 = vmatpush.bf16.msra.mxu0 %v2155
  %2179 = vmatmul.bf16.gmra.mxu0 %v2111
  %v2180 = vpop.f32.mrf.mxu0
  %v2181 = vadd.f32 0.0, %v2180
  %v2182 = vpop.f32.mrf.mxu0
  %v2183 = vadd.f32 0.0, %v2182
  %2184 = vmatmul.bf16.gmra.mxu0 %v2113
  %v2185 = vpop.f32.mrf.mxu0
  %v2186 = vadd.f32 0.0, %v2185
  %v2187 = vpop.f32.mrf.mxu0
  %v2188 = vadd.f32 0.0, %v2187
  %2189 = vmatmul.bf16.gmra.mxu0 %v2115
  %v2190 = vpop.f32.mrf.mxu0
  %v2191 = vadd.f32 0.0, %v2190
  %v2192 = vpop.f32.mrf.mxu0
  %v2193 = vadd.f32 0.0, %v2192
  %2194 = vmatmul.bf16.gmra.mxu0 %v2117
  %v2195 = vpop.f32.mrf.mxu0
  %v2196 = vadd.f32 0.0, %v2195
  %v2197 = vpop.f32.mrf.mxu0
  %v2198 = vadd.f32 0.0, %v2197
  %2199 = vmatmul.bf16.gmra.mxu0 %v2116
  %v2200 = vpop.f32.mrf.mxu0
  %v2201 = vadd.f32 0.0, %v2200
  %v2202 = vpop.f32.mrf.mxu0
  %2203 = vdwg.mxu0
  %v2204 = vadd.f32 %v2065, %v2181
  %v2205 = vadd.f32 %v2067, %v2183
  %v2206 = vadd.f32 %v2070, %v2186
  %v2207 = vadd.f32 %v2072, %v2188
  %v2208 = vadd.f32 %v2075, %v2191
  %v2209 = vadd.f32 %v2077, %v2193
  %v2210 = vadd.f32 %v2080, %v2196
  %v2211 = vadd.f32 %v2082, %v2198
  %v2212 = vadd.f32 %v2085, %v2201
  %v2213 = vld [vmem:[#allocation3] sm:$0x8]
  %v2214 = vld [vmem:[#allocation3 + $0x24] sm:$0x7]
  %s2215 = scalar_lea.vmem %s8, 192
  %v2216 = vld [vmem:[%s2215] sm:$0xf]
  %v2217 = vld [vmem:[%s2215 + $0x4] sm:$0xf]
  %v2218 = vld [vmem:[%s2215 + $0x8] sm:$0xf]
  %v2219 = vld [vmem:[%s2215 + $0xc] sm:$0xf]
  %v2220 = vld [vmem:[%s2215 + $0x10] sm:$0xf]
  %v2221 = vld [vmem:[%s2215 + $0x14] sm:$0xf]
  %v2222 = vld [vmem:[%s2215 + $0x18] sm:$0xf]
  %v2223 = vld [vmem:[%s2215 + $0x1c] sm:$0xf]
  %v2224 = vld [vmem:[%s2215 + $0x20] sm:$0xf]
  %v2225 = vld [vmem:[%s2215 + $0x24] sm:$0xf]
  %v2226 = vld [vmem:[%s2215 + $0x28] sm:$0xf]
  %v2227 = vld [vmem:[%s2215 + $0x2c] sm:$0xf]
  %v2228 = vld [vmem:[%s2215 + $0x30] sm:$0xf]
  %v2229 = vld [vmem:[%s2215 + $0x34] sm:$0xf]
  %v2230 = vld [vmem:[%s2215 + $0x38] sm:$0xf]
  %v2231 = vld [vmem:[%s2215 + $0x3c] sm:$0xf]
  %v2234 = vunpack.c.l.b16 %v2213
  %v2235 = vunpack.c.l.b16 %v2214
  %v2236 = vpack.c.b16 %v1862, %v2234
  %v2237 = vpack.c.b16 %v2235, %v1869
  %v2238 = vrot.slane %v2236, 3
  %v2239 = vrot.slane %v1872, 3
  %v2240 = vsel %vm676, %v2238, %v2239
  %v2241 = vrot.slane %v1873, 3
  %v2242 = vsel %vm676, %v2239, %v2241
  %v2243 = vrot.slane %v1874, 3
  %v2244 = vsel %vm676, %v2241, %v2243
  %v2245 = vrot.slane %v2237, 3
  %v2246 = vsel %vm676, %v2243, %v2245
  %v2268 = vunpack.c.l.b16 %v2216
  %v2269 = vunpack.c.l.b16 %v2217
  %v2270 = vunpack.c.l.b16 %v2218
  %v2271 = vunpack.c.l.b16 %v2219
  %v2272 = vunpack.c.l.b16 %v2220
  %v2273 = vunpack.c.l.b16 %v2221
  %v2274 = vunpack.c.l.b16 %v2222
  %v2275 = vunpack.c.l.b16 %v2223
  %v2276 = vunpack.c.l.b16 %v2224
  %v2277 = vunpack.c.l.b16 %v2225
  %v2278 = vunpack.c.l.b16 %v2226
  %v2279 = vunpack.c.l.b16 %v2227
  %v2280 = vunpack.c.l.b16 %v2228
  %v2281 = vunpack.c.l.b16 %v2229
  %v2282 = vunpack.c.l.b16 %v2230
  %v2283 = vunpack.c.l.b16 %v2231
  %v2284 = vpack.c.b16 %v2269, %v2268
  %v2285 = vpack.c.b16 %v2271, %v2270
  %v2286 = vpack.c.b16 %v2273, %v2272
  %v2287 = vpack.c.b16 %v2275, %v2274
  %v2288 = vpack.c.b16 %v2277, %v2276
  %v2289 = vpack.c.b16 %v2279, %v2278
  %v2290 = vpack.c.b16 %v2281, %v2280
  %v2291 = vpack.c.b16 %v2283, %v2282
  %2300 = vmatpush.bf16.msra.mxu0 %v2291
  %2301 = vmatpush.bf16.msra.mxu0 %v2290
  %2302 = vmatpush.bf16.msra.mxu0 %v2289
  %2303 = vmatpush.bf16.msra.mxu0 %v2288
  %2304 = vmatpush.bf16.msra.mxu0 %v2287
  %2305 = vmatpush.bf16.msra.mxu0 %v2286
  %2306 = vmatpush.bf16.msra.mxu0 %v2285
  %2307 = vmatpush.bf16.msra.mxu0 %v2284
  %2308 = vmatmul.bf16.gmra.mxu0 %v2240
  %v2309 = vpop.f32.mrf.mxu0
  %v2310 = vadd.f32 0.0, %v2309
  %v2311 = vpop.f32.mrf.mxu0
  %v2312 = vadd.f32 0.0, %v2311
  %2313 = vmatmul.bf16.gmra.mxu0 %v2242
  %v2314 = vpop.f32.mrf.mxu0
  %v2315 = vadd.f32 0.0, %v2314
  %v2316 = vpop.f32.mrf.mxu0
  %v2317 = vadd.f32 0.0, %v2316
  %2318 = vmatmul.bf16.gmra.mxu0 %v2244
  %v2319 = vpop.f32.mrf.mxu0
  %v2320 = vadd.f32 0.0, %v2319
  %v2321 = vpop.f32.mrf.mxu0
  %v2322 = vadd.f32 0.0, %v2321
  %2323 = vmatmul.bf16.gmra.mxu0 %v2246
  %v2324 = vpop.f32.mrf.mxu0
  %v2325 = vadd.f32 0.0, %v2324
  %v2326 = vpop.f32.mrf.mxu0
  %v2327 = vadd.f32 0.0, %v2326
  %2328 = vmatmul.bf16.gmra.mxu0 %v2245
  %v2329 = vpop.f32.mrf.mxu0
  %v2330 = vadd.f32 0.0, %v2329
  %v2331 = vpop.f32.mrf.mxu0
  %2332 = vdwg.mxu0
  %v2333 = vadd.f32 %v2204, %v2310
  %v2334 = vadd.f32 %v2205, %v2312
  %v2335 = vadd.f32 %v2206, %v2315
  %v2336 = vadd.f32 %v2207, %v2317
  %v2337 = vadd.f32 %v2208, %v2320
  %v2338 = vadd.f32 %v2209, %v2322
  %v2339 = vadd.f32 %v2210, %v2325
  %v2340 = vadd.f32 %v2211, %v2327
  %v2341 = vadd.f32 %v2212, %v2330
  %v2342 = vld [vmem:[#allocation3 + $0x24] sm:$0xf]
  %s2343 = scalar_lea.vmem %s8, 256
  %v2344 = vld [vmem:[%s2343] sm:$0xf]
  %v2345 = vld [vmem:[%s2343 + $0x4] sm:$0xf]
  %v2346 = vld [vmem:[%s2343 + $0x8] sm:$0xf]
  %v2347 = vld [vmem:[%s2343 + $0xc] sm:$0xf]
  %v2348 = vld [vmem:[%s2343 + $0x10] sm:$0xf]
  %v2349 = vld [vmem:[%s2343 + $0x14] sm:$0xf]
  %v2350 = vld [vmem:[%s2343 + $0x18] sm:$0xf]
  %v2351 = vld [vmem:[%s2343 + $0x1c] sm:$0xf]
  %v2352 = vld [vmem:[%s2343 + $0x20] sm:$0xf]
  %v2353 = vld [vmem:[%s2343 + $0x24] sm:$0xf]
  %v2354 = vld [vmem:[%s2343 + $0x28] sm:$0xf]
  %v2355 = vld [vmem:[%s2343 + $0x2c] sm:$0xf]
  %v2356 = vld [vmem:[%s2343 + $0x30] sm:$0xf]
  %v2357 = vld [vmem:[%s2343 + $0x34] sm:$0xf]
  %v2358 = vld [vmem:[%s2343 + $0x38] sm:$0xf]
  %v2359 = vld [vmem:[%s2343 + $0x3c] sm:$0xf]
  %v2361 = vunpack.c.l.b16 %v2342
  %v2362 = vpack.c.b16 %v2361, %v1869
  %v2364 = vshrl.u32 %v2236, 16
  %v2366 = vrot.slane %v2364, 3
  %v2367 = vshll.u32 %v2236, 16
  %v2369 = vrot.slane %v2367, 4
  %v2370 = vor.u32 %v2366, %v2369
  %v2371 = vrot.slane %v1888, 3
  %v2372 = vrot.slane %v1884, 4
  %v2373 = vor.u32 %v2371, %v2372
  %v2374 = vsel %vm802, %v2370, %v2373
  %v2375 = vrot.slane %v1896, 3
  %v2376 = vrot.slane %v1892, 4
  %v2377 = vor.u32 %v2375, %v2376
  %v2378 = vsel %vm802, %v2373, %v2377
  %v2379 = vrot.slane %v1904, 3
  %v2380 = vrot.slane %v1900, 4
  %v2381 = vor.u32 %v2379, %v2380
  %v2382 = vsel %vm802, %v2377, %v2381
  %v2384 = vshrl.u32 %v2362, 16
  %v2386 = vrot.slane %v2384, 3
  %v2387 = vshll.u32 %v2362, 16
  %v2389 = vrot.slane %v2387, 4
  %v2390 = vor.u32 %v2386, %v2389
  %v2391 = vsel %vm802, %v2381, %v2390
  %v2413 = vunpack.c.l.b16 %v2344
  %v2414 = vunpack.c.l.b16 %v2345
  %v2415 = vunpack.c.l.b16 %v2346
  %v2416 = vunpack.c.l.b16 %v2347
  %v2417 = vunpack.c.l.b16 %v2348
  %v2418 = vunpack.c.l.b16 %v2349
  %v2419 = vunpack.c.l.b16 %v2350
  %v2420 = vunpack.c.l.b16 %v2351
  %v2421 = vunpack.c.l.b16 %v2352
  %v2422 = vunpack.c.l.b16 %v2353
  %v2423 = vunpack.c.l.b16 %v2354
  %v2424 = vunpack.c.l.b16 %v2355
  %v2425 = vunpack.c.l.b16 %v2356
  %v2426 = vunpack.c.l.b16 %v2357
  %v2427 = vunpack.c.l.b16 %v2358
  %v2428 = vunpack.c.l.b16 %v2359
  %v2429 = vpack.c.b16 %v2414, %v2413
  %v2430 = vpack.c.b16 %v2416, %v2415
  %v2431 = vpack.c.b16 %v2418, %v2417
  %v2432 = vpack.c.b16 %v2420, %v2419
  %v2433 = vpack.c.b16 %v2422, %v2421
  %v2434 = vpack.c.b16 %v2424, %v2423
  %v2435 = vpack.c.b16 %v2426, %v2425
  %v2436 = vpack.c.b16 %v2428, %v2427
  %2445 = vmatpush.bf16.msra.mxu0 %v2436
  %2446 = vmatpush.bf16.msra.mxu0 %v2435
  %2447 = vmatpush.bf16.msra.mxu0 %v2434
  %2448 = vmatpush.bf16.msra.mxu0 %v2433
  %2449 = vmatpush.bf16.msra.mxu0 %v2432
  %2450 = vmatpush.bf16.msra.mxu0 %v2431
  %2451 = vmatpush.bf16.msra.mxu0 %v2430
  %2452 = vmatpush.bf16.msra.mxu0 %v2429
  %2453 = vmatmul.bf16.gmra.mxu0 %v2374
  %v2454 = vpop.f32.mrf.mxu0
  %v2455 = vadd.f32 0.0, %v2454
  %v2456 = vpop.f32.mrf.mxu0
  %v2457 = vadd.f32 0.0, %v2456
  %2458 = vmatmul.bf16.gmra.mxu0 %v2378
  %v2459 = vpop.f32.mrf.mxu0
  %v2460 = vadd.f32 0.0, %v2459
  %v2461 = vpop.f32.mrf.mxu0
  %v2462 = vadd.f32 0.0, %v2461
  %2463 = vmatmul.bf16.gmra.mxu0 %v2382
  %v2464 = vpop.f32.mrf.mxu0
  %v2465 = vadd.f32 0.0, %v2464
  %v2466 = vpop.f32.mrf.mxu0
  %v2467 = vadd.f32 0.0, %v2466
  %2468 = vmatmul.bf16.gmra.mxu0 %v2391
  %v2469 = vpop.f32.mrf.mxu0
  %v2470 = vadd.f32 0.0, %v2469
  %v2471 = vpop.f32.mrf.mxu0
  %v2472 = vadd.f32 0.0, %v2471
  %2473 = vmatmul.bf16.gmra.mxu0 %v2390
  %v2474 = vpop.f32.mrf.mxu0
  %v2475 = vadd.f32 0.0, %v2474
  %v2476 = vpop.f32.mrf.mxu0
  %2477 = vdwg.mxu0
  %v2478 = vadd.f32 %v2333, %v2455
  %v2479 = vadd.f32 %v2334, %v2457
  %v2480 = vadd.f32 %v2335, %v2460
  %v2481 = vadd.f32 %v2336, %v2462
  %v2482 = vadd.f32 %v2337, %v2465
  %v2483 = vadd.f32 %v2338, %v2467
  %v2484 = vadd.f32 %v2339, %v2470
  %v2485 = vadd.f32 %v2340, %v2472
  %v2486 = vadd.f32 %v2341, %v2475
  %s2487 = scalar_lea.vmem %s8, 320
  %v2488 = vld [vmem:[%s2487] sm:$0xf]
  %v2489 = vld [vmem:[%s2487 + $0x4] sm:$0xf]
  %v2490 = vld [vmem:[%s2487 + $0x8] sm:$0xf]
  %v2491 = vld [vmem:[%s2487 + $0xc] sm:$0xf]
  %v2492 = vld [vmem:[%s2487 + $0x10] sm:$0xf]
  %v2493 = vld [vmem:[%s2487 + $0x14] sm:$0xf]
  %v2494 = vld [vmem:[%s2487 + $0x18] sm:$0xf]
  %v2495 = vld [vmem:[%s2487 + $0x1c] sm:$0xf]
  %v2496 = vld [vmem:[%s2487 + $0x20] sm:$0xf]
  %v2497 = vld [vmem:[%s2487 + $0x24] sm:$0xf]
  %v2498 = vld [vmem:[%s2487 + $0x28] sm:$0xf]
  %v2499 = vld [vmem:[%s2487 + $0x2c] sm:$0xf]
  %v2500 = vld [vmem:[%s2487 + $0x30] sm:$0xf]
  %v2501 = vld [vmem:[%s2487 + $0x34] sm:$0xf]
  %v2502 = vld [vmem:[%s2487 + $0x38] sm:$0xf]
  %v2503 = vld [vmem:[%s2487 + $0x3c] sm:$0xf]
  %v2504 = vpack.c.b16 %v1863, %v1862
  %v2505 = vpack.c.b16 %v1865, %v1864
  %v2506 = vpack.c.b16 %v1867, %v1866
  %v2507 = vpack.c.b16 %v1869, %v1868
  %v2508 = vpack.c.b16 %v2361, %v2361
  %v2530 = vunpack.c.l.b16 %v2488
  %v2531 = vunpack.c.l.b16 %v2489
  %v2532 = vunpack.c.l.b16 %v2490
  %v2533 = vunpack.c.l.b16 %v2491
  %v2534 = vunpack.c.l.b16 %v2492
  %v2535 = vunpack.c.l.b16 %v2493
  %v2536 = vunpack.c.l.b16 %v2494
  %v2537 = vunpack.c.l.b16 %v2495
  %v2538 = vunpack.c.l.b16 %v2496
  %v2539 = vunpack.c.l.b16 %v2497
  %v2540 = vunpack.c.l.b16 %v2498
  %v2541 = vunpack.c.l.b16 %v2499
  %v2542 = vunpack.c.l.b16 %v2500
  %v2543 = vunpack.c.l.b16 %v2501
  %v2544 = vunpack.c.l.b16 %v2502
  %v2545 = vunpack.c.l.b16 %v2503
  %v2546 = vpack.c.b16 %v2531, %v2530
  %v2547 = vpack.c.b16 %v2533, %v2532
  %v2548 = vpack.c.b16 %v2535, %v2534
  %v2549 = vpack.c.b16 %v2537, %v2536
  %v2550 = vpack.c.b16 %v2539, %v2538
  %v2551 = vpack.c.b16 %v2541, %v2540
  %v2552 = vpack.c.b16 %v2543, %v2542
  %v2553 = vpack.c.b16 %v2545, %v2544
  %2562 = vmatpush.bf16.msra.mxu0 %v2553
  %2563 = vmatpush.bf16.msra.mxu0 %v2552
  %2564 = vmatpush.bf16.msra.mxu0 %v2551
  %2565 = vmatpush.bf16.msra.mxu0 %v2550
  %2566 = vmatpush.bf16.msra.mxu0 %v2549
  %2567 = vmatpush.bf16.msra.mxu0 %v2548
  %2568 = vmatpush.bf16.msra.mxu0 %v2547
  %2569 = vmatpush.bf16.msra.mxu0 %v2546
  %2570 = vmatmul.bf16.gmra.mxu0 %v2504
  %v2571 = vpop.f32.mrf.mxu0
  %v2572 = vadd.f32 0.0, %v2571
  %v2573 = vpop.f32.mrf.mxu0
  %v2574 = vadd.f32 0.0, %v2573
  %2575 = vmatmul.bf16.gmra.mxu0 %v2505
  %v2576 = vpop.f32.mrf.mxu0
  %v2577 = vadd.f32 0.0, %v2576
  %v2578 = vpop.f32.mrf.mxu0
  %v2579 = vadd.f32 0.0, %v2578
  %2580 = vmatmul.bf16.gmra.mxu0 %v2506
  %v2581 = vpop.f32.mrf.mxu0
  %v2582 = vadd.f32 0.0, %v2581
  %v2583 = vpop.f32.mrf.mxu0
  %v2584 = vadd.f32 0.0, %v2583
  %2585 = vmatmul.bf16.gmra.mxu0 %v2507
  %v2586 = vpop.f32.mrf.mxu0
  %v2587 = vadd.f32 0.0, %v2586
  %v2588 = vpop.f32.mrf.mxu0
  %v2589 = vadd.f32 0.0, %v2588
  %2590 = vmatmul.bf16.gmra.mxu0 %v2508
  %v2591 = vpop.f32.mrf.mxu0
  %v2592 = vadd.f32 0.0, %v2591
  %v2593 = vpop.f32.mrf.mxu0
  %2594 = vdwg.mxu0
  %v2595 = vadd.f32 %v2478, %v2572
  %v2596 = vadd.f32 %v2479, %v2574
  %v2597 = vadd.f32 %v2480, %v2577
  %v2598 = vadd.f32 %v2481, %v2579
  %v2599 = vadd.f32 %v2482, %v2582
  %v2600 = vadd.f32 %v2483, %v2584
  %v2601 = vadd.f32 %v2484, %v2587
  %v2602 = vadd.f32 %v2485, %v2589
  %v2603 = vadd.f32 %v2486, %v2592
  %v2604 = vld [vmem:[#allocation3 + $0x4] sm:$0xc]
  %v2605 = vld [vmem:[#allocation3 + $0x8] sm:$0xf]
  %v2606 = vld [vmem:[#allocation3 + $0xc] sm:$0xf]
  %v2607 = vld [vmem:[#allocation3 + $0x10] sm:$0xf]
  %v2608 = vld [vmem:[#allocation3 + $0x14] sm:$0xf]
  %v2609 = vld [vmem:[#allocation3 + $0x18] sm:$0xf]
  %v2610 = vld [vmem:[#allocation3 + $0x1c] sm:$0xf]
  %v2611 = vld [vmem:[#allocation3 + $0x20] sm:$0xf]
  %v2612 = vld [vmem:[#allocation3 + $0x24] sm:$0xf]
  %v2613 = vld [vmem:[#allocation3 + $0x28] sm:$0x3]
  %s2614 = scalar_lea.vmem %s8, 384
  %v2615 = vld [vmem:[%s2614] sm:$0xf]
  %v2616 = vld [vmem:[%s2614 + $0x4] sm:$0xf]
  %v2617 = vld [vmem:[%s2614 + $0x8] sm:$0xf]
  %v2618 = vld [vmem:[%s2614 + $0xc] sm:$0xf]
  %v2619 = vld [vmem:[%s2614 + $0x10] sm:$0xf]
  %v2620 = vld [vmem:[%s2614 + $0x14] sm:$0xf]
  %v2621 = vld [vmem:[%s2614 + $0x18] sm:$0xf]
  %v2622 = vld [vmem:[%s2614 + $0x1c] sm:$0xf]
  %v2623 = vld [vmem:[%s2614 + $0x20] sm:$0xf]
  %v2624 = vld [vmem:[%s2614 + $0x24] sm:$0xf]
  %v2625 = vld [vmem:[%s2614 + $0x28] sm:$0xf]
  %v2626 = vld [vmem:[%s2614 + $0x2c] sm:$0xf]
  %v2627 = vld [vmem:[%s2614 + $0x30] sm:$0xf]
  %v2628 = vld [vmem:[%s2614 + $0x34] sm:$0xf]
  %v2629 = vld [vmem:[%s2614 + $0x38] sm:$0xf]
  %v2630 = vld [vmem:[%s2614 + $0x3c] sm:$0xf]
  %v2641 = vunpack.c.l.b16 %v2604
  %v2642 = vunpack.c.l.b16 %v2605
  %v2643 = vunpack.c.l.b16 %v2606
  %v2644 = vunpack.c.l.b16 %v2607
  %v2645 = vunpack.c.l.b16 %v2608
  %v2646 = vunpack.c.l.b16 %v2609
  %v2647 = vunpack.c.l.b16 %v2610
  %v2648 = vunpack.c.l.b16 %v2611
  %v2649 = vunpack.c.l.b16 %v2612
  %v2650 = vunpack.c.l.b16 %v2613
  %v2651 = vpack.c.b16 %v2642, %v2641
  %v2652 = vpack.c.b16 %v2644, %v2643
  %v2653 = vpack.c.b16 %v2646, %v2645
  %v2654 = vpack.c.b16 %v2648, %v2647
  %v2655 = vpack.c.b16 %v2650, %v2649
  %v2656 = vrot.slane %v2651, 2
  %v2657 = vrot.slane %v2652, 2
  %v2658 = vsel %vm1096, %v2656, %v2657
  %v2659 = vrot.slane %v2653, 2
  %v2660 = vsel %vm1096, %v2657, %v2659
  %v2661 = vrot.slane %v2654, 2
  %v2662 = vsel %vm1096, %v2659, %v2661
  %v2663 = vrot.slane %v2655, 2
  %v2664 = vsel %vm1096, %v2661, %v2663
  %v2686 = vunpack.c.l.b16 %v2615
  %v2687 = vunpack.c.l.b16 %v2616
  %v2688 = vunpack.c.l.b16 %v2617
  %v2689 = vunpack.c.l.b16 %v2618
  %v2690 = vunpack.c.l.b16 %v2619
  %v2691 = vunpack.c.l.b16 %v2620
  %v2692 = vunpack.c.l.b16 %v2621
  %v2693 = vunpack.c.l.b16 %v2622
  %v2694 = vunpack.c.l.b16 %v2623
  %v2695 = vunpack.c.l.b16 %v2624
  %v2696 = vunpack.c.l.b16 %v2625
  %v2697 = vunpack.c.l.b16 %v2626
  %v2698 = vunpack.c.l.b16 %v2627
  %v2699 = vunpack.c.l.b16 %v2628
  %v2700 = vunpack.c.l.b16 %v2629
  %v2701 = vunpack.c.l.b16 %v2630
  %v2702 = vpack.c.b16 %v2687, %v2686
  %v2703 = vpack.c.b16 %v2689, %v2688
  %v2704 = vpack.c.b16 %v2691, %v2690
  %v2705 = vpack.c.b16 %v2693, %v2692
  %v2706 = vpack.c.b16 %v2695, %v2694
  %v2707 = vpack.c.b16 %v2697, %v2696
  %v2708 = vpack.c.b16 %v2699, %v2698
  %v2709 = vpack.c.b16 %v2701, %v2700
  %2718 = vmatpush.bf16.msra.mxu0 %v2709
  %2719 = vmatpush.bf16.msra.mxu0 %v2708
  %2720 = vmatpush.bf16.msra.mxu0 %v2707
  %2721 = vmatpush.bf16.msra.mxu0 %v2706
  %2722 = vmatpush.bf16.msra.mxu0 %v2705
  %2723 = vmatpush.bf16.msra.mxu0 %v2704
  %2724 = vmatpush.bf16.msra.mxu0 %v2703
  %2725 = vmatpush.bf16.msra.mxu0 %v2702
  %2726 = vmatmul.bf16.gmra.mxu0 %v2658
  %v2727 = vpop.f32.mrf.mxu0
  %v2728 = vadd.f32 0.0, %v2727
  %v2729 = vpop.f32.mrf.mxu0
  %v2730 = vadd.f32 0.0, %v2729
  %2731 = vmatmul.bf16.gmra.mxu0 %v2660
  %v2732 = vpop.f32.mrf.mxu0
  %v2733 = vadd.f32 0.0, %v2732
  %v2734 = vpop.f32.mrf.mxu0
  %v2735 = vadd.f32 0.0, %v2734
  %2736 = vmatmul.bf16.gmra.mxu0 %v2662
  %v2737 = vpop.f32.mrf.mxu0
  %v2738 = vadd.f32 0.0, %v2737
  %v2739 = vpop.f32.mrf.mxu0
  %v2740 = vadd.f32 0.0, %v2739
  %2741 = vmatmul.bf16.gmra.mxu0 %v2664
  %v2742 = vpop.f32.mrf.mxu0
  %v2743 = vadd.f32 0.0, %v2742
  %v2744 = vpop.f32.mrf.mxu0
  %v2745 = vadd.f32 0.0, %v2744
  %2746 = vmatmul.bf16.gmra.mxu0 %v2663
  %v2747 = vpop.f32.mrf.mxu0
  %v2748 = vadd.f32 0.0, %v2747
  %v2749 = vpop.f32.mrf.mxu0
  %2750 = vdwg.mxu0
  %v2751 = vadd.f32 %v2595, %v2728
  %v2752 = vadd.f32 %v2596, %v2730
  %v2753 = vadd.f32 %v2597, %v2733
  %v2754 = vadd.f32 %v2598, %v2735
  %v2755 = vadd.f32 %v2599, %v2738
  %v2756 = vadd.f32 %v2600, %v2740
  %v2757 = vadd.f32 %v2601, %v2743
  %v2758 = vadd.f32 %v2602, %v2745
  %v2759 = vadd.f32 %v2603, %v2748
  %v2760 = vld [vmem:[#allocation3 + $0x28] sm:$0x7]
  %s2761 = scalar_lea.vmem %s8, 448
  %v2762 = vld [vmem:[%s2761] sm:$0xf]
  %v2763 = vld [vmem:[%s2761 + $0x4] sm:$0xf]
  %v2764 = vld [vmem:[%s2761 + $0x8] sm:$0xf]
  %v2765 = vld [vmem:[%s2761 + $0xc] sm:$0xf]
  %v2766 = vld [vmem:[%s2761 + $0x10] sm:$0xf]
  %v2767 = vld [vmem:[%s2761 + $0x14] sm:$0xf]
  %v2768 = vld [vmem:[%s2761 + $0x18] sm:$0xf]
  %v2769 = vld [vmem:[%s2761 + $0x1c] sm:$0xf]
  %v2770 = vld [vmem:[%s2761 + $0x20] sm:$0xf]
  %v2771 = vld [vmem:[%s2761 + $0x24] sm:$0xf]
  %v2772 = vld [vmem:[%s2761 + $0x28] sm:$0xf]
  %v2773 = vld [vmem:[%s2761 + $0x2c] sm:$0xf]
  %v2774 = vld [vmem:[%s2761 + $0x30] sm:$0xf]
  %v2775 = vld [vmem:[%s2761 + $0x34] sm:$0xf]
  %v2776 = vld [vmem:[%s2761 + $0x38] sm:$0xf]
  %v2777 = vld [vmem:[%s2761 + $0x3c] sm:$0xf]
  %v2779 = vunpack.c.l.b16 %v2760
  %v2780 = vpack.c.b16 %v2779, %v2649
  %v2782 = vshrl.u32 %v2651, 16
  %v2784 = vrot.slane %v2782, 2
  %v2785 = vshll.u32 %v2651, 16
  %v2787 = vrot.slane %v2785, 3
  %v2788 = vor.u32 %v2784, %v2787
  %v2790 = vshrl.u32 %v2652, 16
  %v2792 = vrot.slane %v2790, 2
  %v2793 = vshll.u32 %v2652, 16
  %v2795 = vrot.slane %v2793, 3
  %v2796 = vor.u32 %v2792, %v2795
  %v2797 = vsel %vm1222, %v2788, %v2796
  %v2799 = vshrl.u32 %v2653, 16
  %v2801 = vrot.slane %v2799, 2
  %v2802 = vshll.u32 %v2653, 16
  %v2804 = vrot.slane %v2802, 3
  %v2805 = vor.u32 %v2801, %v2804
  %v2806 = vsel %vm1222, %v2796, %v2805
  %v2808 = vshrl.u32 %v2654, 16
  %v2810 = vrot.slane %v2808, 2
  %v2811 = vshll.u32 %v2654, 16
  %v2813 = vrot.slane %v2811, 3
  %v2814 = vor.u32 %v2810, %v2813
  %v2815 = vsel %vm1222, %v2805, %v2814
  %v2817 = vshrl.u32 %v2780, 16
  %v2819 = vrot.slane %v2817, 2
  %v2820 = vshll.u32 %v2780, 16
  %v2822 = vrot.slane %v2820, 3
  %v2823 = vor.u32 %v2819, %v2822
  %v2824 = vsel %vm1222, %v2814, %v2823
  %v2846 = vunpack.c.l.b16 %v2762
  %v2847 = vunpack.c.l.b16 %v2763
  %v2848 = vunpack.c.l.b16 %v2764
  %v2849 = vunpack.c.l.b16 %v2765
  %v2850 = vunpack.c.l.b16 %v2766
  %v2851 = vunpack.c.l.b16 %v2767
  %v2852 = vunpack.c.l.b16 %v2768
  %v2853 = vunpack.c.l.b16 %v2769
  %v2854 = vunpack.c.l.b16 %v2770
  %v2855 = vunpack.c.l.b16 %v2771
  %v2856 = vunpack.c.l.b16 %v2772
  %v2857 = vunpack.c.l.b16 %v2773
  %v2858 = vunpack.c.l.b16 %v2774
  %v2859 = vunpack.c.l.b16 %v2775
  %v2860 = vunpack.c.l.b16 %v2776
  %v2861 = vunpack.c.l.b16 %v2777
  %v2862 = vpack.c.b16 %v2847, %v2846
  %v2863 = vpack.c.b16 %v2849, %v2848
  %v2864 = vpack.c.b16 %v2851, %v2850
  %v2865 = vpack.c.b16 %v2853, %v2852
  %v2866 = vpack.c.b16 %v2855, %v2854
  %v2867 = vpack.c.b16 %v2857, %v2856
  %v2868 = vpack.c.b16 %v2859, %v2858
  %v2869 = vpack.c.b16 %v2861, %v2860
  %2878 = vmatpush.bf16.msra.mxu0 %v2869
  %2879 = vmatpush.bf16.msra.mxu0 %v2868
  %2880 = vmatpush.bf16.msra.mxu0 %v2867
  %2881 = vmatpush.bf16.msra.mxu0 %v2866
  %2882 = vmatpush.bf16.msra.mxu0 %v2865
  %2883 = vmatpush.bf16.msra.mxu0 %v2864
  %2884 = vmatpush.bf16.msra.mxu0 %v2863
  %2885 = vmatpush.bf16.msra.mxu0 %v2862
  %2886 = vmatmul.bf16.gmra.mxu0 %v2797
  %v2887 = vpop.f32.mrf.mxu0
  %v2888 = vadd.f32 0.0, %v2887
  %v2889 = vpop.f32.mrf.mxu0
  %v2890 = vadd.f32 0.0, %v2889
  %2891 = vmatmul.bf16.gmra.mxu0 %v2806
  %v2892 = vpop.f32.mrf.mxu0
  %v2893 = vadd.f32 0.0, %v2892
  %v2894 = vpop.f32.mrf.mxu0
  %v2895 = vadd.f32 0.0, %v2894
  %2896 = vmatmul.bf16.gmra.mxu0 %v2815
  %v2897 = vpop.f32.mrf.mxu0
  %v2898 = vadd.f32 0.0, %v2897
  %v2899 = vpop.f32.mrf.mxu0
  %v2900 = vadd.f32 0.0, %v2899
  %2901 = vmatmul.bf16.gmra.mxu0 %v2824
  %v2902 = vpop.f32.mrf.mxu0
  %v2903 = vadd.f32 0.0, %v2902
  %v2904 = vpop.f32.mrf.mxu0
  %v2905 = vadd.f32 0.0, %v2904
  %2906 = vmatmul.bf16.gmra.mxu0 %v2823
  %v2907 = vpop.f32.mrf.mxu0
  %v2908 = vadd.f32 0.0, %v2907
  %v2909 = vpop.f32.mrf.mxu0
  %2910 = vdwg.mxu0
  %v2911 = vadd.f32 %v2751, %v2888
  %v2912 = vadd.f32 %v2752, %v2890
  %v2913 = vadd.f32 %v2753, %v2893
  %v2914 = vadd.f32 %v2754, %v2895
  %v2915 = vadd.f32 %v2755, %v2898
  %v2916 = vadd.f32 %v2756, %v2900
  %v2917 = vadd.f32 %v2757, %v2903
  %v2918 = vadd.f32 %v2758, %v2905
  %v2919 = vadd.f32 %v2759, %v2908
  %v2920 = vld [vmem:[#allocation3 + $0x4] sm:$0x8]
  %s2921 = scalar_lea.vmem %s8, 512
  %v2922 = vld [vmem:[%s2921] sm:$0xf]
  %v2923 = vld [vmem:[%s2921 + $0x4] sm:$0xf]
  %v2924 = vld [vmem:[%s2921 + $0x8] sm:$0xf]
  %v2925 = vld [vmem:[%s2921 + $0xc] sm:$0xf]
  %v2926 = vld [vmem:[%s2921 + $0x10] sm:$0xf]
  %v2927 = vld [vmem:[%s2921 + $0x14] sm:$0xf]
  %v2928 = vld [vmem:[%s2921 + $0x18] sm:$0xf]
  %v2929 = vld [vmem:[%s2921 + $0x1c] sm:$0xf]
  %v2930 = vld [vmem:[%s2921 + $0x20] sm:$0xf]
  %v2931 = vld [vmem:[%s2921 + $0x24] sm:$0xf]
  %v2932 = vld [vmem:[%s2921 + $0x28] sm:$0xf]
  %v2933 = vld [vmem:[%s2921 + $0x2c] sm:$0xf]
  %v2934 = vld [vmem:[%s2921 + $0x30] sm:$0xf]
  %v2935 = vld [vmem:[%s2921 + $0x34] sm:$0xf]
  %v2936 = vld [vmem:[%s2921 + $0x38] sm:$0xf]
  %v2937 = vld [vmem:[%s2921 + $0x3c] sm:$0xf]
  %v2939 = vunpack.c.l.b16 %v2920
  %v2940 = vpack.c.b16 %v2642, %v2939
  %v2941 = vrot.slane %v2940, 3
  %v2942 = vrot.slane %v2652, 3
  %v2943 = vsel %vm676, %v2941, %v2942
  %v2944 = vrot.slane %v2653, 3
  %v2945 = vsel %vm676, %v2942, %v2944
  %v2946 = vrot.slane %v2654, 3
  %v2947 = vsel %vm676, %v2944, %v2946
  %v2948 = vrot.slane %v2780, 3
  %v2949 = vsel %vm676, %v2946, %v2948
  %v2971 = vunpack.c.l.b16 %v2922
  %v2972 = vunpack.c.l.b16 %v2923
  %v2973 = vunpack.c.l.b16 %v2924
  %v2974 = vunpack.c.l.b16 %v2925
  %v2975 = vunpack.c.l.b16 %v2926
  %v2976 = vunpack.c.l.b16 %v2927
  %v2977 = vunpack.c.l.b16 %v2928
  %v2978 = vunpack.c.l.b16 %v2929
  %v2979 = vunpack.c.l.b16 %v2930
  %v2980 = vunpack.c.l.b16 %v2931
  %v2981 = vunpack.c.l.b16 %v2932
  %v2982 = vunpack.c.l.b16 %v2933
  %v2983 = vunpack.c.l.b16 %v2934
  %v2984 = vunpack.c.l.b16 %v2935
  %v2985 = vunpack.c.l.b16 %v2936
  %v2986 = vunpack.c.l.b16 %v2937
  %v2987 = vpack.c.b16 %v2972, %v2971
  %v2988 = vpack.c.b16 %v2974, %v2973
  %v2989 = vpack.c.b16 %v2976, %v2975
  %v2990 = vpack.c.b16 %v2978, %v2977
  %v2991 = vpack.c.b16 %v2980, %v2979
  %v2992 = vpack.c.b16 %v2982, %v2981
  %v2993 = vpack.c.b16 %v2984, %v2983
  %v2994 = vpack.c.b16 %v2986, %v2985
  %3003 = vmatpush.bf16.msra.mxu0 %v2994
  %3004 = vmatpush.bf16.msra.mxu0 %v2993
  %3005 = vmatpush.bf16.msra.mxu0 %v2992
  %3006 = vmatpush.bf16.msra.mxu0 %v2991
  %3007 = vmatpush.bf16.msra.mxu0 %v2990
  %3008 = vmatpush.bf16.msra.mxu0 %v2989
  %3009 = vmatpush.bf16.msra.mxu0 %v2988
  %3010 = vmatpush.bf16.msra.mxu0 %v2987
  %3011 = vmatmul.bf16.gmra.mxu0 %v2943
  %v3012 = vpop.f32.mrf.mxu0
  %v3013 = vadd.f32 0.0, %v3012
  %v3014 = vpop.f32.mrf.mxu0
  %v3015 = vadd.f32 0.0, %v3014
  %3016 = vmatmul.bf16.gmra.mxu0 %v2945
  %v3017 = vpop.f32.mrf.mxu0
  %v3018 = vadd.f32 0.0, %v3017
  %v3019 = vpop.f32.mrf.mxu0
  %v3020 = vadd.f32 0.0, %v3019
  %3021 = vmatmul.bf16.gmra.mxu0 %v2947
  %v3022 = vpop.f32.mrf.mxu0
  %v3023 = vadd.f32 0.0, %v3022
  %v3024 = vpop.f32.mrf.mxu0
  %v3025 = vadd.f32 0.0, %v3024
  %3026 = vmatmul.bf16.gmra.mxu0 %v2949
  %v3027 = vpop.f32.mrf.mxu0
  %v3028 = vadd.f32 0.0, %v3027
  %v3029 = vpop.f32.mrf.mxu0
  %v3030 = vadd.f32 0.0, %v3029
  %3031 = vmatmul.bf16.gmra.mxu0 %v2948
  %v3032 = vpop.f32.mrf.mxu0
  %v3033 = vadd.f32 0.0, %v3032
  %v3034 = vpop.f32.mrf.mxu0
  %3035 = vdwg.mxu0
  %v3036 = vadd.f32 %v2911, %v3013
  %v3037 = vadd.f32 %v2912, %v3015
  %v3038 = vadd.f32 %v2913, %v3018
  %v3039 = vadd.f32 %v2914, %v3020
  %v3040 = vadd.f32 %v2915, %v3023
  %v3041 = vadd.f32 %v2916, %v3025
  %v3042 = vadd.f32 %v2917, %v3028
  %v3043 = vadd.f32 %v2918, %v3030
  %v3044 = vadd.f32 %v2919, %v3033
  %v3045 = vld [vmem:[%s9] sm:$0x1]
  %v3046 = vld [vmem:[%s10] sm:$0x1]
  %v3047 = vmul.f32 %v3036, %v1492
  %v3048 = vmul.f32 %v3037, %v1497
  %v3049 = vmul.f32 %v3038, %v1502
  %v3050 = vmul.f32 %v3039, %v1507
  %v3051 = vmul.f32 %v3040, %v1512
  %v3052 = vmul.f32 %v3041, %v1517
  %v3053 = vmul.f32 %v3042, %v1522
  %v3054 = vmul.f32 %v3043, %v1527
  %v3055 = vmul.f32 %v3044, %v1532
  %v3056 = vadd.f32 %v3047, %v3048
  %v3057 = vadd.f32 %v3056, %v3049
  %v3058 = vadd.f32 %v3057, %v3050
  %v3059 = vadd.f32 %v3058, %v3051
  %v3060 = vadd.f32 %v3059, %v3052
  %v3061 = vadd.f32 %v3060, %v3053
  %v3062 = vadd.f32 %v3061, %v3054
  %v3063 = vadd.f32 %v3062, %v3055
  %v3064 = vrot.slane %v3063, 4
  %v3065 = vadd.f32 %v3063, %v3064
  %v3066 = vrot.slane %v3065, 2
  %v3067 = vadd.f32 %v3065, %v3066
  %v3068 = vrot.slane %v3067, 1
  %v3069 = vadd.f32 %v3067, %v3068
  %v3070 = vmul.f32 %v3069, %v1563
  %v3071 = vsub.f32 %v3036, %v3070
  %v3072 = vsub.f32 %v3037, %v3070
  %v3073 = vsub.f32 %v3038, %v3070
  %v3074 = vsub.f32 %v3039, %v3070
  %v3075 = vsub.f32 %v3040, %v3070
  %v3076 = vsub.f32 %v3041, %v3070
  %v3077 = vsub.f32 %v3042, %v3070
  %v3078 = vsub.f32 %v3043, %v3070
  %v3079 = vsub.f32 %v3044, %v3070
  %v3080 = vmul.f32 %v3071, %v1492
  %v3081 = vmul.f32 %v3072, %v1497
  %v3082 = vmul.f32 %v3073, %v1502
  %v3083 = vmul.f32 %v3074, %v1507
  %v3084 = vmul.f32 %v3075, %v1512
  %v3085 = vmul.f32 %v3076, %v1517
  %v3086 = vmul.f32 %v3077, %v1522
  %v3087 = vmul.f32 %v3078, %v1527
  %v3088 = vmul.f32 %v3079, %v1532
  %v3089 = vmul.f32 %v3080, %v3080
  %v3090 = vmul.f32 %v3081, %v3081
  %v3091 = vmul.f32 %v3082, %v3082
  %v3092 = vmul.f32 %v3083, %v3083
  %v3093 = vmul.f32 %v3084, %v3084
  %v3094 = vmul.f32 %v3085, %v3085
  %v3095 = vmul.f32 %v3086, %v3086
  %v3096 = vmul.f32 %v3087, %v3087
  %v3097 = vmul.f32 %v3088, %v3088
  %v3098 = vadd.f32 %v3089, %v3090
  %v3099 = vadd.f32 %v3098, %v3091
  %v3100 = vadd.f32 %v3099, %v3092
  %v3101 = vadd.f32 %v3100, %v3093
  %v3102 = vadd.f32 %v3101, %v3094
  %v3103 = vadd.f32 %v3102, %v3095
  %v3104 = vadd.f32 %v3103, %v3096
  %v3105 = vadd.f32 %v3104, %v3097
  %v3106 = vrot.slane %v3105, 4
  %v3107 = vadd.f32 %v3105, %v3106
  %v3108 = vrot.slane %v3107, 2
  %v3109 = vadd.f32 %v3107, %v3108
  %v3110 = vrot.slane %v3109, 1
  %v3111 = vadd.f32 %v3109, %v3110
  %v3112 = vmul.f32 %v3111, %v1563
  %v3113 = vadd.f32 %v3112, 1e-05
  %v3114 = vrsqrt.pop %v3113
  %v3115 = vmul.f32 %v3114, %v3113
  %v3116 = vmul.f32 %v3115, %v3114
  %v3117 = vmul.f32 0.5, %v3116
  %v3118 = vsub.f32 1.5, %v3117
  %v3119 = vmul.f32 %v3114, %v3118
  %vm3120 = vweird.f32 %v3113
  %vm3121 = vweird.f32 %v3114
  %vm3122 = vmor %vm3120, %vm3121
  %v3123 = vsel %vm3122, %v3114, %v3119
  %v3124 = vmul.f32 %v3071, %v3123
  %v3125 = vmul.f32 %v3072, %v3123
  %v3126 = vmul.f32 %v3073, %v3123
  %v3127 = vmul.f32 %v3074, %v3123
  %v3128 = vmul.f32 %v3075, %v3123
  %v3129 = vmul.f32 %v3076, %v3123
  %v3130 = vmul.f32 %v3077, %v3123
  %v3131 = vmul.f32 %v3078, %v3123
  %v3132 = vmul.f32 %v3079, %v3123
  %v3134 = vperm.slane %v3045, 0
  %v3136 = vmul.f32 %v3124, %v3134
  %v3137 = vmul.f32 %v3125, %v3134
  %v3138 = vmul.f32 %v3126, %v3134
  %v3139 = vmul.f32 %v3127, %v3134
  %v3140 = vmul.f32 %v3128, %v3134
  %v3141 = vmul.f32 %v3129, %v3134
  %v3142 = vmul.f32 %v3130, %v3134
  %v3143 = vmul.f32 %v3131, %v3134
  %v3144 = vmul.f32 %v3132, %v3134
  %v3146 = vperm.slane %v3046, 0
  %v3148 = vadd.f32 %v3136, %v3146
  %v3149 = vadd.f32 %v3137, %v3146
  %v3150 = vadd.f32 %v3138, %v3146
  %v3151 = vadd.f32 %v3139, %v3146
  %v3152 = vadd.f32 %v3140, %v3146
  %v3153 = vadd.f32 %v3141, %v3146
  %v3154 = vadd.f32 %v3142, %v3146
  %v3155 = vadd.f32 %v3143, %v3146
  %v3156 = vadd.f32 %v3144, %v3146
  %v3157 = vld [vmem:[%s0 + $0x7] sm:$0xff]
  %v3158 = vld [vmem:[%s0 + $0xf] sm:$0xff]
  %v3159 = vld [vmem:[%s0 + $0x17] sm:$0xff]
  %v3160 = vld [vmem:[%s0 + $0x1f] sm:$0xff]
  %v3161 = vld [vmem:[%s0 + $0x27] sm:$0xff]
  %v3162 = vld [vmem:[%s0 + $0x2f] sm:$0xff]
  %v3163 = vld [vmem:[%s0 + $0x37] sm:$0xff]
  %v3164 = vld [vmem:[%s0 + $0x3f] sm:$0xff]
  %v3165 = vld [vmem:[%s0 + $0x47] sm:$0xff]
  %v3166 = vadd.f32 %v3148, %v3157
  %v3167 = vadd.f32 %v3149, %v3158
  %v3168 = vadd.f32 %v3150, %v3159
  %v3169 = vadd.f32 %v3151, %v3160
  %v3170 = vadd.f32 %v3152, %v3161
  %v3171 = vadd.f32 %v3153, %v3162
  %v3172 = vadd.f32 %v3154, %v3163
  %v3173 = vadd.f32 %v3155, %v3164
  %v3174 = vadd.f32 %v3156, %v3165
  %3175 = vst [vmem:[%s12] sm:$0xff] %v3166
  %3176 = vst [vmem:[%s12 + $0x8] sm:$0xff] %v3167
  %3177 = vst [vmem:[%s12 + $0x10] sm:$0xff] %v3168
  %3178 = vst [vmem:[%s12 + $0x18] sm:$0xff] %v3169
  %3179 = vst [vmem:[%s12 + $0x20] sm:$0xff] %v3170
  %3180 = vst [vmem:[%s12 + $0x28] sm:$0xff] %v3171
  %3181 = vst [vmem:[%s12 + $0x30] sm:$0xff] %v3172
  %3182 = vst [vmem:[%s12 + $0x38] sm:$0xff] %v3173
  %3183 = vst [vmem:[%s12 + $0x40] sm:$0xff] %v3174
  // Predicated region
  $region50: #{encoder_forward.8} parent=0 // pred_check
    _
  $region51: #{encoder_forward.8} parent=0 // pred_check_branch
    %3185 = sbr.rel (0) target = $region53
  $region52: #{encoder_forward.8} parent=0 // pred_region
    _
  $region53: #{encoder_forward.8} parent=0 // pred_fallthru
    _
  // Predicated region
  $region54: #{encoder_forward.8} parent=0 // pred_check
    _
  $region55: #{encoder_forward.8} parent=0 // pred_check_branch
    %3187 = sbr.rel (0) target = $region57
  $region56: #{encoder_forward.8} parent=0 // pred_region
    _
  $region57: #{encoder_forward.8} parent=0 // pred_fallthru
    _

// kernel: encoder_forward.6
$region0: #{encoder_forward.6}
  #allocation0 [shape = 'u32[]', space=smem, size = 0x4, offset = 0x4, fixed_abs, tag = 'smem constant byte address 0x4 - core index']
  #allocation1 [shape = 'u32[72,128]{1,0:T(1,128)}', space=vmem, size = 0x9000, scoped, tag = 'internal scratch']
  #allocation2 [shape = 'bf16[240,128]{1,0:T(8,128)(2,1)}', space=vmem, size = 0xf000, scoped, tag = 'scratch operand']
  #allocation3 [shape = 'bf16[240,128]{1,0:T(8,128)(2,1)}', space=vmem, size = 0xf000, scoped, tag = 'scratch operand']
  %s0 = inlined_call_operand.vmem [shape: f32[240,128], index: 0, kind: input, shape index: {}]
  %s1 = inlined_call_operand.vmem [shape: f32[128,8], index: 1, kind: input, shape index: {}]
  %s2 = inlined_call_operand.vmem [shape: f32[1,8], index: 2, kind: input, shape index: {}]
  %s3 = inlined_call_operand.vmem [shape: f32[8,128], index: 3, kind: input, shape index: {}]
  %s4 = inlined_call_operand.vmem [shape: f32[1,128], index: 4, kind: input, shape index: {}]
  %s5 = inlined_call_operand.vmem [shape: bf16[9,128,128], index: 5, kind: input, shape index: {}]
  %s6 = inlined_call_operand.vmem [shape: f32[1,128], index: 6, kind: input, shape index: {}]
  %s7 = inlined_call_operand.vmem [shape: f32[1,128], index: 7, kind: input, shape index: {}]
  %s8 = inlined_call_operand.vmem [shape: bf16[9,128,128], index: 8, kind: input, shape index: {}]
  %s9 = inlined_call_operand.vmem [shape: f32[1,128], index: 9, kind: input, shape index: {}]
  %s10 = inlined_call_operand.vmem [shape: f32[1,128], index: 10, kind: input, shape index: {}]
  %s11 = inlined_call_operand.vmem [shape: f32[200,1], index: 11, kind: input, shape index: {}]
  %s12 = inlined_call_operand.vmem [shape: f32[200,128], index: 12, kind: output, shape index: {}]
  %s13 = sld [smem:[#allocation0]]
  $region58: #{encoder_forward.6} parent=0
    _
  %s15 = ssub.s32 1, %s13
  %s16 = scalar_select 0, %s15, %s13
  // Predicated region
  $region2: #{encoder_forward.6} parent=0 // pred_check
    _
  $region3: #{encoder_forward.6} parent=0 // pred_check_branch
    %18 = sbr.rel (0) target = $region5
  $region4: #{encoder_forward.6} parent=0 // pred_region
    _
  $region5: #{encoder_forward.6} parent=0 // pred_fallthru
    _
  // Predicated region
  $region6: #{encoder_forward.6} parent=0 // pred_check
    _
  $region7: #{encoder_forward.6} parent=0 // pred_check_branch
    %20 = sbr.rel (0) target = $region9
  $region8: #{encoder_forward.6} parent=0 // pred_region
    _
  $region9: #{encoder_forward.6} parent=0 // pred_fallthru
    _
  // Predicated region
  $region10: #{encoder_forward.6} parent=0 // pred_check
    _
  $region11: #{encoder_forward.6} parent=0 // pred_check_branch
    %22 = sbr.rel (0) target = $region13
  $region12: #{encoder_forward.6} parent=0 // pred_region
    _
  $region13: #{encoder_forward.6} parent=0 // pred_fallthru
    _
  // Predicated region
  $region14: #{encoder_forward.6} parent=0 // pred_check
    _
  $region15: #{encoder_forward.6} parent=0 // pred_check_branch
    %24 = sbr.rel (0) target = $region17
  $region16: #{encoder_forward.6} parent=0 // pred_region
    _
  $region17: #{encoder_forward.6} parent=0 // pred_fallthru
    _
  // Predicated region
  $region18: #{encoder_forward.6} parent=0 // pred_check
    _
  $region19: #{encoder_forward.6} parent=0 // pred_check_branch
    %26 = sbr.rel (0) target = $region21
  $region20: #{encoder_forward.6} parent=0 // pred_region
    _
  $region21: #{encoder_forward.6} parent=0 // pred_fallthru
    _
  // Predicated region
  $region22: #{encoder_forward.6} parent=0 // pred_check
    _
  $region23: #{encoder_forward.6} parent=0 // pred_check_branch
    %28 = sbr.rel (0) target = $region25
  $region24: #{encoder_forward.6} parent=0 // pred_region
    _
  $region25: #{encoder_forward.6} parent=0 // pred_fallthru
    _
  // Predicated region
  $region26: #{encoder_forward.6} parent=0 // pred_check
    _
  $region27: #{encoder_forward.6} parent=0 // pred_check_branch
    %30 = sbr.rel (0) target = $region29
  $region28: #{encoder_forward.6} parent=0 // pred_region
    _
  $region29: #{encoder_forward.6} parent=0 // pred_fallthru
    _
  // Predicated region
  $region30: #{encoder_forward.6} parent=0 // pred_check
    _
  $region31: #{encoder_forward.6} parent=0 // pred_check_branch
    %32 = sbr.rel (0) target = $region33
  $region32: #{encoder_forward.6} parent=0 // pred_region
    _
  $region33: #{encoder_forward.6} parent=0 // pred_fallthru
    _
  // Predicated region
  $region34: #{encoder_forward.6} parent=0 // pred_check
    _
  $region35: #{encoder_forward.6} parent=0 // pred_check_branch
    %34 = sbr.rel (0) target = $region37
  $region36: #{encoder_forward.6} parent=0 // pred_region
    _
  $region37: #{encoder_forward.6} parent=0 // pred_fallthru
    _
  // Predicated region
  $region38: #{encoder_forward.6} parent=0 // pred_check
    _
  $region39: #{encoder_forward.6} parent=0 // pred_check_branch
    %36 = sbr.rel (0) target = $region41
  $region40: #{encoder_forward.6} parent=0 // pred_region
    _
  $region41: #{encoder_forward.6} parent=0 // pred_fallthru
    _
  // Predicated region
  $region42: #{encoder_forward.6} parent=0 // pred_check
    _
  $region43: #{encoder_forward.6} parent=0 // pred_check_branch
    %38 = sbr.rel (0) target = $region45
  $region44: #{encoder_forward.6} parent=0 // pred_region
    _
  $region45: #{encoder_forward.6} parent=0 // pred_fallthru
    _
  // Predicated region
  $region46: #{encoder_forward.6} parent=0 // pred_check
    _
  $region47: #{encoder_forward.6} parent=0 // pred_check_branch
    %40 = sbr.rel (0) target = $region49
  $region48: #{encoder_forward.6} parent=0 // pred_region
    _
  $region49: #{encoder_forward.6} parent=0 // pred_fallthru
    _
  %v42 = vld [vmem:[%s11] sm:$0xff]
  %v43 = vld [vmem:[%s11 + $0x8] sm:$0xff]
  %v44 = vld [vmem:[%s11 + $0x10] sm:$0xff]
  %v45 = vld [vmem:[%s11 + $0x18] sm:$0xff]
  %v46 = vld [vmem:[%s11 + $0x20] sm:$0xff]
  %v47 = vld [vmem:[%s11 + $0x28] sm:$0xff]
  %v48 = vld [vmem:[%s11 + $0x30] sm:$0xff]
  %v49 = vld [vmem:[%s11 + $0x38] sm:$0xff]
  %v50 = vld [vmem:[%s11 + $0x40] sm:$0xff]
  %v51 = vld [vmem:[%s11 + $0x48] sm:$0xff]
  %v52 = vld [vmem:[%s11 + $0x50] sm:$0xff]
  %v53 = vld [vmem:[%s11 + $0x58] sm:$0xff]
  %v54 = vld [vmem:[%s11 + $0x60] sm:$0xff]
  %v55 = vld [vmem:[%s11 + $0x68] sm:$0xff]
  %v56 = vld [vmem:[%s11 + $0x70] sm:$0xff]
  %v57 = vld [vmem:[%s11 + $0x78] sm:$0xff]
  %v58 = vld [vmem:[%s11 + $0x80] sm:$0xff]
  %v59 = vld [vmem:[%s11 + $0x88] sm:$0xff]
  %v60 = vld [vmem:[%s11 + $0x90] sm:$0xff]
  %v61 = vld [vmem:[%s11 + $0x98] sm:$0xff]
  %v62 = vld [vmem:[%s11 + $0xa0] sm:$0xff]
  %v63 = vld [vmem:[%s11 + $0xa8] sm:$0xff]
  %v64 = vld [vmem:[%s11 + $0xb0] sm:$0xff]
  %v65 = vld [vmem:[%s11 + $0xb8] sm:$0xff]
  %v66 = vld [vmem:[%s11 + $0xc0] sm:$0xff]
  %v67 = vld [vmem:[%s0] sm:$0xff]
  %v68 = vld [vmem:[%s0 + $0x8] sm:$0xff]
  %v69 = vld [vmem:[%s0 + $0x10] sm:$0xff]
  %v70 = vld [vmem:[%s0 + $0x18] sm:$0xff]
  %v71 = vld [vmem:[%s0 + $0x20] sm:$0xff]
  %v72 = vld [vmem:[%s0 + $0x28] sm:$0xff]
  %v73 = vld [vmem:[%s0 + $0x30] sm:$0xff]
  %v74 = vld [vmem:[%s0 + $0x38] sm:$0xff]
  %v75 = vld [vmem:[%s0 + $0x40] sm:$0xff]
  %v76 = vld [vmem:[%s0 + $0x48] sm:$0xff]
  %v77 = vld [vmem:[%s0 + $0x50] sm:$0xff]
  %v78 = vld [vmem:[%s0 + $0x58] sm:$0xff]
  %v79 = vld [vmem:[%s0 + $0x60] sm:$0xf]
  %v80 = vadd.f32 %v67, %v68
  %v81 = vadd.f32 %v80, %v69
  %v82 = vadd.f32 %v81, %v70
  %v83 = vadd.f32 %v82, %v71
  %v84 = vadd.f32 %v83, %v72
  %v85 = vadd.f32 %v84, %v73
  %v86 = vadd.f32 %v85, %v74
  %v87 = vadd.f32 %v86, %v75
  %v88 = vadd.f32 %v87, %v76
  %v89 = vadd.f32 %v88, %v77
  %v90 = vadd.f32 %v89, %v78
  %vm91 = vcmask 1043456
  %v92 = vsel %vm91, %v79, 0.0
  %v93 = vadd.f32 %v90, %v92
  %v94 = vrot.slane %v93, 4
  %v95 = vadd.f32 %v93, %v94
  %v96 = vrot.slane %v95, 2
  %v97 = vadd.f32 %v95, %v96
  %v98 = vrot.slane %v97, 1
  %v99 = vadd.f32 %v97, %v98
  %v100 = vmul.f32 %v99, 0.015625
  %v101 = vld [vmem:[%s0 + $0x64] sm:$0xff]
  %v102 = vld [vmem:[%s0 + $0x6c] sm:$0xff]
  %v103 = vld [vmem:[%s0 + $0x74] sm:$0xff]
  %v104 = vld [vmem:[%s0 + $0x7c] sm:$0xff]
  %v105 = vld [vmem:[%s0 + $0x84] sm:$0xff]
  %v106 = vld [vmem:[%s0 + $0x8c] sm:$0xff]
  %v107 = vld [vmem:[%s0 + $0x94] sm:$0xff]
  %v108 = vld [vmem:[%s0 + $0x9c] sm:$0xff]
  %v109 = vld [vmem:[%s0 + $0xa4] sm:$0xff]
  %v110 = vld [vmem:[%s0 + $0xac] sm:$0xff]
  %v111 = vld [vmem:[%s0 + $0xb4] sm:$0xff]
  %v112 = vld [vmem:[%s0 + $0xbc] sm:$0xff]
  %v113 = vld [vmem:[%s0 + $0xc4] sm:$0xf]
  %v114 = vadd.f32 %v101, %v102
  %v115 = vadd.f32 %v114, %v103
  %v116 = vadd.f32 %v115, %v104
  %v117 = vadd.f32 %v116, %v105
  %v118 = vadd.f32 %v117, %v106
  %v119 = vadd.f32 %v118, %v107
  %v120 = vadd.f32 %v119, %v108
  %v121 = vadd.f32 %v120, %v109
  %v122 = vadd.f32 %v121, %v110
  %v123 = vadd.f32 %v122, %v111
  %v124 = vadd.f32 %v123, %v112
  %v125 = vsel %vm91, %v113, 0.0
  %v126 = vadd.f32 %v124, %v125
  %v127 = vrot.slane %v126, 4
  %v128 = vadd.f32 %v126, %v127
  %v129 = vrot.slane %v128, 2
  %v130 = vadd.f32 %v128, %v129
  %v131 = vrot.slane %v130, 1
  %v132 = vadd.f32 %v130, %v131
  %v133 = vmul.f32 %v132, 0.015625
  %vm134 = vcmask 1040384
  %v135 = vsel %vm134, %v100, %v133
  %v136 = vld [vmem:[%s1] sm:$0xff]
  %v137 = vld [vmem:[%s1 + $0x8] sm:$0xff]
  %v138 = vld [vmem:[%s1 + $0x10] sm:$0xff]
  %v139 = vld [vmem:[%s1 + $0x18] sm:$0xff]
  %v140 = vld [vmem:[%s1 + $0x20] sm:$0xff]
  %v141 = vld [vmem:[%s1 + $0x28] sm:$0xff]
  %v142 = vld [vmem:[%s1 + $0x30] sm:$0xff]
  %v143 = vld [vmem:[%s1 + $0x38] sm:$0xff]
  %v144 = vld [vmem:[%s1 + $0x40] sm:$0xff]
  %v145 = vld [vmem:[%s1 + $0x48] sm:$0xff]
  %v146 = vld [vmem:[%s1 + $0x50] sm:$0xff]
  %v147 = vld [vmem:[%s1 + $0x58] sm:$0xff]
  %v148 = vld [vmem:[%s1 + $0x60] sm:$0xff]
  %v149 = vld [vmem:[%s1 + $0x68] sm:$0xff]
  %v150 = vld [vmem:[%s1 + $0x70] sm:$0xff]
  %v151 = vld [vmem:[%s1 + $0x78] sm:$0xff]
  %v152 = vld [vmem:[%s2] sm:$0x1]
  %v154 = vperm.slane %v152, 0
  %156 = vmatpush.msra.mxu0 %v151
  %157 = vmatpush.msra.mxu0 %v150
  %158 = vmatpush.msra.mxu0 %v149
  %159 = vmatpush.msra.mxu0 %v148
  %160 = vmatpush.msra.mxu0 %v147
  %161 = vmatpush.msra.mxu0 %v146
  %162 = vmatpush.msra.mxu0 %v145
  %163 = vmatpush.msra.mxu0 %v144
  %164 = vmatpush.msra.mxu0 %v143
  %165 = vmatpush.msra.mxu0 %v142
  %166 = vmatpush.msra.mxu0 %v141
  %167 = vmatpush.msra.mxu0 %v140
  %168 = vmatpush.msra.mxu0 %v139
  %169 = vmatpush.msra.mxu0 %v138
  %170 = vmatpush.msra.mxu0 %v137
  %171 = vmatpush.msra.mxu0 %v136
  %172 = vmatmul.f32.gmra.mxu0 %v135
  %v173 = vpop.f32.mrf.mxu0
  %v174 = vadd.f32 %v154, %v173
  %175 = vdwg.mxu0
  %v176 = vmax.f32 %v174, 0.0
  %v177 = vld [vmem:[%s3] sm:$0xff]
  %v178 = vld [vmem:[%s4] sm:$0x1]
  %v180 = vperm.slane %v178, 0
  %vm182 = vcmask 64512
  %v184 = vsel %vm182, %v176, 0
  %186 = vmatpush.msra.mxu0 0.0
  %187 = vmatpush.msra.mxu0 0.0
  %188 = vmatpush.msra.mxu0 0.0
  %189 = vmatpush.msra.mxu0 0.0
  %190 = vmatpush.msra.mxu0 0.0
  %191 = vmatpush.msra.mxu0 0.0
  %192 = vmatpush.msra.mxu0 0.0
  %193 = vmatpush.msra.mxu0 0.0
  %194 = vmatpush.msra.mxu0 0.0
  %195 = vmatpush.msra.mxu0 0.0
  %196 = vmatpush.msra.mxu0 0.0
  %197 = vmatpush.msra.mxu0 0.0
  %198 = vmatpush.msra.mxu0 0.0
  %199 = vmatpush.msra.mxu0 0.0
  %200 = vmatpush.msra.mxu0 0.0
  %201 = vmatpush.msra.mxu0 %v177
  %202 = vmatmul.f32.gmra.mxu0 %v184
  %v203 = vpop.f32.mrf.mxu0
  %v204 = vadd.f32 %v180, %v203
  %205 = vdwg.mxu0
  %v206 = vsub.f32 0.0, %v204
  %v207 = vmul.f32 %v206, 1.442695
  %v208 = vpow.pop %v207
  %v209 = vadd.f32 %v208, 1.0
  %v210 = vrcp.pop %v209
  %v211 = vmul.f32 %v209, %v210
  %v212 = vsub.f32 1.0, %v211
  %v213 = vmul.f32 %v210, %v212
  %v214 = vadd.f32 %v210, %v213
  %vm215 = vweird.f32 %v209
  %vm216 = vweird.f32 %v210
  %vm217 = vmor %vm215, %vm216
  %v218 = vsel %vm217, %v210, %v214
  %v219 = vand.u32 2147483647, %v209
  %vm220 = vcmp.eq.f32.partialorder %v219, 8.507059e+37
  %v221 = vand.u32 %v209, 2147483648
  %v222 = vor.u32 1.1754944e-38, %v221
  %v223 = vsel %vm220, %v222, %v218
  %v224 = vmul.f32 1.0, %v223
  %v225 = vperm.slane %v224, 0
  %v226 = vmul.f32 %v67, %v225
  %v227 = vmul.f32 %v68, %v225
  %v228 = vmul.f32 %v69, %v225
  %v229 = vmul.f32 %v70, %v225
  %v230 = vmul.f32 %v71, %v225
  %v231 = vmul.f32 %v72, %v225
  %v232 = vmul.f32 %v73, %v225
  %v233 = vmul.f32 %v74, %v225
  %v234 = vmul.f32 %v75, %v225
  %v235 = vmul.f32 %v76, %v225
  %v236 = vmul.f32 %v77, %v225
  %v237 = vmul.f32 %v78, %v225
  %v238 = vmul.f32 %v79, %v225
  %v239 = vpack.c.bf16 %v226, %v226
  %v240 = vpack.c.bf16 %v227, %v227
  %v241 = vpack.c.bf16 %v228, %v228
  %v242 = vpack.c.bf16 %v229, %v229
  %v243 = vpack.c.bf16 %v230, %v230
  %v244 = vpack.c.bf16 %v231, %v231
  %v245 = vpack.c.bf16 %v232, %v232
  %v246 = vpack.c.bf16 %v233, %v233
  %v247 = vpack.c.bf16 %v234, %v234
  %v248 = vpack.c.bf16 %v235, %v235
  %v249 = vpack.c.bf16 %v236, %v236
  %v250 = vpack.c.bf16 %v237, %v237
  %v251 = vpack.c.bf16 %v238, %v238
  %252 = vst [vmem:[#allocation2] sm:$0xf] %v239
  %253 = vst [vmem:[#allocation2 + $0x4] sm:$0xf] %v240
  %254 = vst [vmem:[#allocation2 + $0x8] sm:$0xf] %v241
  %255 = vst [vmem:[#allocation2 + $0xc] sm:$0xf] %v242
  %256 = vst [vmem:[#allocation2 + $0x10] sm:$0xf] %v243
  %257 = vst [vmem:[#allocation2 + $0x14] sm:$0xf] %v244
  %258 = vst [vmem:[#allocation2 + $0x18] sm:$0xf] %v245
  %259 = vst [vmem:[#allocation2 + $0x1c] sm:$0xf] %v246
  %260 = vst [vmem:[#allocation2 + $0x20] sm:$0xf] %v247
  %261 = vst [vmem:[#allocation2 + $0x24] sm:$0xf] %v248
  %262 = vst [vmem:[#allocation2 + $0x28] sm:$0xf] %v249
  %263 = vst [vmem:[#allocation2 + $0x2c] sm:$0xf] %v250
  %264 = vst [vmem:[#allocation2 + $0x30] sm:$0x3] %v251
  %v265 = vld [vmem:[%s0 + $0x64] sm:$0xff]
  %v266 = vld [vmem:[%s0 + $0x6c] sm:$0xff]
  %v267 = vld [vmem:[%s0 + $0x74] sm:$0xff]
  %v268 = vld [vmem:[%s0 + $0x7c] sm:$0xff]
  %v269 = vld [vmem:[%s0 + $0x84] sm:$0xff]
  %v270 = vld [vmem:[%s0 + $0x8c] sm:$0xff]
  %v271 = vld [vmem:[%s0 + $0x94] sm:$0xff]
  %v272 = vld [vmem:[%s0 + $0x9c] sm:$0xff]
  %v273 = vld [vmem:[%s0 + $0xa4] sm:$0xff]
  %v274 = vld [vmem:[%s0 + $0xac] sm:$0xff]
  %v275 = vld [vmem:[%s0 + $0xb4] sm:$0xff]
  %v276 = vld [vmem:[%s0 + $0xbc] sm:$0xff]
  %v277 = vld [vmem:[%s0 + $0xc4] sm:$0xf]
  %v278 = vperm.slane %v224, 1
  %v279 = vmul.f32 %v265, %v278
  %v280 = vmul.f32 %v266, %v278
  %v281 = vmul.f32 %v267, %v278
  %v282 = vmul.f32 %v268, %v278
  %v283 = vmul.f32 %v269, %v278
  %v284 = vmul.f32 %v270, %v278
  %v285 = vmul.f32 %v271, %v278
  %v286 = vmul.f32 %v272, %v278
  %v287 = vmul.f32 %v273, %v278
  %v288 = vmul.f32 %v274, %v278
  %v289 = vmul.f32 %v275, %v278
  %v290 = vmul.f32 %v276, %v278
  %v291 = vmul.f32 %v277, %v278
  %v292 = vpack.c.bf16 %v279, %v279
  %v293 = vpack.c.bf16 %v280, %v280
  %v294 = vpack.c.bf16 %v281, %v281
  %v295 = vpack.c.bf16 %v282, %v282
  %v296 = vpack.c.bf16 %v283, %v283
  %v297 = vpack.c.bf16 %v284, %v284
  %v298 = vpack.c.bf16 %v285, %v285
  %v299 = vpack.c.bf16 %v286, %v286
  %v300 = vpack.c.bf16 %v287, %v287
  %v301 = vpack.c.bf16 %v288, %v288
  %v302 = vpack.c.bf16 %v289, %v289
  %v303 = vpack.c.bf16 %v290, %v290
  %v304 = vpack.c.bf16 %v291, %v291
  %vm318 = vcmask 1041408
  %vm319 = vcmask 1045508
  %vm320 = vmor %vm318, %vm319
  %v321 = vrot.slane %v292, 6
  %v322 = vrot.slane %v321, 4
  %v323 = vrot.slane %v293, 6
  %v324 = vsel %vm320, %v322, %v323
  %v325 = vrot.slane %v323, 4
  %v326 = vrot.slane %v294, 6
  %v327 = vsel %vm320, %v325, %v326
  %v328 = vrot.slane %v326, 4
  %v329 = vrot.slane %v295, 6
  %v330 = vsel %vm320, %v328, %v329
  %v331 = vrot.slane %v329, 4
  %v332 = vrot.slane %v296, 6
  %v333 = vsel %vm320, %v331, %v332
  %v334 = vrot.slane %v332, 4
  %v335 = vrot.slane %v297, 6
  %v336 = vsel %vm320, %v334, %v335
  %v337 = vrot.slane %v335, 4
  %v338 = vrot.slane %v298, 6
  %v339 = vsel %vm320, %v337, %v338
  %v340 = vrot.slane %v338, 4
  %v341 = vrot.slane %v299, 6
  %v342 = vsel %vm320, %v340, %v341
  %v343 = vrot.slane %v341, 4
  %v344 = vrot.slane %v300, 6
  %v345 = vsel %vm320, %v343, %v344
  %v346 = vrot.slane %v344, 4
  %v347 = vrot.slane %v301, 6
  %v348 = vsel %vm320, %v346, %v347
  %v349 = vrot.slane %v347, 4
  %v350 = vrot.slane %v302, 6
  %v351 = vsel %vm320, %v349, %v350
  %v352 = vrot.slane %v350, 4
  %v353 = vrot.slane %v303, 6
  %v354 = vsel %vm320, %v352, %v353
  %v355 = vrot.slane %v353, 4
  %v356 = vrot.slane %v304, 6
  %v357 = vsel %vm320, %v355, %v356
  %371 = vst [vmem:[#allocation2 + $0x30] sm:$0xc] %v321
  %372 = vst [vmem:[#allocation2 + $0x34] sm:$0xf] %v324
  %373 = vst [vmem:[#allocation2 + $0x38] sm:$0xf] %v327
  %374 = vst [vmem:[#allocation2 + $0x3c] sm:$0xf] %v330
  %375 = vst [vmem:[#allocation2 + $0x40] sm:$0xf] %v333
  %376 = vst [vmem:[#allocation2 + $0x44] sm:$0xf] %v336
  %377 = vst [vmem:[#allocation2 + $0x48] sm:$0xf] %v339
  %378 = vst [vmem:[#allocation2 + $0x4c] sm:$0xf] %v342
  %379 = vst [vmem:[#allocation2 + $0x50] sm:$0xf] %v345
  %380 = vst [vmem:[#allocation2 + $0x54] sm:$0xf] %v348
  %381 = vst [vmem:[#allocation2 + $0x58] sm:$0xf] %v351
  %382 = vst [vmem:[#allocation2 + $0x5c] sm:$0xf] %v354
  %383 = vst [vmem:[#allocation2 + $0x60] sm:$0xf] %v357
  %384 = vst [vmem:[#allocation2 + $0x64] sm:$0xf] 0
  %385 = vst [vmem:[#allocation2 + $0x68] sm:$0xf] 0
  %386 = vst [vmem:[#allocation2 + $0x6c] sm:$0xf] 0
  %387 = vst [vmem:[#allocation2 + $0x70] sm:$0xf] 0
  %388 = vst [vmem:[#allocation2 + $0x74] sm:$0xf] 0
  %v389 = vld [vmem:[#allocation2] sm:$0xf]
  %v390 = vld [vmem:[#allocation2 + $0x4] sm:$0xf]
  %v391 = vld [vmem:[#allocation2 + $0x8] sm:$0xf]
  %v392 = vld [vmem:[#allocation2 + $0xc] sm:$0xf]
  %v393 = vld [vmem:[#allocation2 + $0x10] sm:$0xf]
  %v394 = vld [vmem:[#allocation2 + $0x14] sm:$0xf]
  %v395 = vld [vmem:[#allocation2 + $0x18] sm:$0xf]
  %v396 = vld [vmem:[#allocation2 + $0x1c] sm:$0xf]
  %v397 = vld [vmem:[#allocation2 + $0x20] sm:$0xf]
  %v398 = vld [vmem:[#allocation2 + $0x24] sm:$0xf]
  %v399 = vld [vmem:[#allocation2 + $0x28] sm:$0xf]
  %v400 = vld [vmem:[#allocation2 + $0x2c] sm:$0xf]
  %v401 = vld [vmem:[#allocation2 + $0x30] sm:$0xf]
  %v402 = vld [vmem:[#allocation2 + $0x34] sm:$0xf]
  %v403 = vld [vmem:[#allocation2 + $0x38] sm:$0xf]
  %v404 = vld [vmem:[#allocation2 + $0x3c] sm:$0xf]
  %v405 = vld [vmem:[#allocation2 + $0x40] sm:$0xf]
  %v406 = vld [vmem:[#allocation2 + $0x44] sm:$0xf]
  %v407 = vld [vmem:[#allocation2 + $0x48] sm:$0xf]
  %v408 = vld [vmem:[#allocation2 + $0x4c] sm:$0xf]
  %v409 = vld [vmem:[#allocation2 + $0x50] sm:$0xf]
  %v410 = vld [vmem:[#allocation2 + $0x54] sm:$0xf]
  %v411 = vld [vmem:[#allocation2 + $0x58] sm:$0xf]
  %v412 = vld [vmem:[#allocation2 + $0x5c] sm:$0xf]
  %v413 = vld [vmem:[#allocation2 + $0x60] sm:$0xf]
  %v414 = vld [vmem:[%s5] sm:$0xf]
  %v415 = vld [vmem:[%s5 + $0x4] sm:$0xf]
  %v416 = vld [vmem:[%s5 + $0x8] sm:$0xf]
  %v417 = vld [vmem:[%s5 + $0xc] sm:$0xf]
  %v418 = vld [vmem:[%s5 + $0x10] sm:$0xf]
  %v419 = vld [vmem:[%s5 + $0x14] sm:$0xf]
  %v420 = vld [vmem:[%s5 + $0x18] sm:$0xf]
  %v421 = vld [vmem:[%s5 + $0x1c] sm:$0xf]
  %v422 = vld [vmem:[%s5 + $0x20] sm:$0xf]
  %v423 = vld [vmem:[%s5 + $0x24] sm:$0xf]
  %v424 = vld [vmem:[%s5 + $0x28] sm:$0xf]
  %v425 = vld [vmem:[%s5 + $0x2c] sm:$0xf]
  %v426 = vld [vmem:[%s5 + $0x30] sm:$0xf]
  %v427 = vld [vmem:[%s5 + $0x34] sm:$0xf]
  %v428 = vld [vmem:[%s5 + $0x38] sm:$0xf]
  %v429 = vld [vmem:[%s5 + $0x3c] sm:$0xf]
  %v430 = vld [vmem:[#allocation2 + $0x64] sm:$0x1]
  %s431 = scalar_lea.vmem %s5, 64
  %v432 = vld [vmem:[%s431] sm:$0xf]
  %v433 = vld [vmem:[%s431 + $0x4] sm:$0xf]
  %v434 = vld [vmem:[%s431 + $0x8] sm:$0xf]
  %v435 = vld [vmem:[%s431 + $0xc] sm:$0xf]
  %v436 = vld [vmem:[%s431 + $0x10] sm:$0xf]
  %v437 = vld [vmem:[%s431 + $0x14] sm:$0xf]
  %v438 = vld [vmem:[%s431 + $0x18] sm:$0xf]
  %v439 = vld [vmem:[%s431 + $0x1c] sm:$0xf]
  %v440 = vld [vmem:[%s431 + $0x20] sm:$0xf]
  %v441 = vld [vmem:[%s431 + $0x24] sm:$0xf]
  %v442 = vld [vmem:[%s431 + $0x28] sm:$0xf]
  %v443 = vld [vmem:[%s431 + $0x2c] sm:$0xf]
  %v444 = vld [vmem:[%s431 + $0x30] sm:$0xf]
  %v445 = vld [vmem:[%s431 + $0x34] sm:$0xf]
  %v446 = vld [vmem:[%s431 + $0x38] sm:$0xf]
  %v447 = vld [vmem:[%s431 + $0x3c] sm:$0xf]
  %v474 = vunpack.c.l.b16 %v389
  %v475 = vunpack.c.l.b16 %v390
  %v476 = vunpack.c.l.b16 %v391
  %v477 = vunpack.c.l.b16 %v392
  %v478 = vunpack.c.l.b16 %v393
  %v479 = vunpack.c.l.b16 %v394
  %v480 = vunpack.c.l.b16 %v395
  %v481 = vunpack.c.l.b16 %v396
  %v482 = vunpack.c.l.b16 %v397
  %v483 = vunpack.c.l.b16 %v398
  %v484 = vunpack.c.l.b16 %v399
  %v485 = vunpack.c.l.b16 %v400
  %v486 = vunpack.c.l.b16 %v401
  %v487 = vunpack.c.l.b16 %v402
  %v488 = vunpack.c.l.b16 %v403
  %v489 = vunpack.c.l.b16 %v404
  %v490 = vunpack.c.l.b16 %v405
  %v491 = vunpack.c.l.b16 %v406
  %v492 = vunpack.c.l.b16 %v407
  %v493 = vunpack.c.l.b16 %v408
  %v494 = vunpack.c.l.b16 %v409
  %v495 = vunpack.c.l.b16 %v410
  %v496 = vunpack.c.l.b16 %v411
  %v497 = vunpack.c.l.b16 %v412
  %v498 = vunpack.c.l.b16 %v413
  %v499 = vunpack.c.l.b16 %v430
  %v500 = vpack.c.b16 %v475, %v474
  %v501 = vpack.c.b16 %v477, %v476
  %v502 = vpack.c.b16 %v479, %v478
  %v503 = vpack.c.b16 %v481, %v480
  %v504 = vpack.c.b16 %v483, %v482
  %v505 = vpack.c.b16 %v485, %v484
  %v506 = vpack.c.b16 %v487, %v486
  %v507 = vpack.c.b16 %v489, %v488
  %v508 = vpack.c.b16 %v491, %v490
  %v509 = vpack.c.b16 %v493, %v492
  %v510 = vpack.c.b16 %v495, %v494
  %v511 = vpack.c.b16 %v497, %v496
  %v512 = vpack.c.b16 %v499, %v498
  %vm513 = vsmask.f32 7424
  %v515 = vshrl.u32 %v500, 16
  %v517 = vshll.u32 %v500, 16
  %v519 = vrot.slane %v517, 1
  %v520 = vor.u32 %v515, %v519
  %v522 = vshll.u32 %v501, 16
  %v524 = vrot.slane %v522, 1
  %v525 = vsel %vm513, %v520, %v524
  %v526 = vshrl.u32 %v501, 16
  %v528 = vor.u32 %v526, %v524
  %v530 = vshll.u32 %v502, 16
  %v532 = vrot.slane %v530, 1
  %v533 = vsel %vm513, %v528, %v532
  %v534 = vshrl.u32 %v502, 16
  %v536 = vor.u32 %v534, %v532
  %v538 = vshll.u32 %v503, 16
  %v540 = vrot.slane %v538, 1
  %v541 = vsel %vm513, %v536, %v540
  %v542 = vshrl.u32 %v503, 16
  %v544 = vor.u32 %v542, %v540
  %v546 = vshll.u32 %v504, 16
  %v548 = vrot.slane %v546, 1
  %v549 = vsel %vm513, %v544, %v548
  %v550 = vshrl.u32 %v504, 16
  %v552 = vor.u32 %v550, %v548
  %v554 = vshll.u32 %v505, 16
  %v556 = vrot.slane %v554, 1
  %v557 = vsel %vm513, %v552, %v556
  %v558 = vshrl.u32 %v505, 16
  %v560 = vor.u32 %v558, %v556
  %v562 = vshll.u32 %v506, 16
  %v564 = vrot.slane %v562, 1
  %v565 = vsel %vm513, %v560, %v564
  %v566 = vshrl.u32 %v506, 16
  %v568 = vor.u32 %v566, %v564
  %v570 = vshll.u32 %v507, 16
  %v572 = vrot.slane %v570, 1
  %v573 = vsel %vm513, %v568, %v572
  %v574 = vshrl.u32 %v507, 16
  %v576 = vor.u32 %v574, %v572
  %v578 = vshll.u32 %v508, 16
  %v580 = vrot.slane %v578, 1
  %v581 = vsel %vm513, %v576, %v580
  %v582 = vshrl.u32 %v508, 16
  %v584 = vor.u32 %v582, %v580
  %v586 = vshll.u32 %v509, 16
  %v588 = vrot.slane %v586, 1
  %v589 = vsel %vm513, %v584, %v588
  %v590 = vshrl.u32 %v509, 16
  %v592 = vor.u32 %v590, %v588
  %v594 = vshll.u32 %v510, 16
  %v596 = vrot.slane %v594, 1
  %v597 = vsel %vm513, %v592, %v596
  %v598 = vshrl.u32 %v510, 16
  %v600 = vor.u32 %v598, %v596
  %v602 = vshll.u32 %v511, 16
  %v604 = vrot.slane %v602, 1
  %v605 = vsel %vm513, %v600, %v604
  %v606 = vshrl.u32 %v511, 16
  %v608 = vor.u32 %v606, %v604
  %v610 = vshll.u32 %v512, 16
  %v612 = vrot.slane %v610, 1
  %v613 = vsel %vm513, %v608, %v612
  %v614 = vshrl.u32 %v512, 16
  %v616 = vor.u32 %v614, %v612
  %v646 = vunpack.c.l.b16 %v432
  %v647 = vunpack.c.l.b16 %v433
  %v648 = vunpack.c.l.b16 %v434
  %v649 = vunpack.c.l.b16 %v435
  %v650 = vunpack.c.l.b16 %v436
  %v651 = vunpack.c.l.b16 %v437
  %v652 = vunpack.c.l.b16 %v438
  %v653 = vunpack.c.l.b16 %v439
  %v654 = vunpack.c.l.b16 %v440
  %v655 = vunpack.c.l.b16 %v441
  %v656 = vunpack.c.l.b16 %v442
  %v657 = vunpack.c.l.b16 %v443
  %v658 = vunpack.c.l.b16 %v444
  %v659 = vunpack.c.l.b16 %v445
  %v660 = vunpack.c.l.b16 %v446
  %v661 = vunpack.c.l.b16 %v447
  %v662 = vpack.c.b16 %v647, %v646
  %v663 = vpack.c.b16 %v649, %v648
  %v664 = vpack.c.b16 %v651, %v650
  %v665 = vpack.c.b16 %v653, %v652
  %v666 = vpack.c.b16 %v655, %v654
  %v667 = vpack.c.b16 %v657, %v656
  %v668 = vpack.c.b16 %v659, %v658
  %v669 = vpack.c.b16 %v661, %v660
  %678 = vmatpush.bf16.msra.mxu0 %v669
  %679 = vmatpush.bf16.msra.mxu0 %v668
  %680 = vmatpush.bf16.msra.mxu0 %v667
  %681 = vmatpush.bf16.msra.mxu0 %v666
  %682 = vmatpush.bf16.msra.mxu0 %v665
  %683 = vmatpush.bf16.msra.mxu0 %v664
  %684 = vmatpush.bf16.msra.mxu0 %v663
  %685 = vmatpush.bf16.msra.mxu0 %v662
  %686 = vmatmul.bf16.gmra.mxu0 %v525
  %v687 = vpop.f32.mrf.mxu0
  %v688 = vadd.f32 0.0, %v687
  %v689 = vpop.f32.mrf.mxu0
  %v690 = vadd.f32 0.0, %v689
  %691 = vmatmul.bf16.gmra.mxu0 %v533
  %v692 = vpop.f32.mrf.mxu0
  %v693 = vadd.f32 0.0, %v692
  %v694 = vpop.f32.mrf.mxu0
  %v695 = vadd.f32 0.0, %v694
  %696 = vmatmul.bf16.gmra.mxu0 %v541
  %v697 = vpop.f32.mrf.mxu0
  %v698 = vadd.f32 0.0, %v697
  %v699 = vpop.f32.mrf.mxu0
  %v700 = vadd.f32 0.0, %v699
  %701 = vmatmul.bf16.gmra.mxu0 %v549
  %v702 = vpop.f32.mrf.mxu0
  %v703 = vadd.f32 0.0, %v702
  %v704 = vpop.f32.mrf.mxu0
  %v705 = vadd.f32 0.0, %v704
  %706 = vmatmul.bf16.gmra.mxu0 %v557
  %v707 = vpop.f32.mrf.mxu0
  %v708 = vadd.f32 0.0, %v707
  %v709 = vpop.f32.mrf.mxu0
  %v710 = vadd.f32 0.0, %v709
  %711 = vmatmul.bf16.gmra.mxu0 %v565
  %v712 = vpop.f32.mrf.mxu0
  %v713 = vadd.f32 0.0, %v712
  %v714 = vpop.f32.mrf.mxu0
  %v715 = vadd.f32 0.0, %v714
  %716 = vmatmul.bf16.gmra.mxu0 %v573
  %v717 = vpop.f32.mrf.mxu0
  %v718 = vadd.f32 0.0, %v717
  %v719 = vpop.f32.mrf.mxu0
  %v720 = vadd.f32 0.0, %v719
  %721 = vmatmul.bf16.gmra.mxu0 %v581
  %v722 = vpop.f32.mrf.mxu0
  %v723 = vadd.f32 0.0, %v722
  %v724 = vpop.f32.mrf.mxu0
  %v725 = vadd.f32 0.0, %v724
  %726 = vmatmul.bf16.gmra.mxu0 %v589
  %v727 = vpop.f32.mrf.mxu0
  %v728 = vadd.f32 0.0, %v727
  %v729 = vpop.f32.mrf.mxu0
  %v730 = vadd.f32 0.0, %v729
  %731 = vmatmul.bf16.gmra.mxu0 %v597
  %v732 = vpop.f32.mrf.mxu0
  %v733 = vadd.f32 0.0, %v732
  %v734 = vpop.f32.mrf.mxu0
  %v735 = vadd.f32 0.0, %v734
  %736 = vmatmul.bf16.gmra.mxu0 %v605
  %v737 = vpop.f32.mrf.mxu0
  %v738 = vadd.f32 0.0, %v737
  %v739 = vpop.f32.mrf.mxu0
  %v740 = vadd.f32 0.0, %v739
  %741 = vmatmul.bf16.gmra.mxu0 %v613
  %v742 = vpop.f32.mrf.mxu0
  %v743 = vadd.f32 0.0, %v742
  %v744 = vpop.f32.mrf.mxu0
  %v745 = vadd.f32 0.0, %v744
  %746 = vmatmul.bf16.gmra.mxu0 %v616
  %v747 = vpop.f32.mrf.mxu0
  %v748 = vadd.f32 0.0, %v747
  %v749 = vpop.f32.mrf.mxu0
  %750 = vdwg.mxu0
  %v751 = vpack.c.b16 %v498, %v498
  %v781 = vunpack.c.l.b16 %v414
  %v782 = vunpack.c.l.b16 %v415
  %v783 = vunpack.c.l.b16 %v416
  %v784 = vunpack.c.l.b16 %v417
  %v785 = vunpack.c.l.b16 %v418
  %v786 = vunpack.c.l.b16 %v419
  %v787 = vunpack.c.l.b16 %v420
  %v788 = vunpack.c.l.b16 %v421
  %v789 = vunpack.c.l.b16 %v422
  %v790 = vunpack.c.l.b16 %v423
  %v791 = vunpack.c.l.b16 %v424
  %v792 = vunpack.c.l.b16 %v425
  %v793 = vunpack.c.l.b16 %v426
  %v794 = vunpack.c.l.b16 %v427
  %v795 = vunpack.c.l.b16 %v428
  %v796 = vunpack.c.l.b16 %v429
  %v797 = vpack.c.b16 %v782, %v781
  %v798 = vpack.c.b16 %v784, %v783
  %v799 = vpack.c.b16 %v786, %v785
  %v800 = vpack.c.b16 %v788, %v787
  %v801 = vpack.c.b16 %v790, %v789
  %v802 = vpack.c.b16 %v792, %v791
  %v803 = vpack.c.b16 %v794, %v793
  %v804 = vpack.c.b16 %v796, %v795
  %813 = vmatpush.bf16.msra.mxu0 %v804
  %814 = vmatpush.bf16.msra.mxu0 %v803
  %815 = vmatpush.bf16.msra.mxu0 %v802
  %816 = vmatpush.bf16.msra.mxu0 %v801
  %817 = vmatpush.bf16.msra.mxu0 %v800
  %818 = vmatpush.bf16.msra.mxu0 %v799
  %819 = vmatpush.bf16.msra.mxu0 %v798
  %820 = vmatpush.bf16.msra.mxu0 %v797
  %821 = vmatmul.bf16.gmra.mxu0 %v500
  %v822 = vpop.f32.mrf.mxu0
  %v823 = vadd.f32 %v688, %v822
  %v824 = vpop.f32.mrf.mxu0
  %v825 = vadd.f32 %v690, %v824
  %826 = vmatmul.bf16.gmra.mxu0 %v501
  %v827 = vpop.f32.mrf.mxu0
  %v828 = vadd.f32 %v693, %v827
  %v829 = vpop.f32.mrf.mxu0
  %v830 = vadd.f32 %v695, %v829
  %831 = vmatmul.bf16.gmra.mxu0 %v502
  %v832 = vpop.f32.mrf.mxu0
  %v833 = vadd.f32 %v698, %v832
  %v834 = vpop.f32.mrf.mxu0
  %v835 = vadd.f32 %v700, %v834
  %836 = vmatmul.bf16.gmra.mxu0 %v503
  %v837 = vpop.f32.mrf.mxu0
  %v838 = vadd.f32 %v703, %v837
  %v839 = vpop.f32.mrf.mxu0
  %v840 = vadd.f32 %v705, %v839
  %841 = vmatmul.bf16.gmra.mxu0 %v504
  %v842 = vpop.f32.mrf.mxu0
  %v843 = vadd.f32 %v708, %v842
  %v844 = vpop.f32.mrf.mxu0
  %v845 = vadd.f32 %v710, %v844
  %846 = vmatmul.bf16.gmra.mxu0 %v505
  %v847 = vpop.f32.mrf.mxu0
  %v848 = vadd.f32 %v713, %v847
  %v849 = vpop.f32.mrf.mxu0
  %v850 = vadd.f32 %v715, %v849
  %851 = vmatmul.bf16.gmra.mxu0 %v506
  %v852 = vpop.f32.mrf.mxu0
  %v853 = vadd.f32 %v718, %v852
  %v854 = vpop.f32.mrf.mxu0
  %v855 = vadd.f32 %v720, %v854
  %856 = vmatmul.bf16.gmra.mxu0 %v507
  %v857 = vpop.f32.mrf.mxu0
  %v858 = vadd.f32 %v723, %v857
  %v859 = vpop.f32.mrf.mxu0
  %v860 = vadd.f32 %v725, %v859
  %861 = vmatmul.bf16.gmra.mxu0 %v508
  %v862 = vpop.f32.mrf.mxu0
  %v863 = vadd.f32 %v728, %v862
  %v864 = vpop.f32.mrf.mxu0
  %v865 = vadd.f32 %v730, %v864
  %866 = vmatmul.bf16.gmra.mxu0 %v509
  %v867 = vpop.f32.mrf.mxu0
  %v868 = vadd.f32 %v733, %v867
  %v869 = vpop.f32.mrf.mxu0
  %v870 = vadd.f32 %v735, %v869
  %871 = vmatmul.bf16.gmra.mxu0 %v510
  %v872 = vpop.f32.mrf.mxu0
  %v873 = vadd.f32 %v738, %v872
  %v874 = vpop.f32.mrf.mxu0
  %v875 = vadd.f32 %v740, %v874
  %876 = vmatmul.bf16.gmra.mxu0 %v511
  %v877 = vpop.f32.mrf.mxu0
  %v878 = vadd.f32 %v743, %v877
  %v879 = vpop.f32.mrf.mxu0
  %v880 = vadd.f32 %v745, %v879
  %881 = vmatmul.bf16.gmra.mxu0 %v751
  %v882 = vpop.f32.mrf.mxu0
  %v883 = vadd.f32 %v748, %v882
  %v884 = vpop.f32.mrf.mxu0
  %885 = vdwg.mxu0
  %v886 = vld [vmem:[#allocation2] sm:$0xe]
  %s887 = scalar_lea.vmem %s5, 128
  %v888 = vld [vmem:[%s887] sm:$0xf]
  %v889 = vld [vmem:[%s887 + $0x4] sm:$0xf]
  %v890 = vld [vmem:[%s887 + $0x8] sm:$0xf]
  %v891 = vld [vmem:[%s887 + $0xc] sm:$0xf]
  %v892 = vld [vmem:[%s887 + $0x10] sm:$0xf]
  %v893 = vld [vmem:[%s887 + $0x14] sm:$0xf]
  %v894 = vld [vmem:[%s887 + $0x18] sm:$0xf]
  %v895 = vld [vmem:[%s887 + $0x1c] sm:$0xf]
  %v896 = vld [vmem:[%s887 + $0x20] sm:$0xf]
  %v897 = vld [vmem:[%s887 + $0x24] sm:$0xf]
  %v898 = vld [vmem:[%s887 + $0x28] sm:$0xf]
  %v899 = vld [vmem:[%s887 + $0x2c] sm:$0xf]
  %v900 = vld [vmem:[%s887 + $0x30] sm:$0xf]
  %v901 = vld [vmem:[%s887 + $0x34] sm:$0xf]
  %v902 = vld [vmem:[%s887 + $0x38] sm:$0xf]
  %v903 = vld [vmem:[%s887 + $0x3c] sm:$0xf]
  %v905 = vunpack.c.l.b16 %v886
  %v906 = vpack.c.b16 %v475, %v905
  %vm907 = vcmask 1046528
  %v908 = vrot.slane %v906, 1
  %v909 = vrot.slane %v501, 1
  %v910 = vsel %vm907, %v908, %v909
  %v911 = vrot.slane %v502, 1
  %v912 = vsel %vm907, %v909, %v911
  %v913 = vrot.slane %v503, 1
  %v914 = vsel %vm907, %v911, %v913
  %v915 = vrot.slane %v504, 1
  %v916 = vsel %vm907, %v913, %v915
  %v917 = vrot.slane %v505, 1
  %v918 = vsel %vm907, %v915, %v917
  %v919 = vrot.slane %v506, 1
  %v920 = vsel %vm907, %v917, %v919
  %v921 = vrot.slane %v507, 1
  %v922 = vsel %vm907, %v919, %v921
  %v923 = vrot.slane %v508, 1
  %v924 = vsel %vm907, %v921, %v923
  %v925 = vrot.slane %v509, 1
  %v926 = vsel %vm907, %v923, %v925
  %v927 = vrot.slane %v510, 1
  %v928 = vsel %vm907, %v925, %v927
  %v929 = vrot.slane %v511, 1
  %v930 = vsel %vm907, %v927, %v929
  %v931 = vrot.slane %v512, 1
  %v932 = vsel %vm907, %v929, %v931
  %v962 = vunpack.c.l.b16 %v888
  %v963 = vunpack.c.l.b16 %v889
  %v964 = vunpack.c.l.b16 %v890
  %v965 = vunpack.c.l.b16 %v891
  %v966 = vunpack.c.l.b16 %v892
  %v967 = vunpack.c.l.b16 %v893
  %v968 = vunpack.c.l.b16 %v894
  %v969 = vunpack.c.l.b16 %v895
  %v970 = vunpack.c.l.b16 %v896
  %v971 = vunpack.c.l.b16 %v897
  %v972 = vunpack.c.l.b16 %v898
  %v973 = vunpack.c.l.b16 %v899
  %v974 = vunpack.c.l.b16 %v900
  %v975 = vunpack.c.l.b16 %v901
  %v976 = vunpack.c.l.b16 %v902
  %v977 = vunpack.c.l.b16 %v903
  %v978 = vpack.c.b16 %v963, %v962
  %v979 = vpack.c.b16 %v965, %v964
  %v980 = vpack.c.b16 %v967, %v966
  %v981 = vpack.c.b16 %v969, %v968
  %v982 = vpack.c.b16 %v971, %v970
  %v983 = vpack.c.b16 %v973, %v972
  %v984 = vpack.c.b16 %v975, %v974
  %v985 = vpack.c.b16 %v977, %v976
  %994 = vmatpush.bf16.msra.mxu0 %v985
  %995 = vmatpush.bf16.msra.mxu0 %v984
  %996 = vmatpush.bf16.msra.mxu0 %v983
  %997 = vmatpush.bf16.msra.mxu0 %v982
  %998 = vmatpush.bf16.msra.mxu0 %v981
  %999 = vmatpush.bf16.msra.mxu0 %v980
  %1000 = vmatpush.bf16.msra.mxu0 %v979
  %1001 = vmatpush.bf16.msra.mxu0 %v978
  %1002 = vmatmul.bf16.gmra.mxu0 %v910
  %v1003 = vpop.f32.mrf.mxu0
  %v1004 = vadd.f32 0.0, %v1003
  %v1005 = vpop.f32.mrf.mxu0
  %v1006 = vadd.f32 0.0, %v1005
  %1007 = vmatmul.bf16.gmra.mxu0 %v912
  %v1008 = vpop.f32.mrf.mxu0
  %v1009 = vadd.f32 0.0, %v1008
  %v1010 = vpop.f32.mrf.mxu0
  %v1011 = vadd.f32 0.0, %v1010
  %1012 = vmatmul.bf16.gmra.mxu0 %v914
  %v1013 = vpop.f32.mrf.mxu0
  %v1014 = vadd.f32 0.0, %v1013
  %v1015 = vpop.f32.mrf.mxu0
  %v1016 = vadd.f32 0.0, %v1015
  %1017 = vmatmul.bf16.gmra.mxu0 %v916
  %v1018 = vpop.f32.mrf.mxu0
  %v1019 = vadd.f32 0.0, %v1018
  %v1020 = vpop.f32.mrf.mxu0
  %v1021 = vadd.f32 0.0, %v1020
  %1022 = vmatmul.bf16.gmra.mxu0 %v918
  %v1023 = vpop.f32.mrf.mxu0
  %v1024 = vadd.f32 0.0, %v1023
  %v1025 = vpop.f32.mrf.mxu0
  %v1026 = vadd.f32 0.0, %v1025
  %1027 = vmatmul.bf16.gmra.mxu0 %v920
  %v1028 = vpop.f32.mrf.mxu0
  %v1029 = vadd.f32 0.0, %v1028
  %v1030 = vpop.f32.mrf.mxu0
  %v1031 = vadd.f32 0.0, %v1030
  %1032 = vmatmul.bf16.gmra.mxu0 %v922
  %v1033 = vpop.f32.mrf.mxu0
  %v1034 = vadd.f32 0.0, %v1033
  %v1035 = vpop.f32.mrf.mxu0
  %v1036 = vadd.f32 0.0, %v1035
  %1037 = vmatmul.bf16.gmra.mxu0 %v924
  %v1038 = vpop.f32.mrf.mxu0
  %v1039 = vadd.f32 0.0, %v1038
  %v1040 = vpop.f32.mrf.mxu0
  %v1041 = vadd.f32 0.0, %v1040
  %1042 = vmatmul.bf16.gmra.mxu0 %v926
  %v1043 = vpop.f32.mrf.mxu0
  %v1044 = vadd.f32 0.0, %v1043
  %v1045 = vpop.f32.mrf.mxu0
  %v1046 = vadd.f32 0.0, %v1045
  %1047 = vmatmul.bf16.gmra.mxu0 %v928
  %v1048 = vpop.f32.mrf.mxu0
  %v1049 = vadd.f32 0.0, %v1048
  %v1050 = vpop.f32.mrf.mxu0
  %v1051 = vadd.f32 0.0, %v1050
  %1052 = vmatmul.bf16.gmra.mxu0 %v930
  %v1053 = vpop.f32.mrf.mxu0
  %v1054 = vadd.f32 0.0, %v1053
  %v1055 = vpop.f32.mrf.mxu0
  %v1056 = vadd.f32 0.0, %v1055
  %1057 = vmatmul.bf16.gmra.mxu0 %v932
  %v1058 = vpop.f32.mrf.mxu0
  %v1059 = vadd.f32 0.0, %v1058
  %v1060 = vpop.f32.mrf.mxu0
  %v1061 = vadd.f32 0.0, %v1060
  %1062 = vmatmul.bf16.gmra.mxu0 %v931
  %v1063 = vpop.f32.mrf.mxu0
  %v1064 = vadd.f32 0.0, %v1063
  %v1065 = vpop.f32.mrf.mxu0
  %1066 = vdwg.mxu0
  %v1067 = vadd.f32 %v823, %v1004
  %v1068 = vadd.f32 %v825, %v1006
  %v1069 = vadd.f32 %v828, %v1009
  %v1070 = vadd.f32 %v830, %v1011
  %v1071 = vadd.f32 %v833, %v1014
  %v1072 = vadd.f32 %v835, %v1016
  %v1073 = vadd.f32 %v838, %v1019
  %v1074 = vadd.f32 %v840, %v1021
  %v1075 = vadd.f32 %v843, %v1024
  %v1076 = vadd.f32 %v845, %v1026
  %v1077 = vadd.f32 %v848, %v1029
  %v1078 = vadd.f32 %v850, %v1031
  %v1079 = vadd.f32 %v853, %v1034
  %v1080 = vadd.f32 %v855, %v1036
  %v1081 = vadd.f32 %v858, %v1039
  %v1082 = vadd.f32 %v860, %v1041
  %v1083 = vadd.f32 %v863, %v1044
  %v1084 = vadd.f32 %v865, %v1046
  %v1085 = vadd.f32 %v868, %v1049
  %v1086 = vadd.f32 %v870, %v1051
  %v1087 = vadd.f32 %v873, %v1054
  %v1088 = vadd.f32 %v875, %v1056
  %v1089 = vadd.f32 %v878, %v1059
  %v1090 = vadd.f32 %v880, %v1061
  %v1091 = vadd.f32 %v883, %v1064
  %v1092 = vld [vmem:[#allocation2 + $0x4] sm:$0xe]
  %v1093 = vld [vmem:[#allocation2 + $0x8] sm:$0xf]
  %v1094 = vld [vmem:[#allocation2 + $0xc] sm:$0xf]
  %v1095 = vld [vmem:[#allocation2 + $0x10] sm:$0xf]
  %v1096 = vld [vmem:[#allocation2 + $0x14] sm:$0xf]
  %v1097 = vld [vmem:[#allocation2 + $0x18] sm:$0xf]
  %v1098 = vld [vmem:[#allocation2 + $0x1c] sm:$0xf]
  %v1099 = vld [vmem:[#allocation2 + $0x20] sm:$0xf]
  %v1100 = vld [vmem:[#allocation2 + $0x24] sm:$0xf]
  %v1101 = vld [vmem:[#allocation2 + $0x28] sm:$0xf]
  %v1102 = vld [vmem:[#allocation2 + $0x2c] sm:$0xf]
  %v1103 = vld [vmem:[#allocation2 + $0x30] sm:$0xf]
  %v1104 = vld [vmem:[#allocation2 + $0x34] sm:$0xf]
  %v1105 = vld [vmem:[#allocation2 + $0x38] sm:$0xf]
  %v1106 = vld [vmem:[#allocation2 + $0x3c] sm:$0xf]
  %v1107 = vld [vmem:[#allocation2 + $0x40] sm:$0xf]
  %v1108 = vld [vmem:[#allocation2 + $0x44] sm:$0xf]
  %v1109 = vld [vmem:[#allocation2 + $0x48] sm:$0xf]
  %v1110 = vld [vmem:[#allocation2 + $0x4c] sm:$0xf]
  %v1111 = vld [vmem:[#allocation2 + $0x50] sm:$0xf]
  %v1112 = vld [vmem:[#allocation2 + $0x54] sm:$0xf]
  %v1113 = vld [vmem:[#allocation2 + $0x58] sm:$0xf]
  %v1114 = vld [vmem:[#allocation2 + $0x5c] sm:$0xf]
  %v1115 = vld [vmem:[#allocation2 + $0x60] sm:$0xf]
  %v1116 = vld [vmem:[#allocation2 + $0x64] sm:$0xf]
  %v1117 = vld [vmem:[#allocation2 + $0x68] sm:$0x1]
  %s1118 = scalar_lea.vmem %s5, 192
  %v1119 = vld [vmem:[%s1118] sm:$0xf]
  %v1120 = vld [vmem:[%s1118 + $0x4] sm:$0xf]
  %v1121 = vld [vmem:[%s1118 + $0x8] sm:$0xf]
  %v1122 = vld [vmem:[%s1118 + $0xc] sm:$0xf]
  %v1123 = vld [vmem:[%s1118 + $0x10] sm:$0xf]
  %v1124 = vld [vmem:[%s1118 + $0x14] sm:$0xf]
  %v1125 = vld [vmem:[%s1118 + $0x18] sm:$0xf]
  %v1126 = vld [vmem:[%s1118 + $0x1c] sm:$0xf]
  %v1127 = vld [vmem:[%s1118 + $0x20] sm:$0xf]
  %v1128 = vld [vmem:[%s1118 + $0x24] sm:$0xf]
  %v1129 = vld [vmem:[%s1118 + $0x28] sm:$0xf]
  %v1130 = vld [vmem:[%s1118 + $0x2c] sm:$0xf]
  %v1131 = vld [vmem:[%s1118 + $0x30] sm:$0xf]
  %v1132 = vld [vmem:[%s1118 + $0x34] sm:$0xf]
  %v1133 = vld [vmem:[%s1118 + $0x38] sm:$0xf]
  %v1134 = vld [vmem:[%s1118 + $0x3c] sm:$0xf]
  %v1161 = vunpack.c.l.b16 %v1092
  %v1162 = vunpack.c.l.b16 %v1093
  %v1163 = vunpack.c.l.b16 %v1094
  %v1164 = vunpack.c.l.b16 %v1095
  %v1165 = vunpack.c.l.b16 %v1096
  %v1166 = vunpack.c.l.b16 %v1097
  %v1167 = vunpack.c.l.b16 %v1098
  %v1168 = vunpack.c.l.b16 %v1099
  %v1169 = vunpack.c.l.b16 %v1100
  %v1170 = vunpack.c.l.b16 %v1101
  %v1171 = vunpack.c.l.b16 %v1102
  %v1172 = vunpack.c.l.b16 %v1103
  %v1173 = vunpack.c.l.b16 %v1104
  %v1174 = vunpack.c.l.b16 %v1105
  %v1175 = vunpack.c.l.b16 %v1106
  %v1176 = vunpack.c.l.b16 %v1107
  %v1177 = vunpack.c.l.b16 %v1108
  %v1178 = vunpack.c.l.b16 %v1109
  %v1179 = vunpack.c.l.b16 %v1110
  %v1180 = vunpack.c.l.b16 %v1111
  %v1181 = vunpack.c.l.b16 %v1112
  %v1182 = vunpack.c.l.b16 %v1113
  %v1183 = vunpack.c.l.b16 %v1114
  %v1184 = vunpack.c.l.b16 %v1115
  %v1185 = vunpack.c.l.b16 %v1116
  %v1186 = vunpack.c.l.b16 %v1117
  %v1187 = vpack.c.b16 %v1162, %v1161
  %v1188 = vpack.c.b16 %v1164, %v1163
  %v1189 = vpack.c.b16 %v1166, %v1165
  %v1190 = vpack.c.b16 %v1168, %v1167
  %v1191 = vpack.c.b16 %v1170, %v1169
  %v1192 = vpack.c.b16 %v1172, %v1171
  %v1193 = vpack.c.b16 %v1174, %v1173
  %v1194 = vpack.c.b16 %v1176, %v1175
  %v1195 = vpack.c.b16 %v1178, %v1177
  %v1196 = vpack.c.b16 %v1180, %v1179
  %v1197 = vpack.c.b16 %v1182, %v1181
  %v1198 = vpack.c.b16 %v1184, %v1183
  %v1199 = vpack.c.b16 %v1186, %v1185
  %v1200 = vrot.slane %v1187, 1
  %v1201 = vrot.slane %v1188, 1
  %v1202 = vsel %vm907, %v1200, %v1201
  %v1203 = vrot.slane %v1189, 1
  %v1204 = vsel %vm907, %v1201, %v1203
  %v1205 = vrot.slane %v1190, 1
  %v1206 = vsel %vm907, %v1203, %v1205
  %v1207 = vrot.slane %v1191, 1
  %v1208 = vsel %vm907, %v1205, %v1207
  %v1209 = vrot.slane %v1192, 1
  %v1210 = vsel %vm907, %v1207, %v1209
  %v1211 = vrot.slane %v1193, 1
  %v1212 = vsel %vm907, %v1209, %v1211
  %v1213 = vrot.slane %v1194, 1
  %v1214 = vsel %vm907, %v1211, %v1213
  %v1215 = vrot.slane %v1195, 1
  %v1216 = vsel %vm907, %v1213, %v1215
  %v1217 = vrot.slane %v1196, 1
  %v1218 = vsel %vm907, %v1215, %v1217
  %v1219 = vrot.slane %v1197, 1
  %v1220 = vsel %vm907, %v1217, %v1219
  %v1221 = vrot.slane %v1198, 1
  %v1222 = vsel %vm907, %v1219, %v1221
  %v1223 = vrot.slane %v1199, 1
  %v1224 = vsel %vm907, %v1221, %v1223
  %v1254 = vunpack.c.l.b16 %v1119
  %v1255 = vunpack.c.l.b16 %v1120
  %v1256 = vunpack.c.l.b16 %v1121
  %v1257 = vunpack.c.l.b16 %v1122
  %v1258 = vunpack.c.l.b16 %v1123
  %v1259 = vunpack.c.l.b16 %v1124
  %v1260 = vunpack.c.l.b16 %v1125
  %v1261 = vunpack.c.l.b16 %v1126
  %v1262 = vunpack.c.l.b16 %v1127
  %v1263 = vunpack.c.l.b16 %v1128
  %v1264 = vunpack.c.l.b16 %v1129
  %v1265 = vunpack.c.l.b16 %v1130
  %v1266 = vunpack.c.l.b16 %v1131
  %v1267 = vunpack.c.l.b16 %v1132
  %v1268 = vunpack.c.l.b16 %v1133
  %v1269 = vunpack.c.l.b16 %v1134
  %v1270 = vpack.c.b16 %v1255, %v1254
  %v1271 = vpack.c.b16 %v1257, %v1256
  %v1272 = vpack.c.b16 %v1259, %v1258
  %v1273 = vpack.c.b16 %v1261, %v1260
  %v1274 = vpack.c.b16 %v1263, %v1262
  %v1275 = vpack.c.b16 %v1265, %v1264
  %v1276 = vpack.c.b16 %v1267, %v1266
  %v1277 = vpack.c.b16 %v1269, %v1268
  %1286 = vmatpush.bf16.msra.mxu0 %v1277
  %1287 = vmatpush.bf16.msra.mxu0 %v1276
  %1288 = vmatpush.bf16.msra.mxu0 %v1275
  %1289 = vmatpush.bf16.msra.mxu0 %v1274
  %1290 = vmatpush.bf16.msra.mxu0 %v1273
  %1291 = vmatpush.bf16.msra.mxu0 %v1272
  %1292 = vmatpush.bf16.msra.mxu0 %v1271
  %1293 = vmatpush.bf16.msra.mxu0 %v1270
  %1294 = vmatmul.bf16.gmra.mxu0 %v1202
  %v1295 = vpop.f32.mrf.mxu0
  %v1296 = vadd.f32 0.0, %v1295
  %v1297 = vpop.f32.mrf.mxu0
  %v1298 = vadd.f32 0.0, %v1297
  %1299 = vmatmul.bf16.gmra.mxu0 %v1204
  %v1300 = vpop.f32.mrf.mxu0
  %v1301 = vadd.f32 0.0, %v1300
  %v1302 = vpop.f32.mrf.mxu0
  %v1303 = vadd.f32 0.0, %v1302
  %1304 = vmatmul.bf16.gmra.mxu0 %v1206
  %v1305 = vpop.f32.mrf.mxu0
  %v1306 = vadd.f32 0.0, %v1305
  %v1307 = vpop.f32.mrf.mxu0
  %v1308 = vadd.f32 0.0, %v1307
  %1309 = vmatmul.bf16.gmra.mxu0 %v1208
  %v1310 = vpop.f32.mrf.mxu0
  %v1311 = vadd.f32 0.0, %v1310
  %v1312 = vpop.f32.mrf.mxu0
  %v1313 = vadd.f32 0.0, %v1312
  %1314 = vmatmul.bf16.gmra.mxu0 %v1210
  %v1315 = vpop.f32.mrf.mxu0
  %v1316 = vadd.f32 0.0, %v1315
  %v1317 = vpop.f32.mrf.mxu0
  %v1318 = vadd.f32 0.0, %v1317
  %1319 = vmatmul.bf16.gmra.mxu0 %v1212
  %v1320 = vpop.f32.mrf.mxu0
  %v1321 = vadd.f32 0.0, %v1320
  %v1322 = vpop.f32.mrf.mxu0
  %v1323 = vadd.f32 0.0, %v1322
  %1324 = vmatmul.bf16.gmra.mxu0 %v1214
  %v1325 = vpop.f32.mrf.mxu0
  %v1326 = vadd.f32 0.0, %v1325
  %v1327 = vpop.f32.mrf.mxu0
  %v1328 = vadd.f32 0.0, %v1327
  %1329 = vmatmul.bf16.gmra.mxu0 %v1216
  %v1330 = vpop.f32.mrf.mxu0
  %v1331 = vadd.f32 0.0, %v1330
  %v1332 = vpop.f32.mrf.mxu0
  %v1333 = vadd.f32 0.0, %v1332
  %1334 = vmatmul.bf16.gmra.mxu0 %v1218
  %v1335 = vpop.f32.mrf.mxu0
  %v1336 = vadd.f32 0.0, %v1335
  %v1337 = vpop.f32.mrf.mxu0
  %v1338 = vadd.f32 0.0, %v1337
  %1339 = vmatmul.bf16.gmra.mxu0 %v1220
  %v1340 = vpop.f32.mrf.mxu0
  %v1341 = vadd.f32 0.0, %v1340
  %v1342 = vpop.f32.mrf.mxu0
  %v1343 = vadd.f32 0.0, %v1342
  %1344 = vmatmul.bf16.gmra.mxu0 %v1222
  %v1345 = vpop.f32.mrf.mxu0
  %v1346 = vadd.f32 0.0, %v1345
  %v1347 = vpop.f32.mrf.mxu0
  %v1348 = vadd.f32 0.0, %v1347
  %1349 = vmatmul.bf16.gmra.mxu0 %v1224
  %v1350 = vpop.f32.mrf.mxu0
  %v1351 = vadd.f32 0.0, %v1350
  %v1352 = vpop.f32.mrf.mxu0
  %v1353 = vadd.f32 0.0, %v1352
  %1354 = vmatmul.bf16.gmra.mxu0 %v1223
  %v1355 = vpop.f32.mrf.mxu0
  %v1356 = vadd.f32 0.0, %v1355
  %v1357 = vpop.f32.mrf.mxu0
  %1358 = vdwg.mxu0
  %v1359 = vadd.f32 %v1067, %v1296
  %v1360 = vadd.f32 %v1068, %v1298
  %v1361 = vadd.f32 %v1069, %v1301
  %v1362 = vadd.f32 %v1070, %v1303
  %v1363 = vadd.f32 %v1071, %v1306
  %v1364 = vadd.f32 %v1072, %v1308
  %v1365 = vadd.f32 %v1073, %v1311
  %v1366 = vadd.f32 %v1074, %v1313
  %v1367 = vadd.f32 %v1075, %v1316
  %v1368 = vadd.f32 %v1076, %v1318
  %v1369 = vadd.f32 %v1077, %v1321
  %v1370 = vadd.f32 %v1078, %v1323
  %v1371 = vadd.f32 %v1079, %v1326
  %v1372 = vadd.f32 %v1080, %v1328
  %v1373 = vadd.f32 %v1081, %v1331
  %v1374 = vadd.f32 %v1082, %v1333
  %v1375 = vadd.f32 %v1083, %v1336
  %v1376 = vadd.f32 %v1084, %v1338
  %v1377 = vadd.f32 %v1085, %v1341
  %v1378 = vadd.f32 %v1086, %v1343
  %v1379 = vadd.f32 %v1087, %v1346
  %v1380 = vadd.f32 %v1088, %v1348
  %v1381 = vadd.f32 %v1089, %v1351
  %v1382 = vadd.f32 %v1090, %v1353
  %v1383 = vadd.f32 %v1091, %v1356
  %v1384 = vld [vmem:[#allocation2 + $0x68] sm:$0x3]
  %s1385 = scalar_lea.vmem %s5, 256
  %v1386 = vld [vmem:[%s1385] sm:$0xf]
  %v1387 = vld [vmem:[%s1385 + $0x4] sm:$0xf]
  %v1388 = vld [vmem:[%s1385 + $0x8] sm:$0xf]
  %v1389 = vld [vmem:[%s1385 + $0xc] sm:$0xf]
  %v1390 = vld [vmem:[%s1385 + $0x10] sm:$0xf]
  %v1391 = vld [vmem:[%s1385 + $0x14] sm:$0xf]
  %v1392 = vld [vmem:[%s1385 + $0x18] sm:$0xf]
  %v1393 = vld [vmem:[%s1385 + $0x1c] sm:$0xf]
  %v1394 = vld [vmem:[%s1385 + $0x20] sm:$0xf]
  %v1395 = vld [vmem:[%s1385 + $0x24] sm:$0xf]
  %v1396 = vld [vmem:[%s1385 + $0x28] sm:$0xf]
  %v1397 = vld [vmem:[%s1385 + $0x2c] sm:$0xf]
  %v1398 = vld [vmem:[%s1385 + $0x30] sm:$0xf]
  %v1399 = vld [vmem:[%s1385 + $0x34] sm:$0xf]
  %v1400 = vld [vmem:[%s1385 + $0x38] sm:$0xf]
  %v1401 = vld [vmem:[%s1385 + $0x3c] sm:$0xf]
  %v1403 = vunpack.c.l.b16 %v1384
  %v1404 = vpack.c.b16 %v1403, %v1185
  %vm1405 = vsmask.f32 6400
  %v1407 = vshrl.u32 %v1187, 16
  %v1409 = vrot.slane %v1407, 1
  %v1410 = vshll.u32 %v1187, 16
  %v1412 = vrot.slane %v1410, 2
  %v1413 = vor.u32 %v1409, %v1412
  %v1415 = vshrl.u32 %v1188, 16
  %v1417 = vrot.slane %v1415, 1
  %v1418 = vshll.u32 %v1188, 16
  %v1420 = vrot.slane %v1418, 2
  %v1421 = vor.u32 %v1417, %v1420
  %v1422 = vsel %vm1405, %v1413, %v1421
  %v1424 = vshrl.u32 %v1189, 16
  %v1426 = vrot.slane %v1424, 1
  %v1427 = vshll.u32 %v1189, 16
  %v1429 = vrot.slane %v1427, 2
  %v1430 = vor.u32 %v1426, %v1429
  %v1431 = vsel %vm1405, %v1421, %v1430
  %v1433 = vshrl.u32 %v1190, 16
  %v1435 = vrot.slane %v1433, 1
  %v1436 = vshll.u32 %v1190, 16
  %v1438 = vrot.slane %v1436, 2
  %v1439 = vor.u32 %v1435, %v1438
  %v1440 = vsel %vm1405, %v1430, %v1439
  %v1442 = vshrl.u32 %v1191, 16
  %v1444 = vrot.slane %v1442, 1
  %v1445 = vshll.u32 %v1191, 16
  %v1447 = vrot.slane %v1445, 2
  %v1448 = vor.u32 %v1444, %v1447
  %v1449 = vsel %vm1405, %v1439, %v1448
  %v1451 = vshrl.u32 %v1192, 16
  %v1453 = vrot.slane %v1451, 1
  %v1454 = vshll.u32 %v1192, 16
  %v1456 = vrot.slane %v1454, 2
  %v1457 = vor.u32 %v1453, %v1456
  %v1458 = vsel %vm1405, %v1448, %v1457
  %v1460 = vshrl.u32 %v1193, 16
  %v1462 = vrot.slane %v1460, 1
  %v1463 = vshll.u32 %v1193, 16
  %v1465 = vrot.slane %v1463, 2
  %v1466 = vor.u32 %v1462, %v1465
  %v1467 = vsel %vm1405, %v1457, %v1466
  %v1469 = vshrl.u32 %v1194, 16
  %v1471 = vrot.slane %v1469, 1
  %v1472 = vshll.u32 %v1194, 16
  %v1474 = vrot.slane %v1472, 2
  %v1475 = vor.u32 %v1471, %v1474
  %v1476 = vsel %vm1405, %v1466, %v1475
  %v1478 = vshrl.u32 %v1195, 16
  %v1480 = vrot.slane %v1478, 1
  %v1481 = vshll.u32 %v1195, 16
  %v1483 = vrot.slane %v1481, 2
  %v1484 = vor.u32 %v1480, %v1483
  %v1485 = vsel %vm1405, %v1475, %v1484
  %v1487 = vshrl.u32 %v1196, 16
  %v1489 = vrot.slane %v1487, 1
  %v1490 = vshll.u32 %v1196, 16
  %v1492 = vrot.slane %v1490, 2
  %v1493 = vor.u32 %v1489, %v1492
  %v1494 = vsel %vm1405, %v1484, %v1493
  %v1496 = vshrl.u32 %v1197, 16
  %v1498 = vrot.slane %v1496, 1
  %v1499 = vshll.u32 %v1197, 16
  %v1501 = vrot.slane %v1499, 2
  %v1502 = vor.u32 %v1498, %v1501
  %v1503 = vsel %vm1405, %v1493, %v1502
  %v1505 = vshrl.u32 %v1198, 16
  %v1507 = vrot.slane %v1505, 1
  %v1508 = vshll.u32 %v1198, 16
  %v1510 = vrot.slane %v1508, 2
  %v1511 = vor.u32 %v1507, %v1510
  %v1512 = vsel %vm1405, %v1502, %v1511
  %v1514 = vshrl.u32 %v1404, 16
  %v1516 = vrot.slane %v1514, 1
  %v1517 = vshll.u32 %v1404, 16
  %v1519 = vrot.slane %v1517, 2
  %v1520 = vor.u32 %v1516, %v1519
  %v1521 = vsel %vm1405, %v1511, %v1520
  %v1551 = vunpack.c.l.b16 %v1386
  %v1552 = vunpack.c.l.b16 %v1387
  %v1553 = vunpack.c.l.b16 %v1388
  %v1554 = vunpack.c.l.b16 %v1389
  %v1555 = vunpack.c.l.b16 %v1390
  %v1556 = vunpack.c.l.b16 %v1391
  %v1557 = vunpack.c.l.b16 %v1392
  %v1558 = vunpack.c.l.b16 %v1393
  %v1559 = vunpack.c.l.b16 %v1394
  %v1560 = vunpack.c.l.b16 %v1395
  %v1561 = vunpack.c.l.b16 %v1396
  %v1562 = vunpack.c.l.b16 %v1397
  %v1563 = vunpack.c.l.b16 %v1398
  %v1564 = vunpack.c.l.b16 %v1399
  %v1565 = vunpack.c.l.b16 %v1400
  %v1566 = vunpack.c.l.b16 %v1401
  %v1567 = vpack.c.b16 %v1552, %v1551
  %v1568 = vpack.c.b16 %v1554, %v1553
  %v1569 = vpack.c.b16 %v1556, %v1555
  %v1570 = vpack.c.b16 %v1558, %v1557
  %v1571 = vpack.c.b16 %v1560, %v1559
  %v1572 = vpack.c.b16 %v1562, %v1561
  %v1573 = vpack.c.b16 %v1564, %v1563
  %v1574 = vpack.c.b16 %v1566, %v1565
  %1583 = vmatpush.bf16.msra.mxu0 %v1574
  %1584 = vmatpush.bf16.msra.mxu0 %v1573
  %1585 = vmatpush.bf16.msra.mxu0 %v1572
  %1586 = vmatpush.bf16.msra.mxu0 %v1571
  %1587 = vmatpush.bf16.msra.mxu0 %v1570
  %1588 = vmatpush.bf16.msra.mxu0 %v1569
  %1589 = vmatpush.bf16.msra.mxu0 %v1568
  %1590 = vmatpush.bf16.msra.mxu0 %v1567
  %1591 = vmatmul.bf16.gmra.mxu0 %v1422
  %v1592 = vpop.f32.mrf.mxu0
  %v1593 = vadd.f32 0.0, %v1592
  %v1594 = vpop.f32.mrf.mxu0
  %v1595 = vadd.f32 0.0, %v1594
  %1596 = vmatmul.bf16.gmra.mxu0 %v1431
  %v1597 = vpop.f32.mrf.mxu0
  %v1598 = vadd.f32 0.0, %v1597
  %v1599 = vpop.f32.mrf.mxu0
  %v1600 = vadd.f32 0.0, %v1599
  %1601 = vmatmul.bf16.gmra.mxu0 %v1440
  %v1602 = vpop.f32.mrf.mxu0
  %v1603 = vadd.f32 0.0, %v1602
  %v1604 = vpop.f32.mrf.mxu0
  %v1605 = vadd.f32 0.0, %v1604
  %1606 = vmatmul.bf16.gmra.mxu0 %v1449
  %v1607 = vpop.f32.mrf.mxu0
  %v1608 = vadd.f32 0.0, %v1607
  %v1609 = vpop.f32.mrf.mxu0
  %v1610 = vadd.f32 0.0, %v1609
  %1611 = vmatmul.bf16.gmra.mxu0 %v1458
  %v1612 = vpop.f32.mrf.mxu0
  %v1613 = vadd.f32 0.0, %v1612
  %v1614 = vpop.f32.mrf.mxu0
  %v1615 = vadd.f32 0.0, %v1614
  %1616 = vmatmul.bf16.gmra.mxu0 %v1467
  %v1617 = vpop.f32.mrf.mxu0
  %v1618 = vadd.f32 0.0, %v1617
  %v1619 = vpop.f32.mrf.mxu0
  %v1620 = vadd.f32 0.0, %v1619
  %1621 = vmatmul.bf16.gmra.mxu0 %v1476
  %v1622 = vpop.f32.mrf.mxu0
  %v1623 = vadd.f32 0.0, %v1622
  %v1624 = vpop.f32.mrf.mxu0
  %v1625 = vadd.f32 0.0, %v1624
  %1626 = vmatmul.bf16.gmra.mxu0 %v1485
  %v1627 = vpop.f32.mrf.mxu0
  %v1628 = vadd.f32 0.0, %v1627
  %v1629 = vpop.f32.mrf.mxu0
  %v1630 = vadd.f32 0.0, %v1629
  %1631 = vmatmul.bf16.gmra.mxu0 %v1494
  %v1632 = vpop.f32.mrf.mxu0
  %v1633 = vadd.f32 0.0, %v1632
  %v1634 = vpop.f32.mrf.mxu0
  %v1635 = vadd.f32 0.0, %v1634
  %1636 = vmatmul.bf16.gmra.mxu0 %v1503
  %v1637 = vpop.f32.mrf.mxu0
  %v1638 = vadd.f32 0.0, %v1637
  %v1639 = vpop.f32.mrf.mxu0
  %v1640 = vadd.f32 0.0, %v1639
  %1641 = vmatmul.bf16.gmra.mxu0 %v1512
  %v1642 = vpop.f32.mrf.mxu0
  %v1643 = vadd.f32 0.0, %v1642
  %v1644 = vpop.f32.mrf.mxu0
  %v1645 = vadd.f32 0.0, %v1644
  %1646 = vmatmul.bf16.gmra.mxu0 %v1521
  %v1647 = vpop.f32.mrf.mxu0
  %v1648 = vadd.f32 0.0, %v1647
  %v1649 = vpop.f32.mrf.mxu0
  %v1650 = vadd.f32 0.0, %v1649
  %1651 = vmatmul.bf16.gmra.mxu0 %v1520
  %v1652 = vpop.f32.mrf.mxu0
  %v1653 = vadd.f32 0.0, %v1652
  %v1654 = vpop.f32.mrf.mxu0
  %1655 = vdwg.mxu0
  %v1656 = vadd.f32 %v1359, %v1593
  %v1657 = vadd.f32 %v1360, %v1595
  %v1658 = vadd.f32 %v1361, %v1598
  %v1659 = vadd.f32 %v1362, %v1600
  %v1660 = vadd.f32 %v1363, %v1603
  %v1661 = vadd.f32 %v1364, %v1605
  %v1662 = vadd.f32 %v1365, %v1608
  %v1663 = vadd.f32 %v1366, %v1610
  %v1664 = vadd.f32 %v1367, %v1613
  %v1665 = vadd.f32 %v1368, %v1615
  %v1666 = vadd.f32 %v1369, %v1618
  %v1667 = vadd.f32 %v1370, %v1620
  %v1668 = vadd.f32 %v1371, %v1623
  %v1669 = vadd.f32 %v1372, %v1625
  %v1670 = vadd.f32 %v1373, %v1628
  %v1671 = vadd.f32 %v1374, %v1630
  %v1672 = vadd.f32 %v1375, %v1633
  %v1673 = vadd.f32 %v1376, %v1635
  %v1674 = vadd.f32 %v1377, %v1638
  %v1675 = vadd.f32 %v1378, %v1640
  %v1676 = vadd.f32 %v1379, %v1643
  %v1677 = vadd.f32 %v1380, %v1645
  %v1678 = vadd.f32 %v1381, %v1648
  %v1679 = vadd.f32 %v1382, %v1650
  %v1680 = vadd.f32 %v1383, %v1653
  %v1681 = vld [vmem:[#allocation2 + $0x4] sm:$0xc]
  %s1682 = scalar_lea.vmem %s5, 320
  %v1683 = vld [vmem:[%s1682] sm:$0xf]
  %v1684 = vld [vmem:[%s1682 + $0x4] sm:$0xf]
  %v1685 = vld [vmem:[%s1682 + $0x8] sm:$0xf]
  %v1686 = vld [vmem:[%s1682 + $0xc] sm:$0xf]
  %v1687 = vld [vmem:[%s1682 + $0x10] sm:$0xf]
  %v1688 = vld [vmem:[%s1682 + $0x14] sm:$0xf]
  %v1689 = vld [vmem:[%s1682 + $0x18] sm:$0xf]
  %v1690 = vld [vmem:[%s1682 + $0x1c] sm:$0xf]
  %v1691 = vld [vmem:[%s1682 + $0x20] sm:$0xf]
  %v1692 = vld [vmem:[%s1682 + $0x24] sm:$0xf]
  %v1693 = vld [vmem:[%s1682 + $0x28] sm:$0xf]
  %v1694 = vld [vmem:[%s1682 + $0x2c] sm:$0xf]
  %v1695 = vld [vmem:[%s1682 + $0x30] sm:$0xf]
  %v1696 = vld [vmem:[%s1682 + $0x34] sm:$0xf]
  %v1697 = vld [vmem:[%s1682 + $0x38] sm:$0xf]
  %v1698 = vld [vmem:[%s1682 + $0x3c] sm:$0xf]
  %v1700 = vunpack.c.l.b16 %v1681
  %v1701 = vpack.c.b16 %v1162, %v1700
  %vm1702 = vcmask 1045504
  %v1703 = vrot.slane %v1701, 2
  %v1704 = vrot.slane %v1188, 2
  %v1705 = vsel %vm1702, %v1703, %v1704
  %v1706 = vrot.slane %v1189, 2
  %v1707 = vsel %vm1702, %v1704, %v1706
  %v1708 = vrot.slane %v1190, 2
  %v1709 = vsel %vm1702, %v1706, %v1708
  %v1710 = vrot.slane %v1191, 2
  %v1711 = vsel %vm1702, %v1708, %v1710
  %v1712 = vrot.slane %v1192, 2
  %v1713 = vsel %vm1702, %v1710, %v1712
  %v1714 = vrot.slane %v1193, 2
  %v1715 = vsel %vm1702, %v1712, %v1714
  %v1716 = vrot.slane %v1194, 2
  %v1717 = vsel %vm1702, %v1714, %v1716
  %v1718 = vrot.slane %v1195, 2
  %v1719 = vsel %vm1702, %v1716, %v1718
  %v1720 = vrot.slane %v1196, 2
  %v1721 = vsel %vm1702, %v1718, %v1720
  %v1722 = vrot.slane %v1197, 2
  %v1723 = vsel %vm1702, %v1720, %v1722
  %v1724 = vrot.slane %v1198, 2
  %v1725 = vsel %vm1702, %v1722, %v1724
  %v1726 = vrot.slane %v1404, 2
  %v1727 = vsel %vm1702, %v1724, %v1726
  %v1757 = vunpack.c.l.b16 %v1683
  %v1758 = vunpack.c.l.b16 %v1684
  %v1759 = vunpack.c.l.b16 %v1685
  %v1760 = vunpack.c.l.b16 %v1686
  %v1761 = vunpack.c.l.b16 %v1687
  %v1762 = vunpack.c.l.b16 %v1688
  %v1763 = vunpack.c.l.b16 %v1689
  %v1764 = vunpack.c.l.b16 %v1690
  %v1765 = vunpack.c.l.b16 %v1691
  %v1766 = vunpack.c.l.b16 %v1692
  %v1767 = vunpack.c.l.b16 %v1693
  %v1768 = vunpack.c.l.b16 %v1694
  %v1769 = vunpack.c.l.b16 %v1695
  %v1770 = vunpack.c.l.b16 %v1696
  %v1771 = vunpack.c.l.b16 %v1697
  %v1772 = vunpack.c.l.b16 %v1698
  %v1773 = vpack.c.b16 %v1758, %v1757
  %v1774 = vpack.c.b16 %v1760, %v1759
  %v1775 = vpack.c.b16 %v1762, %v1761
  %v1776 = vpack.c.b16 %v1764, %v1763
  %v1777 = vpack.c.b16 %v1766, %v1765
  %v1778 = vpack.c.b16 %v1768, %v1767
  %v1779 = vpack.c.b16 %v1770, %v1769
  %v1780 = vpack.c.b16 %v1772, %v1771
  %1789 = vmatpush.bf16.msra.mxu0 %v1780
  %1790 = vmatpush.bf16.msra.mxu0 %v1779
  %1791 = vmatpush.bf16.msra.mxu0 %v1778
  %1792 = vmatpush.bf16.msra.mxu0 %v1777
  %1793 = vmatpush.bf16.msra.mxu0 %v1776
  %1794 = vmatpush.bf16.msra.mxu0 %v1775
  %1795 = vmatpush.bf16.msra.mxu0 %v1774
  %1796 = vmatpush.bf16.msra.mxu0 %v1773
  %1797 = vmatmul.bf16.gmra.mxu0 %v1705
  %v1798 = vpop.f32.mrf.mxu0
  %v1799 = vadd.f32 0.0, %v1798
  %v1800 = vpop.f32.mrf.mxu0
  %v1801 = vadd.f32 0.0, %v1800
  %1802 = vmatmul.bf16.gmra.mxu0 %v1707
  %v1803 = vpop.f32.mrf.mxu0
  %v1804 = vadd.f32 0.0, %v1803
  %v1805 = vpop.f32.mrf.mxu0
  %v1806 = vadd.f32 0.0, %v1805
  %1807 = vmatmul.bf16.gmra.mxu0 %v1709
  %v1808 = vpop.f32.mrf.mxu0
  %v1809 = vadd.f32 0.0, %v1808
  %v1810 = vpop.f32.mrf.mxu0
  %v1811 = vadd.f32 0.0, %v1810
  %1812 = vmatmul.bf16.gmra.mxu0 %v1711
  %v1813 = vpop.f32.mrf.mxu0
  %v1814 = vadd.f32 0.0, %v1813
  %v1815 = vpop.f32.mrf.mxu0
  %v1816 = vadd.f32 0.0, %v1815
  %1817 = vmatmul.bf16.gmra.mxu0 %v1713
  %v1818 = vpop.f32.mrf.mxu0
  %v1819 = vadd.f32 0.0, %v1818
  %v1820 = vpop.f32.mrf.mxu0
  %v1821 = vadd.f32 0.0, %v1820
  %1822 = vmatmul.bf16.gmra.mxu0 %v1715
  %v1823 = vpop.f32.mrf.mxu0
  %v1824 = vadd.f32 0.0, %v1823
  %v1825 = vpop.f32.mrf.mxu0
  %v1826 = vadd.f32 0.0, %v1825
  %1827 = vmatmul.bf16.gmra.mxu0 %v1717
  %v1828 = vpop.f32.mrf.mxu0
  %v1829 = vadd.f32 0.0, %v1828
  %v1830 = vpop.f32.mrf.mxu0
  %v1831 = vadd.f32 0.0, %v1830
  %1832 = vmatmul.bf16.gmra.mxu0 %v1719
  %v1833 = vpop.f32.mrf.mxu0
  %v1834 = vadd.f32 0.0, %v1833
  %v1835 = vpop.f32.mrf.mxu0
  %v1836 = vadd.f32 0.0, %v1835
  %1837 = vmatmul.bf16.gmra.mxu0 %v1721
  %v1838 = vpop.f32.mrf.mxu0
  %v1839 = vadd.f32 0.0, %v1838
  %v1840 = vpop.f32.mrf.mxu0
  %v1841 = vadd.f32 0.0, %v1840
  %1842 = vmatmul.bf16.gmra.mxu0 %v1723
  %v1843 = vpop.f32.mrf.mxu0
  %v1844 = vadd.f32 0.0, %v1843
  %v1845 = vpop.f32.mrf.mxu0
  %v1846 = vadd.f32 0.0, %v1845
  %1847 = vmatmul.bf16.gmra.mxu0 %v1725
  %v1848 = vpop.f32.mrf.mxu0
  %v1849 = vadd.f32 0.0, %v1848
  %v1850 = vpop.f32.mrf.mxu0
  %v1851 = vadd.f32 0.0, %v1850
  %1852 = vmatmul.bf16.gmra.mxu0 %v1727
  %v1853 = vpop.f32.mrf.mxu0
  %v1854 = vadd.f32 0.0, %v1853
  %v1855 = vpop.f32.mrf.mxu0
  %v1856 = vadd.f32 0.0, %v1855
  %1857 = vmatmul.bf16.gmra.mxu0 %v1726
  %v1858 = vpop.f32.mrf.mxu0
  %v1859 = vadd.f32 0.0, %v1858
  %v1860 = vpop.f32.mrf.mxu0
  %1861 = vdwg.mxu0
  %v1862 = vadd.f32 %v1656, %v1799
  %v1863 = vadd.f32 %v1657, %v1801
  %v1864 = vadd.f32 %v1658, %v1804
  %v1865 = vadd.f32 %v1659, %v1806
  %v1866 = vadd.f32 %v1660, %v1809
  %v1867 = vadd.f32 %v1661, %v1811
  %v1868 = vadd.f32 %v1662, %v1814
  %v1869 = vadd.f32 %v1663, %v1816
  %v1870 = vadd.f32 %v1664, %v1819
  %v1871 = vadd.f32 %v1665, %v1821
  %v1872 = vadd.f32 %v1666, %v1824
  %v1873 = vadd.f32 %v1667, %v1826
  %v1874 = vadd.f32 %v1668, %v1829
  %v1875 = vadd.f32 %v1669, %v1831
  %v1876 = vadd.f32 %v1670, %v1834
  %v1877 = vadd.f32 %v1671, %v1836
  %v1878 = vadd.f32 %v1672, %v1839
  %v1879 = vadd.f32 %v1673, %v1841
  %v1880 = vadd.f32 %v1674, %v1844
  %v1881 = vadd.f32 %v1675, %v1846
  %v1882 = vadd.f32 %v1676, %v1849
  %v1883 = vadd.f32 %v1677, %v1851
  %v1884 = vadd.f32 %v1678, %v1854
  %v1885 = vadd.f32 %v1679, %v1856
  %v1886 = vadd.f32 %v1680, %v1859
  %v1887 = vld [vmem:[#allocation2 + $0x8] sm:$0xc]
  %v1888 = vld [vmem:[#allocation2 + $0xc] sm:$0xf]
  %v1889 = vld [vmem:[#allocation2 + $0x10] sm:$0xf]
  %v1890 = vld [vmem:[#allocation2 + $0x14] sm:$0xf]
  %v1891 = vld [vmem:[#allocation2 + $0x18] sm:$0xf]
  %v1892 = vld [vmem:[#allocation2 + $0x1c] sm:$0xf]
  %v1893 = vld [vmem:[#allocation2 + $0x20] sm:$0xf]
  %v1894 = vld [vmem:[#allocation2 + $0x24] sm:$0xf]
  %v1895 = vld [vmem:[#allocation2 + $0x28] sm:$0xf]
  %v1896 = vld [vmem:[#allocation2 + $0x2c] sm:$0xf]
  %v1897 = vld [vmem:[#allocation2 + $0x30] sm:$0xf]
  %v1898 = vld [vmem:[#allocation2 + $0x34] sm:$0xf]
  %v1899 = vld [vmem:[#allocation2 + $0x38] sm:$0xf]
  %v1900 = vld [vmem:[#allocation2 + $0x3c] sm:$0xf]
  %v1901 = vld [vmem:[#allocation2 + $0x40] sm:$0xf]
  %v1902 = vld [vmem:[#allocation2 + $0x44] sm:$0xf]
  %v1903 = vld [vmem:[#allocation2 + $0x48] sm:$0xf]
  %v1904 = vld [vmem:[#allocation2 + $0x4c] sm:$0xf]
  %v1905 = vld [vmem:[#allocation2 + $0x50] sm:$0xf]
  %v1906 = vld [vmem:[#allocation2 + $0x54] sm:$0xf]
  %v1907 = vld [vmem:[#allocation2 + $0x58] sm:$0xf]
  %v1908 = vld [vmem:[#allocation2 + $0x5c] sm:$0xf]
  %v1909 = vld [vmem:[#allocation2 + $0x60] sm:$0xf]
  %v1910 = vld [vmem:[#allocation2 + $0x64] sm:$0xf]
  %v1911 = vld [vmem:[#allocation2 + $0x68] sm:$0xf]
  %v1912 = vld [vmem:[#allocation2 + $0x6c] sm:$0x3]
  %s1913 = scalar_lea.vmem %s5, 384
  %v1914 = vld [vmem:[%s1913] sm:$0xf]
  %v1915 = vld [vmem:[%s1913 + $0x4] sm:$0xf]
  %v1916 = vld [vmem:[%s1913 + $0x8] sm:$0xf]
  %v1917 = vld [vmem:[%s1913 + $0xc] sm:$0xf]
  %v1918 = vld [vmem:[%s1913 + $0x10] sm:$0xf]
  %v1919 = vld [vmem:[%s1913 + $0x14] sm:$0xf]
  %v1920 = vld [vmem:[%s1913 + $0x18] sm:$0xf]
  %v1921 = vld [vmem:[%s1913 + $0x1c] sm:$0xf]
  %v1922 = vld [vmem:[%s1913 + $0x20] sm:$0xf]
  %v1923 = vld [vmem:[%s1913 + $0x24] sm:$0xf]
  %v1924 = vld [vmem:[%s1913 + $0x28] sm:$0xf]
  %v1925 = vld [vmem:[%s1913 + $0x2c] sm:$0xf]
  %v1926 = vld [vmem:[%s1913 + $0x30] sm:$0xf]
  %v1927 = vld [vmem:[%s1913 + $0x34] sm:$0xf]
  %v1928 = vld [vmem:[%s1913 + $0x38] sm:$0xf]
  %v1929 = vld [vmem:[%s1913 + $0x3c] sm:$0xf]
  %v1956 = vunpack.c.l.b16 %v1887
  %v1957 = vunpack.c.l.b16 %v1888
  %v1958 = vunpack.c.l.b16 %v1889
  %v1959 = vunpack.c.l.b16 %v1890
  %v1960 = vunpack.c.l.b16 %v1891
  %v1961 = vunpack.c.l.b16 %v1892
  %v1962 = vunpack.c.l.b16 %v1893
  %v1963 = vunpack.c.l.b16 %v1894
  %v1964 = vunpack.c.l.b16 %v1895
  %v1965 = vunpack.c.l.b16 %v1896
  %v1966 = vunpack.c.l.b16 %v1897
  %v1967 = vunpack.c.l.b16 %v1898
  %v1968 = vunpack.c.l.b16 %v1899
  %v1969 = vunpack.c.l.b16 %v1900
  %v1970 = vunpack.c.l.b16 %v1901
  %v1971 = vunpack.c.l.b16 %v1902
  %v1972 = vunpack.c.l.b16 %v1903
  %v1973 = vunpack.c.l.b16 %v1904
  %v1974 = vunpack.c.l.b16 %v1905
  %v1975 = vunpack.c.l.b16 %v1906
  %v1976 = vunpack.c.l.b16 %v1907
  %v1977 = vunpack.c.l.b16 %v1908
  %v1978 = vunpack.c.l.b16 %v1909
  %v1979 = vunpack.c.l.b16 %v1910
  %v1980 = vunpack.c.l.b16 %v1911
  %v1981 = vunpack.c.l.b16 %v1912
  %v1982 = vpack.c.b16 %v1957, %v1956
  %v1983 = vpack.c.b16 %v1959, %v1958
  %v1984 = vpack.c.b16 %v1961, %v1960
  %v1985 = vpack.c.b16 %v1963, %v1962
  %v1986 = vpack.c.b16 %v1965, %v1964
  %v1987 = vpack.c.b16 %v1967, %v1966
  %v1988 = vpack.c.b16 %v1969, %v1968
  %v1989 = vpack.c.b16 %v1971, %v1970
  %v1990 = vpack.c.b16 %v1973, %v1972
  %v1991 = vpack.c.b16 %v1975, %v1974
  %v1992 = vpack.c.b16 %v1977, %v1976
  %v1993 = vpack.c.b16 %v1979, %v1978
  %v1994 = vpack.c.b16 %v1981, %v1980
  %v1995 = vrot.slane %v1982, 2
  %v1996 = vrot.slane %v1983, 2
  %v1997 = vsel %vm1702, %v1995, %v1996
  %v1998 = vrot.slane %v1984, 2
  %v1999 = vsel %vm1702, %v1996, %v1998
  %v2000 = vrot.slane %v1985, 2
  %v2001 = vsel %vm1702, %v1998, %v2000
  %v2002 = vrot.slane %v1986, 2
  %v2003 = vsel %vm1702, %v2000, %v2002
  %v2004 = vrot.slane %v1987, 2
  %v2005 = vsel %vm1702, %v2002, %v2004
  %v2006 = vrot.slane %v1988, 2
  %v2007 = vsel %vm1702, %v2004, %v2006
  %v2008 = vrot.slane %v1989, 2
  %v2009 = vsel %vm1702, %v2006, %v2008
  %v2010 = vrot.slane %v1990, 2
  %v2011 = vsel %vm1702, %v2008, %v2010
  %v2012 = vrot.slane %v1991, 2
  %v2013 = vsel %vm1702, %v2010, %v2012
  %v2014 = vrot.slane %v1992, 2
  %v2015 = vsel %vm1702, %v2012, %v2014
  %v2016 = vrot.slane %v1993, 2
  %v2017 = vsel %vm1702, %v2014, %v2016
  %v2018 = vrot.slane %v1994, 2
  %v2019 = vsel %vm1702, %v2016, %v2018
  %v2049 = vunpack.c.l.b16 %v1914
  %v2050 = vunpack.c.l.b16 %v1915
  %v2051 = vunpack.c.l.b16 %v1916
  %v2052 = vunpack.c.l.b16 %v1917
  %v2053 = vunpack.c.l.b16 %v1918
  %v2054 = vunpack.c.l.b16 %v1919
  %v2055 = vunpack.c.l.b16 %v1920
  %v2056 = vunpack.c.l.b16 %v1921
  %v2057 = vunpack.c.l.b16 %v1922
  %v2058 = vunpack.c.l.b16 %v1923
  %v2059 = vunpack.c.l.b16 %v1924
  %v2060 = vunpack.c.l.b16 %v1925
  %v2061 = vunpack.c.l.b16 %v1926
  %v2062 = vunpack.c.l.b16 %v1927
  %v2063 = vunpack.c.l.b16 %v1928
  %v2064 = vunpack.c.l.b16 %v1929
  %v2065 = vpack.c.b16 %v2050, %v2049
  %v2066 = vpack.c.b16 %v2052, %v2051
  %v2067 = vpack.c.b16 %v2054, %v2053
  %v2068 = vpack.c.b16 %v2056, %v2055
  %v2069 = vpack.c.b16 %v2058, %v2057
  %v2070 = vpack.c.b16 %v2060, %v2059
  %v2071 = vpack.c.b16 %v2062, %v2061
  %v2072 = vpack.c.b16 %v2064, %v2063
  %2081 = vmatpush.bf16.msra.mxu0 %v2072
  %2082 = vmatpush.bf16.msra.mxu0 %v2071
  %2083 = vmatpush.bf16.msra.mxu0 %v2070
  %2084 = vmatpush.bf16.msra.mxu0 %v2069
  %2085 = vmatpush.bf16.msra.mxu0 %v2068
  %2086 = vmatpush.bf16.msra.mxu0 %v2067
  %2087 = vmatpush.bf16.msra.mxu0 %v2066
  %2088 = vmatpush.bf16.msra.mxu0 %v2065
  %2089 = vmatmul.bf16.gmra.mxu0 %v1997
  %v2090 = vpop.f32.mrf.mxu0
  %v2091 = vadd.f32 0.0, %v2090
  %v2092 = vpop.f32.mrf.mxu0
  %v2093 = vadd.f32 0.0, %v2092
  %2094 = vmatmul.bf16.gmra.mxu0 %v1999
  %v2095 = vpop.f32.mrf.mxu0
  %v2096 = vadd.f32 0.0, %v2095
  %v2097 = vpop.f32.mrf.mxu0
  %v2098 = vadd.f32 0.0, %v2097
  %2099 = vmatmul.bf16.gmra.mxu0 %v2001
  %v2100 = vpop.f32.mrf.mxu0
  %v2101 = vadd.f32 0.0, %v2100
  %v2102 = vpop.f32.mrf.mxu0
  %v2103 = vadd.f32 0.0, %v2102
  %2104 = vmatmul.bf16.gmra.mxu0 %v2003
  %v2105 = vpop.f32.mrf.mxu0
  %v2106 = vadd.f32 0.0, %v2105
  %v2107 = vpop.f32.mrf.mxu0
  %v2108 = vadd.f32 0.0, %v2107
  %2109 = vmatmul.bf16.gmra.mxu0 %v2005
  %v2110 = vpop.f32.mrf.mxu0
  %v2111 = vadd.f32 0.0, %v2110
  %v2112 = vpop.f32.mrf.mxu0
  %v2113 = vadd.f32 0.0, %v2112
  %2114 = vmatmul.bf16.gmra.mxu0 %v2007
  %v2115 = vpop.f32.mrf.mxu0
  %v2116 = vadd.f32 0.0, %v2115
  %v2117 = vpop.f32.mrf.mxu0
  %v2118 = vadd.f32 0.0, %v2117
  %2119 = vmatmul.bf16.gmra.mxu0 %v2009
  %v2120 = vpop.f32.mrf.mxu0
  %v2121 = vadd.f32 0.0, %v2120
  %v2122 = vpop.f32.mrf.mxu0
  %v2123 = vadd.f32 0.0, %v2122
  %2124 = vmatmul.bf16.gmra.mxu0 %v2011
  %v2125 = vpop.f32.mrf.mxu0
  %v2126 = vadd.f32 0.0, %v2125
  %v2127 = vpop.f32.mrf.mxu0
  %v2128 = vadd.f32 0.0, %v2127
  %2129 = vmatmul.bf16.gmra.mxu0 %v2013
  %v2130 = vpop.f32.mrf.mxu0
  %v2131 = vadd.f32 0.0, %v2130
  %v2132 = vpop.f32.mrf.mxu0
  %v2133 = vadd.f32 0.0, %v2132
  %2134 = vmatmul.bf16.gmra.mxu0 %v2015
  %v2135 = vpop.f32.mrf.mxu0
  %v2136 = vadd.f32 0.0, %v2135
  %v2137 = vpop.f32.mrf.mxu0
  %v2138 = vadd.f32 0.0, %v2137
  %2139 = vmatmul.bf16.gmra.mxu0 %v2017
  %v2140 = vpop.f32.mrf.mxu0
  %v2141 = vadd.f32 0.0, %v2140
  %v2142 = vpop.f32.mrf.mxu0
  %v2143 = vadd.f32 0.0, %v2142
  %2144 = vmatmul.bf16.gmra.mxu0 %v2019
  %v2145 = vpop.f32.mrf.mxu0
  %v2146 = vadd.f32 0.0, %v2145
  %v2147 = vpop.f32.mrf.mxu0
  %v2148 = vadd.f32 0.0, %v2147
  %2149 = vmatmul.bf16.gmra.mxu0 %v2018
  %v2150 = vpop.f32.mrf.mxu0
  %v2151 = vadd.f32 0.0, %v2150
  %v2152 = vpop.f32.mrf.mxu0
  %2153 = vdwg.mxu0
  %v2154 = vadd.f32 %v1862, %v2091
  %v2155 = vadd.f32 %v1863, %v2093
  %v2156 = vadd.f32 %v1864, %v2096
  %v2157 = vadd.f32 %v1865, %v2098
  %v2158 = vadd.f32 %v1866, %v2101
  %v2159 = vadd.f32 %v1867, %v2103
  %v2160 = vadd.f32 %v1868, %v2106
  %v2161 = vadd.f32 %v1869, %v2108
  %v2162 = vadd.f32 %v1870, %v2111
  %v2163 = vadd.f32 %v1871, %v2113
  %v2164 = vadd.f32 %v1872, %v2116
  %v2165 = vadd.f32 %v1873, %v2118
  %v2166 = vadd.f32 %v1874, %v2121
  %v2167 = vadd.f32 %v1875, %v2123
  %v2168 = vadd.f32 %v1876, %v2126
  %v2169 = vadd.f32 %v1877, %v2128
  %v2170 = vadd.f32 %v1878, %v2131
  %v2171 = vadd.f32 %v1879, %v2133
  %v2172 = vadd.f32 %v1880, %v2136
  %v2173 = vadd.f32 %v1881, %v2138
  %v2174 = vadd.f32 %v1882, %v2141
  %v2175 = vadd.f32 %v1883, %v2143
  %v2176 = vadd.f32 %v1884, %v2146
  %v2177 = vadd.f32 %v1885, %v2148
  %v2178 = vadd.f32 %v1886, %v2151
  %v2179 = vld [vmem:[#allocation2 + $0x6c] sm:$0x7]
  %s2180 = scalar_lea.vmem %s5, 448
  %v2181 = vld [vmem:[%s2180] sm:$0xf]
  %v2182 = vld [vmem:[%s2180 + $0x4] sm:$0xf]
  %v2183 = vld [vmem:[%s2180 + $0x8] sm:$0xf]
  %v2184 = vld [vmem:[%s2180 + $0xc] sm:$0xf]
  %v2185 = vld [vmem:[%s2180 + $0x10] sm:$0xf]
  %v2186 = vld [vmem:[%s2180 + $0x14] sm:$0xf]
  %v2187 = vld [vmem:[%s2180 + $0x18] sm:$0xf]
  %v2188 = vld [vmem:[%s2180 + $0x1c] sm:$0xf]
  %v2189 = vld [vmem:[%s2180 + $0x20] sm:$0xf]
  %v2190 = vld [vmem:[%s2180 + $0x24] sm:$0xf]
  %v2191 = vld [vmem:[%s2180 + $0x28] sm:$0xf]
  %v2192 = vld [vmem:[%s2180 + $0x2c] sm:$0xf]
  %v2193 = vld [vmem:[%s2180 + $0x30] sm:$0xf]
  %v2194 = vld [vmem:[%s2180 + $0x34] sm:$0xf]
  %v2195 = vld [vmem:[%s2180 + $0x38] sm:$0xf]
  %v2196 = vld [vmem:[%s2180 + $0x3c] sm:$0xf]
  %v2198 = vunpack.c.l.b16 %v2179
  %v2199 = vpack.c.b16 %v2198, %v1980
  %vm2200 = vsmask.f32 5376
  %v2202 = vshrl.u32 %v1982, 16
  %v2204 = vrot.slane %v2202, 2
  %v2205 = vshll.u32 %v1982, 16
  %v2207 = vrot.slane %v2205, 3
  %v2208 = vor.u32 %v2204, %v2207
  %v2210 = vshrl.u32 %v1983, 16
  %v2212 = vrot.slane %v2210, 2
  %v2213 = vshll.u32 %v1983, 16
  %v2215 = vrot.slane %v2213, 3
  %v2216 = vor.u32 %v2212, %v2215
  %v2217 = vsel %vm2200, %v2208, %v2216
  %v2219 = vshrl.u32 %v1984, 16
  %v2221 = vrot.slane %v2219, 2
  %v2222 = vshll.u32 %v1984, 16
  %v2224 = vrot.slane %v2222, 3
  %v2225 = vor.u32 %v2221, %v2224
  %v2226 = vsel %vm2200, %v2216, %v2225
  %v2228 = vshrl.u32 %v1985, 16
  %v2230 = vrot.slane %v2228, 2
  %v2231 = vshll.u32 %v1985, 16
  %v2233 = vrot.slane %v2231, 3
  %v2234 = vor.u32 %v2230, %v2233
  %v2235 = vsel %vm2200, %v2225, %v2234
  %v2237 = vshrl.u32 %v1986, 16
  %v2239 = vrot.slane %v2237, 2
  %v2240 = vshll.u32 %v1986, 16
  %v2242 = vrot.slane %v2240, 3
  %v2243 = vor.u32 %v2239, %v2242
  %v2244 = vsel %vm2200, %v2234, %v2243
  %v2246 = vshrl.u32 %v1987, 16
  %v2248 = vrot.slane %v2246, 2
  %v2249 = vshll.u32 %v1987, 16
  %v2251 = vrot.slane %v2249, 3
  %v2252 = vor.u32 %v2248, %v2251
  %v2253 = vsel %vm2200, %v2243, %v2252
  %v2255 = vshrl.u32 %v1988, 16
  %v2257 = vrot.slane %v2255, 2
  %v2258 = vshll.u32 %v1988, 16
  %v2260 = vrot.slane %v2258, 3
  %v2261 = vor.u32 %v2257, %v2260
  %v2262 = vsel %vm2200, %v2252, %v2261
  %v2264 = vshrl.u32 %v1989, 16
  %v2266 = vrot.slane %v2264, 2
  %v2267 = vshll.u32 %v1989, 16
  %v2269 = vrot.slane %v2267, 3
  %v2270 = vor.u32 %v2266, %v2269
  %v2271 = vsel %vm2200, %v2261, %v2270
  %v2273 = vshrl.u32 %v1990, 16
  %v2275 = vrot.slane %v2273, 2
  %v2276 = vshll.u32 %v1990, 16
  %v2278 = vrot.slane %v2276, 3
  %v2279 = vor.u32 %v2275, %v2278
  %v2280 = vsel %vm2200, %v2270, %v2279
  %v2282 = vshrl.u32 %v1991, 16
  %v2284 = vrot.slane %v2282, 2
  %v2285 = vshll.u32 %v1991, 16
  %v2287 = vrot.slane %v2285, 3
  %v2288 = vor.u32 %v2284, %v2287
  %v2289 = vsel %vm2200, %v2279, %v2288
  %v2291 = vshrl.u32 %v1992, 16
  %v2293 = vrot.slane %v2291, 2
  %v2294 = vshll.u32 %v1992, 16
  %v2296 = vrot.slane %v2294, 3
  %v2297 = vor.u32 %v2293, %v2296
  %v2298 = vsel %vm2200, %v2288, %v2297
  %v2300 = vshrl.u32 %v1993, 16
  %v2302 = vrot.slane %v2300, 2
  %v2303 = vshll.u32 %v1993, 16
  %v2305 = vrot.slane %v2303, 3
  %v2306 = vor.u32 %v2302, %v2305
  %v2307 = vsel %vm2200, %v2297, %v2306
  %v2309 = vshrl.u32 %v2199, 16
  %v2311 = vrot.slane %v2309, 2
  %v2312 = vshll.u32 %v2199, 16
  %v2314 = vrot.slane %v2312, 3
  %v2315 = vor.u32 %v2311, %v2314
  %v2316 = vsel %vm2200, %v2306, %v2315
  %v2346 = vunpack.c.l.b16 %v2181
  %v2347 = vunpack.c.l.b16 %v2182
  %v2348 = vunpack.c.l.b16 %v2183
  %v2349 = vunpack.c.l.b16 %v2184
  %v2350 = vunpack.c.l.b16 %v2185
  %v2351 = vunpack.c.l.b16 %v2186
  %v2352 = vunpack.c.l.b16 %v2187
  %v2353 = vunpack.c.l.b16 %v2188
  %v2354 = vunpack.c.l.b16 %v2189
  %v2355 = vunpack.c.l.b16 %v2190
  %v2356 = vunpack.c.l.b16 %v2191
  %v2357 = vunpack.c.l.b16 %v2192
  %v2358 = vunpack.c.l.b16 %v2193
  %v2359 = vunpack.c.l.b16 %v2194
  %v2360 = vunpack.c.l.b16 %v2195
  %v2361 = vunpack.c.l.b16 %v2196
  %v2362 = vpack.c.b16 %v2347, %v2346
  %v2363 = vpack.c.b16 %v2349, %v2348
  %v2364 = vpack.c.b16 %v2351, %v2350
  %v2365 = vpack.c.b16 %v2353, %v2352
  %v2366 = vpack.c.b16 %v2355, %v2354
  %v2367 = vpack.c.b16 %v2357, %v2356
  %v2368 = vpack.c.b16 %v2359, %v2358
  %v2369 = vpack.c.b16 %v2361, %v2360
  %2378 = vmatpush.bf16.msra.mxu0 %v2369
  %2379 = vmatpush.bf16.msra.mxu0 %v2368
  %2380 = vmatpush.bf16.msra.mxu0 %v2367
  %2381 = vmatpush.bf16.msra.mxu0 %v2366
  %2382 = vmatpush.bf16.msra.mxu0 %v2365
  %2383 = vmatpush.bf16.msra.mxu0 %v2364
  %2384 = vmatpush.bf16.msra.mxu0 %v2363
  %2385 = vmatpush.bf16.msra.mxu0 %v2362
  %2386 = vmatmul.bf16.gmra.mxu0 %v2217
  %v2387 = vpop.f32.mrf.mxu0
  %v2388 = vadd.f32 0.0, %v2387
  %v2389 = vpop.f32.mrf.mxu0
  %v2390 = vadd.f32 0.0, %v2389
  %2391 = vmatmul.bf16.gmra.mxu0 %v2226
  %v2392 = vpop.f32.mrf.mxu0
  %v2393 = vadd.f32 0.0, %v2392
  %v2394 = vpop.f32.mrf.mxu0
  %v2395 = vadd.f32 0.0, %v2394
  %2396 = vmatmul.bf16.gmra.mxu0 %v2235
  %v2397 = vpop.f32.mrf.mxu0
  %v2398 = vadd.f32 0.0, %v2397
  %v2399 = vpop.f32.mrf.mxu0
  %v2400 = vadd.f32 0.0, %v2399
  %2401 = vmatmul.bf16.gmra.mxu0 %v2244
  %v2402 = vpop.f32.mrf.mxu0
  %v2403 = vadd.f32 0.0, %v2402
  %v2404 = vpop.f32.mrf.mxu0
  %v2405 = vadd.f32 0.0, %v2404
  %2406 = vmatmul.bf16.gmra.mxu0 %v2253
  %v2407 = vpop.f32.mrf.mxu0
  %v2408 = vadd.f32 0.0, %v2407
  %v2409 = vpop.f32.mrf.mxu0
  %v2410 = vadd.f32 0.0, %v2409
  %2411 = vmatmul.bf16.gmra.mxu0 %v2262
  %v2412 = vpop.f32.mrf.mxu0
  %v2413 = vadd.f32 0.0, %v2412
  %v2414 = vpop.f32.mrf.mxu0
  %v2415 = vadd.f32 0.0, %v2414
  %2416 = vmatmul.bf16.gmra.mxu0 %v2271
  %v2417 = vpop.f32.mrf.mxu0
  %v2418 = vadd.f32 0.0, %v2417
  %v2419 = vpop.f32.mrf.mxu0
  %v2420 = vadd.f32 0.0, %v2419
  %2421 = vmatmul.bf16.gmra.mxu0 %v2280
  %v2422 = vpop.f32.mrf.mxu0
  %v2423 = vadd.f32 0.0, %v2422
  %v2424 = vpop.f32.mrf.mxu0
  %v2425 = vadd.f32 0.0, %v2424
  %2426 = vmatmul.bf16.gmra.mxu0 %v2289
  %v2427 = vpop.f32.mrf.mxu0
  %v2428 = vadd.f32 0.0, %v2427
  %v2429 = vpop.f32.mrf.mxu0
  %v2430 = vadd.f32 0.0, %v2429
  %2431 = vmatmul.bf16.gmra.mxu0 %v2298
  %v2432 = vpop.f32.mrf.mxu0
  %v2433 = vadd.f32 0.0, %v2432
  %v2434 = vpop.f32.mrf.mxu0
  %v2435 = vadd.f32 0.0, %v2434
  %2436 = vmatmul.bf16.gmra.mxu0 %v2307
  %v2437 = vpop.f32.mrf.mxu0
  %v2438 = vadd.f32 0.0, %v2437
  %v2439 = vpop.f32.mrf.mxu0
  %v2440 = vadd.f32 0.0, %v2439
  %2441 = vmatmul.bf16.gmra.mxu0 %v2316
  %v2442 = vpop.f32.mrf.mxu0
  %v2443 = vadd.f32 0.0, %v2442
  %v2444 = vpop.f32.mrf.mxu0
  %v2445 = vadd.f32 0.0, %v2444
  %2446 = vmatmul.bf16.gmra.mxu0 %v2315
  %v2447 = vpop.f32.mrf.mxu0
  %v2448 = vadd.f32 0.0, %v2447
  %v2449 = vpop.f32.mrf.mxu0
  %2450 = vdwg.mxu0
  %v2451 = vadd.f32 %v2154, %v2388
  %v2452 = vadd.f32 %v2155, %v2390
  %v2453 = vadd.f32 %v2156, %v2393
  %v2454 = vadd.f32 %v2157, %v2395
  %v2455 = vadd.f32 %v2158, %v2398
  %v2456 = vadd.f32 %v2159, %v2400
  %v2457 = vadd.f32 %v2160, %v2403
  %v2458 = vadd.f32 %v2161, %v2405
  %v2459 = vadd.f32 %v2162, %v2408
  %v2460 = vadd.f32 %v2163, %v2410
  %v2461 = vadd.f32 %v2164, %v2413
  %v2462 = vadd.f32 %v2165, %v2415
  %v2463 = vadd.f32 %v2166, %v2418
  %v2464 = vadd.f32 %v2167, %v2420
  %v2465 = vadd.f32 %v2168, %v2423
  %v2466 = vadd.f32 %v2169, %v2425
  %v2467 = vadd.f32 %v2170, %v2428
  %v2468 = vadd.f32 %v2171, %v2430
  %v2469 = vadd.f32 %v2172, %v2433
  %v2470 = vadd.f32 %v2173, %v2435
  %v2471 = vadd.f32 %v2174, %v2438
  %v2472 = vadd.f32 %v2175, %v2440
  %v2473 = vadd.f32 %v2176, %v2443
  %v2474 = vadd.f32 %v2177, %v2445
  %v2475 = vadd.f32 %v2178, %v2448
  %v2476 = vld [vmem:[#allocation2 + $0x8] sm:$0x8]
  %s2477 = scalar_lea.vmem %s5, 512
  %v2478 = vld [vmem:[%s2477] sm:$0xf]
  %v2479 = vld [vmem:[%s2477 + $0x4] sm:$0xf]
  %v2480 = vld [vmem:[%s2477 + $0x8] sm:$0xf]
  %v2481 = vld [vmem:[%s2477 + $0xc] sm:$0xf]
  %v2482 = vld [vmem:[%s2477 + $0x10] sm:$0xf]
  %v2483 = vld [vmem:[%s2477 + $0x14] sm:$0xf]
  %v2484 = vld [vmem:[%s2477 + $0x18] sm:$0xf]
  %v2485 = vld [vmem:[%s2477 + $0x1c] sm:$0xf]
  %v2486 = vld [vmem:[%s2477 + $0x20] sm:$0xf]
  %v2487 = vld [vmem:[%s2477 + $0x24] sm:$0xf]
  %v2488 = vld [vmem:[%s2477 + $0x28] sm:$0xf]
  %v2489 = vld [vmem:[%s2477 + $0x2c] sm:$0xf]
  %v2490 = vld [vmem:[%s2477 + $0x30] sm:$0xf]
  %v2491 = vld [vmem:[%s2477 + $0x34] sm:$0xf]
  %v2492 = vld [vmem:[%s2477 + $0x38] sm:$0xf]
  %v2493 = vld [vmem:[%s2477 + $0x3c] sm:$0xf]
  %v2495 = vunpack.c.l.b16 %v2476
  %v2496 = vpack.c.b16 %v1957, %v2495
  %vm2497 = vcmask 1044480
  %v2498 = vrot.slane %v2496, 3
  %v2499 = vrot.slane %v1983, 3
  %v2500 = vsel %vm2497, %v2498, %v2499
  %v2501 = vrot.slane %v1984, 3
  %v2502 = vsel %vm2497, %v2499, %v2501
  %v2503 = vrot.slane %v1985, 3
  %v2504 = vsel %vm2497, %v2501, %v2503
  %v2505 = vrot.slane %v1986, 3
  %v2506 = vsel %vm2497, %v2503, %v2505
  %v2507 = vrot.slane %v1987, 3
  %v2508 = vsel %vm2497, %v2505, %v2507
  %v2509 = vrot.slane %v1988, 3
  %v2510 = vsel %vm2497, %v2507, %v2509
  %v2511 = vrot.slane %v1989, 3
  %v2512 = vsel %vm2497, %v2509, %v2511
  %v2513 = vrot.slane %v1990, 3
  %v2514 = vsel %vm2497, %v2511, %v2513
  %v2515 = vrot.slane %v1991, 3
  %v2516 = vsel %vm2497, %v2513, %v2515
  %v2517 = vrot.slane %v1992, 3
  %v2518 = vsel %vm2497, %v2515, %v2517
  %v2519 = vrot.slane %v1993, 3
  %v2520 = vsel %vm2497, %v2517, %v2519
  %v2521 = vrot.slane %v2199, 3
  %v2522 = vsel %vm2497, %v2519, %v2521
  %v2552 = vunpack.c.l.b16 %v2478
  %v2553 = vunpack.c.l.b16 %v2479
  %v2554 = vunpack.c.l.b16 %v2480
  %v2555 = vunpack.c.l.b16 %v2481
  %v2556 = vunpack.c.l.b16 %v2482
  %v2557 = vunpack.c.l.b16 %v2483
  %v2558 = vunpack.c.l.b16 %v2484
  %v2559 = vunpack.c.l.b16 %v2485
  %v2560 = vunpack.c.l.b16 %v2486
  %v2561 = vunpack.c.l.b16 %v2487
  %v2562 = vunpack.c.l.b16 %v2488
  %v2563 = vunpack.c.l.b16 %v2489
  %v2564 = vunpack.c.l.b16 %v2490
  %v2565 = vunpack.c.l.b16 %v2491
  %v2566 = vunpack.c.l.b16 %v2492
  %v2567 = vunpack.c.l.b16 %v2493
  %v2568 = vpack.c.b16 %v2553, %v2552
  %v2569 = vpack.c.b16 %v2555, %v2554
  %v2570 = vpack.c.b16 %v2557, %v2556
  %v2571 = vpack.c.b16 %v2559, %v2558
  %v2572 = vpack.c.b16 %v2561, %v2560
  %v2573 = vpack.c.b16 %v2563, %v2562
  %v2574 = vpack.c.b16 %v2565, %v2564
  %v2575 = vpack.c.b16 %v2567, %v2566
  %2584 = vmatpush.bf16.msra.mxu0 %v2575
  %2585 = vmatpush.bf16.msra.mxu0 %v2574
  %2586 = vmatpush.bf16.msra.mxu0 %v2573
  %2587 = vmatpush.bf16.msra.mxu0 %v2572
  %2588 = vmatpush.bf16.msra.mxu0 %v2571
  %2589 = vmatpush.bf16.msra.mxu0 %v2570
  %2590 = vmatpush.bf16.msra.mxu0 %v2569
  %2591 = vmatpush.bf16.msra.mxu0 %v2568
  %2592 = vmatmul.bf16.gmra.mxu0 %v2500
  %v2593 = vpop.f32.mrf.mxu0
  %v2594 = vadd.f32 0.0, %v2593
  %v2595 = vpop.f32.mrf.mxu0
  %v2596 = vadd.f32 0.0, %v2595
  %2597 = vmatmul.bf16.gmra.mxu0 %v2502
  %v2598 = vpop.f32.mrf.mxu0
  %v2599 = vadd.f32 0.0, %v2598
  %v2600 = vpop.f32.mrf.mxu0
  %v2601 = vadd.f32 0.0, %v2600
  %2602 = vmatmul.bf16.gmra.mxu0 %v2504
  %v2603 = vpop.f32.mrf.mxu0
  %v2604 = vadd.f32 0.0, %v2603
  %v2605 = vpop.f32.mrf.mxu0
  %v2606 = vadd.f32 0.0, %v2605
  %2607 = vmatmul.bf16.gmra.mxu0 %v2506
  %v2608 = vpop.f32.mrf.mxu0
  %v2609 = vadd.f32 0.0, %v2608
  %v2610 = vpop.f32.mrf.mxu0
  %v2611 = vadd.f32 0.0, %v2610
  %2612 = vmatmul.bf16.gmra.mxu0 %v2508
  %v2613 = vpop.f32.mrf.mxu0
  %v2614 = vadd.f32 0.0, %v2613
  %v2615 = vpop.f32.mrf.mxu0
  %v2616 = vadd.f32 0.0, %v2615
  %2617 = vmatmul.bf16.gmra.mxu0 %v2510
  %v2618 = vpop.f32.mrf.mxu0
  %v2619 = vadd.f32 0.0, %v2618
  %v2620 = vpop.f32.mrf.mxu0
  %v2621 = vadd.f32 0.0, %v2620
  %2622 = vmatmul.bf16.gmra.mxu0 %v2512
  %v2623 = vpop.f32.mrf.mxu0
  %v2624 = vadd.f32 0.0, %v2623
  %v2625 = vpop.f32.mrf.mxu0
  %v2626 = vadd.f32 0.0, %v2625
  %2627 = vmatmul.bf16.gmra.mxu0 %v2514
  %v2628 = vpop.f32.mrf.mxu0
  %v2629 = vadd.f32 0.0, %v2628
  %v2630 = vpop.f32.mrf.mxu0
  %v2631 = vadd.f32 0.0, %v2630
  %2632 = vmatmul.bf16.gmra.mxu0 %v2516
  %v2633 = vpop.f32.mrf.mxu0
  %v2634 = vadd.f32 0.0, %v2633
  %v2635 = vpop.f32.mrf.mxu0
  %v2636 = vadd.f32 0.0, %v2635
  %2637 = vmatmul.bf16.gmra.mxu0 %v2518
  %v2638 = vpop.f32.mrf.mxu0
  %v2639 = vadd.f32 0.0, %v2638
  %v2640 = vpop.f32.mrf.mxu0
  %v2641 = vadd.f32 0.0, %v2640
  %2642 = vmatmul.bf16.gmra.mxu0 %v2520
  %v2643 = vpop.f32.mrf.mxu0
  %v2644 = vadd.f32 0.0, %v2643
  %v2645 = vpop.f32.mrf.mxu0
  %v2646 = vadd.f32 0.0, %v2645
  %2647 = vmatmul.bf16.gmra.mxu0 %v2522
  %v2648 = vpop.f32.mrf.mxu0
  %v2649 = vadd.f32 0.0, %v2648
  %v2650 = vpop.f32.mrf.mxu0
  %v2651 = vadd.f32 0.0, %v2650
  %2652 = vmatmul.bf16.gmra.mxu0 %v2521
  %v2653 = vpop.f32.mrf.mxu0
  %v2654 = vadd.f32 0.0, %v2653
  %v2655 = vpop.f32.mrf.mxu0
  %2656 = vdwg.mxu0
  %v2657 = vadd.f32 %v2451, %v2594
  %v2658 = vadd.f32 %v2452, %v2596
  %v2659 = vadd.f32 %v2453, %v2599
  %v2660 = vadd.f32 %v2454, %v2601
  %v2661 = vadd.f32 %v2455, %v2604
  %v2662 = vadd.f32 %v2456, %v2606
  %v2663 = vadd.f32 %v2457, %v2609
  %v2664 = vadd.f32 %v2458, %v2611
  %v2665 = vadd.f32 %v2459, %v2614
  %v2666 = vadd.f32 %v2460, %v2616
  %v2667 = vadd.f32 %v2461, %v2619
  %v2668 = vadd.f32 %v2462, %v2621
  %v2669 = vadd.f32 %v2463, %v2624
  %v2670 = vadd.f32 %v2464, %v2626
  %v2671 = vadd.f32 %v2465, %v2629
  %v2672 = vadd.f32 %v2466, %v2631
  %v2673 = vadd.f32 %v2467, %v2634
  %v2674 = vadd.f32 %v2468, %v2636
  %v2675 = vadd.f32 %v2469, %v2639
  %v2676 = vadd.f32 %v2470, %v2641
  %v2677 = vadd.f32 %v2471, %v2644
  %v2678 = vadd.f32 %v2472, %v2646
  %v2679 = vadd.f32 %v2473, %v2649
  %v2680 = vadd.f32 %v2474, %v2651
  %v2681 = vadd.f32 %v2475, %v2654
  %v2682 = vld [vmem:[%s6] sm:$0x1]
  %v2683 = vld [vmem:[%s7] sm:$0x1]
  %2685 = vset.pattern.permute.xlu0 0
  %2686 = vperm.xlu0 %2685, %v42
  %v2687 = vpop.permute.xlu0 %2686
  %2690 = vset.pattern.permute.xlu0 0
  %2691 = vperm.xlu0 %2690, %v43
  %v2692 = vpop.permute.xlu0 %2691
  %2695 = vset.pattern.permute.xlu0 0
  %2696 = vperm.xlu0 %2695, %v44
  %v2697 = vpop.permute.xlu0 %2696
  %2700 = vset.pattern.permute.xlu0 0
  %2701 = vperm.xlu0 %2700, %v45
  %v2702 = vpop.permute.xlu0 %2701
  %2705 = vset.pattern.permute.xlu0 0
  %2706 = vperm.xlu0 %2705, %v46
  %v2707 = vpop.permute.xlu0 %2706
  %2710 = vset.pattern.permute.xlu0 0
  %2711 = vperm.xlu0 %2710, %v47
  %v2712 = vpop.permute.xlu0 %2711
  %2715 = vset.pattern.permute.xlu0 0
  %2716 = vperm.xlu0 %2715, %v48
  %v2717 = vpop.permute.xlu0 %2716
  %2720 = vset.pattern.permute.xlu0 0
  %2721 = vperm.xlu0 %2720, %v49
  %v2722 = vpop.permute.xlu0 %2721
  %2725 = vset.pattern.permute.xlu0 0
  %2726 = vperm.xlu0 %2725, %v50
  %v2727 = vpop.permute.xlu0 %2726
  %2730 = vset.pattern.permute.xlu0 0
  %2731 = vperm.xlu0 %2730, %v51
  %v2732 = vpop.permute.xlu0 %2731
  %2735 = vset.pattern.permute.xlu0 0
  %2736 = vperm.xlu0 %2735, %v52
  %v2737 = vpop.permute.xlu0 %2736
  %2740 = vset.pattern.permute.xlu0 0
  %2741 = vperm.xlu0 %2740, %v53
  %v2742 = vpop.permute.xlu0 %2741
  %2745 = vset.pattern.permute.xlu0 0
  %2746 = vperm.xlu0 %2745, %v54
  %v2747 = vpop.permute.xlu0 %2746
  %2750 = vset.pattern.permute.xlu0 0
  %2751 = vperm.xlu0 %2750, %v55
  %v2752 = vpop.permute.xlu0 %2751
  %2755 = vset.pattern.permute.xlu0 0
  %2756 = vperm.xlu0 %2755, %v56
  %v2757 = vpop.permute.xlu0 %2756
  %2760 = vset.pattern.permute.xlu0 0
  %2761 = vperm.xlu0 %2760, %v57
  %v2762 = vpop.permute.xlu0 %2761
  %2765 = vset.pattern.permute.xlu0 0
  %2766 = vperm.xlu0 %2765, %v58
  %v2767 = vpop.permute.xlu0 %2766
  %2770 = vset.pattern.permute.xlu0 0
  %2771 = vperm.xlu0 %2770, %v59
  %v2772 = vpop.permute.xlu0 %2771
  %2775 = vset.pattern.permute.xlu0 0
  %2776 = vperm.xlu0 %2775, %v60
  %v2777 = vpop.permute.xlu0 %2776
  %2780 = vset.pattern.permute.xlu0 0
  %2781 = vperm.xlu0 %2780, %v61
  %v2782 = vpop.permute.xlu0 %2781
  %2785 = vset.pattern.permute.xlu0 0
  %2786 = vperm.xlu0 %2785, %v62
  %v2787 = vpop.permute.xlu0 %2786
  %2790 = vset.pattern.permute.xlu0 0
  %2791 = vperm.xlu0 %2790, %v63
  %v2792 = vpop.permute.xlu0 %2791
  %2795 = vset.pattern.permute.xlu0 0
  %2796 = vperm.xlu0 %2795, %v64
  %v2797 = vpop.permute.xlu0 %2796
  %2800 = vset.pattern.permute.xlu0 0
  %2801 = vperm.xlu0 %2800, %v65
  %v2802 = vpop.permute.xlu0 %2801
  %2805 = vset.pattern.permute.xlu0 0
  %2806 = vperm.xlu0 %2805, %v66
  %v2807 = vpop.permute.xlu0 %2806
  %v2809 = vmul.f32 %v2657, %v2687
  %v2810 = vmul.f32 %v2658, %v2692
  %v2811 = vmul.f32 %v2659, %v2697
  %v2812 = vmul.f32 %v2660, %v2702
  %v2813 = vmul.f32 %v2661, %v2707
  %v2814 = vmul.f32 %v2662, %v2712
  %v2815 = vmul.f32 %v2663, %v2717
  %v2816 = vmul.f32 %v2664, %v2722
  %v2817 = vmul.f32 %v2665, %v2727
  %v2818 = vmul.f32 %v2666, %v2732
  %v2819 = vmul.f32 %v2667, %v2737
  %v2820 = vmul.f32 %v2668, %v2742
  %v2821 = vmul.f32 %v2669, %v2747
  %v2822 = vmul.f32 %v2670, %v2752
  %v2823 = vmul.f32 %v2671, %v2757
  %v2824 = vmul.f32 %v2672, %v2762
  %v2825 = vmul.f32 %v2673, %v2767
  %v2826 = vmul.f32 %v2674, %v2772
  %v2827 = vmul.f32 %v2675, %v2777
  %v2828 = vmul.f32 %v2676, %v2782
  %v2829 = vmul.f32 %v2677, %v2787
  %v2830 = vmul.f32 %v2678, %v2792
  %v2831 = vmul.f32 %v2679, %v2797
  %v2832 = vmul.f32 %v2680, %v2802
  %v2833 = vmul.f32 %v2681, %v2807
  %v2834 = vadd.f32 %v2809, %v2810
  %v2835 = vadd.f32 %v2834, %v2811
  %v2836 = vadd.f32 %v2835, %v2812
  %v2837 = vadd.f32 %v2836, %v2813
  %v2838 = vadd.f32 %v2837, %v2814
  %v2839 = vadd.f32 %v2838, %v2815
  %v2840 = vadd.f32 %v2839, %v2816
  %v2841 = vadd.f32 %v2840, %v2817
  %v2842 = vadd.f32 %v2841, %v2818
  %v2843 = vadd.f32 %v2842, %v2819
  %v2844 = vadd.f32 %v2843, %v2820
  %v2845 = vadd.f32 %v2844, %v2821
  %v2846 = vadd.f32 %v2845, %v2822
  %v2847 = vadd.f32 %v2846, %v2823
  %v2848 = vadd.f32 %v2847, %v2824
  %v2849 = vadd.f32 %v2848, %v2825
  %v2850 = vadd.f32 %v2849, %v2826
  %v2851 = vadd.f32 %v2850, %v2827
  %v2852 = vadd.f32 %v2851, %v2828
  %v2853 = vadd.f32 %v2852, %v2829
  %v2854 = vadd.f32 %v2853, %v2830
  %v2855 = vadd.f32 %v2854, %v2831
  %v2856 = vadd.f32 %v2855, %v2832
  %v2857 = vadd.f32 %v2856, %v2833
  %v2858 = vrot.slane %v2857, 4
  %v2859 = vadd.f32 %v2857, %v2858
  %v2860 = vrot.slane %v2859, 2
  %v2861 = vadd.f32 %v2859, %v2860
  %v2862 = vrot.slane %v2861, 1
  %v2863 = vadd.f32 %v2861, %v2862
  %v2864 = vrcp.pop 128.0
  %v2865 = vmul.f32 128.0, %v2864
  %v2866 = vsub.f32 1.0, %v2865
  %v2867 = vmul.f32 %v2864, %v2866
  %v2868 = vadd.f32 %v2864, %v2867
  %vm2869 = vweird.f32 %v2864
  %v2870 = vsel %vm2869, %v2864, %v2868
  %v2871 = vmul.f32 %v2863, %v2870
  %v2872 = vsub.f32 %v2657, %v2871
  %v2873 = vsub.f32 %v2658, %v2871
  %v2874 = vsub.f32 %v2659, %v2871
  %v2875 = vsub.f32 %v2660, %v2871
  %v2876 = vsub.f32 %v2661, %v2871
  %v2877 = vsub.f32 %v2662, %v2871
  %v2878 = vsub.f32 %v2663, %v2871
  %v2879 = vsub.f32 %v2664, %v2871
  %v2880 = vsub.f32 %v2665, %v2871
  %v2881 = vsub.f32 %v2666, %v2871
  %v2882 = vsub.f32 %v2667, %v2871
  %v2883 = vsub.f32 %v2668, %v2871
  %v2884 = vsub.f32 %v2669, %v2871
  %v2885 = vsub.f32 %v2670, %v2871
  %v2886 = vsub.f32 %v2671, %v2871
  %v2887 = vsub.f32 %v2672, %v2871
  %v2888 = vsub.f32 %v2673, %v2871
  %v2889 = vsub.f32 %v2674, %v2871
  %v2890 = vsub.f32 %v2675, %v2871
  %v2891 = vsub.f32 %v2676, %v2871
  %v2892 = vsub.f32 %v2677, %v2871
  %v2893 = vsub.f32 %v2678, %v2871
  %v2894 = vsub.f32 %v2679, %v2871
  %v2895 = vsub.f32 %v2680, %v2871
  %v2896 = vsub.f32 %v2681, %v2871
  %v2897 = vmul.f32 %v2872, %v2687
  %v2898 = vmul.f32 %v2873, %v2692
  %v2899 = vmul.f32 %v2874, %v2697
  %v2900 = vmul.f32 %v2875, %v2702
  %v2901 = vmul.f32 %v2876, %v2707
  %v2902 = vmul.f32 %v2877, %v2712
  %v2903 = vmul.f32 %v2878, %v2717
  %v2904 = vmul.f32 %v2879, %v2722
  %v2905 = vmul.f32 %v2880, %v2727
  %v2906 = vmul.f32 %v2881, %v2732
  %v2907 = vmul.f32 %v2882, %v2737
  %v2908 = vmul.f32 %v2883, %v2742
  %v2909 = vmul.f32 %v2884, %v2747
  %v2910 = vmul.f32 %v2885, %v2752
  %v2911 = vmul.f32 %v2886, %v2757
  %v2912 = vmul.f32 %v2887, %v2762
  %v2913 = vmul.f32 %v2888, %v2767
  %v2914 = vmul.f32 %v2889, %v2772
  %v2915 = vmul.f32 %v2890, %v2777
  %v2916 = vmul.f32 %v2891, %v2782
  %v2917 = vmul.f32 %v2892, %v2787
  %v2918 = vmul.f32 %v2893, %v2792
  %v2919 = vmul.f32 %v2894, %v2797
  %v2920 = vmul.f32 %v2895, %v2802
  %v2921 = vmul.f32 %v2896, %v2807
  %v2922 = vmul.f32 %v2897, %v2897
  %v2923 = vmul.f32 %v2898, %v2898
  %v2924 = vmul.f32 %v2899, %v2899
  %v2925 = vmul.f32 %v2900, %v2900
  %v2926 = vmul.f32 %v2901, %v2901
  %v2927 = vmul.f32 %v2902, %v2902
  %v2928 = vmul.f32 %v2903, %v2903
  %v2929 = vmul.f32 %v2904, %v2904
  %v2930 = vmul.f32 %v2905, %v2905
  %v2931 = vmul.f32 %v2906, %v2906
  %v2932 = vmul.f32 %v2907, %v2907
  %v2933 = vmul.f32 %v2908, %v2908
  %v2934 = vmul.f32 %v2909, %v2909
  %v2935 = vmul.f32 %v2910, %v2910
  %v2936 = vmul.f32 %v2911, %v2911
  %v2937 = vmul.f32 %v2912, %v2912
  %v2938 = vmul.f32 %v2913, %v2913
  %v2939 = vmul.f32 %v2914, %v2914
  %v2940 = vmul.f32 %v2915, %v2915
  %v2941 = vmul.f32 %v2916, %v2916
  %v2942 = vmul.f32 %v2917, %v2917
  %v2943 = vmul.f32 %v2918, %v2918
  %v2944 = vmul.f32 %v2919, %v2919
  %v2945 = vmul.f32 %v2920, %v2920
  %v2946 = vmul.f32 %v2921, %v2921
  %v2947 = vadd.f32 %v2922, %v2923
  %v2948 = vadd.f32 %v2947, %v2924
  %v2949 = vadd.f32 %v2948, %v2925
  %v2950 = vadd.f32 %v2949, %v2926
  %v2951 = vadd.f32 %v2950, %v2927
  %v2952 = vadd.f32 %v2951, %v2928
  %v2953 = vadd.f32 %v2952, %v2929
  %v2954 = vadd.f32 %v2953, %v2930
  %v2955 = vadd.f32 %v2954, %v2931
  %v2956 = vadd.f32 %v2955, %v2932
  %v2957 = vadd.f32 %v2956, %v2933
  %v2958 = vadd.f32 %v2957, %v2934
  %v2959 = vadd.f32 %v2958, %v2935
  %v2960 = vadd.f32 %v2959, %v2936
  %v2961 = vadd.f32 %v2960, %v2937
  %v2962 = vadd.f32 %v2961, %v2938
  %v2963 = vadd.f32 %v2962, %v2939
  %v2964 = vadd.f32 %v2963, %v2940
  %v2965 = vadd.f32 %v2964, %v2941
  %v2966 = vadd.f32 %v2965, %v2942
  %v2967 = vadd.f32 %v2966, %v2943
  %v2968 = vadd.f32 %v2967, %v2944
  %v2969 = vadd.f32 %v2968, %v2945
  %v2970 = vadd.f32 %v2969, %v2946
  %v2971 = vrot.slane %v2970, 4
  %v2972 = vadd.f32 %v2970, %v2971
  %v2973 = vrot.slane %v2972, 2
  %v2974 = vadd.f32 %v2972, %v2973
  %v2975 = vrot.slane %v2974, 1
  %v2976 = vadd.f32 %v2974, %v2975
  %v2977 = vmul.f32 %v2976, %v2870
  %v2978 = vadd.f32 %v2977, 1e-05
  %v2979 = vrsqrt.pop %v2978
  %v2980 = vmul.f32 %v2979, %v2978
  %v2981 = vmul.f32 %v2980, %v2979
  %v2982 = vmul.f32 0.5, %v2981
  %v2983 = vsub.f32 1.5, %v2982
  %v2984 = vmul.f32 %v2979, %v2983
  %vm2985 = vweird.f32 %v2978
  %vm2986 = vweird.f32 %v2979
  %vm2987 = vmor %vm2985, %vm2986
  %v2988 = vsel %vm2987, %v2979, %v2984
  %v2989 = vmul.f32 %v2872, %v2988
  %v2990 = vmul.f32 %v2873, %v2988
  %v2991 = vmul.f32 %v2874, %v2988
  %v2992 = vmul.f32 %v2875, %v2988
  %v2993 = vmul.f32 %v2876, %v2988
  %v2994 = vmul.f32 %v2877, %v2988
  %v2995 = vmul.f32 %v2878, %v2988
  %v2996 = vmul.f32 %v2879, %v2988
  %v2997 = vmul.f32 %v2880, %v2988
  %v2998 = vmul.f32 %v2881, %v2988
  %v2999 = vmul.f32 %v2882, %v2988
  %v3000 = vmul.f32 %v2883, %v2988
  %v3001 = vmul.f32 %v2884, %v2988
  %v3002 = vmul.f32 %v2885, %v2988
  %v3003 = vmul.f32 %v2886, %v2988
  %v3004 = vmul.f32 %v2887, %v2988
  %v3005 = vmul.f32 %v2888, %v2988
  %v3006 = vmul.f32 %v2889, %v2988
  %v3007 = vmul.f32 %v2890, %v2988
  %v3008 = vmul.f32 %v2891, %v2988
  %v3009 = vmul.f32 %v2892, %v2988
  %v3010 = vmul.f32 %v2893, %v2988
  %v3011 = vmul.f32 %v2894, %v2988
  %v3012 = vmul.f32 %v2895, %v2988
  %v3013 = vmul.f32 %v2896, %v2988
  %v3015 = vperm.slane %v2682, 0
  %v3017 = vmul.f32 %v2989, %v3015
  %v3018 = vmul.f32 %v2990, %v3015
  %v3019 = vmul.f32 %v2991, %v3015
  %v3020 = vmul.f32 %v2992, %v3015
  %v3021 = vmul.f32 %v2993, %v3015
  %v3022 = vmul.f32 %v2994, %v3015
  %v3023 = vmul.f32 %v2995, %v3015
  %v3024 = vmul.f32 %v2996, %v3015
  %v3025 = vmul.f32 %v2997, %v3015
  %v3026 = vmul.f32 %v2998, %v3015
  %v3027 = vmul.f32 %v2999, %v3015
  %v3028 = vmul.f32 %v3000, %v3015
  %v3029 = vmul.f32 %v3001, %v3015
  %v3030 = vmul.f32 %v3002, %v3015
  %v3031 = vmul.f32 %v3003, %v3015
  %v3032 = vmul.f32 %v3004, %v3015
  %v3033 = vmul.f32 %v3005, %v3015
  %v3034 = vmul.f32 %v3006, %v3015
  %v3035 = vmul.f32 %v3007, %v3015
  %v3036 = vmul.f32 %v3008, %v3015
  %v3037 = vmul.f32 %v3009, %v3015
  %v3038 = vmul.f32 %v3010, %v3015
  %v3039 = vmul.f32 %v3011, %v3015
  %v3040 = vmul.f32 %v3012, %v3015
  %v3041 = vmul.f32 %v3013, %v3015
  %v3043 = vperm.slane %v2683, 0
  %v3045 = vadd.f32 %v3017, %v3043
  %v3046 = vadd.f32 %v3018, %v3043
  %v3047 = vadd.f32 %v3019, %v3043
  %v3048 = vadd.f32 %v3020, %v3043
  %v3049 = vadd.f32 %v3021, %v3043
  %v3050 = vadd.f32 %v3022, %v3043
  %v3051 = vadd.f32 %v3023, %v3043
  %v3052 = vadd.f32 %v3024, %v3043
  %v3053 = vadd.f32 %v3025, %v3043
  %v3054 = vadd.f32 %v3026, %v3043
  %v3055 = vadd.f32 %v3027, %v3043
  %v3056 = vadd.f32 %v3028, %v3043
  %v3057 = vadd.f32 %v3029, %v3043
  %v3058 = vadd.f32 %v3030, %v3043
  %v3059 = vadd.f32 %v3031, %v3043
  %v3060 = vadd.f32 %v3032, %v3043
  %v3061 = vadd.f32 %v3033, %v3043
  %v3062 = vadd.f32 %v3034, %v3043
  %v3063 = vadd.f32 %v3035, %v3043
  %v3064 = vadd.f32 %v3036, %v3043
  %v3065 = vadd.f32 %v3037, %v3043
  %v3066 = vadd.f32 %v3038, %v3043
  %v3067 = vadd.f32 %v3039, %v3043
  %v3068 = vadd.f32 %v3040, %v3043
  %v3069 = vadd.f32 %v3041, %v3043
  %v3070 = vmax.f32 %v3045, 0.0
  %v3071 = vmax.f32 %v3046, 0.0
  %v3072 = vmax.f32 %v3047, 0.0
  %v3073 = vmax.f32 %v3048, 0.0
  %v3074 = vmax.f32 %v3049, 0.0
  %v3075 = vmax.f32 %v3050, 0.0
  %v3076 = vmax.f32 %v3051, 0.0
  %v3077 = vmax.f32 %v3052, 0.0
  %v3078 = vmax.f32 %v3053, 0.0
  %v3079 = vmax.f32 %v3054, 0.0
  %v3080 = vmax.f32 %v3055, 0.0
  %v3081 = vmax.f32 %v3056, 0.0
  %v3082 = vmax.f32 %v3057, 0.0
  %v3083 = vmax.f32 %v3058, 0.0
  %v3084 = vmax.f32 %v3059, 0.0
  %v3085 = vmax.f32 %v3060, 0.0
  %v3086 = vmax.f32 %v3061, 0.0
  %v3087 = vmax.f32 %v3062, 0.0
  %v3088 = vmax.f32 %v3063, 0.0
  %v3089 = vmax.f32 %v3064, 0.0
  %v3090 = vmax.f32 %v3065, 0.0
  %v3091 = vmax.f32 %v3066, 0.0
  %v3092 = vmax.f32 %v3067, 0.0
  %v3093 = vmax.f32 %v3068, 0.0
  %v3094 = vmax.f32 %v3069, 0.0
  %v3095 = vmul.f32 %v3070, %v2687
  %v3096 = vmul.f32 %v3071, %v2692
  %v3097 = vmul.f32 %v3072, %v2697
  %v3098 = vmul.f32 %v3073, %v2702
  %v3099 = vmul.f32 %v3074, %v2707
  %v3100 = vmul.f32 %v3075, %v2712
  %v3101 = vmul.f32 %v3076, %v2717
  %v3102 = vmul.f32 %v3077, %v2722
  %v3103 = vmul.f32 %v3078, %v2727
  %v3104 = vmul.f32 %v3079, %v2732
  %v3105 = vmul.f32 %v3080, %v2737
  %v3106 = vmul.f32 %v3081, %v2742
  %v3107 = vmul.f32 %v3082, %v2747
  %v3108 = vmul.f32 %v3083, %v2752
  %v3109 = vmul.f32 %v3084, %v2757
  %v3110 = vmul.f32 %v3085, %v2762
  %v3111 = vmul.f32 %v3086, %v2767
  %v3112 = vmul.f32 %v3087, %v2772
  %v3113 = vmul.f32 %v3088, %v2777
  %v3114 = vmul.f32 %v3089, %v2782
  %v3115 = vmul.f32 %v3090, %v2787
  %v3116 = vmul.f32 %v3091, %v2792
  %v3117 = vmul.f32 %v3092, %v2797
  %v3118 = vmul.f32 %v3093, %v2802
  %v3119 = vmul.f32 %v3094, %v2807
  %3120 = vst [vmem:[#allocation3] sm:$0xf] 0
  %vm3121 = vsmask.f32 1280
  %vm3122 = vmand %vm318, %vm3121
  %v3123 = vld [vmem:[#allocation3 + $0x4] sm:$0x3]
  %v3124 = vsel %vm3122, 0, %v3123
  %3125 = vst [vmem:[#allocation3 + $0x4] sm:$0x3] %v3124
  %vm3126 = vcmask 1043457
  %vm3127 = vsmask.f32 7942
  %vm3128 = vmand %vm3126, %vm3127
  %v3129 = vld [vmem:[#allocation3 + $0x68] sm:$0xe]
  %v3130 = vsel %vm3128, 0, %v3129
  %3131 = vst [vmem:[#allocation3 + $0x68] sm:$0xe] %v3130
  %3132 = vst [vmem:[#allocation3 + $0x6c] sm:$0xf] 0
  %3133 = vst [vmem:[#allocation3 + $0x70] sm:$0xf] 0
  %3134 = vst [vmem:[#allocation3 + $0x74] sm:$0xf] 0
  %v3135 = vpack.c.bf16 %v3095, %v3095
  %v3136 = vpack.c.bf16 %v3096, %v3096
  %v3137 = vpack.c.bf16 %v3097, %v3097
  %v3138 = vpack.c.bf16 %v3098, %v3098
  %v3139 = vpack.c.bf16 %v3099, %v3099
  %v3140 = vpack.c.bf16 %v3100, %v3100
  %v3141 = vpack.c.bf16 %v3101, %v3101
  %v3142 = vpack.c.bf16 %v3102, %v3102
  %v3143 = vpack.c.bf16 %v3103, %v3103
  %v3144 = vpack.c.bf16 %v3104, %v3104
  %v3145 = vpack.c.bf16 %v3105, %v3105
  %v3146 = vpack.c.bf16 %v3106, %v3106
  %v3147 = vpack.c.bf16 %v3107, %v3107
  %v3148 = vpack.c.bf16 %v3108, %v3108
  %v3149 = vpack.c.bf16 %v3109, %v3109
  %v3150 = vpack.c.bf16 %v3110, %v3110
  %v3151 = vpack.c.bf16 %v3111, %v3111
  %v3152 = vpack.c.bf16 %v3112, %v3112
  %v3153 = vpack.c.bf16 %v3113, %v3113
  %v3154 = vpack.c.bf16 %v3114, %v3114
  %v3155 = vpack.c.bf16 %v3115, %v3115
  %v3156 = vpack.c.bf16 %v3116, %v3116
  %v3157 = vpack.c.bf16 %v3117, %v3117
  %v3158 = vpack.c.bf16 %v3118, %v3118
  %v3159 = vpack.c.bf16 %v3119, %v3119
  %vm3160 = vsmask.f32 5392
  %vm3161 = vmor %vm3121, %vm3160
  %v3163 = vshrl.u32 %v3135, 16
  %v3165 = vrot.slane %v3163, 6
  %v3166 = vshll.u32 %v3135, 16
  %v3168 = vrot.slane %v3166, 7
  %v3169 = vor.u32 %v3165, %v3168
  %v3170 = vrot.slane %v3169, 4
  %v3172 = vshrl.u32 %v3136, 16
  %v3174 = vrot.slane %v3172, 6
  %v3175 = vshll.u32 %v3136, 16
  %v3177 = vrot.slane %v3175, 7
  %v3178 = vor.u32 %v3174, %v3177
  %v3179 = vsel %vm3161, %v3170, %v3178
  %v3180 = vrot.slane %v3178, 4
  %v3182 = vshrl.u32 %v3137, 16
  %v3184 = vrot.slane %v3182, 6
  %v3185 = vshll.u32 %v3137, 16
  %v3187 = vrot.slane %v3185, 7
  %v3188 = vor.u32 %v3184, %v3187
  %v3189 = vsel %vm3161, %v3180, %v3188
  %v3190 = vrot.slane %v3188, 4
  %v3192 = vshrl.u32 %v3138, 16
  %v3194 = vrot.slane %v3192, 6
  %v3195 = vshll.u32 %v3138, 16
  %v3197 = vrot.slane %v3195, 7
  %v3198 = vor.u32 %v3194, %v3197
  %v3199 = vsel %vm3161, %v3190, %v3198
  %v3200 = vrot.slane %v3198, 4
  %v3202 = vshrl.u32 %v3139, 16
  %v3204 = vrot.slane %v3202, 6
  %v3205 = vshll.u32 %v3139, 16
  %v3207 = vrot.slane %v3205, 7
  %v3208 = vor.u32 %v3204, %v3207
  %v3209 = vsel %vm3161, %v3200, %v3208
  %v3210 = vrot.slane %v3208, 4
  %v3212 = vshrl.u32 %v3140, 16
  %v3214 = vrot.slane %v3212, 6
  %v3215 = vshll.u32 %v3140, 16
  %v3217 = vrot.slane %v3215, 7
  %v3218 = vor.u32 %v3214, %v3217
  %v3219 = vsel %vm3161, %v3210, %v3218
  %v3220 = vrot.slane %v3218, 4
  %v3222 = vshrl.u32 %v3141, 16
  %v3224 = vrot.slane %v3222, 6
  %v3225 = vshll.u32 %v3141, 16
  %v3227 = vrot.slane %v3225, 7
  %v3228 = vor.u32 %v3224, %v3227
  %v3229 = vsel %vm3161, %v3220, %v3228
  %v3230 = vrot.slane %v3228, 4
  %v3232 = vshrl.u32 %v3142, 16
  %v3234 = vrot.slane %v3232, 6
  %v3235 = vshll.u32 %v3142, 16
  %v3237 = vrot.slane %v3235, 7
  %v3238 = vor.u32 %v3234, %v3237
  %v3239 = vsel %vm3161, %v3230, %v3238
  %v3240 = vrot.slane %v3238, 4
  %v3242 = vshrl.u32 %v3143, 16
  %v3244 = vrot.slane %v3242, 6
  %v3245 = vshll.u32 %v3143, 16
  %v3247 = vrot.slane %v3245, 7
  %v3248 = vor.u32 %v3244, %v3247
  %v3249 = vsel %vm3161, %v3240, %v3248
  %v3250 = vrot.slane %v3248, 4
  %v3252 = vshrl.u32 %v3144, 16
  %v3254 = vrot.slane %v3252, 6
  %v3255 = vshll.u32 %v3144, 16
  %v3257 = vrot.slane %v3255, 7
  %v3258 = vor.u32 %v3254, %v3257
  %v3259 = vsel %vm3161, %v3250, %v3258
  %v3260 = vrot.slane %v3258, 4
  %v3262 = vshrl.u32 %v3145, 16
  %v3264 = vrot.slane %v3262, 6
  %v3265 = vshll.u32 %v3145, 16
  %v3267 = vrot.slane %v3265, 7
  %v3268 = vor.u32 %v3264, %v3267
  %v3269 = vsel %vm3161, %v3260, %v3268
  %v3270 = vrot.slane %v3268, 4
  %v3272 = vshrl.u32 %v3146, 16
  %v3274 = vrot.slane %v3272, 6
  %v3275 = vshll.u32 %v3146, 16
  %v3277 = vrot.slane %v3275, 7
  %v3278 = vor.u32 %v3274, %v3277
  %v3279 = vsel %vm3161, %v3270, %v3278
  %v3280 = vrot.slane %v3278, 4
  %v3282 = vshrl.u32 %v3147, 16
  %v3284 = vrot.slane %v3282, 6
  %v3285 = vshll.u32 %v3147, 16
  %v3287 = vrot.slane %v3285, 7
  %v3288 = vor.u32 %v3284, %v3287
  %v3289 = vsel %vm3161, %v3280, %v3288
  %v3290 = vrot.slane %v3288, 4
  %v3292 = vshrl.u32 %v3148, 16
  %v3294 = vrot.slane %v3292, 6
  %v3295 = vshll.u32 %v3148, 16
  %v3297 = vrot.slane %v3295, 7
  %v3298 = vor.u32 %v3294, %v3297
  %v3299 = vsel %vm3161, %v3290, %v3298
  %v3300 = vrot.slane %v3298, 4
  %v3302 = vshrl.u32 %v3149, 16
  %v3304 = vrot.slane %v3302, 6
  %v3305 = vshll.u32 %v3149, 16
  %v3307 = vrot.slane %v3305, 7
  %v3308 = vor.u32 %v3304, %v3307
  %v3309 = vsel %vm3161, %v3300, %v3308
  %v3310 = vrot.slane %v3308, 4
  %v3312 = vshrl.u32 %v3150, 16
  %v3314 = vrot.slane %v3312, 6
  %v3315 = vshll.u32 %v3150, 16
  %v3317 = vrot.slane %v3315, 7
  %v3318 = vor.u32 %v3314, %v3317
  %v3319 = vsel %vm3161, %v3310, %v3318
  %v3320 = vrot.slane %v3318, 4
  %v3322 = vshrl.u32 %v3151, 16
  %v3324 = vrot.slane %v3322, 6
  %v3325 = vshll.u32 %v3151, 16
  %v3327 = vrot.slane %v3325, 7
  %v3328 = vor.u32 %v3324, %v3327
  %v3329 = vsel %vm3161, %v3320, %v3328
  %v3330 = vrot.slane %v3328, 4
  %v3332 = vshrl.u32 %v3152, 16
  %v3334 = vrot.slane %v3332, 6
  %v3335 = vshll.u32 %v3152, 16
  %v3337 = vrot.slane %v3335, 7
  %v3338 = vor.u32 %v3334, %v3337
  %v3339 = vsel %vm3161, %v3330, %v3338
  %v3340 = vrot.slane %v3338, 4
  %v3342 = vshrl.u32 %v3153, 16
  %v3344 = vrot.slane %v3342, 6
  %v3345 = vshll.u32 %v3153, 16
  %v3347 = vrot.slane %v3345, 7
  %v3348 = vor.u32 %v3344, %v3347
  %v3349 = vsel %vm3161, %v3340, %v3348
  %v3350 = vrot.slane %v3348, 4
  %v3352 = vshrl.u32 %v3154, 16
  %v3354 = vrot.slane %v3352, 6
  %v3355 = vshll.u32 %v3154, 16
  %v3357 = vrot.slane %v3355, 7
  %v3358 = vor.u32 %v3354, %v3357
  %v3359 = vsel %vm3161, %v3350, %v3358
  %v3360 = vrot.slane %v3358, 4
  %v3362 = vshrl.u32 %v3155, 16
  %v3364 = vrot.slane %v3362, 6
  %v3365 = vshll.u32 %v3155, 16
  %v3367 = vrot.slane %v3365, 7
  %v3368 = vor.u32 %v3364, %v3367
  %v3369 = vsel %vm3161, %v3360, %v3368
  %v3370 = vrot.slane %v3368, 4
  %v3372 = vshrl.u32 %v3156, 16
  %v3374 = vrot.slane %v3372, 6
  %v3375 = vshll.u32 %v3156, 16
  %v3377 = vrot.slane %v3375, 7
  %v3378 = vor.u32 %v3374, %v3377
  %v3379 = vsel %vm3161, %v3370, %v3378
  %v3380 = vrot.slane %v3378, 4
  %v3382 = vshrl.u32 %v3157, 16
  %v3384 = vrot.slane %v3382, 6
  %v3385 = vshll.u32 %v3157, 16
  %v3387 = vrot.slane %v3385, 7
  %v3388 = vor.u32 %v3384, %v3387
  %v3389 = vsel %vm3161, %v3380, %v3388
  %v3390 = vrot.slane %v3388, 4
  %v3392 = vshrl.u32 %v3158, 16
  %v3394 = vrot.slane %v3392, 6
  %v3395 = vshll.u32 %v3158, 16
  %v3397 = vrot.slane %v3395, 7
  %v3398 = vor.u32 %v3394, %v3397
  %v3399 = vsel %vm3161, %v3390, %v3398
  %v3400 = vrot.slane %v3398, 4
  %v3402 = vshrl.u32 %v3159, 16
  %v3404 = vrot.slane %v3402, 6
  %v3405 = vshll.u32 %v3159, 16
  %v3407 = vrot.slane %v3405, 7
  %v3408 = vor.u32 %v3404, %v3407
  %v3409 = vsel %vm3161, %v3400, %v3408
  %v3410 = vrot.slane %v3408, 4
  %v3437 = vld [vmem:[#allocation3 + $0x4] sm:$0xe]
  %v3438 = vsel %vm3128, %v3169, %v3437
  %3439 = vst [vmem:[#allocation3 + $0x4] sm:$0xe] %v3438
  %3440 = vst [vmem:[#allocation3 + $0x8] sm:$0xf] %v3179
  %3441 = vst [vmem:[#allocation3 + $0xc] sm:$0xf] %v3189
  %3442 = vst [vmem:[#allocation3 + $0x10] sm:$0xf] %v3199
  %3443 = vst [vmem:[#allocation3 + $0x14] sm:$0xf] %v3209
  %3444 = vst [vmem:[#allocation3 + $0x18] sm:$0xf] %v3219
  %3445 = vst [vmem:[#allocation3 + $0x1c] sm:$0xf] %v3229
  %3446 = vst [vmem:[#allocation3 + $0x20] sm:$0xf] %v3239
  %3447 = vst [vmem:[#allocation3 + $0x24] sm:$0xf] %v3249
  %3448 = vst [vmem:[#allocation3 + $0x28] sm:$0xf] %v3259
  %3449 = vst [vmem:[#allocation3 + $0x2c] sm:$0xf] %v3269
  %3450 = vst [vmem:[#allocation3 + $0x30] sm:$0xf] %v3279
  %3451 = vst [vmem:[#allocation3 + $0x34] sm:$0xf] %v3289
  %3452 = vst [vmem:[#allocation3 + $0x38] sm:$0xf] %v3299
  %3453 = vst [vmem:[#allocation3 + $0x3c] sm:$0xf] %v3309
  %3454 = vst [vmem:[#allocation3 + $0x40] sm:$0xf] %v3319
  %3455 = vst [vmem:[#allocation3 + $0x44] sm:$0xf] %v3329
  %3456 = vst [vmem:[#allocation3 + $0x48] sm:$0xf] %v3339
  %3457 = vst [vmem:[#allocation3 + $0x4c] sm:$0xf] %v3349
  %3458 = vst [vmem:[#allocation3 + $0x50] sm:$0xf] %v3359
  %3459 = vst [vmem:[#allocation3 + $0x54] sm:$0xf] %v3369
  %3460 = vst [vmem:[#allocation3 + $0x58] sm:$0xf] %v3379
  %3461 = vst [vmem:[#allocation3 + $0x5c] sm:$0xf] %v3389
  %3462 = vst [vmem:[#allocation3 + $0x60] sm:$0xf] %v3399
  %3463 = vst [vmem:[#allocation3 + $0x64] sm:$0xf] %v3409
  %v3464 = vld [vmem:[#allocation3 + $0x68] sm:$0x3]
  %v3465 = vsel %vm3122, %v3410, %v3464
  %3466 = vst [vmem:[#allocation3 + $0x68] sm:$0x3] %v3465
  %v3467 = vld [vmem:[#allocation3] sm:$0xf]
  %v3468 = vld [vmem:[#allocation3 + $0x4] sm:$0xf]
  %v3469 = vld [vmem:[#allocation3 + $0x8] sm:$0xf]
  %v3470 = vld [vmem:[#allocation3 + $0xc] sm:$0xf]
  %v3471 = vld [vmem:[#allocation3 + $0x10] sm:$0xf]
  %v3472 = vld [vmem:[#allocation3 + $0x14] sm:$0xf]
  %v3473 = vld [vmem:[#allocation3 + $0x18] sm:$0xf]
  %v3474 = vld [vmem:[#allocation3 + $0x1c] sm:$0xf]
  %v3475 = vld [vmem:[#allocation3 + $0x20] sm:$0xf]
  %v3476 = vld [vmem:[#allocation3 + $0x24] sm:$0xf]
  %v3477 = vld [vmem:[#allocation3 + $0x28] sm:$0xf]
  %v3478 = vld [vmem:[#allocation3 + $0x2c] sm:$0xf]
  %v3479 = vld [vmem:[#allocation3 + $0x30] sm:$0xf]
  %v3480 = vld [vmem:[#allocation3 + $0x34] sm:$0xf]
  %v3481 = vld [vmem:[#allocation3 + $0x38] sm:$0xf]
  %v3482 = vld [vmem:[#allocation3 + $0x3c] sm:$0xf]
  %v3483 = vld [vmem:[#allocation3 + $0x40] sm:$0xf]
  %v3484 = vld [vmem:[#allocation3 + $0x44] sm:$0xf]
  %v3485 = vld [vmem:[#allocation3 + $0x48] sm:$0xf]
  %v3486 = vld [vmem:[#allocation3 + $0x4c] sm:$0xf]
  %v3487 = vld [vmem:[#allocation3 + $0x50] sm:$0xf]
  %v3488 = vld [vmem:[#allocation3 + $0x54] sm:$0xf]
  %v3489 = vld [vmem:[#allocation3 + $0x58] sm:$0xf]
  %v3490 = vld [vmem:[#allocation3 + $0x5c] sm:$0xf]
  %v3491 = vld [vmem:[#allocation3 + $0x60] sm:$0xf]
  %v3492 = vld [vmem:[%s8] sm:$0xf]
  %v3493 = vld [vmem:[%s8 + $0x4] sm:$0xf]
  %v3494 = vld [vmem:[%s8 + $0x8] sm:$0xf]
  %v3495 = vld [vmem:[%s8 + $0xc] sm:$0xf]
  %v3496 = vld [vmem:[%s8 + $0x10] sm:$0xf]
  %v3497 = vld [vmem:[%s8 + $0x14] sm:$0xf]
  %v3498 = vld [vmem:[%s8 + $0x18] sm:$0xf]
  %v3499 = vld [vmem:[%s8 + $0x1c] sm:$0xf]
  %v3500 = vld [vmem:[%s8 + $0x20] sm:$0xf]
  %v3501 = vld [vmem:[%s8 + $0x24] sm:$0xf]
  %v3502 = vld [vmem:[%s8 + $0x28] sm:$0xf]
  %v3503 = vld [vmem:[%s8 + $0x2c] sm:$0xf]
  %v3504 = vld [vmem:[%s8 + $0x30] sm:$0xf]
  %v3505 = vld [vmem:[%s8 + $0x34] sm:$0xf]
  %v3506 = vld [vmem:[%s8 + $0x38] sm:$0xf]
  %v3507 = vld [vmem:[%s8 + $0x3c] sm:$0xf]
  %v3508 = vld [vmem:[#allocation3 + $0x64] sm:$0x1]
  %s3509 = scalar_lea.vmem %s8, 64
  %v3510 = vld [vmem:[%s3509] sm:$0xf]
  %v3511 = vld [vmem:[%s3509 + $0x4] sm:$0xf]
  %v3512 = vld [vmem:[%s3509 + $0x8] sm:$0xf]
  %v3513 = vld [vmem:[%s3509 + $0xc] sm:$0xf]
  %v3514 = vld [vmem:[%s3509 + $0x10] sm:$0xf]
  %v3515 = vld [vmem:[%s3509 + $0x14] sm:$0xf]
  %v3516 = vld [vmem:[%s3509 + $0x18] sm:$0xf]
  %v3517 = vld [vmem:[%s3509 + $0x1c] sm:$0xf]
  %v3518 = vld [vmem:[%s3509 + $0x20] sm:$0xf]
  %v3519 = vld [vmem:[%s3509 + $0x24] sm:$0xf]
  %v3520 = vld [vmem:[%s3509 + $0x28] sm:$0xf]
  %v3521 = vld [vmem:[%s3509 + $0x2c] sm:$0xf]
  %v3522 = vld [vmem:[%s3509 + $0x30] sm:$0xf]
  %v3523 = vld [vmem:[%s3509 + $0x34] sm:$0xf]
  %v3524 = vld [vmem:[%s3509 + $0x38] sm:$0xf]
  %v3525 = vld [vmem:[%s3509 + $0x3c] sm:$0xf]
  %v3552 = vunpack.c.l.b16 %v3467
  %v3553 = vunpack.c.l.b16 %v3468
  %v3554 = vunpack.c.l.b16 %v3469
  %v3555 = vunpack.c.l.b16 %v3470
  %v3556 = vunpack.c.l.b16 %v3471
  %v3557 = vunpack.c.l.b16 %v3472
  %v3558 = vunpack.c.l.b16 %v3473
  %v3559 = vunpack.c.l.b16 %v3474
  %v3560 = vunpack.c.l.b16 %v3475
  %v3561 = vunpack.c.l.b16 %v3476
  %v3562 = vunpack.c.l.b16 %v3477
  %v3563 = vunpack.c.l.b16 %v3478
  %v3564 = vunpack.c.l.b16 %v3479
  %v3565 = vunpack.c.l.b16 %v3480
  %v3566 = vunpack.c.l.b16 %v3481
  %v3567 = vunpack.c.l.b16 %v3482
  %v3568 = vunpack.c.l.b16 %v3483
  %v3569 = vunpack.c.l.b16 %v3484
  %v3570 = vunpack.c.l.b16 %v3485
  %v3571 = vunpack.c.l.b16 %v3486
  %v3572 = vunpack.c.l.b16 %v3487
  %v3573 = vunpack.c.l.b16 %v3488
  %v3574 = vunpack.c.l.b16 %v3489
  %v3575 = vunpack.c.l.b16 %v3490
  %v3576 = vunpack.c.l.b16 %v3491
  %v3577 = vunpack.c.l.b16 %v3508
  %v3578 = vpack.c.b16 %v3553, %v3552
  %v3579 = vpack.c.b16 %v3555, %v3554
  %v3580 = vpack.c.b16 %v3557, %v3556
  %v3581 = vpack.c.b16 %v3559, %v3558
  %v3582 = vpack.c.b16 %v3561, %v3560
  %v3583 = vpack.c.b16 %v3563, %v3562
  %v3584 = vpack.c.b16 %v3565, %v3564
  %v3585 = vpack.c.b16 %v3567, %v3566
  %v3586 = vpack.c.b16 %v3569, %v3568
  %v3587 = vpack.c.b16 %v3571, %v3570
  %v3588 = vpack.c.b16 %v3573, %v3572
  %v3589 = vpack.c.b16 %v3575, %v3574
  %v3590 = vpack.c.b16 %v3577, %v3576
  %v3592 = vshrl.u32 %v3578, 16
  %v3594 = vshll.u32 %v3578, 16
  %v3596 = vrot.slane %v3594, 1
  %v3597 = vor.u32 %v3592, %v3596
  %v3599 = vshll.u32 %v3579, 16
  %v3601 = vrot.slane %v3599, 1
  %v3602 = vsel %vm513, %v3597, %v3601
  %v3603 = vshrl.u32 %v3579, 16
  %v3605 = vor.u32 %v3603, %v3601
  %v3607 = vshll.u32 %v3580, 16
  %v3609 = vrot.slane %v3607, 1
  %v3610 = vsel %vm513, %v3605, %v3609
  %v3611 = vshrl.u32 %v3580, 16
  %v3613 = vor.u32 %v3611, %v3609
  %v3615 = vshll.u32 %v3581, 16
  %v3617 = vrot.slane %v3615, 1
  %v3618 = vsel %vm513, %v3613, %v3617
  %v3619 = vshrl.u32 %v3581, 16
  %v3621 = vor.u32 %v3619, %v3617
  %v3623 = vshll.u32 %v3582, 16
  %v3625 = vrot.slane %v3623, 1
  %v3626 = vsel %vm513, %v3621, %v3625
  %v3627 = vshrl.u32 %v3582, 16
  %v3629 = vor.u32 %v3627, %v3625
  %v3631 = vshll.u32 %v3583, 16
  %v3633 = vrot.slane %v3631, 1
  %v3634 = vsel %vm513, %v3629, %v3633
  %v3635 = vshrl.u32 %v3583, 16
  %v3637 = vor.u32 %v3635, %v3633
  %v3639 = vshll.u32 %v3584, 16
  %v3641 = vrot.slane %v3639, 1
  %v3642 = vsel %vm513, %v3637, %v3641
  %v3643 = vshrl.u32 %v3584, 16
  %v3645 = vor.u32 %v3643, %v3641
  %v3647 = vshll.u32 %v3585, 16
  %v3649 = vrot.slane %v3647, 1
  %v3650 = vsel %vm513, %v3645, %v3649
  %v3651 = vshrl.u32 %v3585, 16
  %v3653 = vor.u32 %v3651, %v3649
  %v3655 = vshll.u32 %v3586, 16
  %v3657 = vrot.slane %v3655, 1
  %v3658 = vsel %vm513, %v3653, %v3657
  %v3659 = vshrl.u32 %v3586, 16
  %v3661 = vor.u32 %v3659, %v3657
  %v3663 = vshll.u32 %v3587, 16
  %v3665 = vrot.slane %v3663, 1
  %v3666 = vsel %vm513, %v3661, %v3665
  %v3667 = vshrl.u32 %v3587, 16
  %v3669 = vor.u32 %v3667, %v3665
  %v3671 = vshll.u32 %v3588, 16
  %v3673 = vrot.slane %v3671, 1
  %v3674 = vsel %vm513, %v3669, %v3673
  %v3675 = vshrl.u32 %v3588, 16
  %v3677 = vor.u32 %v3675, %v3673
  %v3679 = vshll.u32 %v3589, 16
  %v3681 = vrot.slane %v3679, 1
  %v3682 = vsel %vm513, %v3677, %v3681
  %v3683 = vshrl.u32 %v3589, 16
  %v3685 = vor.u32 %v3683, %v3681
  %v3687 = vshll.u32 %v3590, 16
  %v3689 = vrot.slane %v3687, 1
  %v3690 = vsel %vm513, %v3685, %v3689
  %v3691 = vshrl.u32 %v3590, 16
  %v3693 = vor.u32 %v3691, %v3689
  %v3723 = vunpack.c.l.b16 %v3510
  %v3724 = vunpack.c.l.b16 %v3511
  %v3725 = vunpack.c.l.b16 %v3512
  %v3726 = vunpack.c.l.b16 %v3513
  %v3727 = vunpack.c.l.b16 %v3514
  %v3728 = vunpack.c.l.b16 %v3515
  %v3729 = vunpack.c.l.b16 %v3516
  %v3730 = vunpack.c.l.b16 %v3517
  %v3731 = vunpack.c.l.b16 %v3518
  %v3732 = vunpack.c.l.b16 %v3519
  %v3733 = vunpack.c.l.b16 %v3520
  %v3734 = vunpack.c.l.b16 %v3521
  %v3735 = vunpack.c.l.b16 %v3522
  %v3736 = vunpack.c.l.b16 %v3523
  %v3737 = vunpack.c.l.b16 %v3524
  %v3738 = vunpack.c.l.b16 %v3525
  %v3739 = vpack.c.b16 %v3724, %v3723
  %v3740 = vpack.c.b16 %v3726, %v3725
  %v3741 = vpack.c.b16 %v3728, %v3727
  %v3742 = vpack.c.b16 %v3730, %v3729
  %v3743 = vpack.c.b16 %v3732, %v3731
  %v3744 = vpack.c.b16 %v3734, %v3733
  %v3745 = vpack.c.b16 %v3736, %v3735
  %v3746 = vpack.c.b16 %v3738, %v3737
  %3755 = vmatpush.bf16.msra.mxu0 %v3746
  %3756 = vmatpush.bf16.msra.mxu0 %v3745
  %3757 = vmatpush.bf16.msra.mxu0 %v3744
  %3758 = vmatpush.bf16.msra.mxu0 %v3743
  %3759 = vmatpush.bf16.msra.mxu0 %v3742
  %3760 = vmatpush.bf16.msra.mxu0 %v3741
  %3761 = vmatpush.bf16.msra.mxu0 %v3740
  %3762 = vmatpush.bf16.msra.mxu0 %v3739
  %3763 = vmatmul.bf16.gmra.mxu0 %v3602
  %v3764 = vpop.f32.mrf.mxu0
  %v3765 = vadd.f32 0.0, %v3764
  %v3766 = vpop.f32.mrf.mxu0
  %v3767 = vadd.f32 0.0, %v3766
  %3768 = vmatmul.bf16.gmra.mxu0 %v3610
  %v3769 = vpop.f32.mrf.mxu0
  %v3770 = vadd.f32 0.0, %v3769
  %v3771 = vpop.f32.mrf.mxu0
  %v3772 = vadd.f32 0.0, %v3771
  %3773 = vmatmul.bf16.gmra.mxu0 %v3618
  %v3774 = vpop.f32.mrf.mxu0
  %v3775 = vadd.f32 0.0, %v3774
  %v3776 = vpop.f32.mrf.mxu0
  %v3777 = vadd.f32 0.0, %v3776
  %3778 = vmatmul.bf16.gmra.mxu0 %v3626
  %v3779 = vpop.f32.mrf.mxu0
  %v3780 = vadd.f32 0.0, %v3779
  %v3781 = vpop.f32.mrf.mxu0
  %v3782 = vadd.f32 0.0, %v3781
  %3783 = vmatmul.bf16.gmra.mxu0 %v3634
  %v3784 = vpop.f32.mrf.mxu0
  %v3785 = vadd.f32 0.0, %v3784
  %v3786 = vpop.f32.mrf.mxu0
  %v3787 = vadd.f32 0.0, %v3786
  %3788 = vmatmul.bf16.gmra.mxu0 %v3642
  %v3789 = vpop.f32.mrf.mxu0
  %v3790 = vadd.f32 0.0, %v3789
  %v3791 = vpop.f32.mrf.mxu0
  %v3792 = vadd.f32 0.0, %v3791
  %3793 = vmatmul.bf16.gmra.mxu0 %v3650
  %v3794 = vpop.f32.mrf.mxu0
  %v3795 = vadd.f32 0.0, %v3794
  %v3796 = vpop.f32.mrf.mxu0
  %v3797 = vadd.f32 0.0, %v3796
  %3798 = vmatmul.bf16.gmra.mxu0 %v3658
  %v3799 = vpop.f32.mrf.mxu0
  %v3800 = vadd.f32 0.0, %v3799
  %v3801 = vpop.f32.mrf.mxu0
  %v3802 = vadd.f32 0.0, %v3801
  %3803 = vmatmul.bf16.gmra.mxu0 %v3666
  %v3804 = vpop.f32.mrf.mxu0
  %v3805 = vadd.f32 0.0, %v3804
  %v3806 = vpop.f32.mrf.mxu0
  %v3807 = vadd.f32 0.0, %v3806
  %3808 = vmatmul.bf16.gmra.mxu0 %v3674
  %v3809 = vpop.f32.mrf.mxu0
  %v3810 = vadd.f32 0.0, %v3809
  %v3811 = vpop.f32.mrf.mxu0
  %v3812 = vadd.f32 0.0, %v3811
  %3813 = vmatmul.bf16.gmra.mxu0 %v3682
  %v3814 = vpop.f32.mrf.mxu0
  %v3815 = vadd.f32 0.0, %v3814
  %v3816 = vpop.f32.mrf.mxu0
  %v3817 = vadd.f32 0.0, %v3816
  %3818 = vmatmul.bf16.gmra.mxu0 %v3690
  %v3819 = vpop.f32.mrf.mxu0
  %v3820 = vadd.f32 0.0, %v3819
  %v3821 = vpop.f32.mrf.mxu0
  %v3822 = vadd.f32 0.0, %v3821
  %3823 = vmatmul.bf16.gmra.mxu0 %v3693
  %v3824 = vpop.f32.mrf.mxu0
  %v3825 = vadd.f32 0.0, %v3824
  %v3826 = vpop.f32.mrf.mxu0
  %3827 = vdwg.mxu0
  %v3828 = vpack.c.b16 %v3576, %v3576
  %v3858 = vunpack.c.l.b16 %v3492
  %v3859 = vunpack.c.l.b16 %v3493
  %v3860 = vunpack.c.l.b16 %v3494
  %v3861 = vunpack.c.l.b16 %v3495
  %v3862 = vunpack.c.l.b16 %v3496
  %v3863 = vunpack.c.l.b16 %v3497
  %v3864 = vunpack.c.l.b16 %v3498
  %v3865 = vunpack.c.l.b16 %v3499
  %v3866 = vunpack.c.l.b16 %v3500
  %v3867 = vunpack.c.l.b16 %v3501
  %v3868 = vunpack.c.l.b16 %v3502
  %v3869 = vunpack.c.l.b16 %v3503
  %v3870 = vunpack.c.l.b16 %v3504
  %v3871 = vunpack.c.l.b16 %v3505
  %v3872 = vunpack.c.l.b16 %v3506
  %v3873 = vunpack.c.l.b16 %v3507
  %v3874 = vpack.c.b16 %v3859, %v3858
  %v3875 = vpack.c.b16 %v3861, %v3860
  %v3876 = vpack.c.b16 %v3863, %v3862
  %v3877 = vpack.c.b16 %v3865, %v3864
  %v3878 = vpack.c.b16 %v3867, %v3866
  %v3879 = vpack.c.b16 %v3869, %v3868
  %v3880 = vpack.c.b16 %v3871, %v3870
  %v3881 = vpack.c.b16 %v3873, %v3872
  %3890 = vmatpush.bf16.msra.mxu0 %v3881
  %3891 = vmatpush.bf16.msra.mxu0 %v3880
  %3892 = vmatpush.bf16.msra.mxu0 %v3879
  %3893 = vmatpush.bf16.msra.mxu0 %v3878
  %3894 = vmatpush.bf16.msra.mxu0 %v3877
  %3895 = vmatpush.bf16.msra.mxu0 %v3876
  %3896 = vmatpush.bf16.msra.mxu0 %v3875
  %3897 = vmatpush.bf16.msra.mxu0 %v3874
  %3898 = vmatmul.bf16.gmra.mxu0 %v3578
  %v3899 = vpop.f32.mrf.mxu0
  %v3900 = vadd.f32 %v3765, %v3899
  %v3901 = vpop.f32.mrf.mxu0
  %v3902 = vadd.f32 %v3767, %v3901
  %3903 = vmatmul.bf16.gmra.mxu0 %v3579
  %v3904 = vpop.f32.mrf.mxu0
  %v3905 = vadd.f32 %v3770, %v3904
  %v3906 = vpop.f32.mrf.mxu0
  %v3907 = vadd.f32 %v3772, %v3906
  %3908 = vmatmul.bf16.gmra.mxu0 %v3580
  %v3909 = vpop.f32.mrf.mxu0
  %v3910 = vadd.f32 %v3775, %v3909
  %v3911 = vpop.f32.mrf.mxu0
  %v3912 = vadd.f32 %v3777, %v3911
  %3913 = vmatmul.bf16.gmra.mxu0 %v3581
  %v3914 = vpop.f32.mrf.mxu0
  %v3915 = vadd.f32 %v3780, %v3914
  %v3916 = vpop.f32.mrf.mxu0
  %v3917 = vadd.f32 %v3782, %v3916
  %3918 = vmatmul.bf16.gmra.mxu0 %v3582
  %v3919 = vpop.f32.mrf.mxu0
  %v3920 = vadd.f32 %v3785, %v3919
  %v3921 = vpop.f32.mrf.mxu0
  %v3922 = vadd.f32 %v3787, %v3921
  %3923 = vmatmul.bf16.gmra.mxu0 %v3583
  %v3924 = vpop.f32.mrf.mxu0
  %v3925 = vadd.f32 %v3790, %v3924
  %v3926 = vpop.f32.mrf.mxu0
  %v3927 = vadd.f32 %v3792, %v3926
  %3928 = vmatmul.bf16.gmra.mxu0 %v3584
  %v3929 = vpop.f32.mrf.mxu0
  %v3930 = vadd.f32 %v3795, %v3929
  %v3931 = vpop.f32.mrf.mxu0
  %v3932 = vadd.f32 %v3797, %v3931
  %3933 = vmatmul.bf16.gmra.mxu0 %v3585
  %v3934 = vpop.f32.mrf.mxu0
  %v3935 = vadd.f32 %v3800, %v3934
  %v3936 = vpop.f32.mrf.mxu0
  %v3937 = vadd.f32 %v3802, %v3936
  %3938 = vmatmul.bf16.gmra.mxu0 %v3586
  %v3939 = vpop.f32.mrf.mxu0
  %v3940 = vadd.f32 %v3805, %v3939
  %v3941 = vpop.f32.mrf.mxu0
  %v3942 = vadd.f32 %v3807, %v3941
  %3943 = vmatmul.bf16.gmra.mxu0 %v3587
  %v3944 = vpop.f32.mrf.mxu0
  %v3945 = vadd.f32 %v3810, %v3944
  %v3946 = vpop.f32.mrf.mxu0
  %v3947 = vadd.f32 %v3812, %v3946
  %3948 = vmatmul.bf16.gmra.mxu0 %v3588
  %v3949 = vpop.f32.mrf.mxu0
  %v3950 = vadd.f32 %v3815, %v3949
  %v3951 = vpop.f32.mrf.mxu0
  %v3952 = vadd.f32 %v3817, %v3951
  %3953 = vmatmul.bf16.gmra.mxu0 %v3589
  %v3954 = vpop.f32.mrf.mxu0
  %v3955 = vadd.f32 %v3820, %v3954
  %v3956 = vpop.f32.mrf.mxu0
  %v3957 = vadd.f32 %v3822, %v3956
  %3958 = vmatmul.bf16.gmra.mxu0 %v3828
  %v3959 = vpop.f32.mrf.mxu0
  %v3960 = vadd.f32 %v3825, %v3959
  %v3961 = vpop.f32.mrf.mxu0
  %3962 = vdwg.mxu0
  %v3963 = vld [vmem:[#allocation3] sm:$0xe]
  %s3964 = scalar_lea.vmem %s8, 128
  %v3965 = vld [vmem:[%s3964] sm:$0xf]
  %v3966 = vld [vmem:[%s3964 + $0x4] sm:$0xf]
  %v3967 = vld [vmem:[%s3964 + $0x8] sm:$0xf]
  %v3968 = vld [vmem:[%s3964 + $0xc] sm:$0xf]
  %v3969 = vld [vmem:[%s3964 + $0x10] sm:$0xf]
  %v3970 = vld [vmem:[%s3964 + $0x14] sm:$0xf]
  %v3971 = vld [vmem:[%s3964 + $0x18] sm:$0xf]
  %v3972 = vld [vmem:[%s3964 + $0x1c] sm:$0xf]
  %v3973 = vld [vmem:[%s3964 + $0x20] sm:$0xf]
  %v3974 = vld [vmem:[%s3964 + $0x24] sm:$0xf]
  %v3975 = vld [vmem:[%s3964 + $0x28] sm:$0xf]
  %v3976 = vld [vmem:[%s3964 + $0x2c] sm:$0xf]
  %v3977 = vld [vmem:[%s3964 + $0x30] sm:$0xf]
  %v3978 = vld [vmem:[%s3964 + $0x34] sm:$0xf]
  %v3979 = vld [vmem:[%s3964 + $0x38] sm:$0xf]
  %v3980 = vld [vmem:[%s3964 + $0x3c] sm:$0xf]
  %v3982 = vunpack.c.l.b16 %v3963
  %v3983 = vpack.c.b16 %v3553, %v3982
  %v3984 = vrot.slane %v3983, 1
  %v3985 = vrot.slane %v3579, 1
  %v3986 = vsel %vm907, %v3984, %v3985
  %v3987 = vrot.slane %v3580, 1
  %v3988 = vsel %vm907, %v3985, %v3987
  %v3989 = vrot.slane %v3581, 1
  %v3990 = vsel %vm907, %v3987, %v3989
  %v3991 = vrot.slane %v3582, 1
  %v3992 = vsel %vm907, %v3989, %v3991
  %v3993 = vrot.slane %v3583, 1
  %v3994 = vsel %vm907, %v3991, %v3993
  %v3995 = vrot.slane %v3584, 1
  %v3996 = vsel %vm907, %v3993, %v3995
  %v3997 = vrot.slane %v3585, 1
  %v3998 = vsel %vm907, %v3995, %v3997
  %v3999 = vrot.slane %v3586, 1
  %v4000 = vsel %vm907, %v3997, %v3999
  %v4001 = vrot.slane %v3587, 1
  %v4002 = vsel %vm907, %v3999, %v4001
  %v4003 = vrot.slane %v3588, 1
  %v4004 = vsel %vm907, %v4001, %v4003
  %v4005 = vrot.slane %v3589, 1
  %v4006 = vsel %vm907, %v4003, %v4005
  %v4007 = vrot.slane %v3590, 1
  %v4008 = vsel %vm907, %v4005, %v4007
  %v4038 = vunpack.c.l.b16 %v3965
  %v4039 = vunpack.c.l.b16 %v3966
  %v4040 = vunpack.c.l.b16 %v3967
  %v4041 = vunpack.c.l.b16 %v3968
  %v4042 = vunpack.c.l.b16 %v3969
  %v4043 = vunpack.c.l.b16 %v3970
  %v4044 = vunpack.c.l.b16 %v3971
  %v4045 = vunpack.c.l.b16 %v3972
  %v4046 = vunpack.c.l.b16 %v3973
  %v4047 = vunpack.c.l.b16 %v3974
  %v4048 = vunpack.c.l.b16 %v3975
  %v4049 = vunpack.c.l.b16 %v3976
  %v4050 = vunpack.c.l.b16 %v3977
  %v4051 = vunpack.c.l.b16 %v3978
  %v4052 = vunpack.c.l.b16 %v3979
  %v4053 = vunpack.c.l.b16 %v3980
  %v4054 = vpack.c.b16 %v4039, %v4038
  %v4055 = vpack.c.b16 %v4041, %v4040
  %v4056 = vpack.c.b16 %v4043, %v4042
  %v4057 = vpack.c.b16 %v4045, %v4044
  %v4058 = vpack.c.b16 %v4047, %v4046
  %v4059 = vpack.c.b16 %v4049, %v4048
  %v4060 = vpack.c.b16 %v4051, %v4050
  %v4061 = vpack.c.b16 %v4053, %v4052
  %4070 = vmatpush.bf16.msra.mxu0 %v4061
  %4071 = vmatpush.bf16.msra.mxu0 %v4060
  %4072 = vmatpush.bf16.msra.mxu0 %v4059
  %4073 = vmatpush.bf16.msra.mxu0 %v4058
  %4074 = vmatpush.bf16.msra.mxu0 %v4057
  %4075 = vmatpush.bf16.msra.mxu0 %v4056
  %4076 = vmatpush.bf16.msra.mxu0 %v4055
  %4077 = vmatpush.bf16.msra.mxu0 %v4054
  %4078 = vmatmul.bf16.gmra.mxu0 %v3986
  %v4079 = vpop.f32.mrf.mxu0
  %v4080 = vadd.f32 0.0, %v4079
  %v4081 = vpop.f32.mrf.mxu0
  %v4082 = vadd.f32 0.0, %v4081
  %4083 = vmatmul.bf16.gmra.mxu0 %v3988
  %v4084 = vpop.f32.mrf.mxu0
  %v4085 = vadd.f32 0.0, %v4084
  %v4086 = vpop.f32.mrf.mxu0
  %v4087 = vadd.f32 0.0, %v4086
  %4088 = vmatmul.bf16.gmra.mxu0 %v3990
  %v4089 = vpop.f32.mrf.mxu0
  %v4090 = vadd.f32 0.0, %v4089
  %v4091 = vpop.f32.mrf.mxu0
  %v4092 = vadd.f32 0.0, %v4091
  %4093 = vmatmul.bf16.gmra.mxu0 %v3992
  %v4094 = vpop.f32.mrf.mxu0
  %v4095 = vadd.f32 0.0, %v4094
  %v4096 = vpop.f32.mrf.mxu0
  %v4097 = vadd.f32 0.0, %v4096
  %4098 = vmatmul.bf16.gmra.mxu0 %v3994
  %v4099 = vpop.f32.mrf.mxu0
  %v4100 = vadd.f32 0.0, %v4099
  %v4101 = vpop.f32.mrf.mxu0
  %v4102 = vadd.f32 0.0, %v4101
  %4103 = vmatmul.bf16.gmra.mxu0 %v3996
  %v4104 = vpop.f32.mrf.mxu0
  %v4105 = vadd.f32 0.0, %v4104
  %v4106 = vpop.f32.mrf.mxu0
  %v4107 = vadd.f32 0.0, %v4106
  %4108 = vmatmul.bf16.gmra.mxu0 %v3998
  %v4109 = vpop.f32.mrf.mxu0
  %v4110 = vadd.f32 0.0, %v4109
  %v4111 = vpop.f32.mrf.mxu0
  %v4112 = vadd.f32 0.0, %v4111
  %4113 = vmatmul.bf16.gmra.mxu0 %v4000
  %v4114 = vpop.f32.mrf.mxu0
  %v4115 = vadd.f32 0.0, %v4114
  %v4116 = vpop.f32.mrf.mxu0
  %v4117 = vadd.f32 0.0, %v4116
  %4118 = vmatmul.bf16.gmra.mxu0 %v4002
  %v4119 = vpop.f32.mrf.mxu0
  %v4120 = vadd.f32 0.0, %v4119
  %v4121 = vpop.f32.mrf.mxu0
  %v4122 = vadd.f32 0.0, %v4121
  %4123 = vmatmul.bf16.gmra.mxu0 %v4004
  %v4124 = vpop.f32.mrf.mxu0
  %v4125 = vadd.f32 0.0, %v4124
  %v4126 = vpop.f32.mrf.mxu0
  %v4127 = vadd.f32 0.0, %v4126
  %4128 = vmatmul.bf16.gmra.mxu0 %v4006
  %v4129 = vpop.f32.mrf.mxu0
  %v4130 = vadd.f32 0.0, %v4129
  %v4131 = vpop.f32.mrf.mxu0
  %v4132 = vadd.f32 0.0, %v4131
  %4133 = vmatmul.bf16.gmra.mxu0 %v4008
  %v4134 = vpop.f32.mrf.mxu0
  %v4135 = vadd.f32 0.0, %v4134
  %v4136 = vpop.f32.mrf.mxu0
  %v4137 = vadd.f32 0.0, %v4136
  %4138 = vmatmul.bf16.gmra.mxu0 %v4007
  %v4139 = vpop.f32.mrf.mxu0
  %v4140 = vadd.f32 0.0, %v4139
  %v4141 = vpop.f32.mrf.mxu0
  %4142 = vdwg.mxu0
  %v4143 = vadd.f32 %v3900, %v4080
  %v4144 = vadd.f32 %v3902, %v4082
  %v4145 = vadd.f32 %v3905, %v4085
  %v4146 = vadd.f32 %v3907, %v4087
  %v4147 = vadd.f32 %v3910, %v4090
  %v4148 = vadd.f32 %v3912, %v4092
  %v4149 = vadd.f32 %v3915, %v4095
  %v4150 = vadd.f32 %v3917, %v4097
  %v4151 = vadd.f32 %v3920, %v4100
  %v4152 = vadd.f32 %v3922, %v4102
  %v4153 = vadd.f32 %v3925, %v4105
  %v4154 = vadd.f32 %v3927, %v4107
  %v4155 = vadd.f32 %v3930, %v4110
  %v4156 = vadd.f32 %v3932, %v4112
  %v4157 = vadd.f32 %v3935, %v4115
  %v4158 = vadd.f32 %v3937, %v4117
  %v4159 = vadd.f32 %v3940, %v4120
  %v4160 = vadd.f32 %v3942, %v4122
  %v4161 = vadd.f32 %v3945, %v4125
  %v4162 = vadd.f32 %v3947, %v4127
  %v4163 = vadd.f32 %v3950, %v4130
  %v4164 = vadd.f32 %v3952, %v4132
  %v4165 = vadd.f32 %v3955, %v4135
  %v4166 = vadd.f32 %v3957, %v4137
  %v4167 = vadd.f32 %v3960, %v4140
  %v4168 = vld [vmem:[#allocation3 + $0x4] sm:$0xe]
  %v4169 = vld [vmem:[#allocation3 + $0x8] sm:$0xf]
  %v4170 = vld [vmem:[#allocation3 + $0xc] sm:$0xf]
  %v4171 = vld [vmem:[#allocation3 + $0x10] sm:$0xf]
  %v4172 = vld [vmem:[#allocation3 + $0x14] sm:$0xf]
  %v4173 = vld [vmem:[#allocation3 + $0x18] sm:$0xf]
  %v4174 = vld [vmem:[#allocation3 + $0x1c] sm:$0xf]
  %v4175 = vld [vmem:[#allocation3 + $0x20] sm:$0xf]
  %v4176 = vld [vmem:[#allocation3 + $0x24] sm:$0xf]
  %v4177 = vld [vmem:[#allocation3 + $0x28] sm:$0xf]
  %v4178 = vld [vmem:[#allocation3 + $0x2c] sm:$0xf]
  %v4179 = vld [vmem:[#allocation3 + $0x30] sm:$0xf]
  %v4180 = vld [vmem:[#allocation3 + $0x34] sm:$0xf]
  %v4181 = vld [vmem:[#allocation3 + $0x38] sm:$0xf]
  %v4182 = vld [vmem:[#allocation3 + $0x3c] sm:$0xf]
  %v4183 = vld [vmem:[#allocation3 + $0x40] sm:$0xf]
  %v4184 = vld [vmem:[#allocation3 + $0x44] sm:$0xf]
  %v4185 = vld [vmem:[#allocation3 + $0x48] sm:$0xf]
  %v4186 = vld [vmem:[#allocation3 + $0x4c] sm:$0xf]
  %v4187 = vld [vmem:[#allocation3 + $0x50] sm:$0xf]
  %v4188 = vld [vmem:[#allocation3 + $0x54] sm:$0xf]
  %v4189 = vld [vmem:[#allocation3 + $0x58] sm:$0xf]
  %v4190 = vld [vmem:[#allocation3 + $0x5c] sm:$0xf]
  %v4191 = vld [vmem:[#allocation3 + $0x60] sm:$0xf]
  %v4192 = vld [vmem:[#allocation3 + $0x64] sm:$0xf]
  %v4193 = vld [vmem:[#allocation3 + $0x68] sm:$0x1]
  %s4194 = scalar_lea.vmem %s8, 192
  %v4195 = vld [vmem:[%s4194] sm:$0xf]
  %v4196 = vld [vmem:[%s4194 + $0x4] sm:$0xf]
  %v4197 = vld [vmem:[%s4194 + $0x8] sm:$0xf]
  %v4198 = vld [vmem:[%s4194 + $0xc] sm:$0xf]
  %v4199 = vld [vmem:[%s4194 + $0x10] sm:$0xf]
  %v4200 = vld [vmem:[%s4194 + $0x14] sm:$0xf]
  %v4201 = vld [vmem:[%s4194 + $0x18] sm:$0xf]
  %v4202 = vld [vmem:[%s4194 + $0x1c] sm:$0xf]
  %v4203 = vld [vmem:[%s4194 + $0x20] sm:$0xf]
  %v4204 = vld [vmem:[%s4194 + $0x24] sm:$0xf]
  %v4205 = vld [vmem:[%s4194 + $0x28] sm:$0xf]
  %v4206 = vld [vmem:[%s4194 + $0x2c] sm:$0xf]
  %v4207 = vld [vmem:[%s4194 + $0x30] sm:$0xf]
  %v4208 = vld [vmem:[%s4194 + $0x34] sm:$0xf]
  %v4209 = vld [vmem:[%s4194 + $0x38] sm:$0xf]
  %v4210 = vld [vmem:[%s4194 + $0x3c] sm:$0xf]
  %v4237 = vunpack.c.l.b16 %v4168
  %v4238 = vunpack.c.l.b16 %v4169
  %v4239 = vunpack.c.l.b16 %v4170
  %v4240 = vunpack.c.l.b16 %v4171
  %v4241 = vunpack.c.l.b16 %v4172
  %v4242 = vunpack.c.l.b16 %v4173
  %v4243 = vunpack.c.l.b16 %v4174
  %v4244 = vunpack.c.l.b16 %v4175
  %v4245 = vunpack.c.l.b16 %v4176
  %v4246 = vunpack.c.l.b16 %v4177
  %v4247 = vunpack.c.l.b16 %v4178
  %v4248 = vunpack.c.l.b16 %v4179
  %v4249 = vunpack.c.l.b16 %v4180
  %v4250 = vunpack.c.l.b16 %v4181
  %v4251 = vunpack.c.l.b16 %v4182
  %v4252 = vunpack.c.l.b16 %v4183
  %v4253 = vunpack.c.l.b16 %v4184
  %v4254 = vunpack.c.l.b16 %v4185
  %v4255 = vunpack.c.l.b16 %v4186
  %v4256 = vunpack.c.l.b16 %v4187
  %v4257 = vunpack.c.l.b16 %v4188
  %v4258 = vunpack.c.l.b16 %v4189
  %v4259 = vunpack.c.l.b16 %v4190
  %v4260 = vunpack.c.l.b16 %v4191
  %v4261 = vunpack.c.l.b16 %v4192
  %v4262 = vunpack.c.l.b16 %v4193
  %v4263 = vpack.c.b16 %v4238, %v4237
  %v4264 = vpack.c.b16 %v4240, %v4239
  %v4265 = vpack.c.b16 %v4242, %v4241
  %v4266 = vpack.c.b16 %v4244, %v4243
  %v4267 = vpack.c.b16 %v4246, %v4245
  %v4268 = vpack.c.b16 %v4248, %v4247
  %v4269 = vpack.c.b16 %v4250, %v4249
  %v4270 = vpack.c.b16 %v4252, %v4251
  %v4271 = vpack.c.b16 %v4254, %v4253
  %v4272 = vpack.c.b16 %v4256, %v4255
  %v4273 = vpack.c.b16 %v4258, %v4257
  %v4274 = vpack.c.b16 %v4260, %v4259
  %v4275 = vpack.c.b16 %v4262, %v4261
  %v4276 = vrot.slane %v4263, 1
  %v4277 = vrot.slane %v4264, 1
  %v4278 = vsel %vm907, %v4276, %v4277
  %v4279 = vrot.slane %v4265, 1
  %v4280 = vsel %vm907, %v4277, %v4279
  %v4281 = vrot.slane %v4266, 1
  %v4282 = vsel %vm907, %v4279, %v4281
  %v4283 = vrot.slane %v4267, 1
  %v4284 = vsel %vm907, %v4281, %v4283
  %v4285 = vrot.slane %v4268, 1
  %v4286 = vsel %vm907, %v4283, %v4285
  %v4287 = vrot.slane %v4269, 1
  %v4288 = vsel %vm907, %v4285, %v4287
  %v4289 = vrot.slane %v4270, 1
  %v4290 = vsel %vm907, %v4287, %v4289
  %v4291 = vrot.slane %v4271, 1
  %v4292 = vsel %vm907, %v4289, %v4291
  %v4293 = vrot.slane %v4272, 1
  %v4294 = vsel %vm907, %v4291, %v4293
  %v4295 = vrot.slane %v4273, 1
  %v4296 = vsel %vm907, %v4293, %v4295
  %v4297 = vrot.slane %v4274, 1
  %v4298 = vsel %vm907, %v4295, %v4297
  %v4299 = vrot.slane %v4275, 1
  %v4300 = vsel %vm907, %v4297, %v4299
  %v4330 = vunpack.c.l.b16 %v4195
  %v4331 = vunpack.c.l.b16 %v4196
  %v4332 = vunpack.c.l.b16 %v4197
  %v4333 = vunpack.c.l.b16 %v4198
  %v4334 = vunpack.c.l.b16 %v4199
  %v4335 = vunpack.c.l.b16 %v4200
  %v4336 = vunpack.c.l.b16 %v4201
  %v4337 = vunpack.c.l.b16 %v4202
  %v4338 = vunpack.c.l.b16 %v4203
  %v4339 = vunpack.c.l.b16 %v4204
  %v4340 = vunpack.c.l.b16 %v4205
  %v4341 = vunpack.c.l.b16 %v4206
  %v4342 = vunpack.c.l.b16 %v4207
  %v4343 = vunpack.c.l.b16 %v4208
  %v4344 = vunpack.c.l.b16 %v4209
  %v4345 = vunpack.c.l.b16 %v4210
  %v4346 = vpack.c.b16 %v4331, %v4330
  %v4347 = vpack.c.b16 %v4333, %v4332
  %v4348 = vpack.c.b16 %v4335, %v4334
  %v4349 = vpack.c.b16 %v4337, %v4336
  %v4350 = vpack.c.b16 %v4339, %v4338
  %v4351 = vpack.c.b16 %v4341, %v4340
  %v4352 = vpack.c.b16 %v4343, %v4342
  %v4353 = vpack.c.b16 %v4345, %v4344
  %4362 = vmatpush.bf16.msra.mxu0 %v4353
  %4363 = vmatpush.bf16.msra.mxu0 %v4352
  %4364 = vmatpush.bf16.msra.mxu0 %v4351
  %4365 = vmatpush.bf16.msra.mxu0 %v4350
  %4366 = vmatpush.bf16.msra.mxu0 %v4349
  %4367 = vmatpush.bf16.msra.mxu0 %v4348
  %4368 = vmatpush.bf16.msra.mxu0 %v4347
  %4369 = vmatpush.bf16.msra.mxu0 %v4346
  %4370 = vmatmul.bf16.gmra.mxu0 %v4278
  %v4371 = vpop.f32.mrf.mxu0
  %v4372 = vadd.f32 0.0, %v4371
  %v4373 = vpop.f32.mrf.mxu0
  %v4374 = vadd.f32 0.0, %v4373
  %4375 = vmatmul.bf16.gmra.mxu0 %v4280
  %v4376 = vpop.f32.mrf.mxu0
  %v4377 = vadd.f32 0.0, %v4376
  %v4378 = vpop.f32.mrf.mxu0
  %v4379 = vadd.f32 0.0, %v4378
  %4380 = vmatmul.bf16.gmra.mxu0 %v4282
  %v4381 = vpop.f32.mrf.mxu0
  %v4382 = vadd.f32 0.0, %v4381
  %v4383 = vpop.f32.mrf.mxu0
  %v4384 = vadd.f32 0.0, %v4383
  %4385 = vmatmul.bf16.gmra.mxu0 %v4284
  %v4386 = vpop.f32.mrf.mxu0
  %v4387 = vadd.f32 0.0, %v4386
  %v4388 = vpop.f32.mrf.mxu0
  %v4389 = vadd.f32 0.0, %v4388
  %4390 = vmatmul.bf16.gmra.mxu0 %v4286
  %v4391 = vpop.f32.mrf.mxu0
  %v4392 = vadd.f32 0.0, %v4391
  %v4393 = vpop.f32.mrf.mxu0
  %v4394 = vadd.f32 0.0, %v4393
  %4395 = vmatmul.bf16.gmra.mxu0 %v4288
  %v4396 = vpop.f32.mrf.mxu0
  %v4397 = vadd.f32 0.0, %v4396
  %v4398 = vpop.f32.mrf.mxu0
  %v4399 = vadd.f32 0.0, %v4398
  %4400 = vmatmul.bf16.gmra.mxu0 %v4290
  %v4401 = vpop.f32.mrf.mxu0
  %v4402 = vadd.f32 0.0, %v4401
  %v4403 = vpop.f32.mrf.mxu0
  %v4404 = vadd.f32 0.0, %v4403
  %4405 = vmatmul.bf16.gmra.mxu0 %v4292
  %v4406 = vpop.f32.mrf.mxu0
  %v4407 = vadd.f32 0.0, %v4406
  %v4408 = vpop.f32.mrf.mxu0
  %v4409 = vadd.f32 0.0, %v4408
  %4410 = vmatmul.bf16.gmra.mxu0 %v4294
  %v4411 = vpop.f32.mrf.mxu0
  %v4412 = vadd.f32 0.0, %v4411
  %v4413 = vpop.f32.mrf.mxu0
  %v4414 = vadd.f32 0.0, %v4413
  %4415 = vmatmul.bf16.gmra.mxu0 %v4296
  %v4416 = vpop.f32.mrf.mxu0
  %v4417 = vadd.f32 0.0, %v4416
  %v4418 = vpop.f32.mrf.mxu0
  %v4419 = vadd.f32 0.0, %v4418
  %4420 = vmatmul.bf16.gmra.mxu0 %v4298
  %v4421 = vpop.f32.mrf.mxu0
  %v4422 = vadd.f32 0.0, %v4421
  %v4423 = vpop.f32.mrf.mxu0
  %v4424 = vadd.f32 0.0, %v4423
  %4425 = vmatmul.bf16.gmra.mxu0 %v4300
  %v4426 = vpop.f32.mrf.mxu0
  %v4427 = vadd.f32 0.0, %v4426
  %v4428 = vpop.f32.mrf.mxu0
  %v4429 = vadd.f32 0.0, %v4428
  %4430 = vmatmul.bf16.gmra.mxu0 %v4299
  %v4431 = vpop.f32.mrf.mxu0
  %v4432 = vadd.f32 0.0, %v4431
  %v4433 = vpop.f32.mrf.mxu0
  %4434 = vdwg.mxu0
  %v4435 = vadd.f32 %v4143, %v4372
  %v4436 = vadd.f32 %v4144, %v4374
  %v4437 = vadd.f32 %v4145, %v4377
  %v4438 = vadd.f32 %v4146, %v4379
  %v4439 = vadd.f32 %v4147, %v4382
  %v4440 = vadd.f32 %v4148, %v4384
  %v4441 = vadd.f32 %v4149, %v4387
  %v4442 = vadd.f32 %v4150, %v4389
  %v4443 = vadd.f32 %v4151, %v4392
  %v4444 = vadd.f32 %v4152, %v4394
  %v4445 = vadd.f32 %v4153, %v4397
  %v4446 = vadd.f32 %v4154, %v4399
  %v4447 = vadd.f32 %v4155, %v4402
  %v4448 = vadd.f32 %v4156, %v4404
  %v4449 = vadd.f32 %v4157, %v4407
  %v4450 = vadd.f32 %v4158, %v4409
  %v4451 = vadd.f32 %v4159, %v4412
  %v4452 = vadd.f32 %v4160, %v4414
  %v4453 = vadd.f32 %v4161, %v4417
  %v4454 = vadd.f32 %v4162, %v4419
  %v4455 = vadd.f32 %v4163, %v4422
  %v4456 = vadd.f32 %v4164, %v4424
  %v4457 = vadd.f32 %v4165, %v4427
  %v4458 = vadd.f32 %v4166, %v4429
  %v4459 = vadd.f32 %v4167, %v4432
  %v4460 = vld [vmem:[#allocation3 + $0x68] sm:$0x3]
  %s4461 = scalar_lea.vmem %s8, 256
  %v4462 = vld [vmem:[%s4461] sm:$0xf]
  %v4463 = vld [vmem:[%s4461 + $0x4] sm:$0xf]
  %v4464 = vld [vmem:[%s4461 + $0x8] sm:$0xf]
  %v4465 = vld [vmem:[%s4461 + $0xc] sm:$0xf]
  %v4466 = vld [vmem:[%s4461 + $0x10] sm:$0xf]
  %v4467 = vld [vmem:[%s4461 + $0x14] sm:$0xf]
  %v4468 = vld [vmem:[%s4461 + $0x18] sm:$0xf]
  %v4469 = vld [vmem:[%s4461 + $0x1c] sm:$0xf]
  %v4470 = vld [vmem:[%s4461 + $0x20] sm:$0xf]
  %v4471 = vld [vmem:[%s4461 + $0x24] sm:$0xf]
  %v4472 = vld [vmem:[%s4461 + $0x28] sm:$0xf]
  %v4473 = vld [vmem:[%s4461 + $0x2c] sm:$0xf]
  %v4474 = vld [vmem:[%s4461 + $0x30] sm:$0xf]
  %v4475 = vld [vmem:[%s4461 + $0x34] sm:$0xf]
  %v4476 = vld [vmem:[%s4461 + $0x38] sm:$0xf]
  %v4477 = vld [vmem:[%s4461 + $0x3c] sm:$0xf]
  %v4479 = vunpack.c.l.b16 %v4460
  %v4480 = vpack.c.b16 %v4479, %v4261
  %v4482 = vshrl.u32 %v4263, 16
  %v4484 = vrot.slane %v4482, 1
  %v4485 = vshll.u32 %v4263, 16
  %v4487 = vrot.slane %v4485, 2
  %v4488 = vor.u32 %v4484, %v4487
  %v4490 = vshrl.u32 %v4264, 16
  %v4492 = vrot.slane %v4490, 1
  %v4493 = vshll.u32 %v4264, 16
  %v4495 = vrot.slane %v4493, 2
  %v4496 = vor.u32 %v4492, %v4495
  %v4497 = vsel %vm1405, %v4488, %v4496
  %v4499 = vshrl.u32 %v4265, 16
  %v4501 = vrot.slane %v4499, 1
  %v4502 = vshll.u32 %v4265, 16
  %v4504 = vrot.slane %v4502, 2
  %v4505 = vor.u32 %v4501, %v4504
  %v4506 = vsel %vm1405, %v4496, %v4505
  %v4508 = vshrl.u32 %v4266, 16
  %v4510 = vrot.slane %v4508, 1
  %v4511 = vshll.u32 %v4266, 16
  %v4513 = vrot.slane %v4511, 2
  %v4514 = vor.u32 %v4510, %v4513
  %v4515 = vsel %vm1405, %v4505, %v4514
  %v4517 = vshrl.u32 %v4267, 16
  %v4519 = vrot.slane %v4517, 1
  %v4520 = vshll.u32 %v4267, 16
  %v4522 = vrot.slane %v4520, 2
  %v4523 = vor.u32 %v4519, %v4522
  %v4524 = vsel %vm1405, %v4514, %v4523
  %v4526 = vshrl.u32 %v4268, 16
  %v4528 = vrot.slane %v4526, 1
  %v4529 = vshll.u32 %v4268, 16
  %v4531 = vrot.slane %v4529, 2
  %v4532 = vor.u32 %v4528, %v4531
  %v4533 = vsel %vm1405, %v4523, %v4532
  %v4535 = vshrl.u32 %v4269, 16
  %v4537 = vrot.slane %v4535, 1
  %v4538 = vshll.u32 %v4269, 16
  %v4540 = vrot.slane %v4538, 2
  %v4541 = vor.u32 %v4537, %v4540
  %v4542 = vsel %vm1405, %v4532, %v4541
  %v4544 = vshrl.u32 %v4270, 16
  %v4546 = vrot.slane %v4544, 1
  %v4547 = vshll.u32 %v4270, 16
  %v4549 = vrot.slane %v4547, 2
  %v4550 = vor.u32 %v4546, %v4549
  %v4551 = vsel %vm1405, %v4541, %v4550
  %v4553 = vshrl.u32 %v4271, 16
  %v4555 = vrot.slane %v4553, 1
  %v4556 = vshll.u32 %v4271, 16
  %v4558 = vrot.slane %v4556, 2
  %v4559 = vor.u32 %v4555, %v4558
  %v4560 = vsel %vm1405, %v4550, %v4559
  %v4562 = vshrl.u32 %v4272, 16
  %v4564 = vrot.slane %v4562, 1
  %v4565 = vshll.u32 %v4272, 16
  %v4567 = vrot.slane %v4565, 2
  %v4568 = vor.u32 %v4564, %v4567
  %v4569 = vsel %vm1405, %v4559, %v4568
  %v4571 = vshrl.u32 %v4273, 16
  %v4573 = vrot.slane %v4571, 1
  %v4574 = vshll.u32 %v4273, 16
  %v4576 = vrot.slane %v4574, 2
  %v4577 = vor.u32 %v4573, %v4576
  %v4578 = vsel %vm1405, %v4568, %v4577
  %v4580 = vshrl.u32 %v4274, 16
  %v4582 = vrot.slane %v4580, 1
  %v4583 = vshll.u32 %v4274, 16
  %v4585 = vrot.slane %v4583, 2
  %v4586 = vor.u32 %v4582, %v4585
  %v4587 = vsel %vm1405, %v4577, %v4586
  %v4589 = vshrl.u32 %v4480, 16
  %v4591 = vrot.slane %v4589, 1
  %v4592 = vshll.u32 %v4480, 16
  %v4594 = vrot.slane %v4592, 2
  %v4595 = vor.u32 %v4591, %v4594
  %v4596 = vsel %vm1405, %v4586, %v4595
  %v4626 = vunpack.c.l.b16 %v4462
  %v4627 = vunpack.c.l.b16 %v4463
  %v4628 = vunpack.c.l.b16 %v4464
  %v4629 = vunpack.c.l.b16 %v4465
  %v4630 = vunpack.c.l.b16 %v4466
  %v4631 = vunpack.c.l.b16 %v4467
  %v4632 = vunpack.c.l.b16 %v4468
  %v4633 = vunpack.c.l.b16 %v4469
  %v4634 = vunpack.c.l.b16 %v4470
  %v4635 = vunpack.c.l.b16 %v4471
  %v4636 = vunpack.c.l.b16 %v4472
  %v4637 = vunpack.c.l.b16 %v4473
  %v4638 = vunpack.c.l.b16 %v4474
  %v4639 = vunpack.c.l.b16 %v4475
  %v4640 = vunpack.c.l.b16 %v4476
  %v4641 = vunpack.c.l.b16 %v4477
  %v4642 = vpack.c.b16 %v4627, %v4626
  %v4643 = vpack.c.b16 %v4629, %v4628
  %v4644 = vpack.c.b16 %v4631, %v4630
  %v4645 = vpack.c.b16 %v4633, %v4632
  %v4646 = vpack.c.b16 %v4635, %v4634
  %v4647 = vpack.c.b16 %v4637, %v4636
  %v4648 = vpack.c.b16 %v4639, %v4638
  %v4649 = vpack.c.b16 %v4641, %v4640
  %4658 = vmatpush.bf16.msra.mxu0 %v4649
  %4659 = vmatpush.bf16.msra.mxu0 %v4648
  %4660 = vmatpush.bf16.msra.mxu0 %v4647
  %4661 = vmatpush.bf16.msra.mxu0 %v4646
  %4662 = vmatpush.bf16.msra.mxu0 %v4645
  %4663 = vmatpush.bf16.msra.mxu0 %v4644
  %4664 = vmatpush.bf16.msra.mxu0 %v4643
  %4665 = vmatpush.bf16.msra.mxu0 %v4642
  %4666 = vmatmul.bf16.gmra.mxu0 %v4497
  %v4667 = vpop.f32.mrf.mxu0
  %v4668 = vadd.f32 0.0, %v4667
  %v4669 = vpop.f32.mrf.mxu0
  %v4670 = vadd.f32 0.0, %v4669
  %4671 = vmatmul.bf16.gmra.mxu0 %v4506
  %v4672 = vpop.f32.mrf.mxu0
  %v4673 = vadd.f32 0.0, %v4672
  %v4674 = vpop.f32.mrf.mxu0
  %v4675 = vadd.f32 0.0, %v4674
  %4676 = vmatmul.bf16.gmra.mxu0 %v4515
  %v4677 = vpop.f32.mrf.mxu0
  %v4678 = vadd.f32 0.0, %v4677
  %v4679 = vpop.f32.mrf.mxu0
  %v4680 = vadd.f32 0.0, %v4679
  %4681 = vmatmul.bf16.gmra.mxu0 %v4524
  %v4682 = vpop.f32.mrf.mxu0
  %v4683 = vadd.f32 0.0, %v4682
  %v4684 = vpop.f32.mrf.mxu0
  %v4685 = vadd.f32 0.0, %v4684
  %4686 = vmatmul.bf16.gmra.mxu0 %v4533
  %v4687 = vpop.f32.mrf.mxu0
  %v4688 = vadd.f32 0.0, %v4687
  %v4689 = vpop.f32.mrf.mxu0
  %v4690 = vadd.f32 0.0, %v4689
  %4691 = vmatmul.bf16.gmra.mxu0 %v4542
  %v4692 = vpop.f32.mrf.mxu0
  %v4693 = vadd.f32 0.0, %v4692
  %v4694 = vpop.f32.mrf.mxu0
  %v4695 = vadd.f32 0.0, %v4694
  %4696 = vmatmul.bf16.gmra.mxu0 %v4551
  %v4697 = vpop.f32.mrf.mxu0
  %v4698 = vadd.f32 0.0, %v4697
  %v4699 = vpop.f32.mrf.mxu0
  %v4700 = vadd.f32 0.0, %v4699
  %4701 = vmatmul.bf16.gmra.mxu0 %v4560
  %v4702 = vpop.f32.mrf.mxu0
  %v4703 = vadd.f32 0.0, %v4702
  %v4704 = vpop.f32.mrf.mxu0
  %v4705 = vadd.f32 0.0, %v4704
  %4706 = vmatmul.bf16.gmra.mxu0 %v4569
  %v4707 = vpop.f32.mrf.mxu0
  %v4708 = vadd.f32 0.0, %v4707
  %v4709 = vpop.f32.mrf.mxu0
  %v4710 = vadd.f32 0.0, %v4709
  %4711 = vmatmul.bf16.gmra.mxu0 %v4578
  %v4712 = vpop.f32.mrf.mxu0
  %v4713 = vadd.f32 0.0, %v4712
  %v4714 = vpop.f32.mrf.mxu0
  %v4715 = vadd.f32 0.0, %v4714
  %4716 = vmatmul.bf16.gmra.mxu0 %v4587
  %v4717 = vpop.f32.mrf.mxu0
  %v4718 = vadd.f32 0.0, %v4717
  %v4719 = vpop.f32.mrf.mxu0
  %v4720 = vadd.f32 0.0, %v4719
  %4721 = vmatmul.bf16.gmra.mxu0 %v4596
  %v4722 = vpop.f32.mrf.mxu0
  %v4723 = vadd.f32 0.0, %v4722
  %v4724 = vpop.f32.mrf.mxu0
  %v4725 = vadd.f32 0.0, %v4724
  %4726 = vmatmul.bf16.gmra.mxu0 %v4595
  %v4727 = vpop.f32.mrf.mxu0
  %v4728 = vadd.f32 0.0, %v4727
  %v4729 = vpop.f32.mrf.mxu0
  %4730 = vdwg.mxu0
  %v4731 = vadd.f32 %v4435, %v4668
  %v4732 = vadd.f32 %v4436, %v4670
  %v4733 = vadd.f32 %v4437, %v4673
  %v4734 = vadd.f32 %v4438, %v4675
  %v4735 = vadd.f32 %v4439, %v4678
  %v4736 = vadd.f32 %v4440, %v4680
  %v4737 = vadd.f32 %v4441, %v4683
  %v4738 = vadd.f32 %v4442, %v4685
  %v4739 = vadd.f32 %v4443, %v4688
  %v4740 = vadd.f32 %v4444, %v4690
  %v4741 = vadd.f32 %v4445, %v4693
  %v4742 = vadd.f32 %v4446, %v4695
  %v4743 = vadd.f32 %v4447, %v4698
  %v4744 = vadd.f32 %v4448, %v4700
  %v4745 = vadd.f32 %v4449, %v4703
  %v4746 = vadd.f32 %v4450, %v4705
  %v4747 = vadd.f32 %v4451, %v4708
  %v4748 = vadd.f32 %v4452, %v4710
  %v4749 = vadd.f32 %v4453, %v4713
  %v4750 = vadd.f32 %v4454, %v4715
  %v4751 = vadd.f32 %v4455, %v4718
  %v4752 = vadd.f32 %v4456, %v4720
  %v4753 = vadd.f32 %v4457, %v4723
  %v4754 = vadd.f32 %v4458, %v4725
  %v4755 = vadd.f32 %v4459, %v4728
  %v4756 = vld [vmem:[#allocation3 + $0x4] sm:$0xc]
  %s4757 = scalar_lea.vmem %s8, 320
  %v4758 = vld [vmem:[%s4757] sm:$0xf]
  %v4759 = vld [vmem:[%s4757 + $0x4] sm:$0xf]
  %v4760 = vld [vmem:[%s4757 + $0x8] sm:$0xf]
  %v4761 = vld [vmem:[%s4757 + $0xc] sm:$0xf]
  %v4762 = vld [vmem:[%s4757 + $0x10] sm:$0xf]
  %v4763 = vld [vmem:[%s4757 + $0x14] sm:$0xf]
  %v4764 = vld [vmem:[%s4757 + $0x18] sm:$0xf]
  %v4765 = vld [vmem:[%s4757 + $0x1c] sm:$0xf]
  %v4766 = vld [vmem:[%s4757 + $0x20] sm:$0xf]
  %v4767 = vld [vmem:[%s4757 + $0x24] sm:$0xf]
  %v4768 = vld [vmem:[%s4757 + $0x28] sm:$0xf]
  %v4769 = vld [vmem:[%s4757 + $0x2c] sm:$0xf]
  %v4770 = vld [vmem:[%s4757 + $0x30] sm:$0xf]
  %v4771 = vld [vmem:[%s4757 + $0x34] sm:$0xf]
  %v4772 = vld [vmem:[%s4757 + $0x38] sm:$0xf]
  %v4773 = vld [vmem:[%s4757 + $0x3c] sm:$0xf]
  %v4775 = vunpack.c.l.b16 %v4756
  %v4776 = vpack.c.b16 %v4238, %v4775
  %v4777 = vrot.slane %v4776, 2
  %v4778 = vrot.slane %v4264, 2
  %v4779 = vsel %vm1702, %v4777, %v4778
  %v4780 = vrot.slane %v4265, 2
  %v4781 = vsel %vm1702, %v4778, %v4780
  %v4782 = vrot.slane %v4266, 2
  %v4783 = vsel %vm1702, %v4780, %v4782
  %v4784 = vrot.slane %v4267, 2
  %v4785 = vsel %vm1702, %v4782, %v4784
  %v4786 = vrot.slane %v4268, 2
  %v4787 = vsel %vm1702, %v4784, %v4786
  %v4788 = vrot.slane %v4269, 2
  %v4789 = vsel %vm1702, %v4786, %v4788
  %v4790 = vrot.slane %v4270, 2
  %v4791 = vsel %vm1702, %v4788, %v4790
  %v4792 = vrot.slane %v4271, 2
  %v4793 = vsel %vm1702, %v4790, %v4792
  %v4794 = vrot.slane %v4272, 2
  %v4795 = vsel %vm1702, %v4792, %v4794
  %v4796 = vrot.slane %v4273, 2
  %v4797 = vsel %vm1702, %v4794, %v4796
  %v4798 = vrot.slane %v4274, 2
  %v4799 = vsel %vm1702, %v4796, %v4798
  %v4800 = vrot.slane %v4480, 2
  %v4801 = vsel %vm1702, %v4798, %v4800
  %v4831 = vunpack.c.l.b16 %v4758
  %v4832 = vunpack.c.l.b16 %v4759
  %v4833 = vunpack.c.l.b16 %v4760
  %v4834 = vunpack.c.l.b16 %v4761
  %v4835 = vunpack.c.l.b16 %v4762
  %v4836 = vunpack.c.l.b16 %v4763
  %v4837 = vunpack.c.l.b16 %v4764
  %v4838 = vunpack.c.l.b16 %v4765
  %v4839 = vunpack.c.l.b16 %v4766
  %v4840 = vunpack.c.l.b16 %v4767
  %v4841 = vunpack.c.l.b16 %v4768
  %v4842 = vunpack.c.l.b16 %v4769
  %v4843 = vunpack.c.l.b16 %v4770
  %v4844 = vunpack.c.l.b16 %v4771
  %v4845 = vunpack.c.l.b16 %v4772
  %v4846 = vunpack.c.l.b16 %v4773
  %v4847 = vpack.c.b16 %v4832, %v4831
  %v4848 = vpack.c.b16 %v4834, %v4833
  %v4849 = vpack.c.b16 %v4836, %v4835
  %v4850 = vpack.c.b16 %v4838, %v4837
  %v4851 = vpack.c.b16 %v4840, %v4839
  %v4852 = vpack.c.b16 %v4842, %v4841
  %v4853 = vpack.c.b16 %v4844, %v4843
  %v4854 = vpack.c.b16 %v4846, %v4845
  %4863 = vmatpush.bf16.msra.mxu0 %v4854
  %4864 = vmatpush.bf16.msra.mxu0 %v4853
  %4865 = vmatpush.bf16.msra.mxu0 %v4852
  %4866 = vmatpush.bf16.msra.mxu0 %v4851
  %4867 = vmatpush.bf16.msra.mxu0 %v4850
  %4868 = vmatpush.bf16.msra.mxu0 %v4849
  %4869 = vmatpush.bf16.msra.mxu0 %v4848
  %4870 = vmatpush.bf16.msra.mxu0 %v4847
  %4871 = vmatmul.bf16.gmra.mxu0 %v4779
  %v4872 = vpop.f32.mrf.mxu0
  %v4873 = vadd.f32 0.0, %v4872
  %v4874 = vpop.f32.mrf.mxu0
  %v4875 = vadd.f32 0.0, %v4874
  %4876 = vmatmul.bf16.gmra.mxu0 %v4781
  %v4877 = vpop.f32.mrf.mxu0
  %v4878 = vadd.f32 0.0, %v4877
  %v4879 = vpop.f32.mrf.mxu0
  %v4880 = vadd.f32 0.0, %v4879
  %4881 = vmatmul.bf16.gmra.mxu0 %v4783
  %v4882 = vpop.f32.mrf.mxu0
  %v4883 = vadd.f32 0.0, %v4882
  %v4884 = vpop.f32.mrf.mxu0
  %v4885 = vadd.f32 0.0, %v4884
  %4886 = vmatmul.bf16.gmra.mxu0 %v4785
  %v4887 = vpop.f32.mrf.mxu0
  %v4888 = vadd.f32 0.0, %v4887
  %v4889 = vpop.f32.mrf.mxu0
  %v4890 = vadd.f32 0.0, %v4889
  %4891 = vmatmul.bf16.gmra.mxu0 %v4787
  %v4892 = vpop.f32.mrf.mxu0
  %v4893 = vadd.f32 0.0, %v4892
  %v4894 = vpop.f32.mrf.mxu0
  %v4895 = vadd.f32 0.0, %v4894
  %4896 = vmatmul.bf16.gmra.mxu0 %v4789
  %v4897 = vpop.f32.mrf.mxu0
  %v4898 = vadd.f32 0.0, %v4897
  %v4899 = vpop.f32.mrf.mxu0
  %v4900 = vadd.f32 0.0, %v4899
  %4901 = vmatmul.bf16.gmra.mxu0 %v4791
  %v4902 = vpop.f32.mrf.mxu0
  %v4903 = vadd.f32 0.0, %v4902
  %v4904 = vpop.f32.mrf.mxu0
  %v4905 = vadd.f32 0.0, %v4904
  %4906 = vmatmul.bf16.gmra.mxu0 %v4793
  %v4907 = vpop.f32.mrf.mxu0
  %v4908 = vadd.f32 0.0, %v4907
  %v4909 = vpop.f32.mrf.mxu0
  %v4910 = vadd.f32 0.0, %v4909
  %4911 = vmatmul.bf16.gmra.mxu0 %v4795
  %v4912 = vpop.f32.mrf.mxu0
  %v4913 = vadd.f32 0.0, %v4912
  %v4914 = vpop.f32.mrf.mxu0
  %v4915 = vadd.f32 0.0, %v4914
  %4916 = vmatmul.bf16.gmra.mxu0 %v4797
  %v4917 = vpop.f32.mrf.mxu0
  %v4918 = vadd.f32 0.0, %v4917
  %v4919 = vpop.f32.mrf.mxu0
  %v4920 = vadd.f32 0.0, %v4919
  %4921 = vmatmul.bf16.gmra.mxu0 %v4799
  %v4922 = vpop.f32.mrf.mxu0
  %v4923 = vadd.f32 0.0, %v4922
  %v4924 = vpop.f32.mrf.mxu0
  %v4925 = vadd.f32 0.0, %v4924
  %4926 = vmatmul.bf16.gmra.mxu0 %v4801
  %v4927 = vpop.f32.mrf.mxu0
  %v4928 = vadd.f32 0.0, %v4927
  %v4929 = vpop.f32.mrf.mxu0
  %v4930 = vadd.f32 0.0, %v4929
  %4931 = vmatmul.bf16.gmra.mxu0 %v4800
  %v4932 = vpop.f32.mrf.mxu0
  %v4933 = vadd.f32 0.0, %v4932
  %v4934 = vpop.f32.mrf.mxu0
  %4935 = vdwg.mxu0
  %v4936 = vadd.f32 %v4731, %v4873
  %v4937 = vadd.f32 %v4732, %v4875
  %v4938 = vadd.f32 %v4733, %v4878
  %v4939 = vadd.f32 %v4734, %v4880
  %v4940 = vadd.f32 %v4735, %v4883
  %v4941 = vadd.f32 %v4736, %v4885
  %v4942 = vadd.f32 %v4737, %v4888
  %v4943 = vadd.f32 %v4738, %v4890
  %v4944 = vadd.f32 %v4739, %v4893
  %v4945 = vadd.f32 %v4740, %v4895
  %v4946 = vadd.f32 %v4741, %v4898
  %v4947 = vadd.f32 %v4742, %v4900
  %v4948 = vadd.f32 %v4743, %v4903
  %v4949 = vadd.f32 %v4744, %v4905
  %v4950 = vadd.f32 %v4745, %v4908
  %v4951 = vadd.f32 %v4746, %v4910
  %v4952 = vadd.f32 %v4747, %v4913
  %v4953 = vadd.f32 %v4748, %v4915
  %v4954 = vadd.f32 %v4749, %v4918
  %v4955 = vadd.f32 %v4750, %v4920
  %v4956 = vadd.f32 %v4751, %v4923
  %v4957 = vadd.f32 %v4752, %v4925
  %v4958 = vadd.f32 %v4753, %v4928
  %v4959 = vadd.f32 %v4754, %v4930
  %v4960 = vadd.f32 %v4755, %v4933
  %v4961 = vld [vmem:[#allocation3 + $0x8] sm:$0xc]
  %v4962 = vld [vmem:[#allocation3 + $0xc] sm:$0xf]
  %v4963 = vld [vmem:[#allocation3 + $0x10] sm:$0xf]
  %v4964 = vld [vmem:[#allocation3 + $0x14] sm:$0xf]
  %v4965 = vld [vmem:[#allocation3 + $0x18] sm:$0xf]
  %v4966 = vld [vmem:[#allocation3 + $0x1c] sm:$0xf]
  %v4967 = vld [vmem:[#allocation3 + $0x20] sm:$0xf]
  %v4968 = vld [vmem:[#allocation3 + $0x24] sm:$0xf]
  %v4969 = vld [vmem:[#allocation3 + $0x28] sm:$0xf]
  %v4970 = vld [vmem:[#allocation3 + $0x2c] sm:$0xf]
  %v4971 = vld [vmem:[#allocation3 + $0x30] sm:$0xf]
  %v4972 = vld [vmem:[#allocation3 + $0x34] sm:$0xf]
  %v4973 = vld [vmem:[#allocation3 + $0x38] sm:$0xf]
  %v4974 = vld [vmem:[#allocation3 + $0x3c] sm:$0xf]
  %v4975 = vld [vmem:[#allocation3 + $0x40] sm:$0xf]
  %v4976 = vld [vmem:[#allocation3 + $0x44] sm:$0xf]
  %v4977 = vld [vmem:[#allocation3 + $0x48] sm:$0xf]
  %v4978 = vld [vmem:[#allocation3 + $0x4c] sm:$0xf]
  %v4979 = vld [vmem:[#allocation3 + $0x50] sm:$0xf]
  %v4980 = vld [vmem:[#allocation3 + $0x54] sm:$0xf]
  %v4981 = vld [vmem:[#allocation3 + $0x58] sm:$0xf]
  %v4982 = vld [vmem:[#allocation3 + $0x5c] sm:$0xf]
  %v4983 = vld [vmem:[#allocation3 + $0x60] sm:$0xf]
  %v4984 = vld [vmem:[#allocation3 + $0x64] sm:$0xf]
  %v4985 = vld [vmem:[#allocation3 + $0x68] sm:$0xf]
  %v4986 = vld [vmem:[#allocation3 + $0x6c] sm:$0x3]
  %s4987 = scalar_lea.vmem %s8, 384
  %v4988 = vld [vmem:[%s4987] sm:$0xf]
  %v4989 = vld [vmem:[%s4987 + $0x4] sm:$0xf]
  %v4990 = vld [vmem:[%s4987 + $0x8] sm:$0xf]
  %v4991 = vld [vmem:[%s4987 + $0xc] sm:$0xf]
  %v4992 = vld [vmem:[%s4987 + $0x10] sm:$0xf]
  %v4993 = vld [vmem:[%s4987 + $0x14] sm:$0xf]
  %v4994 = vld [vmem:[%s4987 + $0x18] sm:$0xf]
  %v4995 = vld [vmem:[%s4987 + $0x1c] sm:$0xf]
  %v4996 = vld [vmem:[%s4987 + $0x20] sm:$0xf]
  %v4997 = vld [vmem:[%s4987 + $0x24] sm:$0xf]
  %v4998 = vld [vmem:[%s4987 + $0x28] sm:$0xf]
  %v4999 = vld [vmem:[%s4987 + $0x2c] sm:$0xf]
  %v5000 = vld [vmem:[%s4987 + $0x30] sm:$0xf]
  %v5001 = vld [vmem:[%s4987 + $0x34] sm:$0xf]
  %v5002 = vld [vmem:[%s4987 + $0x38] sm:$0xf]
  %v5003 = vld [vmem:[%s4987 + $0x3c] sm:$0xf]
  %v5030 = vunpack.c.l.b16 %v4961
  %v5031 = vunpack.c.l.b16 %v4962
  %v5032 = vunpack.c.l.b16 %v4963
  %v5033 = vunpack.c.l.b16 %v4964
  %v5034 = vunpack.c.l.b16 %v4965
  %v5035 = vunpack.c.l.b16 %v4966
  %v5036 = vunpack.c.l.b16 %v4967
  %v5037 = vunpack.c.l.b16 %v4968
  %v5038 = vunpack.c.l.b16 %v4969
  %v5039 = vunpack.c.l.b16 %v4970
  %v5040 = vunpack.c.l.b16 %v4971
  %v5041 = vunpack.c.l.b16 %v4972
  %v5042 = vunpack.c.l.b16 %v4973
  %v5043 = vunpack.c.l.b16 %v4974
  %v5044 = vunpack.c.l.b16 %v4975
  %v5045 = vunpack.c.l.b16 %v4976
  %v5046 = vunpack.c.l.b16 %v4977
  %v5047 = vunpack.c.l.b16 %v4978
  %v5048 = vunpack.c.l.b16 %v4979
  %v5049 = vunpack.c.l.b16 %v4980
  %v5050 = vunpack.c.l.b16 %v4981
  %v5051 = vunpack.c.l.b16 %v4982
  %v5052 = vunpack.c.l.b16 %v4983
  %v5053 = vunpack.c.l.b16 %v4984
  %v5054 = vunpack.c.l.b16 %v4985
  %v5055 = vunpack.c.l.b16 %v4986
  %v5056 = vpack.c.b16 %v5031, %v5030
  %v5057 = vpack.c.b16 %v5033, %v5032
  %v5058 = vpack.c.b16 %v5035, %v5034
  %v5059 = vpack.c.b16 %v5037, %v5036
  %v5060 = vpack.c.b16 %v5039, %v5038
  %v5061 = vpack.c.b16 %v5041, %v5040
  %v5062 = vpack.c.b16 %v5043, %v5042
  %v5063 = vpack.c.b16 %v5045, %v5044
  %v5064 = vpack.c.b16 %v5047, %v5046
  %v5065 = vpack.c.b16 %v5049, %v5048
  %v5066 = vpack.c.b16 %v5051, %v5050
  %v5067 = vpack.c.b16 %v5053, %v5052
  %v5068 = vpack.c.b16 %v5055, %v5054
  %v5069 = vrot.slane %v5056, 2
  %v5070 = vrot.slane %v5057, 2
  %v5071 = vsel %vm1702, %v5069, %v5070
  %v5072 = vrot.slane %v5058, 2
  %v5073 = vsel %vm1702, %v5070, %v5072
  %v5074 = vrot.slane %v5059, 2
  %v5075 = vsel %vm1702, %v5072, %v5074
  %v5076 = vrot.slane %v5060, 2
  %v5077 = vsel %vm1702, %v5074, %v5076
  %v5078 = vrot.slane %v5061, 2
  %v5079 = vsel %vm1702, %v5076, %v5078
  %v5080 = vrot.slane %v5062, 2
  %v5081 = vsel %vm1702, %v5078, %v5080
  %v5082 = vrot.slane %v5063, 2
  %v5083 = vsel %vm1702, %v5080, %v5082
  %v5084 = vrot.slane %v5064, 2
  %v5085 = vsel %vm1702, %v5082, %v5084
  %v5086 = vrot.slane %v5065, 2
  %v5087 = vsel %vm1702, %v5084, %v5086
  %v5088 = vrot.slane %v5066, 2
  %v5089 = vsel %vm1702, %v5086, %v5088
  %v5090 = vrot.slane %v5067, 2
  %v5091 = vsel %vm1702, %v5088, %v5090
  %v5092 = vrot.slane %v5068, 2
  %v5093 = vsel %vm1702, %v5090, %v5092
  %v5123 = vunpack.c.l.b16 %v4988
  %v5124 = vunpack.c.l.b16 %v4989
  %v5125 = vunpack.c.l.b16 %v4990
  %v5126 = vunpack.c.l.b16 %v4991
  %v5127 = vunpack.c.l.b16 %v4992
  %v5128 = vunpack.c.l.b16 %v4993
  %v5129 = vunpack.c.l.b16 %v4994
  %v5130 = vunpack.c.l.b16 %v4995
  %v5131 = vunpack.c.l.b16 %v4996
  %v5132 = vunpack.c.l.b16 %v4997
  %v5133 = vunpack.c.l.b16 %v4998
  %v5134 = vunpack.c.l.b16 %v4999
  %v5135 = vunpack.c.l.b16 %v5000
  %v5136 = vunpack.c.l.b16 %v5001
  %v5137 = vunpack.c.l.b16 %v5002
  %v5138 = vunpack.c.l.b16 %v5003
  %v5139 = vpack.c.b16 %v5124, %v5123
  %v5140 = vpack.c.b16 %v5126, %v5125
  %v5141 = vpack.c.b16 %v5128, %v5127
  %v5142 = vpack.c.b16 %v5130, %v5129
  %v5143 = vpack.c.b16 %v5132, %v5131
  %v5144 = vpack.c.b16 %v5134, %v5133
  %v5145 = vpack.c.b16 %v5136, %v5135
  %v5146 = vpack.c.b16 %v5138, %v5137
  %5155 = vmatpush.bf16.msra.mxu0 %v5146
  %5156 = vmatpush.bf16.msra.mxu0 %v5145
  %5157 = vmatpush.bf16.msra.mxu0 %v5144
  %5158 = vmatpush.bf16.msra.mxu0 %v5143
  %5159 = vmatpush.bf16.msra.mxu0 %v5142
  %5160 = vmatpush.bf16.msra.mxu0 %v5141
  %5161 = vmatpush.bf16.msra.mxu0 %v5140
  %5162 = vmatpush.bf16.msra.mxu0 %v5139
  %5163 = vmatmul.bf16.gmra.mxu0 %v5071
  %v5164 = vpop.f32.mrf.mxu0
  %v5165 = vadd.f32 0.0, %v5164
  %v5166 = vpop.f32.mrf.mxu0
  %v5167 = vadd.f32 0.0, %v5166
  %5168 = vmatmul.bf16.gmra.mxu0 %v5073
  %v5169 = vpop.f32.mrf.mxu0
  %v5170 = vadd.f32 0.0, %v5169
  %v5171 = vpop.f32.mrf.mxu0
  %v5172 = vadd.f32 0.0, %v5171
  %5173 = vmatmul.bf16.gmra.mxu0 %v5075
  %v5174 = vpop.f32.mrf.mxu0
  %v5175 = vadd.f32 0.0, %v5174
  %v5176 = vpop.f32.mrf.mxu0
  %v5177 = vadd.f32 0.0, %v5176
  %5178 = vmatmul.bf16.gmra.mxu0 %v5077
  %v5179 = vpop.f32.mrf.mxu0
  %v5180 = vadd.f32 0.0, %v5179
  %v5181 = vpop.f32.mrf.mxu0
  %v5182 = vadd.f32 0.0, %v5181
  %5183 = vmatmul.bf16.gmra.mxu0 %v5079
  %v5184 = vpop.f32.mrf.mxu0
  %v5185 = vadd.f32 0.0, %v5184
  %v5186 = vpop.f32.mrf.mxu0
  %v5187 = vadd.f32 0.0, %v5186
  %5188 = vmatmul.bf16.gmra.mxu0 %v5081
  %v5189 = vpop.f32.mrf.mxu0
  %v5190 = vadd.f32 0.0, %v5189
  %v5191 = vpop.f32.mrf.mxu0
  %v5192 = vadd.f32 0.0, %v5191
  %5193 = vmatmul.bf16.gmra.mxu0 %v5083
  %v5194 = vpop.f32.mrf.mxu0
  %v5195 = vadd.f32 0.0, %v5194
  %v5196 = vpop.f32.mrf.mxu0
  %v5197 = vadd.f32 0.0, %v5196
  %5198 = vmatmul.bf16.gmra.mxu0 %v5085
  %v5199 = vpop.f32.mrf.mxu0
  %v5200 = vadd.f32 0.0, %v5199
  %v5201 = vpop.f32.mrf.mxu0
  %v5202 = vadd.f32 0.0, %v5201
  %5203 = vmatmul.bf16.gmra.mxu0 %v5087
  %v5204 = vpop.f32.mrf.mxu0
  %v5205 = vadd.f32 0.0, %v5204
  %v5206 = vpop.f32.mrf.mxu0
  %v5207 = vadd.f32 0.0, %v5206
  %5208 = vmatmul.bf16.gmra.mxu0 %v5089
  %v5209 = vpop.f32.mrf.mxu0
  %v5210 = vadd.f32 0.0, %v5209
  %v5211 = vpop.f32.mrf.mxu0
  %v5212 = vadd.f32 0.0, %v5211
  %5213 = vmatmul.bf16.gmra.mxu0 %v5091
  %v5214 = vpop.f32.mrf.mxu0
  %v5215 = vadd.f32 0.0, %v5214
  %v5216 = vpop.f32.mrf.mxu0
  %v5217 = vadd.f32 0.0, %v5216
  %5218 = vmatmul.bf16.gmra.mxu0 %v5093
  %v5219 = vpop.f32.mrf.mxu0
  %v5220 = vadd.f32 0.0, %v5219
  %v5221 = vpop.f32.mrf.mxu0
  %v5222 = vadd.f32 0.0, %v5221
  %5223 = vmatmul.bf16.gmra.mxu0 %v5092
  %v5224 = vpop.f32.mrf.mxu0
  %v5225 = vadd.f32 0.0, %v5224
  %v5226 = vpop.f32.mrf.mxu0
  %5227 = vdwg.mxu0
  %v5228 = vadd.f32 %v4936, %v5165
  %v5229 = vadd.f32 %v4937, %v5167
  %v5230 = vadd.f32 %v4938, %v5170
  %v5231 = vadd.f32 %v4939, %v5172
  %v5232 = vadd.f32 %v4940, %v5175
  %v5233 = vadd.f32 %v4941, %v5177
  %v5234 = vadd.f32 %v4942, %v5180
  %v5235 = vadd.f32 %v4943, %v5182
  %v5236 = vadd.f32 %v4944, %v5185
  %v5237 = vadd.f32 %v4945, %v5187
  %v5238 = vadd.f32 %v4946, %v5190
  %v5239 = vadd.f32 %v4947, %v5192
  %v5240 = vadd.f32 %v4948, %v5195
  %v5241 = vadd.f32 %v4949, %v5197
  %v5242 = vadd.f32 %v4950, %v5200
  %v5243 = vadd.f32 %v4951, %v5202
  %v5244 = vadd.f32 %v4952, %v5205
  %v5245 = vadd.f32 %v4953, %v5207
  %v5246 = vadd.f32 %v4954, %v5210
  %v5247 = vadd.f32 %v4955, %v5212
  %v5248 = vadd.f32 %v4956, %v5215
  %v5249 = vadd.f32 %v4957, %v5217
  %v5250 = vadd.f32 %v4958, %v5220
  %v5251 = vadd.f32 %v4959, %v5222
  %v5252 = vadd.f32 %v4960, %v5225
  %v5253 = vld [vmem:[#allocation3 + $0x6c] sm:$0x7]
  %s5254 = scalar_lea.vmem %s8, 448
  %v5255 = vld [vmem:[%s5254] sm:$0xf]
  %v5256 = vld [vmem:[%s5254 + $0x4] sm:$0xf]
  %v5257 = vld [vmem:[%s5254 + $0x8] sm:$0xf]
  %v5258 = vld [vmem:[%s5254 + $0xc] sm:$0xf]
  %v5259 = vld [vmem:[%s5254 + $0x10] sm:$0xf]
  %v5260 = vld [vmem:[%s5254 + $0x14] sm:$0xf]
  %v5261 = vld [vmem:[%s5254 + $0x18] sm:$0xf]
  %v5262 = vld [vmem:[%s5254 + $0x1c] sm:$0xf]
  %v5263 = vld [vmem:[%s5254 + $0x20] sm:$0xf]
  %v5264 = vld [vmem:[%s5254 + $0x24] sm:$0xf]
  %v5265 = vld [vmem:[%s5254 + $0x28] sm:$0xf]
  %v5266 = vld [vmem:[%s5254 + $0x2c] sm:$0xf]
  %v5267 = vld [vmem:[%s5254 + $0x30] sm:$0xf]
  %v5268 = vld [vmem:[%s5254 + $0x34] sm:$0xf]
  %v5269 = vld [vmem:[%s5254 + $0x38] sm:$0xf]
  %v5270 = vld [vmem:[%s5254 + $0x3c] sm:$0xf]
  %v5272 = vunpack.c.l.b16 %v5253
  %v5273 = vpack.c.b16 %v5272, %v5054
  %v5275 = vshrl.u32 %v5056, 16
  %v5277 = vrot.slane %v5275, 2
  %v5278 = vshll.u32 %v5056, 16
  %v5280 = vrot.slane %v5278, 3
  %v5281 = vor.u32 %v5277, %v5280
  %v5283 = vshrl.u32 %v5057, 16
  %v5285 = vrot.slane %v5283, 2
  %v5286 = vshll.u32 %v5057, 16
  %v5288 = vrot.slane %v5286, 3
  %v5289 = vor.u32 %v5285, %v5288
  %v5290 = vsel %vm2200, %v5281, %v5289
  %v5292 = vshrl.u32 %v5058, 16
  %v5294 = vrot.slane %v5292, 2
  %v5295 = vshll.u32 %v5058, 16
  %v5297 = vrot.slane %v5295, 3
  %v5298 = vor.u32 %v5294, %v5297
  %v5299 = vsel %vm2200, %v5289, %v5298
  %v5301 = vshrl.u32 %v5059, 16
  %v5303 = vrot.slane %v5301, 2
  %v5304 = vshll.u32 %v5059, 16
  %v5306 = vrot.slane %v5304, 3
  %v5307 = vor.u32 %v5303, %v5306
  %v5308 = vsel %vm2200, %v5298, %v5307
  %v5310 = vshrl.u32 %v5060, 16
  %v5312 = vrot.slane %v5310, 2
  %v5313 = vshll.u32 %v5060, 16
  %v5315 = vrot.slane %v5313, 3
  %v5316 = vor.u32 %v5312, %v5315
  %v5317 = vsel %vm2200, %v5307, %v5316
  %v5319 = vshrl.u32 %v5061, 16
  %v5321 = vrot.slane %v5319, 2
  %v5322 = vshll.u32 %v5061, 16
  %v5324 = vrot.slane %v5322, 3
  %v5325 = vor.u32 %v5321, %v5324
  %v5326 = vsel %vm2200, %v5316, %v5325
  %v5328 = vshrl.u32 %v5062, 16
  %v5330 = vrot.slane %v5328, 2
  %v5331 = vshll.u32 %v5062, 16
  %v5333 = vrot.slane %v5331, 3
  %v5334 = vor.u32 %v5330, %v5333
  %v5335 = vsel %vm2200, %v5325, %v5334
  %v5337 = vshrl.u32 %v5063, 16
  %v5339 = vrot.slane %v5337, 2
  %v5340 = vshll.u32 %v5063, 16
  %v5342 = vrot.slane %v5340, 3
  %v5343 = vor.u32 %v5339, %v5342
  %v5344 = vsel %vm2200, %v5334, %v5343
  %v5346 = vshrl.u32 %v5064, 16
  %v5348 = vrot.slane %v5346, 2
  %v5349 = vshll.u32 %v5064, 16
  %v5351 = vrot.slane %v5349, 3
  %v5352 = vor.u32 %v5348, %v5351
  %v5353 = vsel %vm2200, %v5343, %v5352
  %v5355 = vshrl.u32 %v5065, 16
  %v5357 = vrot.slane %v5355, 2
  %v5358 = vshll.u32 %v5065, 16
  %v5360 = vrot.slane %v5358, 3
  %v5361 = vor.u32 %v5357, %v5360
  %v5362 = vsel %vm2200, %v5352, %v5361
  %v5364 = vshrl.u32 %v5066, 16
  %v5366 = vrot.slane %v5364, 2
  %v5367 = vshll.u32 %v5066, 16
  %v5369 = vrot.slane %v5367, 3
  %v5370 = vor.u32 %v5366, %v5369
  %v5371 = vsel %vm2200, %v5361, %v5370
  %v5373 = vshrl.u32 %v5067, 16
  %v5375 = vrot.slane %v5373, 2
  %v5376 = vshll.u32 %v5067, 16
  %v5378 = vrot.slane %v5376, 3
  %v5379 = vor.u32 %v5375, %v5378
  %v5380 = vsel %vm2200, %v5370, %v5379
  %v5382 = vshrl.u32 %v5273, 16
  %v5384 = vrot.slane %v5382, 2
  %v5385 = vshll.u32 %v5273, 16
  %v5387 = vrot.slane %v5385, 3
  %v5388 = vor.u32 %v5384, %v5387
  %v5389 = vsel %vm2200, %v5379, %v5388
  %v5419 = vunpack.c.l.b16 %v5255
  %v5420 = vunpack.c.l.b16 %v5256
  %v5421 = vunpack.c.l.b16 %v5257
  %v5422 = vunpack.c.l.b16 %v5258
  %v5423 = vunpack.c.l.b16 %v5259
  %v5424 = vunpack.c.l.b16 %v5260
  %v5425 = vunpack.c.l.b16 %v5261
  %v5426 = vunpack.c.l.b16 %v5262
  %v5427 = vunpack.c.l.b16 %v5263
  %v5428 = vunpack.c.l.b16 %v5264
  %v5429 = vunpack.c.l.b16 %v5265
  %v5430 = vunpack.c.l.b16 %v5266
  %v5431 = vunpack.c.l.b16 %v5267
  %v5432 = vunpack.c.l.b16 %v5268
  %v5433 = vunpack.c.l.b16 %v5269
  %v5434 = vunpack.c.l.b16 %v5270
  %v5435 = vpack.c.b16 %v5420, %v5419
  %v5436 = vpack.c.b16 %v5422, %v5421
  %v5437 = vpack.c.b16 %v5424, %v5423
  %v5438 = vpack.c.b16 %v5426, %v5425
  %v5439 = vpack.c.b16 %v5428, %v5427
  %v5440 = vpack.c.b16 %v5430, %v5429
  %v5441 = vpack.c.b16 %v5432, %v5431
  %v5442 = vpack.c.b16 %v5434, %v5433
  %5451 = vmatpush.bf16.msra.mxu0 %v5442
  %5452 = vmatpush.bf16.msra.mxu0 %v5441
  %5453 = vmatpush.bf16.msra.mxu0 %v5440
  %5454 = vmatpush.bf16.msra.mxu0 %v5439
  %5455 = vmatpush.bf16.msra.mxu0 %v5438
  %5456 = vmatpush.bf16.msra.mxu0 %v5437
  %5457 = vmatpush.bf16.msra.mxu0 %v5436
  %5458 = vmatpush.bf16.msra.mxu0 %v5435
  %5459 = vmatmul.bf16.gmra.mxu0 %v5290
  %v5460 = vpop.f32.mrf.mxu0
  %v5461 = vadd.f32 0.0, %v5460
  %v5462 = vpop.f32.mrf.mxu0
  %v5463 = vadd.f32 0.0, %v5462
  %5464 = vmatmul.bf16.gmra.mxu0 %v5299
  %v5465 = vpop.f32.mrf.mxu0
  %v5466 = vadd.f32 0.0, %v5465
  %v5467 = vpop.f32.mrf.mxu0
  %v5468 = vadd.f32 0.0, %v5467
  %5469 = vmatmul.bf16.gmra.mxu0 %v5308
  %v5470 = vpop.f32.mrf.mxu0
  %v5471 = vadd.f32 0.0, %v5470
  %v5472 = vpop.f32.mrf.mxu0
  %v5473 = vadd.f32 0.0, %v5472
  %5474 = vmatmul.bf16.gmra.mxu0 %v5317
  %v5475 = vpop.f32.mrf.mxu0
  %v5476 = vadd.f32 0.0, %v5475
  %v5477 = vpop.f32.mrf.mxu0
  %v5478 = vadd.f32 0.0, %v5477
  %5479 = vmatmul.bf16.gmra.mxu0 %v5326
  %v5480 = vpop.f32.mrf.mxu0
  %v5481 = vadd.f32 0.0, %v5480
  %v5482 = vpop.f32.mrf.mxu0
  %v5483 = vadd.f32 0.0, %v5482
  %5484 = vmatmul.bf16.gmra.mxu0 %v5335
  %v5485 = vpop.f32.mrf.mxu0
  %v5486 = vadd.f32 0.0, %v5485
  %v5487 = vpop.f32.mrf.mxu0
  %v5488 = vadd.f32 0.0, %v5487
  %5489 = vmatmul.bf16.gmra.mxu0 %v5344
  %v5490 = vpop.f32.mrf.mxu0
  %v5491 = vadd.f32 0.0, %v5490
  %v5492 = vpop.f32.mrf.mxu0
  %v5493 = vadd.f32 0.0, %v5492
  %5494 = vmatmul.bf16.gmra.mxu0 %v5353
  %v5495 = vpop.f32.mrf.mxu0
  %v5496 = vadd.f32 0.0, %v5495
  %v5497 = vpop.f32.mrf.mxu0
  %v5498 = vadd.f32 0.0, %v5497
  %5499 = vmatmul.bf16.gmra.mxu0 %v5362
  %v5500 = vpop.f32.mrf.mxu0
  %v5501 = vadd.f32 0.0, %v5500
  %v5502 = vpop.f32.mrf.mxu0
  %v5503 = vadd.f32 0.0, %v5502
  %5504 = vmatmul.bf16.gmra.mxu0 %v5371
  %v5505 = vpop.f32.mrf.mxu0
  %v5506 = vadd.f32 0.0, %v5505
  %v5507 = vpop.f32.mrf.mxu0
  %v5508 = vadd.f32 0.0, %v5507
  %5509 = vmatmul.bf16.gmra.mxu0 %v5380
  %v5510 = vpop.f32.mrf.mxu0
  %v5511 = vadd.f32 0.0, %v5510
  %v5512 = vpop.f32.mrf.mxu0
  %v5513 = vadd.f32 0.0, %v5512
  %5514 = vmatmul.bf16.gmra.mxu0 %v5389
  %v5515 = vpop.f32.mrf.mxu0
  %v5516 = vadd.f32 0.0, %v5515
  %v5517 = vpop.f32.mrf.mxu0
  %v5518 = vadd.f32 0.0, %v5517
  %5519 = vmatmul.bf16.gmra.mxu0 %v5388
  %v5520 = vpop.f32.mrf.mxu0
  %v5521 = vadd.f32 0.0, %v5520
  %v5522 = vpop.f32.mrf.mxu0
  %5523 = vdwg.mxu0
  %v5524 = vadd.f32 %v5228, %v5461
  %v5525 = vadd.f32 %v5229, %v5463
  %v5526 = vadd.f32 %v5230, %v5466
  %v5527 = vadd.f32 %v5231, %v5468
  %v5528 = vadd.f32 %v5232, %v5471
  %v5529 = vadd.f32 %v5233, %v5473
  %v5530 = vadd.f32 %v5234, %v5476
  %v5531 = vadd.f32 %v5235, %v5478
  %v5532 = vadd.f32 %v5236, %v5481
  %v5533 = vadd.f32 %v5237, %v5483
  %v5534 = vadd.f32 %v5238, %v5486
  %v5535 = vadd.f32 %v5239, %v5488
  %v5536 = vadd.f32 %v5240, %v5491
  %v5537 = vadd.f32 %v5241, %v5493
  %v5538 = vadd.f32 %v5242, %v5496
  %v5539 = vadd.f32 %v5243, %v5498
  %v5540 = vadd.f32 %v5244, %v5501
  %v5541 = vadd.f32 %v5245, %v5503
  %v5542 = vadd.f32 %v5246, %v5506
  %v5543 = vadd.f32 %v5247, %v5508
  %v5544 = vadd.f32 %v5248, %v5511
  %v5545 = vadd.f32 %v5249, %v5513
  %v5546 = vadd.f32 %v5250, %v5516
  %v5547 = vadd.f32 %v5251, %v5518
  %v5548 = vadd.f32 %v5252, %v5521
  %v5549 = vld [vmem:[#allocation3 + $0x8] sm:$0x8]
  %s5550 = scalar_lea.vmem %s8, 512
  %v5551 = vld [vmem:[%s5550] sm:$0xf]
  %v5552 = vld [vmem:[%s5550 + $0x4] sm:$0xf]
  %v5553 = vld [vmem:[%s5550 + $0x8] sm:$0xf]
  %v5554 = vld [vmem:[%s5550 + $0xc] sm:$0xf]
  %v5555 = vld [vmem:[%s5550 + $0x10] sm:$0xf]
  %v5556 = vld [vmem:[%s5550 + $0x14] sm:$0xf]
  %v5557 = vld [vmem:[%s5550 + $0x18] sm:$0xf]
  %v5558 = vld [vmem:[%s5550 + $0x1c] sm:$0xf]
  %v5559 = vld [vmem:[%s5550 + $0x20] sm:$0xf]
  %v5560 = vld [vmem:[%s5550 + $0x24] sm:$0xf]
  %v5561 = vld [vmem:[%s5550 + $0x28] sm:$0xf]
  %v5562 = vld [vmem:[%s5550 + $0x2c] sm:$0xf]
  %v5563 = vld [vmem:[%s5550 + $0x30] sm:$0xf]
  %v5564 = vld [vmem:[%s5550 + $0x34] sm:$0xf]
  %v5565 = vld [vmem:[%s5550 + $0x38] sm:$0xf]
  %v5566 = vld [vmem:[%s5550 + $0x3c] sm:$0xf]
  %v5568 = vunpack.c.l.b16 %v5549
  %v5569 = vpack.c.b16 %v5031, %v5568
  %v5570 = vrot.slane %v5569, 3
  %v5571 = vrot.slane %v5057, 3
  %v5572 = vsel %vm2497, %v5570, %v5571
  %v5573 = vrot.slane %v5058, 3
  %v5574 = vsel %vm2497, %v5571, %v5573
  %v5575 = vrot.slane %v5059, 3
  %v5576 = vsel %vm2497, %v5573, %v5575
  %v5577 = vrot.slane %v5060, 3
  %v5578 = vsel %vm2497, %v5575, %v5577
  %v5579 = vrot.slane %v5061, 3
  %v5580 = vsel %vm2497, %v5577, %v5579
  %v5581 = vrot.slane %v5062, 3
  %v5582 = vsel %vm2497, %v5579, %v5581
  %v5583 = vrot.slane %v5063, 3
  %v5584 = vsel %vm2497, %v5581, %v5583
  %v5585 = vrot.slane %v5064, 3
  %v5586 = vsel %vm2497, %v5583, %v5585
  %v5587 = vrot.slane %v5065, 3
  %v5588 = vsel %vm2497, %v5585, %v5587
  %v5589 = vrot.slane %v5066, 3
  %v5590 = vsel %vm2497, %v5587, %v5589
  %v5591 = vrot.slane %v5067, 3
  %v5592 = vsel %vm2497, %v5589, %v5591
  %v5593 = vrot.slane %v5273, 3
  %v5594 = vsel %vm2497, %v5591, %v5593
  %v5624 = vunpack.c.l.b16 %v5551
  %v5625 = vunpack.c.l.b16 %v5552
  %v5626 = vunpack.c.l.b16 %v5553
  %v5627 = vunpack.c.l.b16 %v5554
  %v5628 = vunpack.c.l.b16 %v5555
  %v5629 = vunpack.c.l.b16 %v5556
  %v5630 = vunpack.c.l.b16 %v5557
  %v5631 = vunpack.c.l.b16 %v5558
  %v5632 = vunpack.c.l.b16 %v5559
  %v5633 = vunpack.c.l.b16 %v5560
  %v5634 = vunpack.c.l.b16 %v5561
  %v5635 = vunpack.c.l.b16 %v5562
  %v5636 = vunpack.c.l.b16 %v5563
  %v5637 = vunpack.c.l.b16 %v5564
  %v5638 = vunpack.c.l.b16 %v5565
  %v5639 = vunpack.c.l.b16 %v5566
  %v5640 = vpack.c.b16 %v5625, %v5624
  %v5641 = vpack.c.b16 %v5627, %v5626
  %v5642 = vpack.c.b16 %v5629, %v5628
  %v5643 = vpack.c.b16 %v5631, %v5630
  %v5644 = vpack.c.b16 %v5633, %v5632
  %v5645 = vpack.c.b16 %v5635, %v5634
  %v5646 = vpack.c.b16 %v5637, %v5636
  %v5647 = vpack.c.b16 %v5639, %v5638
  %5656 = vmatpush.bf16.msra.mxu0 %v5647
  %5657 = vmatpush.bf16.msra.mxu0 %v5646
  %5658 = vmatpush.bf16.msra.mxu0 %v5645
  %5659 = vmatpush.bf16.msra.mxu0 %v5644
  %5660 = vmatpush.bf16.msra.mxu0 %v5643
  %5661 = vmatpush.bf16.msra.mxu0 %v5642
  %5662 = vmatpush.bf16.msra.mxu0 %v5641
  %5663 = vmatpush.bf16.msra.mxu0 %v5640
  %5664 = vmatmul.bf16.gmra.mxu0 %v5572
  %v5665 = vpop.f32.mrf.mxu0
  %v5666 = vadd.f32 0.0, %v5665
  %v5667 = vpop.f32.mrf.mxu0
  %v5668 = vadd.f32 0.0, %v5667
  %5669 = vmatmul.bf16.gmra.mxu0 %v5574
  %v5670 = vpop.f32.mrf.mxu0
  %v5671 = vadd.f32 0.0, %v5670
  %v5672 = vpop.f32.mrf.mxu0
  %v5673 = vadd.f32 0.0, %v5672
  %5674 = vmatmul.bf16.gmra.mxu0 %v5576
  %v5675 = vpop.f32.mrf.mxu0
  %v5676 = vadd.f32 0.0, %v5675
  %v5677 = vpop.f32.mrf.mxu0
  %v5678 = vadd.f32 0.0, %v5677
  %5679 = vmatmul.bf16.gmra.mxu0 %v5578
  %v5680 = vpop.f32.mrf.mxu0
  %v5681 = vadd.f32 0.0, %v5680
  %v5682 = vpop.f32.mrf.mxu0
  %v5683 = vadd.f32 0.0, %v5682
  %5684 = vmatmul.bf16.gmra.mxu0 %v5580
  %v5685 = vpop.f32.mrf.mxu0
  %v5686 = vadd.f32 0.0, %v5685
  %v5687 = vpop.f32.mrf.mxu0
  %v5688 = vadd.f32 0.0, %v5687
  %5689 = vmatmul.bf16.gmra.mxu0 %v5582
  %v5690 = vpop.f32.mrf.mxu0
  %v5691 = vadd.f32 0.0, %v5690
  %v5692 = vpop.f32.mrf.mxu0
  %v5693 = vadd.f32 0.0, %v5692
  %5694 = vmatmul.bf16.gmra.mxu0 %v5584
  %v5695 = vpop.f32.mrf.mxu0
  %v5696 = vadd.f32 0.0, %v5695
  %v5697 = vpop.f32.mrf.mxu0
  %v5698 = vadd.f32 0.0, %v5697
  %5699 = vmatmul.bf16.gmra.mxu0 %v5586
  %v5700 = vpop.f32.mrf.mxu0
  %v5701 = vadd.f32 0.0, %v5700
  %v5702 = vpop.f32.mrf.mxu0
  %v5703 = vadd.f32 0.0, %v5702
  %5704 = vmatmul.bf16.gmra.mxu0 %v5588
  %v5705 = vpop.f32.mrf.mxu0
  %v5706 = vadd.f32 0.0, %v5705
  %v5707 = vpop.f32.mrf.mxu0
  %v5708 = vadd.f32 0.0, %v5707
  %5709 = vmatmul.bf16.gmra.mxu0 %v5590
  %v5710 = vpop.f32.mrf.mxu0
  %v5711 = vadd.f32 0.0, %v5710
  %v5712 = vpop.f32.mrf.mxu0
  %v5713 = vadd.f32 0.0, %v5712
  %5714 = vmatmul.bf16.gmra.mxu0 %v5592
  %v5715 = vpop.f32.mrf.mxu0
  %v5716 = vadd.f32 0.0, %v5715
  %v5717 = vpop.f32.mrf.mxu0
  %v5718 = vadd.f32 0.0, %v5717
  %5719 = vmatmul.bf16.gmra.mxu0 %v5594
  %v5720 = vpop.f32.mrf.mxu0
  %v5721 = vadd.f32 0.0, %v5720
  %v5722 = vpop.f32.mrf.mxu0
  %v5723 = vadd.f32 0.0, %v5722
  %5724 = vmatmul.bf16.gmra.mxu0 %v5593
  %v5725 = vpop.f32.mrf.mxu0
  %v5726 = vadd.f32 0.0, %v5725
  %v5727 = vpop.f32.mrf.mxu0
  %5728 = vdwg.mxu0
  %v5729 = vadd.f32 %v5524, %v5666
  %v5730 = vadd.f32 %v5525, %v5668
  %v5731 = vadd.f32 %v5526, %v5671
  %v5732 = vadd.f32 %v5527, %v5673
  %v5733 = vadd.f32 %v5528, %v5676
  %v5734 = vadd.f32 %v5529, %v5678
  %v5735 = vadd.f32 %v5530, %v5681
  %v5736 = vadd.f32 %v5531, %v5683
  %v5737 = vadd.f32 %v5532, %v5686
  %v5738 = vadd.f32 %v5533, %v5688
  %v5739 = vadd.f32 %v5534, %v5691
  %v5740 = vadd.f32 %v5535, %v5693
  %v5741 = vadd.f32 %v5536, %v5696
  %v5742 = vadd.f32 %v5537, %v5698
  %v5743 = vadd.f32 %v5538, %v5701
  %v5744 = vadd.f32 %v5539, %v5703
  %v5745 = vadd.f32 %v5540, %v5706
  %v5746 = vadd.f32 %v5541, %v5708
  %v5747 = vadd.f32 %v5542, %v5711
  %v5748 = vadd.f32 %v5543, %v5713
  %v5749 = vadd.f32 %v5544, %v5716
  %v5750 = vadd.f32 %v5545, %v5718
  %v5751 = vadd.f32 %v5546, %v5721
  %v5752 = vadd.f32 %v5547, %v5723
  %v5753 = vadd.f32 %v5548, %v5726
  %v5754 = vld [vmem:[%s9] sm:$0x1]
  %v5755 = vld [vmem:[%s10] sm:$0x1]
  %v5756 = vmul.f32 %v5729, %v2687
  %v5757 = vmul.f32 %v5730, %v2692
  %v5758 = vmul.f32 %v5731, %v2697
  %v5759 = vmul.f32 %v5732, %v2702
  %v5760 = vmul.f32 %v5733, %v2707
  %v5761 = vmul.f32 %v5734, %v2712
  %v5762 = vmul.f32 %v5735, %v2717
  %v5763 = vmul.f32 %v5736, %v2722
  %v5764 = vmul.f32 %v5737, %v2727
  %v5765 = vmul.f32 %v5738, %v2732
  %v5766 = vmul.f32 %v5739, %v2737
  %v5767 = vmul.f32 %v5740, %v2742
  %v5768 = vmul.f32 %v5741, %v2747
  %v5769 = vmul.f32 %v5742, %v2752
  %v5770 = vmul.f32 %v5743, %v2757
  %v5771 = vmul.f32 %v5744, %v2762
  %v5772 = vmul.f32 %v5745, %v2767
  %v5773 = vmul.f32 %v5746, %v2772
  %v5774 = vmul.f32 %v5747, %v2777
  %v5775 = vmul.f32 %v5748, %v2782
  %v5776 = vmul.f32 %v5749, %v2787
  %v5777 = vmul.f32 %v5750, %v2792
  %v5778 = vmul.f32 %v5751, %v2797
  %v5779 = vmul.f32 %v5752, %v2802
  %v5780 = vmul.f32 %v5753, %v2807
  %v5781 = vadd.f32 %v5756, %v5757
  %v5782 = vadd.f32 %v5781, %v5758
  %v5783 = vadd.f32 %v5782, %v5759
  %v5784 = vadd.f32 %v5783, %v5760
  %v5785 = vadd.f32 %v5784, %v5761
  %v5786 = vadd.f32 %v5785, %v5762
  %v5787 = vadd.f32 %v5786, %v5763
  %v5788 = vadd.f32 %v5787, %v5764
  %v5789 = vadd.f32 %v5788, %v5765
  %v5790 = vadd.f32 %v5789, %v5766
  %v5791 = vadd.f32 %v5790, %v5767
  %v5792 = vadd.f32 %v5791, %v5768
  %v5793 = vadd.f32 %v5792, %v5769
  %v5794 = vadd.f32 %v5793, %v5770
  %v5795 = vadd.f32 %v5794, %v5771
  %v5796 = vadd.f32 %v5795, %v5772
  %v5797 = vadd.f32 %v5796, %v5773
  %v5798 = vadd.f32 %v5797, %v5774
  %v5799 = vadd.f32 %v5798, %v5775
  %v5800 = vadd.f32 %v5799, %v5776
  %v5801 = vadd.f32 %v5800, %v5777
  %v5802 = vadd.f32 %v5801, %v5778
  %v5803 = vadd.f32 %v5802, %v5779
  %v5804 = vadd.f32 %v5803, %v5780
  %v5805 = vrot.slane %v5804, 4
  %v5806 = vadd.f32 %v5804, %v5805
  %v5807 = vrot.slane %v5806, 2
  %v5808 = vadd.f32 %v5806, %v5807
  %v5809 = vrot.slane %v5808, 1
  %v5810 = vadd.f32 %v5808, %v5809
  %v5811 = vmul.f32 %v5810, %v2870
  %v5812 = vsub.f32 %v5729, %v5811
  %v5813 = vsub.f32 %v5730, %v5811
  %v5814 = vsub.f32 %v5731, %v5811
  %v5815 = vsub.f32 %v5732, %v5811
  %v5816 = vsub.f32 %v5733, %v5811
  %v5817 = vsub.f32 %v5734, %v5811
  %v5818 = vsub.f32 %v5735, %v5811
  %v5819 = vsub.f32 %v5736, %v5811
  %v5820 = vsub.f32 %v5737, %v5811
  %v5821 = vsub.f32 %v5738, %v5811
  %v5822 = vsub.f32 %v5739, %v5811
  %v5823 = vsub.f32 %v5740, %v5811
  %v5824 = vsub.f32 %v5741, %v5811
  %v5825 = vsub.f32 %v5742, %v5811
  %v5826 = vsub.f32 %v5743, %v5811
  %v5827 = vsub.f32 %v5744, %v5811
  %v5828 = vsub.f32 %v5745, %v5811
  %v5829 = vsub.f32 %v5746, %v5811
  %v5830 = vsub.f32 %v5747, %v5811
  %v5831 = vsub.f32 %v5748, %v5811
  %v5832 = vsub.f32 %v5749, %v5811
  %v5833 = vsub.f32 %v5750, %v5811
  %v5834 = vsub.f32 %v5751, %v5811
  %v5835 = vsub.f32 %v5752, %v5811
  %v5836 = vsub.f32 %v5753, %v5811
  %v5837 = vmul.f32 %v5812, %v2687
  %v5838 = vmul.f32 %v5813, %v2692
  %v5839 = vmul.f32 %v5814, %v2697
  %v5840 = vmul.f32 %v5815, %v2702
  %v5841 = vmul.f32 %v5816, %v2707
  %v5842 = vmul.f32 %v5817, %v2712
  %v5843 = vmul.f32 %v5818, %v2717
  %v5844 = vmul.f32 %v5819, %v2722
  %v5845 = vmul.f32 %v5820, %v2727
  %v5846 = vmul.f32 %v5821, %v2732
  %v5847 = vmul.f32 %v5822, %v2737
  %v5848 = vmul.f32 %v5823, %v2742
  %v5849 = vmul.f32 %v5824, %v2747
  %v5850 = vmul.f32 %v5825, %v2752
  %v5851 = vmul.f32 %v5826, %v2757
  %v5852 = vmul.f32 %v5827, %v2762
  %v5853 = vmul.f32 %v5828, %v2767
  %v5854 = vmul.f32 %v5829, %v2772
  %v5855 = vmul.f32 %v5830, %v2777
  %v5856 = vmul.f32 %v5831, %v2782
  %v5857 = vmul.f32 %v5832, %v2787
  %v5858 = vmul.f32 %v5833, %v2792
  %v5859 = vmul.f32 %v5834, %v2797
  %v5860 = vmul.f32 %v5835, %v2802
  %v5861 = vmul.f32 %v5836, %v2807
  %v5862 = vmul.f32 %v5837, %v5837
  %v5863 = vmul.f32 %v5838, %v5838
  %v5864 = vmul.f32 %v5839, %v5839
  %v5865 = vmul.f32 %v5840, %v5840
  %v5866 = vmul.f32 %v5841, %v5841
  %v5867 = vmul.f32 %v5842, %v5842
  %v5868 = vmul.f32 %v5843, %v5843
  %v5869 = vmul.f32 %v5844, %v5844
  %v5870 = vmul.f32 %v5845, %v5845
  %v5871 = vmul.f32 %v5846, %v5846
  %v5872 = vmul.f32 %v5847, %v5847
  %v5873 = vmul.f32 %v5848, %v5848
  %v5874 = vmul.f32 %v5849, %v5849
  %v5875 = vmul.f32 %v5850, %v5850
  %v5876 = vmul.f32 %v5851, %v5851
  %v5877 = vmul.f32 %v5852, %v5852
  %v5878 = vmul.f32 %v5853, %v5853
  %v5879 = vmul.f32 %v5854, %v5854
  %v5880 = vmul.f32 %v5855, %v5855
  %v5881 = vmul.f32 %v5856, %v5856
  %v5882 = vmul.f32 %v5857, %v5857
  %v5883 = vmul.f32 %v5858, %v5858
  %v5884 = vmul.f32 %v5859, %v5859
  %v5885 = vmul.f32 %v5860, %v5860
  %v5886 = vmul.f32 %v5861, %v5861
  %v5887 = vadd.f32 %v5862, %v5863
  %v5888 = vadd.f32 %v5887, %v5864
  %v5889 = vadd.f32 %v5888, %v5865
  %v5890 = vadd.f32 %v5889, %v5866
  %v5891 = vadd.f32 %v5890, %v5867
  %v5892 = vadd.f32 %v5891, %v5868
  %v5893 = vadd.f32 %v5892, %v5869
  %v5894 = vadd.f32 %v5893, %v5870
  %v5895 = vadd.f32 %v5894, %v5871
  %v5896 = vadd.f32 %v5895, %v5872
  %v5897 = vadd.f32 %v5896, %v5873
  %v5898 = vadd.f32 %v5897, %v5874
  %v5899 = vadd.f32 %v5898, %v5875
  %v5900 = vadd.f32 %v5899, %v5876
  %v5901 = vadd.f32 %v5900, %v5877
  %v5902 = vadd.f32 %v5901, %v5878
  %v5903 = vadd.f32 %v5902, %v5879
  %v5904 = vadd.f32 %v5903, %v5880
  %v5905 = vadd.f32 %v5904, %v5881
  %v5906 = vadd.f32 %v5905, %v5882
  %v5907 = vadd.f32 %v5906, %v5883
  %v5908 = vadd.f32 %v5907, %v5884
  %v5909 = vadd.f32 %v5908, %v5885
  %v5910 = vadd.f32 %v5909, %v5886
  %v5911 = vrot.slane %v5910, 4
  %v5912 = vadd.f32 %v5910, %v5911
  %v5913 = vrot.slane %v5912, 2
  %v5914 = vadd.f32 %v5912, %v5913
  %v5915 = vrot.slane %v5914, 1
  %v5916 = vadd.f32 %v5914, %v5915
  %v5917 = vmul.f32 %v5916, %v2870
  %v5918 = vadd.f32 %v5917, 1e-05
  %v5919 = vrsqrt.pop %v5918
  %v5920 = vmul.f32 %v5919, %v5918
  %v5921 = vmul.f32 %v5920, %v5919
  %v5922 = vmul.f32 0.5, %v5921
  %v5923 = vsub.f32 1.5, %v5922
  %v5924 = vmul.f32 %v5919, %v5923
  %vm5925 = vweird.f32 %v5918
  %vm5926 = vweird.f32 %v5919
  %vm5927 = vmor %vm5925, %vm5926
  %v5928 = vsel %vm5927, %v5919, %v5924
  %v5929 = vmul.f32 %v5812, %v5928
  %v5930 = vmul.f32 %v5813, %v5928
  %v5931 = vmul.f32 %v5814, %v5928
  %v5932 = vmul.f32 %v5815, %v5928
  %v5933 = vmul.f32 %v5816, %v5928
  %v5934 = vmul.f32 %v5817, %v5928
  %v5935 = vmul.f32 %v5818, %v5928
  %v5936 = vmul.f32 %v5819, %v5928
  %v5937 = vmul.f32 %v5820, %v5928
  %v5938 = vmul.f32 %v5821, %v5928
  %v5939 = vmul.f32 %v5822, %v5928
  %v5940 = vmul.f32 %v5823, %v5928
  %v5941 = vmul.f32 %v5824, %v5928
  %v5942 = vmul.f32 %v5825, %v5928
  %v5943 = vmul.f32 %v5826, %v5928
  %v5944 = vmul.f32 %v5827, %v5928
  %v5945 = vmul.f32 %v5828, %v5928
  %v5946 = vmul.f32 %v5829, %v5928
  %v5947 = vmul.f32 %v5830, %v5928
  %v5948 = vmul.f32 %v5831, %v5928
  %v5949 = vmul.f32 %v5832, %v5928
  %v5950 = vmul.f32 %v5833, %v5928
  %v5951 = vmul.f32 %v5834, %v5928
  %v5952 = vmul.f32 %v5835, %v5928
  %v5953 = vmul.f32 %v5836, %v5928
  %v5955 = vperm.slane %v5754, 0
  %v5957 = vmul.f32 %v5929, %v5955
  %v5958 = vmul.f32 %v5930, %v5955
  %v5959 = vmul.f32 %v5931, %v5955
  %v5960 = vmul.f32 %v5932, %v5955
  %v5961 = vmul.f32 %v5933, %v5955
  %v5962 = vmul.f32 %v5934, %v5955
  %v5963 = vmul.f32 %v5935, %v5955
  %v5964 = vmul.f32 %v5936, %v5955
  %v5965 = vmul.f32 %v5937, %v5955
  %v5966 = vmul.f32 %v5938, %v5955
  %v5967 = vmul.f32 %v5939, %v5955
  %v5968 = vmul.f32 %v5940, %v5955
  %v5969 = vmul.f32 %v5941, %v5955
  %v5970 = vmul.f32 %v5942, %v5955
  %v5971 = vmul.f32 %v5943, %v5955
  %v5972 = vmul.f32 %v5944, %v5955
  %v5973 = vmul.f32 %v5945, %v5955
  %v5974 = vmul.f32 %v5946, %v5955
  %v5975 = vmul.f32 %v5947, %v5955
  %v5976 = vmul.f32 %v5948, %v5955
  %v5977 = vmul.f32 %v5949, %v5955
  %v5978 = vmul.f32 %v5950, %v5955
  %v5979 = vmul.f32 %v5951, %v5955
  %v5980 = vmul.f32 %v5952, %v5955
  %v5981 = vmul.f32 %v5953, %v5955
  %v5983 = vperm.slane %v5755, 0
  %v5985 = vadd.f32 %v5957, %v5983
  %v5986 = vadd.f32 %v5958, %v5983
  %v5987 = vadd.f32 %v5959, %v5983
  %v5988 = vadd.f32 %v5960, %v5983
  %v5989 = vadd.f32 %v5961, %v5983
  %v5990 = vadd.f32 %v5962, %v5983
  %v5991 = vadd.f32 %v5963, %v5983
  %v5992 = vadd.f32 %v5964, %v5983
  %v5993 = vadd.f32 %v5965, %v5983
  %v5994 = vadd.f32 %v5966, %v5983
  %v5995 = vadd.f32 %v5967, %v5983
  %v5996 = vadd.f32 %v5968, %v5983
  %v5997 = vadd.f32 %v5969, %v5983
  %v5998 = vadd.f32 %v5970, %v5983
  %v5999 = vadd.f32 %v5971, %v5983
  %v6000 = vadd.f32 %v5972, %v5983
  %v6001 = vadd.f32 %v5973, %v5983
  %v6002 = vadd.f32 %v5974, %v5983
  %v6003 = vadd.f32 %v5975, %v5983
  %v6004 = vadd.f32 %v5976, %v5983
  %v6005 = vadd.f32 %v5977, %v5983
  %v6006 = vadd.f32 %v5978, %v5983
  %v6007 = vadd.f32 %v5979, %v5983
  %v6008 = vadd.f32 %v5980, %v5983
  %v6009 = vadd.f32 %v5981, %v5983
  %v6010 = vld [vmem:[%s0 + $0xb] sm:$0xff]
  %v6011 = vld [vmem:[%s0 + $0x13] sm:$0xff]
  %v6012 = vld [vmem:[%s0 + $0x1b] sm:$0xff]
  %v6013 = vld [vmem:[%s0 + $0x23] sm:$0xff]
  %v6014 = vld [vmem:[%s0 + $0x2b] sm:$0xff]
  %v6015 = vld [vmem:[%s0 + $0x33] sm:$0xff]
  %v6016 = vld [vmem:[%s0 + $0x3b] sm:$0xff]
  %v6017 = vld [vmem:[%s0 + $0x43] sm:$0xff]
  %v6018 = vld [vmem:[%s0 + $0x4b] sm:$0xff]
  %v6019 = vld [vmem:[%s0 + $0x53] sm:$0xff]
  %v6020 = vld [vmem:[%s0 + $0x5b] sm:$0xff]
  %v6021 = vld [vmem:[%s0 + $0x63] sm:$0xff]
  %v6022 = vld [vmem:[%s0 + $0x6b] sm:$0xff]
  %v6023 = vld [vmem:[%s0 + $0x73] sm:$0xff]
  %v6024 = vld [vmem:[%s0 + $0x7b] sm:$0xff]
  %v6025 = vld [vmem:[%s0 + $0x83] sm:$0xff]
  %v6026 = vld [vmem:[%s0 + $0x8b] sm:$0xff]
  %v6027 = vld [vmem:[%s0 + $0x93] sm:$0xff]
  %v6028 = vld [vmem:[%s0 + $0x9b] sm:$0xff]
  %v6029 = vld [vmem:[%s0 + $0xa3] sm:$0xff]
  %v6030 = vld [vmem:[%s0 + $0xab] sm:$0xff]
  %v6031 = vld [vmem:[%s0 + $0xb3] sm:$0xff]
  %v6032 = vld [vmem:[%s0 + $0xbb] sm:$0xff]
  %v6033 = vld [vmem:[%s0 + $0xc3] sm:$0xff]
  %v6034 = vld [vmem:[%s0 + $0xcb] sm:$0xff]
  %v6035 = vadd.f32 %v5985, %v6010
  %v6036 = vadd.f32 %v5986, %v6011
  %v6037 = vadd.f32 %v5987, %v6012
  %v6038 = vadd.f32 %v5988, %v6013
  %v6039 = vadd.f32 %v5989, %v6014
  %v6040 = vadd.f32 %v5990, %v6015
  %v6041 = vadd.f32 %v5991, %v6016
  %v6042 = vadd.f32 %v5992, %v6017
  %v6043 = vadd.f32 %v5993, %v6018
  %v6044 = vadd.f32 %v5994, %v6019
  %v6045 = vadd.f32 %v5995, %v6020
  %v6046 = vadd.f32 %v5996, %v6021
  %v6047 = vadd.f32 %v5997, %v6022
  %v6048 = vadd.f32 %v5998, %v6023
  %v6049 = vadd.f32 %v5999, %v6024
  %v6050 = vadd.f32 %v6000, %v6025
  %v6051 = vadd.f32 %v6001, %v6026
  %v6052 = vadd.f32 %v6002, %v6027
  %v6053 = vadd.f32 %v6003, %v6028
  %v6054 = vadd.f32 %v6004, %v6029
  %v6055 = vadd.f32 %v6005, %v6030
  %v6056 = vadd.f32 %v6006, %v6031
  %v6057 = vadd.f32 %v6007, %v6032
  %v6058 = vadd.f32 %v6008, %v6033
  %v6059 = vadd.f32 %v6009, %v6034
  %6060 = vst [vmem:[%s12] sm:$0xff] %v6035
  %6061 = vst [vmem:[%s12 + $0x8] sm:$0xff] %v6036
  %6062 = vst [vmem:[%s12 + $0x10] sm:$0xff] %v6037
  %6063 = vst [vmem:[%s12 + $0x18] sm:$0xff] %v6038
  %6064 = vst [vmem:[%s12 + $0x20] sm:$0xff] %v6039
  %6065 = vst [vmem:[%s12 + $0x28] sm:$0xff] %v6040
  %6066 = vst [vmem:[%s12 + $0x30] sm:$0xff] %v6041
  %6067 = vst [vmem:[%s12 + $0x38] sm:$0xff] %v6042
  %6068 = vst [vmem:[%s12 + $0x40] sm:$0xff] %v6043
  %6069 = vst [vmem:[%s12 + $0x48] sm:$0xff] %v6044
  %6070 = vst [vmem:[%s12 + $0x50] sm:$0xff] %v6045
  %6071 = vst [vmem:[%s12 + $0x58] sm:$0xff] %v6046
  %6072 = vst [vmem:[%s12 + $0x60] sm:$0xff] %v6047
  %6073 = vst [vmem:[%s12 + $0x68] sm:$0xff] %v6048
  %6074 = vst [vmem:[%s12 + $0x70] sm:$0xff] %v6049
  %6075 = vst [vmem:[%s12 + $0x78] sm:$0xff] %v6050
  %6076 = vst [vmem:[%s12 + $0x80] sm:$0xff] %v6051
  %6077 = vst [vmem:[%s12 + $0x88] sm:$0xff] %v6052
  %6078 = vst [vmem:[%s12 + $0x90] sm:$0xff] %v6053
  %6079 = vst [vmem:[%s12 + $0x98] sm:$0xff] %v6054
  %6080 = vst [vmem:[%s12 + $0xa0] sm:$0xff] %v6055
  %6081 = vst [vmem:[%s12 + $0xa8] sm:$0xff] %v6056
  %6082 = vst [vmem:[%s12 + $0xb0] sm:$0xff] %v6057
  %6083 = vst [vmem:[%s12 + $0xb8] sm:$0xff] %v6058
  %6084 = vst [vmem:[%s12 + $0xc0] sm:$0xff] %v6059
  // Predicated region
  $region50: #{encoder_forward.6} parent=0 // pred_check
    _
  $region51: #{encoder_forward.6} parent=0 // pred_check_branch
    %6086 = sbr.rel (0) target = $region53
  $region52: #{encoder_forward.6} parent=0 // pred_region
    _
  $region53: #{encoder_forward.6} parent=0 // pred_fallthru
    _
  // Predicated region
  $region54: #{encoder_forward.6} parent=0 // pred_check
    _
  $region55: #{encoder_forward.6} parent=0 // pred_check_branch
    %6088 = sbr.rel (0) target = $region57
  $region56: #{encoder_forward.6} parent=0 // pred_region
    _
  $region57: #{encoder_forward.6} parent=0 // pred_fallthru
    _

</llo_original>
